<compile_context>
chip_gen: v6e
topology: v6e:2x2x1
jax: 0.10.0
libtpu: 0.0.40
codegen_flags: <defaults>
</compile_context>

<pallas_src>
import jax
import jax.numpy as jnp
from jax.experimental import pallas as pl
from jax.experimental.pallas import tpu as pltpu


# --------------------------------------------------------------------------
# Fused whole-network kernel
# --------------------------------------------------------------------------
def _fused_net_kernel(x_ref, w1_ref, s1_ref, t1_ref,
                      w2_ref, s2_ref, t2_ref,
                      w3_ref, s3_ref, t3_ref,
                      w4_ref, t4_ref,
                      o_ref, acc2_ref):
    i = pl.program_id(0)

    @pl.when(i == 0)
    def _init():
        acc2_ref[...] = jnp.zeros_like(acc2_ref)

    # ---- fc1 N-tile: relu((x @ W1_tile) * s1 + t1) -------------------------
    # s1 carries BN1 scale * int8 dequant scale; t1 carries bias/BN shift.
    x = x_ref[...]                                      # (B, 6144) bf16
    w1 = w1_ref[...].astype(jnp.bfloat16)               # int8 -> bf16
    y1 = jnp.dot(x, w1, preferred_element_type=jnp.float32)
    h1 = jnp.maximum(y1 * s1_ref[...] + t1_ref[...], 0.0)   # (B, tn1) f32

    # ---- fc2 partial reduction over this fc1 tile's rows of W2 -------------
    w2 = w2_ref[...].astype(jnp.bfloat16)               # (tn1, N2)
    acc2_ref[...] += jnp.dot(h1.astype(jnp.bfloat16), w2,
                             preferred_element_type=jnp.float32)

    # ---- last step: BN2/ReLU, fc3+BN3+ReLU, fc4+sigmoid ---------------------
    @pl.when(i == pl.num_programs(0) - 1)
    def _tail():
        h2 = jnp.maximum(acc2_ref[...] * s2_ref[...] + t2_ref[...], 0.0)
        w3 = w3_ref[...].astype(jnp.bfloat16)
        h3 = jnp.dot(h2.astype(jnp.bfloat16), w3,
                     preferred_element_type=jnp.float32)
        h3 = jnp.maximum(h3 * s3_ref[...] + t3_ref[...], 0.0)
        y4 = jnp.dot(h3.astype(jnp.bfloat16), w4_ref[...],
                     preferred_element_type=jnp.float32)
        o_ref[...] = jax.nn.sigmoid(y4 + t4_ref[...])


def fused_net(x, w1q, s1, t1, w2q, s2, t2, w3q, s3, t3, w4p, t4p, *, tn1=512):
    """Whole forward pass in one pallas_call.  Returns (B, 128) f32 (padded)."""
    B, K1 = x.shape
    K1w, N1 = w1q.shape
    N1w, N2 = w2q.shape
    N2w, N3 = w3q.shape
    N3w, NP = w4p.shape
    assert K1 == K1w and N1 == N1w and N2 == N2w and N3 == N3w
    assert N1 % tn1 == 0
    steps = N1 // tn1

    # Scoped VMEM: double-buffered streamed tiles + resident tail weights +
    # dequant temps + headroom.  ~26 MiB -> fits every generation's physical
    # VMEM (v7x 64 MiB, v5e/v6e 128 MiB); exceeds v5e's 16 MiB default, hence
    # the explicit limit.
    vmem_limit = (
        2 * B * K1 * 2          # x bf16 (pipeline buffers)
        + 2 * K1 * tn1 * 1      # fc1 int8 weight tile (double-buffered)
        + 2 * tn1 * N2 * 1      # fc2 int8 row-chunk (double-buffered)
        + 2 * N2 * N3 * 1      # fc3 int8 (resident)
        + 2 * N3 * NP * 2      # fc4 bf16 padded (resident)
        + 2 * B * NP * 4        # output tile
        + B * N2 * 4            # fc2 accumulator scratch
        + K1 * tn1 * 2          # bf16 dequant temp for the fc1 tile
        + 2 * N2 * N3 * 2       # bf16 dequant temps for fc2 chunk / fc3
        + 8 * 1024 * 1024       # headroom
    )

    grid_spec = pltpu.PrefetchScalarGridSpec(
        num_scalar_prefetch=0,
        grid=(steps,),
        in_specs=[
            pl.BlockSpec((B, K1), lambda i: (0, 0)),     # x (resident)
            pl.BlockSpec((K1, tn1), lambda i: (0, i)),   # fc1 weight N-tile
            pl.BlockSpec((1, tn1), lambda i: (0, i)),    # fc1 scale tile
            pl.BlockSpec((1, tn1), lambda i: (0, i)),    # fc1 shift tile
            pl.BlockSpec((tn1, N2), lambda i: (i, 0)),   # fc2 weight row-chunk
            pl.BlockSpec((1, N2), lambda i: (0, 0)),     # fc2 scale (resident)
            pl.BlockSpec((1, N2), lambda i: (0, 0)),     # fc2 shift
            pl.BlockSpec((N2, N3), lambda i: (0, 0)),    # fc3 weight (resident)
            pl.BlockSpec((1, N3), lambda i: (0, 0)),     # fc3 scale
            pl.BlockSpec((1, N3), lambda i: (0, 0)),     # fc3 shift
            pl.BlockSpec((N3, NP), lambda i: (0, 0)),    # fc4 weight (padded)
            pl.BlockSpec((1, NP), lambda i: (0, 0)),     # fc4 bias (padded)
        ],
        out_specs=pl.BlockSpec((B, NP), lambda i: (0, 0)),
        scratch_shapes=[pltpu.VMEM((B, N2), jnp.float32)],   # fc2 accumulator
    )

    return pl.pallas_call(
        _fused_net_kernel,
        out_shape=jax.ShapeDtypeStruct((B, NP), jnp.float32),
        grid_spec=grid_spec,
        compiler_params=pltpu.CompilerParams(
            # The grid axis carries the fc2 accumulator -> must be sequential.
            dimension_semantics=("arbitrary",),
            vmem_limit_bytes=int(vmem_limit)),
    )(x, w1q, s1, t1, w2q, s2, t2, w3q, s3, t3, w4p, t4p)


# --------------------------------------------------------------------------
# Parameters
# --------------------------------------------------------------------------
def _init_linear(key, in_f, out_f):
    """PyTorch nn.Linear default init: U(-1/sqrt(in_f), 1/sqrt(in_f))."""
    kw, kb = jax.random.split(key)
    bound = 1.0 / jnp.sqrt(jnp.float32(in_f))
    # Weight stored as [in_f, out_f] (transpose of PyTorch) so kernels do x @ W.
    w = jax.random.uniform(kw, (in_f, out_f), jnp.float32, -bound, bound)
    b = jax.random.uniform(kb, (out_f,), jnp.float32, -bound, bound)
    return w, b


def init_params(key):
    keys = jax.random.split(key, 4)
    dims = [(6144, 2048), (2048, 1024), (1024, 512), (512, 1)]
    params = {}
    for i, ((din, dout), k) in enumerate(zip(dims, keys), start=1):
        w, b = _init_linear(k, din, dout)
        params[f"fc{i}"] = (w, b)
        if i <= 3:
            # BatchNorm1d defaults: gamma=1, beta=0, running mean=0, var=1, eps=1e-5.
            params[f"bn{i}"] = (
                jnp.ones((dout,), jnp.float32),
                jnp.zeros((dout,), jnp.float32),
                jnp.zeros((dout,), jnp.float32),
                jnp.ones((dout,), jnp.float32),
                1e-5,
            )
    return params


def _quantize_int8_per_channel(w):
    """Symmetric per-output-channel int8 quantization of a (K, N) weight."""
    amax = jnp.max(jnp.abs(w), axis=0)                       # (N,)
    scale = jnp.maximum(amax, 1e-12) / 127.0
    wq = jnp.clip(jnp.round(w / scale), -127.0, 127.0).astype(jnp.int8)
    return wq, scale


def prepare_params(params):
    """One-time prep (NOT per forward call):
       - quantize fc1/fc2/fc3 weights to per-channel int8,
       - fold (BatchNorm running stats + Linear bias + int8 dequant scale)
         into per-feature scale/shift vectors,
       - pad fc4 to a lane-dense 128-wide bf16 output."""
    def fold_bn(bias, bn):
        gamma, beta, mean, var, eps = bn
        bn_scale = gamma / jnp.sqrt(var + eps)
        shift = (bias - mean) * bn_scale + beta
        return bn_scale, shift

    prep = {}
    for i in (1, 2, 3):
        w, b = params[f"fc{i}"]
        bn_scale, shift = fold_bn(b, params[f"bn{i}"])
        wq, qscale = _quantize_int8_per_channel(w)
        prep[f"w{i}q"] = wq
        prep[f"s{i}"] = (bn_scale * qscale).reshape(1, -1).astype(jnp.float32)
        prep[f"t{i}"] = shift.reshape(1, -1).astype(jnp.float32)

    w4, b4 = params["fc4"]
    npad = 128
    w4p = jnp.zeros((w4.shape[0], npad), jnp.bfloat16)
    w4p = w4p.at[:, :1].set(w4.astype(jnp.bfloat16))
    t4p = jnp.zeros((1, npad), jnp.float32).at[0, 0].set(b4[0])
    prep["w4"] = w4p
    prep["t4"] = t4p
    return prep


# --------------------------------------------------------------------------
# Forward
# --------------------------------------------------------------------------
@jax.jit
def net_forward(prep, x):
    y = fused_net(x.astype(jnp.bfloat16),
                  prep["w1q"], prep["s1"], prep["t1"],
                  prep["w2q"], prep["s2"], prep["t2"],
                  prep["w3q"], prep["s3"], prep["t3"],
                  prep["w4"], prep["t4"])
    return y[:, :1]   # padded fc4 lanes (sigmoid(0)=0.5) are dropped here


# --------------------------------------------------------------------------
# References
# --------------------------------------------------------------------------
def reference_forward_emulated(prep, x):
    """Pure-JAX reference with the kernel's exact numerics (int8 weights
    dequantized via the folded scale, bf16 activations, f32 accumulation)."""
    h = x.astype(jnp.bfloat16)
    for i in (1, 2, 3):
        y = jnp.dot(h, prep[f"w{i}q"].astype(jnp.bfloat16),
                    preferred_element_type=jnp.float32)
        h = jnp.maximum(y * prep[f"s{i}"] + prep[f"t{i}"], 0.0)
        h = h.astype(jnp.bfloat16)
    y = jnp.dot(h, prep["w4"], preferred_element_type=jnp.float32) + prep["t4"]
    return jax.nn.sigmoid(y)[:, :1]


def reference_forward_f32(params, x):
    """Full-precision reference matching the original PyTorch module (eval)."""
    def layer(x, w, b, bn, act):
        y = x @ w + b
        if bn is not None:
            gamma, beta, mean, var, eps = bn
            y = (y - mean) / jnp.sqrt(var + eps) * gamma + beta
        if act == "relu":
            y = jnp.maximum(y, 0.0)
        elif act == "sigmoid":
            y = jax.nn.sigmoid(y)
        return y

    x = layer(x, *params["fc1"], params["bn1"], "relu")
    x = layer(x, *params["fc2"], params["bn2"], "relu")
    x = layer(x, *params["fc3"], params["bn3"], "relu")
    x = layer(x, *params["fc4"], None, "sigmoid")
    return x


# --------------------------------------------------------------------------
if __name__ == "__main__":
    key = jax.random.PRNGKey(0)
    kp, kx = jax.random.split(key)

    params = init_params(kp)
    prep = prepare_params(params)

    B = 8
    x = jax.random.normal(kx, (B, 6144), jnp.float32)

    out = jax.block_until_ready(net_forward(prep, x))
    assert out.shape == (B, 1), out.shape

    ref_emul = reference_forward_emulated(prep, x)
    ref_f32 = reference_forward_f32(params, x)

    err_emul = float(jnp.max(jnp.abs(out - ref_emul)))
    err_f32 = float(jnp.max(jnp.abs(out - ref_f32)))
    assert jnp.allclose(out, ref_emul, atol=2e-3, rtol=2e-3), err_emul
    assert jnp.allclose(out, ref_f32, atol=3e-2), err_f32

    print("KERNEL_OK")
</pallas_src>

<mosaic_0001>
module attributes {stable_mosaic.version = 11 : i64} {
  func.func @_fused_net_kernel(%arg0: i32, %arg1: memref<8x6144xbf16, #tpu.memory_space<vmem>>, %arg2: memref<6144x512xi8, #tpu.memory_space<vmem>>, %arg3: memref<1x512xf32, #tpu.memory_space<vmem>>, %arg4: memref<1x512xf32, #tpu.memory_space<vmem>>, %arg5: memref<512x1024xi8, #tpu.memory_space<vmem>>, %arg6: memref<1x1024xf32, #tpu.memory_space<vmem>>, %arg7: memref<1x1024xf32, #tpu.memory_space<vmem>>, %arg8: memref<1024x512xi8, #tpu.memory_space<vmem>>, %arg9: memref<1x512xf32, #tpu.memory_space<vmem>>, %arg10: memref<1x512xf32, #tpu.memory_space<vmem>>, %arg11: memref<512x128xbf16, #tpu.memory_space<vmem>>, %arg12: memref<1x128xf32, #tpu.memory_space<vmem>>, %arg13: memref<8x128xf32, #tpu.memory_space<vmem>>, %arg14: memref<8x1024xf32, #tpu.memory_space<vmem>>) attributes {dimension_semantics = [#tpu.dimension_semantics<arbitrary>], iteration_bounds = array<i64: 4>, scalar_prefetch = 0 : i64, scratch_operands = 1 : i64, tpu.core_type = #tpu.core_type<tc>, window_params = [{pipeline_mode = #tpu.pipeline_mode<synchronous>, transform_indices = @transform_0, window_bounds = array<i64: 8, 6144>}, {transform_indices = @transform_1, window_bounds = array<i64: 6144, 512>}, {transform_indices = @transform_2, window_bounds = array<i64: 1, 512>}, {transform_indices = @transform_3, window_bounds = array<i64: 1, 512>}, {transform_indices = @transform_4, window_bounds = array<i64: 512, 1024>}, {pipeline_mode = #tpu.pipeline_mode<synchronous>, transform_indices = @transform_5, window_bounds = array<i64: 1, 1024>}, {pipeline_mode = #tpu.pipeline_mode<synchronous>, transform_indices = @transform_6, window_bounds = array<i64: 1, 1024>}, {pipeline_mode = #tpu.pipeline_mode<synchronous>, transform_indices = @transform_7, window_bounds = array<i64: 1024, 512>}, {pipeline_mode = #tpu.pipeline_mode<synchronous>, transform_indices = @transform_8, window_bounds = array<i64: 1, 512>}, {pipeline_mode = #tpu.pipeline_mode<synchronous>, transform_indices = @transform_9, window_bounds = array<i64: 1, 512>}, {pipeline_mode = #tpu.pipeline_mode<synchronous>, transform_indices = @transform_10, window_bounds = array<i64: 512, 128>}, {pipeline_mode = #tpu.pipeline_mode<synchronous>, transform_indices = @transform_11, window_bounds = array<i64: 1, 128>}, {pipeline_mode = #tpu.pipeline_mode<synchronous>, transform_indices = @transform_12, window_bounds = array<i64: 8, 128>}]} {
    %c0_i32 = arith.constant 0 : i32
    %0 = arith.cmpi eq, %arg0, %c0_i32 : i32
    %1 = arith.extui %0 : i1 to i32
    %c0_i32_0 = arith.constant 0 : i32
    %2 = arith.cmpi ne, %1, %c0_i32_0 : i32
    scf.if %2 {
      %cst_17 = arith.constant 0.000000e+00 : f32
      %25 = vector.broadcast %cst_17 : f32 to vector<8x1024xf32>
      %c0_18 = arith.constant 0 : index
      %c0_19 = arith.constant 0 : index
      %26 = vector.load %arg14[%c0_18, %c0_19] : memref<8x1024xf32, #tpu.memory_space<vmem>>, vector<8x1024xf32>
      tpu.vector_store %arg14[%c0_18, %c0_19], %25 {strides = array<i32>} : memref<8x1024xf32, #tpu.memory_space<vmem>>, vector<8x1024xf32>,
    } else {
    }
    %c0 = arith.constant 0 : index
    %c0_1 = arith.constant 0 : index
    %3 = vector.load %arg1[%c0, %c0_1] : memref<8x6144xbf16, #tpu.memory_space<vmem>>, vector<8x6144xbf16>
    %c0_2 = arith.constant 0 : index
    %c0_3 = arith.constant 0 : index
    %4 = vector.load %arg2[%c0_2, %c0_3] : memref<6144x512xi8, #tpu.memory_space<vmem>>, vector<6144x512xi8>
    %5 = arith.sitofp %4 : vector<6144x512xi8> to vector<6144x512xbf16>
    %cst = arith.constant dense<0.000000e+00> : vector<8x512xf32>
    %6 = tpu.matmul %3, %5, %cst {dimension_numbers = #tpu.dot_dimension_numbers<[1], [0], [0], [1], [0, 0, 1, 1], [], []>} : vector<8x6144xbf16>, vector<6144x512xbf16>, vector<8x512xf32> -> vector<8x512xf32>
    %c0_4 = arith.constant 0 : index
    %c0_5 = arith.constant 0 : index
    %7 = vector.load %arg3[%c0_4, %c0_5] : memref<1x512xf32, #tpu.memory_space<vmem>>, vector<1x512xf32>
    %8 = vector.broadcast %7 : vector<1x512xf32> to vector<8x512xf32>
    %9 = arith.mulf %6, %8 : vector<8x512xf32>
    %c0_6 = arith.constant 0 : index
    %c0_7 = arith.constant 0 : index
    %10 = vector.load %arg4[%c0_6, %c0_7] : memref<1x512xf32, #tpu.memory_space<vmem>>, vector<1x512xf32>
    %11 = vector.broadcast %10 : vector<1x512xf32> to vector<8x512xf32>
    %12 = arith.addf %9, %11 : vector<8x512xf32>
    %cst_8 = arith.constant 0.000000e+00 : f32
    %13 = vector.broadcast %cst_8 : f32 to vector<8x512xf32>
    %14 = arith.maximumf %12, %13 : vector<8x512xf32>
    %c0_9 = arith.constant 0 : index
    %c0_10 = arith.constant 0 : index
    %15 = vector.load %arg5[%c0_9, %c0_10] : memref<512x1024xi8, #tpu.memory_space<vmem>>, vector<512x1024xi8>
    %16 = arith.sitofp %15 : vector<512x1024xi8> to vector<512x1024xbf16>
    %c0_11 = arith.constant 0 : index
    %c0_12 = arith.constant 0 : index
    %17 = vector.load %arg14[%c0_11, %c0_12] : memref<8x1024xf32, #tpu.memory_space<vmem>>, vector<8x1024xf32>
    %18 = arith.truncf %14 : vector<8x512xf32> to vector<8x512xbf16>
    %cst_13 = arith.constant dense<0.000000e+00> : vector<8x1024xf32>
    %19 = tpu.matmul %18, %16, %cst_13 {dimension_numbers = #tpu.dot_dimension_numbers<[1], [0], [0], [1], [0, 0, 1, 1], [], []>} : vector<8x512xbf16>, vector<512x1024xbf16>, vector<8x1024xf32> -> vector<8x1024xf32>
    %20 = arith.addf %17, %19 : vector<8x1024xf32>
    %c0_14 = arith.constant 0 : index
    %c0_15 = arith.constant 0 : index
    %21 = vector.load %arg14[%c0_14, %c0_15] : memref<8x1024xf32, #tpu.memory_space<vmem>>, vector<8x1024xf32>
    tpu.vector_store %arg14[%c0_14, %c0_15], %20 {strides = array<i32>} : memref<8x1024xf32, #tpu.memory_space<vmem>>, vector<8x1024xf32>,
    %c3_i32 = arith.constant 3 : i32
    %22 = arith.cmpi eq, %arg0, %c3_i32 : i32
    %23 = arith.extui %22 : i1 to i32
    %c0_i32_16 = arith.constant 0 : i32
    %24 = arith.cmpi ne, %23, %c0_i32_16 : i32
    scf.if %24 {
      %c0_17 = arith.constant 0 : index
      %c0_18 = arith.constant 0 : index
      %25 = vector.load %arg14[%c0_17, %c0_18] : memref<8x1024xf32, #tpu.memory_space<vmem>>, vector<8x1024xf32>
      %c0_19 = arith.constant 0 : index
      %c0_20 = arith.constant 0 : index
      %26 = vector.load %arg6[%c0_19, %c0_20] : memref<1x1024xf32, #tpu.memory_space<vmem>>, vector<1x1024xf32>
      %27 = vector.broadcast %26 : vector<1x1024xf32> to vector<8x1024xf32>
      %28 = arith.mulf %25, %27 : vector<8x1024xf32>
      %c0_21 = arith.constant 0 : index
      %c0_22 = arith.constant 0 : index
      %29 = vector.load %arg7[%c0_21, %c0_22] : memref<1x1024xf32, #tpu.memory_space<vmem>>, vector<1x1024xf32>
      %30 = vector.broadcast %29 : vector<1x1024xf32> to vector<8x1024xf32>
      %31 = arith.addf %28, %30 : vector<8x1024xf32>
      %cst_23 = arith.constant 0.000000e+00 : f32
      %32 = vector.broadcast %cst_23 : f32 to vector<8x1024xf32>
      %33 = arith.maximumf %31, %32 : vector<8x1024xf32>
      %c0_24 = arith.constant 0 : index
      %c0_25 = arith.constant 0 : index
      %34 = vector.load %arg8[%c0_24, %c0_25] : memref<1024x512xi8, #tpu.memory_space<vmem>>, vector<1024x512xi8>
      %35 = arith.sitofp %34 : vector<1024x512xi8> to vector<1024x512xbf16>
      %36 = arith.truncf %33 : vector<8x1024xf32> to vector<8x1024xbf16>
      %cst_26 = arith.constant dense<0.000000e+00> : vector<8x512xf32>
      %37 = tpu.matmul %36, %35, %cst_26 {dimension_numbers = #tpu.dot_dimension_numbers<[1], [0], [0], [1], [0, 0, 1, 1], [], []>} : vector<8x1024xbf16>, vector<1024x512xbf16>, vector<8x512xf32> -> vector<8x512xf32>
      %c0_27 = arith.constant 0 : index
      %c0_28 = arith.constant 0 : index
      %38 = vector.load %arg9[%c0_27, %c0_28] : memref<1x512xf32, #tpu.memory_space<vmem>>, vector<1x512xf32>
      %39 = vector.broadcast %38 : vector<1x512xf32> to vector<8x512xf32>
      %40 = arith.mulf %37, %39 : vector<8x512xf32>
      %c0_29 = arith.constant 0 : index
      %c0_30 = arith.constant 0 : index
      %41 = vector.load %arg10[%c0_29, %c0_30] : memref<1x512xf32, #tpu.memory_space<vmem>>, vector<1x512xf32>
      %42 = vector.broadcast %41 : vector<1x512xf32> to vector<8x512xf32>
      %43 = arith.addf %40, %42 : vector<8x512xf32>
      %cst_31 = arith.constant 0.000000e+00 : f32
      %44 = vector.broadcast %cst_31 : f32 to vector<8x512xf32>
      %45 = arith.maximumf %43, %44 : vector<8x512xf32>
      %46 = arith.truncf %45 : vector<8x512xf32> to vector<8x512xbf16>
      %c0_32 = arith.constant 0 : index
      %c0_33 = arith.constant 0 : index
      %47 = vector.load %arg11[%c0_32, %c0_33] : memref<512x128xbf16, #tpu.memory_space<vmem>>, vector<512x128xbf16>
      %cst_34 = arith.constant dense<0.000000e+00> : vector<8x128xf32>
      %48 = tpu.matmul %46, %47, %cst_34 {dimension_numbers = #tpu.dot_dimension_numbers<[1], [0], [0], [1], [0, 0, 1, 1], [], []>} : vector<8x512xbf16>, vector<512x128xbf16>, vector<8x128xf32> -> vector<8x128xf32>
      %c0_35 = arith.constant 0 : index
      %c0_36 = arith.constant 0 : index
      %49 = vector.load %arg12[%c0_35, %c0_36] : memref<1x128xf32, #tpu.memory_space<vmem>>, vector<1x128xf32>
      %50 = vector.broadcast %49 : vector<1x128xf32> to vector<8x128xf32>
      %51 = arith.addf %48, %50 : vector<8x128xf32>
      %52 = arith.negf %51 : vector<8x128xf32>
      %53 = math.exp %52 : vector<8x128xf32>
      %cst_37 = arith.constant 1.000000e+00 : f32
      %54 = vector.broadcast %cst_37 : f32 to vector<8x128xf32>
      %55 = arith.addf %54, %53 : vector<8x128xf32>
      %56 = arith.divf %54, %55 : vector<8x128xf32>
      %c0_38 = arith.constant 0 : index
      %c0_39 = arith.constant 0 : index
      %57 = vector.load %arg13[%c0_38, %c0_39] : memref<8x128xf32, #tpu.memory_space<vmem>>, vector<8x128xf32>
      tpu.vector_store %arg13[%c0_38, %c0_39], %56 {strides = array<i32>} : memref<8x128xf32, #tpu.memory_space<vmem>>, vector<8x128xf32>,
    } else {
    }
    return
  }
  func.func @transform_0(%arg0: i32) -> (i32, i32) {
    %c0_i32 = arith.constant 0 : i32
    %c0_i32_0 = arith.constant 0 : i32
    %c0_i32_1 = arith.constant 0 : i32
    return %c0_i32, %c0_i32_0 : i32, i32
  }
  func.func @transform_1(%arg0: i32) -> (i32, i32) {
    %c0_i32 = arith.constant 0 : i32
    %c0_i32_0 = arith.constant 0 : i32
    return %c0_i32, %arg0 : i32, i32
  }
  func.func @transform_2(%arg0: i32) -> (i32, i32) {
    %c0_i32 = arith.constant 0 : i32
    %c0_i32_0 = arith.constant 0 : i32
    return %c0_i32, %arg0 : i32, i32
  }
  func.func @transform_3(%arg0: i32) -> (i32, i32) {
    %c0_i32 = arith.constant 0 : i32
    %c0_i32_0 = arith.constant 0 : i32
    return %c0_i32, %arg0 : i32, i32
  }
  func.func @transform_4(%arg0: i32) -> (i32, i32) {
    %c0_i32 = arith.constant 0 : i32
    %c0_i32_0 = arith.constant 0 : i32
    return %arg0, %c0_i32 : i32, i32
  }
  func.func @transform_5(%arg0: i32) -> (i32, i32) {
    %c0_i32 = arith.constant 0 : i32
    %c0_i32_0 = arith.constant 0 : i32
    %c0_i32_1 = arith.constant 0 : i32
    return %c0_i32, %c0_i32_0 : i32, i32
  }
  func.func @transform_6(%arg0: i32) -> (i32, i32) {
    %c0_i32 = arith.constant 0 : i32
    %c0_i32_0 = arith.constant 0 : i32
    %c0_i32_1 = arith.constant 0 : i32
    return %c0_i32, %c0_i32_0 : i32, i32
  }
  func.func @transform_7(%arg0: i32) -> (i32, i32) {
    %c0_i32 = arith.constant 0 : i32
    %c0_i32_0 = arith.constant 0 : i32
    %c0_i32_1 = arith.constant 0 : i32
    return %c0_i32, %c0_i32_0 : i32, i32
  }
  func.func @transform_8(%arg0: i32) -> (i32, i32) {
    %c0_i32 = arith.constant 0 : i32
    %c0_i32_0 = arith.constant 0 : i32
    %c0_i32_1 = arith.constant 0 : i32
    return %c0_i32, %c0_i32_0 : i32, i32
  }
  func.func @transform_9(%arg0: i32) -> (i32, i32) {
    %c0_i32 = arith.constant 0 : i32
    %c0_i32_0 = arith.constant 0 : i32
    %c0_i32_1 = arith.constant 0 : i32
    return %c0_i32, %c0_i32_0 : i32, i32
  }
  func.func @transform_10(%arg0: i32) -> (i32, i32) {
    %c0_i32 = arith.constant 0 : i32
    %c0_i32_0 = arith.constant 0 : i32
    %c0_i32_1 = arith.constant 0 : i32
    return %c0_i32, %c0_i32_0 : i32, i32
  }
  func.func @transform_11(%arg0: i32) -> (i32, i32) {
    %c0_i32 = arith.constant 0 : i32
    %c0_i32_0 = arith.constant 0 : i32
    %c0_i32_1 = arith.constant 0 : i32
    return %c0_i32, %c0_i32_0 : i32, i32
  }
  func.func @transform_12(%arg0: i32) -> (i32, i32) {
    %c0_i32 = arith.constant 0 : i32
    %c0_i32_0 = arith.constant 0 : i32
    %c0_i32_1 = arith.constant 0 : i32
    return %c0_i32, %c0_i32_0 : i32, i32
  }
}

</mosaic_0001>

<llo_original>
// kernel: net_forward.1
$region0: #{net_forward.1}
  #allocation0 [shape = 'u32[]', space=smem, size = 0x4, offset = 0x4, fixed_abs, tag = 'smem constant byte address 0x4 - core index']
  #allocation1 [shape = 'u32[144,128]{1,0:T(1,128)}', space=vmem, size = 0x12000, scoped, tag = 'internal scratch']
  #allocation2 [shape = 'f32[8,1024]{1,0:T(8,128)}', space=vmem, size = 0x8000, scoped, tag = 'scratch operand']
  %s0 = inlined_call_operand.vmem [shape: bf16[8,6144], index: 0, kind: input, shape index: {}]
  %s1 = inlined_call_operand.hbm [shape: s8[6144,2048], index: 1, kind: input, shape index: {}]
  %s2 = inlined_call_operand.hbm [shape: f32[1,2048], index: 2, kind: input, shape index: {}]
  %s3 = inlined_call_operand.hbm [shape: f32[1,2048], index: 3, kind: input, shape index: {}]
  %s4 = inlined_call_operand.hbm [shape: s8[2048,1024], index: 4, kind: input, shape index: {}]
  %s5 = inlined_call_operand.hbm [shape: f32[1,1024], index: 5, kind: input, shape index: {}]
  %s6 = inlined_call_operand.hbm [shape: f32[1,1024], index: 6, kind: input, shape index: {}]
  %s7 = inlined_call_operand.hbm [shape: s8[1024,512], index: 7, kind: input, shape index: {}]
  %s8 = inlined_call_operand.hbm [shape: f32[1,512], index: 8, kind: input, shape index: {}]
  %s9 = inlined_call_operand.hbm [shape: f32[1,512], index: 9, kind: input, shape index: {}]
  %s10 = inlined_call_operand.hbm [shape: bf16[512,128], index: 10, kind: input, shape index: {}]
  %s11 = inlined_call_operand.hbm [shape: f32[1,128], index: 11, kind: input, shape index: {}]
  %s12 = inlined_call_operand.vmem [shape: f32[8,128], index: 12, kind: output, shape index: {}]
  %s13 = sld [smem:[#allocation0]]
  $region133: #{net_forward.1} parent=0
    _
  %s15 = ssub.s32 1, %s13
  %s16 = scalar_select 0, %s15, %s13
  $region1: #{net_forward.1} parent=0
    #allocation3 [shape = 'u8[6291456]{0}', space=vmem, size = 0x600000, scoped, tag = 'input window, operand 1']
    #allocation4 [shape = 's32[2]{0}', space=sflag, size = 0x8, scoped, tag = 'scoped memory for net_forward.1']
    #allocation5 [shape = 'u8[4096]{0}', space=vmem, size = 0x1000, scoped, tag = 'input window, operand 2']
    #allocation6 [shape = 's32[2]{0}', space=sflag, size = 0x8, scoped, tag = 'scoped memory for net_forward.1']
    #allocation7 [shape = 'u8[4096]{0}', space=vmem, size = 0x1000, scoped, tag = 'input window, operand 3']
    #allocation8 [shape = 'u8[1048576]{0}', space=vmem, size = 0x100000, scoped, tag = 'input window, operand 4']
    #allocation9 [shape = 's32[2]{0}', space=sflag, size = 0x8, scoped, tag = 'scoped memory for net_forward.1']
    #allocation10 [shape = 'u8[4096]{0}', space=vmem, size = 0x1000, scoped, tag = 'input window, operand 5, single buffered']
    #allocation11 [shape = 'u8[4096]{0}', space=vmem, size = 0x1000, scoped, tag = 'input window, operand 6, single buffered']
    #allocation12 [shape = 's32[1]{0}', space=sflag, size = 0x4, scoped, tag = 'scoped memory for net_forward.1']
    #allocation13 [shape = 'u8[524288]{0}', space=vmem, size = 0x80000, scoped, tag = 'input window, operand 7, single buffered']
    #allocation14 [shape = 'u8[2048]{0}', space=vmem, size = 0x800, scoped, tag = 'input window, operand 8, single buffered']
    #allocation15 [shape = 's32[1]{0}', space=sflag, size = 0x4, scoped, tag = 'scoped memory for net_forward.1']
    #allocation16 [shape = 'u8[2048]{0}', space=vmem, size = 0x800, scoped, tag = 'input window, operand 9, single buffered']
    #allocation17 [shape = 'u8[131072]{0}', space=vmem, size = 0x20000, scoped, tag = 'input window, operand 10, single buffered']
    #allocation18 [shape = 's32[1]{0}', space=sflag, size = 0x4, scoped, tag = 'scoped memory for net_forward.1']
    #allocation19 [shape = 'u8[512]{0}', space=vmem, size = 0x400, scoped, tag = 'input window, operand 11, single buffered']
    %17 = vsyncpa [#allocation4], 0
    %s18 = scalar_lea.sflag [#allocation4], 1
    %19 = vsyncpa %s18, 0
    %20 = vsyncpa [#allocation6], 0
    %s21 = scalar_lea.sflag [#allocation6], 1
    %22 = vsyncpa %s21, 0
    %23 = vsyncpa [#allocation9], 0
    %s24 = scalar_lea.sflag [#allocation9], 1
    %25 = vsyncpa %s24, 0
    %26 = vsyncpa [#allocation12], 0
    %27 = vsyncpa [#allocation15], 0
    %28 = vsyncpa [#allocation18], 0
    loop: start=0, step=1, limit=6
    $region2: #{net_forward.1} parent=1 // loop_pre_header
      _
    $region3: #{net_forward.1} parent=1 // loop_header
      %s30 = sphi 0, %s34
      %p31 = scmp.ge.s32.totalorder %s30, 6
      %s38 = sphi 0, %s38
      %s40 = sphi 0, %s38
      %s41 = sphi 0, %s40
      %s55 = sphi 0, %s41
      %s61 = sphi 0, %s63
      %s64 = sphi 0, %s61
      %s65 = sphi 0, %s64
      %s81 = sphi 0, %s65
      %s87 = sphi 0, %s89
      %s90 = sphi 0, %s87
      %s91 = sphi 0, %s90
      %s107 = sphi 0, %s91
      %s113 = sphi 0, %s115
      %s116 = sphi 0, %s113
      %s117 = sphi 0, %s116
      %s133 = sphi 0, %s117
      %s139 = sphi 0, %s141
      %s142 = sphi 0, %s139
      %s143 = sphi 0, %s142
      %s159 = sphi 0, %s143
      %s163 = sphi 0, %s163
      %s165 = sphi 0, %s163
      %s166 = sphi 0, %s165
      %s180 = sphi 0, %s166
      %s184 = sphi 0, %s184
      %s186 = sphi 0, %s184
      %s187 = sphi 0, %s186
      %s201 = sphi 0, %s187
      %s205 = sphi 0, %s205
      %s207 = sphi 0, %s205
      %s208 = sphi 0, %s207
      %s222 = sphi 0, %s208
      %s226 = sphi 0, %s226
      %s228 = sphi 0, %s226
      %s229 = sphi 0, %s228
      %s243 = sphi 0, %s229
      %s247 = sphi 0, %s247
      %s249 = sphi 0, %s247
      %s250 = sphi 0, %s249
      %s264 = sphi 0, %s250
      %s268 = sphi 0, %s268
      %s270 = sphi 0, %s268
      %s271 = sphi 0, %s270
      %s285 = sphi 0, %s271
      %s289 = sphi 0, %s289
      %s291 = sphi 0, %s289
      %s292 = sphi 0, %s291
      %s306 = sphi 0, %s292
      %s310 = sphi 0, %s310
      %s312 = sphi 0, %s310
      %s313 = sphi 0, %s312
      %s327 = sphi 0, %s313
    $region4: #{net_forward.1} parent=1 // loop_header_branch
      %33 = sbr.rel (%p31) target = $region8
    $region5: #{net_forward.1} parent=1 // loop_body
      %s35 = ssub.s32 %s30, 1
      %s36 = ssub.s32 %s30, 2
      %s37 = sadd.s32 %s30, 1
      %s39 = sadd.s32 %s38, 1
      %p42 = scmp.eq.s32.totalorder %s30, 3
      %p43 = scmp.ne.s32.totalorder %s38, %s40
      %p44 = scmp.eq.s32.totalorder %s30, 0
      %p45 = por %p43, %p44
      %p46 = scmp.ne.s32.totalorder %s38, %s40
      %p47 = scmp.eq.s32.totalorder %s35, 3
      %p48 = por %p46, %p47
      %p49 = scmp.ne.s32.totalorder %s40, %s41
      %p50 = scmp.eq.s32.totalorder %s35, 0
      %p51 = por %p49, %p50
      %p52 = scmp.ne.s32.totalorder %s40, %s41
      %p53 = scmp.eq.s32.totalorder %s36, 3
      %p54 = por %p52, %p53
      %p56 = scmp.ne.s32.totalorder %s41, %s55
      %p57 = scmp.eq.s32.totalorder %s36, 0
      %p58 = por %p56, %p57
      %s59 = ssub.s32 %s30, %s37
      %p60 = scmp.eq.s32.totalorder %s59, 0
      %s62 = sadd.s32 %s61, 1
      %s63 = scalar_select %p60, %s61, %s62
      %p66 = pneg %p60
      %p67 = scmp.eq.s32.totalorder %s30, 3
      %p68 = por %p66, %p67
      %p69 = scmp.ne.s32.totalorder %s61, %s64
      %p70 = scmp.eq.s32.totalorder %s30, 0
      %p71 = por %p69, %p70
      %p72 = scmp.ne.s32.totalorder %s61, %s64
      %p73 = scmp.eq.s32.totalorder %s35, 3
      %p74 = por %p72, %p73
      %p75 = scmp.ne.s32.totalorder %s64, %s65
      %p76 = scmp.eq.s32.totalorder %s35, 0
      %p77 = por %p75, %p76
      %p78 = scmp.ne.s32.totalorder %s64, %s65
      %p79 = scmp.eq.s32.totalorder %s36, 3
      %p80 = por %p78, %p79
      %p82 = scmp.ne.s32.totalorder %s65, %s81
      %p83 = scmp.eq.s32.totalorder %s36, 0
      %p84 = por %p82, %p83
      %s85 = ssub.s32 %s30, %s37
      %p86 = scmp.eq.s32.totalorder %s85, 0
      %s88 = sadd.s32 %s87, 1
      %s89 = scalar_select %p86, %s87, %s88
      %p92 = pneg %p86
      %p93 = scmp.eq.s32.totalorder %s30, 3
      %p94 = por %p92, %p93
      %p95 = scmp.ne.s32.totalorder %s87, %s90
      %p96 = scmp.eq.s32.totalorder %s30, 0
      %p97 = por %p95, %p96
      %p98 = scmp.ne.s32.totalorder %s87, %s90
      %p99 = scmp.eq.s32.totalorder %s35, 3
      %p100 = por %p98, %p99
      %p101 = scmp.ne.s32.totalorder %s90, %s91
      %p102 = scmp.eq.s32.totalorder %s35, 0
      %p103 = por %p101, %p102
      %p104 = scmp.ne.s32.totalorder %s90, %s91
      %p105 = scmp.eq.s32.totalorder %s36, 3
      %p106 = por %p104, %p105
      %p108 = scmp.ne.s32.totalorder %s91, %s107
      %p109 = scmp.eq.s32.totalorder %s36, 0
      %p110 = por %p108, %p109
      %s111 = ssub.s32 %s30, %s37
      %p112 = scmp.eq.s32.totalorder %s111, 0
      %s114 = sadd.s32 %s113, 1
      %s115 = scalar_select %p112, %s113, %s114
      %p118 = pneg %p112
      %p119 = scmp.eq.s32.totalorder %s30, 3
      %p120 = por %p118, %p119
      %p121 = scmp.ne.s32.totalorder %s113, %s116
      %p122 = scmp.eq.s32.totalorder %s30, 0
      %p123 = por %p121, %p122
      %p124 = scmp.ne.s32.totalorder %s113, %s116
      %p125 = scmp.eq.s32.totalorder %s35, 3
      %p126 = por %p124, %p125
      %p127 = scmp.ne.s32.totalorder %s116, %s117
      %p128 = scmp.eq.s32.totalorder %s35, 0
      %p129 = por %p127, %p128
      %p130 = scmp.ne.s32.totalorder %s116, %s117
      %p131 = scmp.eq.s32.totalorder %s36, 3
      %p132 = por %p130, %p131
      %p134 = scmp.ne.s32.totalorder %s117, %s133
      %p135 = scmp.eq.s32.totalorder %s36, 0
      %p136 = por %p134, %p135
      %s137 = ssub.s32 %s30, %s37
      %p138 = scmp.eq.s32.totalorder %s137, 0
      %s140 = sadd.s32 %s139, 1
      %s141 = scalar_select %p138, %s139, %s140
      %p144 = pneg %p138
      %p145 = scmp.eq.s32.totalorder %s30, 3
      %p146 = por %p144, %p145
      %p147 = scmp.ne.s32.totalorder %s139, %s142
      %p148 = scmp.eq.s32.totalorder %s30, 0
      %p149 = por %p147, %p148
      %p150 = scmp.ne.s32.totalorder %s139, %s142
      %p151 = scmp.eq.s32.totalorder %s35, 3
      %p152 = por %p150, %p151
      %p153 = scmp.ne.s32.totalorder %s142, %s143
      %p154 = scmp.eq.s32.totalorder %s35, 0
      %p155 = por %p153, %p154
      %p156 = scmp.ne.s32.totalorder %s142, %s143
      %p157 = scmp.eq.s32.totalorder %s36, 3
      %p158 = por %p156, %p157
      %p160 = scmp.ne.s32.totalorder %s143, %s159
      %p161 = scmp.eq.s32.totalorder %s36, 0
      %p162 = por %p160, %p161
      %s164 = sadd.s32 %s163, 1
      %p167 = scmp.eq.s32.totalorder %s30, 3
      %p168 = scmp.ne.s32.totalorder %s163, %s165
      %p169 = scmp.eq.s32.totalorder %s30, 0
      %p170 = por %p168, %p169
      %p171 = scmp.ne.s32.totalorder %s163, %s165
      %p172 = scmp.eq.s32.totalorder %s35, 3
      %p173 = por %p171, %p172
      %p174 = scmp.ne.s32.totalorder %s165, %s166
      %p175 = scmp.eq.s32.totalorder %s35, 0
      %p176 = por %p174, %p175
      %p177 = scmp.ne.s32.totalorder %s165, %s166
      %p178 = scmp.eq.s32.totalorder %s36, 3
      %p179 = por %p177, %p178
      %p181 = scmp.ne.s32.totalorder %s166, %s180
      %p182 = scmp.eq.s32.totalorder %s36, 0
      %p183 = por %p181, %p182
      %s185 = sadd.s32 %s184, 1
      %p188 = scmp.eq.s32.totalorder %s30, 3
      %p189 = scmp.ne.s32.totalorder %s184, %s186
      %p190 = scmp.eq.s32.totalorder %s30, 0
      %p191 = por %p189, %p190
      %p192 = scmp.ne.s32.totalorder %s184, %s186
      %p193 = scmp.eq.s32.totalorder %s35, 3
      %p194 = por %p192, %p193
      %p195 = scmp.ne.s32.totalorder %s186, %s187
      %p196 = scmp.eq.s32.totalorder %s35, 0
      %p197 = por %p195, %p196
      %p198 = scmp.ne.s32.totalorder %s186, %s187
      %p199 = scmp.eq.s32.totalorder %s36, 3
      %p200 = por %p198, %p199
      %p202 = scmp.ne.s32.totalorder %s187, %s201
      %p203 = scmp.eq.s32.totalorder %s36, 0
      %p204 = por %p202, %p203
      %s206 = sadd.s32 %s205, 1
      %p209 = scmp.eq.s32.totalorder %s30, 3
      %p210 = scmp.ne.s32.totalorder %s205, %s207
      %p211 = scmp.eq.s32.totalorder %s30, 0
      %p212 = por %p210, %p211
      %p213 = scmp.ne.s32.totalorder %s205, %s207
      %p214 = scmp.eq.s32.totalorder %s35, 3
      %p215 = por %p213, %p214
      %p216 = scmp.ne.s32.totalorder %s207, %s208
      %p217 = scmp.eq.s32.totalorder %s35, 0
      %p218 = por %p216, %p217
      %p219 = scmp.ne.s32.totalorder %s207, %s208
      %p220 = scmp.eq.s32.totalorder %s36, 3
      %p221 = por %p219, %p220
      %p223 = scmp.ne.s32.totalorder %s208, %s222
      %p224 = scmp.eq.s32.totalorder %s36, 0
      %p225 = por %p223, %p224
      %s227 = sadd.s32 %s226, 1
      %p230 = scmp.eq.s32.totalorder %s30, 3
      %p231 = scmp.ne.s32.totalorder %s226, %s228
      %p232 = scmp.eq.s32.totalorder %s30, 0
      %p233 = por %p231, %p232
      %p234 = scmp.ne.s32.totalorder %s226, %s228
      %p235 = scmp.eq.s32.totalorder %s35, 3
      %p236 = por %p234, %p235
      %p237 = scmp.ne.s32.totalorder %s228, %s229
      %p238 = scmp.eq.s32.totalorder %s35, 0
      %p239 = por %p237, %p238
      %p240 = scmp.ne.s32.totalorder %s228, %s229
      %p241 = scmp.eq.s32.totalorder %s36, 3
      %p242 = por %p240, %p241
      %p244 = scmp.ne.s32.totalorder %s229, %s243
      %p245 = scmp.eq.s32.totalorder %s36, 0
      %p246 = por %p244, %p245
      %s248 = sadd.s32 %s247, 1
      %p251 = scmp.eq.s32.totalorder %s30, 3
      %p252 = scmp.ne.s32.totalorder %s247, %s249
      %p253 = scmp.eq.s32.totalorder %s30, 0
      %p254 = por %p252, %p253
      %p255 = scmp.ne.s32.totalorder %s247, %s249
      %p256 = scmp.eq.s32.totalorder %s35, 3
      %p257 = por %p255, %p256
      %p258 = scmp.ne.s32.totalorder %s249, %s250
      %p259 = scmp.eq.s32.totalorder %s35, 0
      %p260 = por %p258, %p259
      %p261 = scmp.ne.s32.totalorder %s249, %s250
      %p262 = scmp.eq.s32.totalorder %s36, 3
      %p263 = por %p261, %p262
      %p265 = scmp.ne.s32.totalorder %s250, %s264
      %p266 = scmp.eq.s32.totalorder %s36, 0
      %p267 = por %p265, %p266
      %s269 = sadd.s32 %s268, 1
      %p272 = scmp.eq.s32.totalorder %s30, 3
      %p273 = scmp.ne.s32.totalorder %s268, %s270
      %p274 = scmp.eq.s32.totalorder %s30, 0
      %p275 = por %p273, %p274
      %p276 = scmp.ne.s32.totalorder %s268, %s270
      %p277 = scmp.eq.s32.totalorder %s35, 3
      %p278 = por %p276, %p277
      %p279 = scmp.ne.s32.totalorder %s270, %s271
      %p280 = scmp.eq.s32.totalorder %s35, 0
      %p281 = por %p279, %p280
      %p282 = scmp.ne.s32.totalorder %s270, %s271
      %p283 = scmp.eq.s32.totalorder %s36, 3
      %p284 = por %p282, %p283
      %p286 = scmp.ne.s32.totalorder %s271, %s285
      %p287 = scmp.eq.s32.totalorder %s36, 0
      %p288 = por %p286, %p287
      %s290 = sadd.s32 %s289, 1
      %p293 = scmp.eq.s32.totalorder %s30, 3
      %p294 = scmp.ne.s32.totalorder %s289, %s291
      %p295 = scmp.eq.s32.totalorder %s30, 0
      %p296 = por %p294, %p295
      %p297 = scmp.ne.s32.totalorder %s289, %s291
      %p298 = scmp.eq.s32.totalorder %s35, 3
      %p299 = por %p297, %p298
      %p300 = scmp.ne.s32.totalorder %s291, %s292
      %p301 = scmp.eq.s32.totalorder %s35, 0
      %p302 = por %p300, %p301
      %p303 = scmp.ne.s32.totalorder %s291, %s292
      %p304 = scmp.eq.s32.totalorder %s36, 3
      %p305 = por %p303, %p304
      %p307 = scmp.ne.s32.totalorder %s292, %s306
      %p308 = scmp.eq.s32.totalorder %s36, 0
      %p309 = por %p307, %p308
      %s311 = sadd.s32 %s310, 1
      %p314 = scmp.eq.s32.totalorder %s30, 3
      %p315 = scmp.ne.s32.totalorder %s310, %s312
      %p316 = scmp.eq.s32.totalorder %s30, 0
      %p317 = por %p315, %p316
      %p318 = scmp.ne.s32.totalorder %s310, %s312
      %p319 = scmp.eq.s32.totalorder %s35, 3
      %p320 = por %p318, %p319
      %p321 = scmp.ne.s32.totalorder %s312, %s313
      %p322 = scmp.eq.s32.totalorder %s35, 0
      %p323 = por %p321, %p322
      %p324 = scmp.ne.s32.totalorder %s312, %s313
      %p325 = scmp.eq.s32.totalorder %s36, 3
      %p326 = por %p324, %p325
      %p328 = scmp.ne.s32.totalorder %s313, %s327
      %p329 = scmp.eq.s32.totalorder %s36, 0
      %p330 = por %p328, %p329
      %p331 = scmp.le.s32.totalorder 1, %s30
      %p332 = scmp.lt.s32.totalorder %s30, 5
      %p333 = pnand %p331, %p332
      %p334 = pneg %p333
      // Predicated region
      $region9: #{net_forward.1} parent=5 // pred_check
        _
      $region10: #{net_forward.1} parent=5 // pred_check_branch
        %336 = sbr.rel (%p333) target = $region12
      $region11: #{net_forward.1} parent=5 // pred_region
        %s337 = ssub.s32 %s30, 1
        // Predicated region
        $region13: #{net_forward.1} parent=11 // pred_check
          %p338 = pneg %p51
        $region14: #{net_forward.1} parent=11 // pred_check_branch
          %340 = sbr.rel (%p338) target = $region16
        $region15: #{net_forward.1} parent=11 // pred_region
          _
        $region16: #{net_forward.1} parent=11 // pred_fallthru
          _
        // Predicated region
        $region17: #{net_forward.1} parent=11 // pred_check
          %p341 = pneg %p176
        $region18: #{net_forward.1} parent=11 // pred_check_branch
          %343 = sbr.rel (%p341) target = $region20
        $region19: #{net_forward.1} parent=11 // pred_region
          %s345 = ssub.s32 128, 128
          %346 = vsyncadd [#allocation9], %s345
          %s348 = sshll.u32 [#allocation10], 4
          %s349 = int_to_ptr.vmem [resolvable:$true] %s348
          %351 = dma.hbm_to_vmem [thread:$0]  %s5, 128, %s349, [#allocation9]
        $region20: #{net_forward.1} parent=11 // pred_fallthru
          _
        // Predicated region
        $region21: #{net_forward.1} parent=11 // pred_check
          %p352 = pneg %p197
        $region22: #{net_forward.1} parent=11 // pred_check_branch
          %354 = sbr.rel (%p352) target = $region24
        $region23: #{net_forward.1} parent=11 // pred_region
          %s356 = ssub.s32 128, 128
          %357 = vsyncadd [#allocation12], %s356
          %s359 = sshll.u32 [#allocation11], 4
          %s360 = int_to_ptr.vmem [resolvable:$true] %s359
          %362 = dma.hbm_to_vmem [thread:$0]  %s6, 128, %s360, [#allocation12]
        $region24: #{net_forward.1} parent=11 // pred_fallthru
          _
        // Predicated region
        $region25: #{net_forward.1} parent=11 // pred_check
          %p363 = pneg %p218
        $region26: #{net_forward.1} parent=11 // pred_check_branch
          %365 = sbr.rel (%p363) target = $region28
        $region27: #{net_forward.1} parent=11 // pred_region
          %s367 = ssub.s32 16384, 16384
          %368 = vsyncadd [#allocation12], %s367
          %s369 = sshll.u32 [#allocation13], 4
          %s370 = int_to_ptr.vmem [resolvable:$true] %s369
          %375 = dma.hbm_to_vmem [thread:$0]  %s7, 16384, %s370, [#allocation12], 512, 512, 32
        $region28: #{net_forward.1} parent=11 // pred_fallthru
          _
        // Predicated region
        $region29: #{net_forward.1} parent=11 // pred_check
          %p376 = pneg %p239
        $region30: #{net_forward.1} parent=11 // pred_check_branch
          %378 = sbr.rel (%p376) target = $region32
        $region31: #{net_forward.1} parent=11 // pred_region
          %s380 = ssub.s32 64, 64
          %381 = vsyncadd [#allocation15], %s380
          %s383 = sshll.u32 [#allocation14], 4
          %s384 = int_to_ptr.vmem [resolvable:$true] %s383
          %386 = dma.hbm_to_vmem [thread:$0]  %s8, 64, %s384, [#allocation15]
        $region32: #{net_forward.1} parent=11 // pred_fallthru
          _
        // Predicated region
        $region33: #{net_forward.1} parent=11 // pred_check
          %p387 = pneg %p260
        $region34: #{net_forward.1} parent=11 // pred_check_branch
          %389 = sbr.rel (%p387) target = $region36
        $region35: #{net_forward.1} parent=11 // pred_region
          %s391 = ssub.s32 64, 64
          %392 = vsyncadd [#allocation15], %s391
          %s394 = sshll.u32 [#allocation16], 4
          %s395 = int_to_ptr.vmem [resolvable:$true] %s394
          %397 = dma.hbm_to_vmem [thread:$0]  %s9, 64, %s395, [#allocation15]
        $region36: #{net_forward.1} parent=11 // pred_fallthru
          _
        // Predicated region
        $region37: #{net_forward.1} parent=11 // pred_check
          %p398 = pneg %p281
        $region38: #{net_forward.1} parent=11 // pred_check_branch
          %400 = sbr.rel (%p398) target = $region40
        $region39: #{net_forward.1} parent=11 // pred_region
          %s402 = ssub.s32 4096, 4096
          %403 = vsyncadd [#allocation18], %s402
          %s404 = sshll.u32 [#allocation17], 4
          %s405 = int_to_ptr.vmem [resolvable:$true] %s404
          %410 = dma.hbm_to_vmem [thread:$0]  %s10, 4096, %s405, [#allocation18], 64, 64, 4
        $region40: #{net_forward.1} parent=11 // pred_fallthru
          _
        // Predicated region
        $region41: #{net_forward.1} parent=11 // pred_check
          %p411 = pneg %p302
        $region42: #{net_forward.1} parent=11 // pred_check_branch
          %413 = sbr.rel (%p411) target = $region44
        $region43: #{net_forward.1} parent=11 // pred_region
          %s415 = ssub.s32 16, 16
          %416 = vsyncadd [#allocation18], %s415
          %s418 = sshll.u32 [#allocation19], 4
          %s419 = int_to_ptr.vmem [resolvable:$true] %s418
          %421 = dma.hbm_to_vmem [thread:$0]  %s11, 16, %s419, [#allocation18]
        $region44: #{net_forward.1} parent=11 // pred_fallthru
          _
      $region12: #{net_forward.1} parent=5 // pred_fallthru
        _
      %p422 = scmp.lt.s32.totalorder %s30, 4
      // Predicated region
      $region45: #{net_forward.1} parent=5 // pred_check
        %p423 = pneg %p422
      $region46: #{net_forward.1} parent=5 // pred_check_branch
        %425 = sbr.rel (%p423) target = $region48
      $region47: #{net_forward.1} parent=5 // pred_region
        // Predicated region
        $region49: #{net_forward.1} parent=47 // pred_check
          %p426 = pneg %p71
        $region50: #{net_forward.1} parent=47 // pred_check_branch
          %428 = sbr.rel (%p426) target = $region52
        $region51: #{net_forward.1} parent=47 // pred_region
          %s429 = sand.u32 %s61, 1
          %s430 = scalar_lea.sflag [#allocation4], %s429
          %s431 = sand.u32 %s61, 1
          %s432 = smul.addr %s431, 6144
          %s433 = scalar_lea.vmem [#allocation3], %s432
          %s434 = smul.u32 4, %s30
          %s436 = ssub.s32 98304, 98304
          %437 = vsyncadd %s430, %s436
          %s438 = smul.addr %s434, 128
          %s439 = scalar_lea.hbm %s1, %s438
          %s440 = sshll.u32 %s433, 4
          %s441 = int_to_ptr.vmem [resolvable:$true] %s440
          %446 = dma.hbm_to_vmem [thread:$0]  %s439, 98304, %s441, %s430, 2048, 512, 32
        $region52: #{net_forward.1} parent=47 // pred_fallthru
          _
        // Predicated region
        $region53: #{net_forward.1} parent=47 // pred_check
          %p447 = pneg %p97
        $region54: #{net_forward.1} parent=47 // pred_check_branch
          %449 = sbr.rel (%p447) target = $region56
        $region55: #{net_forward.1} parent=47 // pred_region
          %s450 = sand.u32 %s30, 1
          %s451 = scalar_lea.sflag [#allocation6], %s450
          %s452 = sand.u32 %s87, 1
          %s453 = smul.addr %s452, 4
          %s454 = scalar_lea.vmem [#allocation5], %s453
          %s455 = smul.u32 4, %s30
          %s457 = ssub.s32 64, 64
          %458 = vsyncadd %s451, %s457
          %s459 = smul.addr %s455, 16
          %s460 = scalar_lea.hbm %s2, %s459
          %s462 = sshll.u32 %s454, 4
          %s463 = int_to_ptr.vmem [resolvable:$true] %s462
          %465 = dma.hbm_to_vmem [thread:$0]  %s460, 64, %s463, %s451
        $region56: #{net_forward.1} parent=47 // pred_fallthru
          _
        // Predicated region
        $region57: #{net_forward.1} parent=47 // pred_check
          %p466 = pneg %p123
        $region58: #{net_forward.1} parent=47 // pred_check_branch
          %468 = sbr.rel (%p466) target = $region60
        $region59: #{net_forward.1} parent=47 // pred_region
          %s469 = sand.u32 %s30, 1
          %s470 = scalar_lea.sflag [#allocation6], %s469
          %s471 = sand.u32 %s113, 1
          %s472 = smul.addr %s471, 4
          %s473 = scalar_lea.vmem [#allocation7], %s472
          %s474 = smul.u32 4, %s30
          %s476 = ssub.s32 64, 64
          %477 = vsyncadd %s470, %s476
          %s478 = smul.addr %s474, 16
          %s479 = scalar_lea.hbm %s3, %s478
          %s481 = sshll.u32 %s473, 4
          %s482 = int_to_ptr.vmem [resolvable:$true] %s481
          %484 = dma.hbm_to_vmem [thread:$0]  %s479, 64, %s482, %s470
        $region60: #{net_forward.1} parent=47 // pred_fallthru
          _
        // Predicated region
        $region61: #{net_forward.1} parent=47 // pred_check
          %p485 = pneg %p149
        $region62: #{net_forward.1} parent=47 // pred_check_branch
          %487 = sbr.rel (%p485) target = $region64
        $region63: #{net_forward.1} parent=47 // pred_region
          %s488 = sand.u32 %s30, 1
          %s489 = scalar_lea.sflag [#allocation9], %s488
          %s490 = sand.u32 %s139, 1
          %s491 = smul.addr %s490, 1024
          %s492 = scalar_lea.vmem [#allocation8], %s491
          %s493 = smul.u32 16, %s30
          %s495 = ssub.s32 16384, 16384
          %496 = vsyncadd %s489, %s495
          %s497 = smul.addr %s493, 8
          %s498 = smul.addr %s497, 128
          %s499 = scalar_lea.hbm %s4, %s498
          %s500 = sshll.u32 %s492, 4
          %s501 = int_to_ptr.vmem [resolvable:$true] %s500
          %506 = dma.hbm_to_vmem [thread:$0]  %s499, 16384, %s501, %s489, 1024, 1024, 64
        $region64: #{net_forward.1} parent=47 // pred_fallthru
          _
      $region48: #{net_forward.1} parent=5 // pred_fallthru
        _
      %p507 = scmp.le.s32.totalorder 1, %s30
      %p508 = scmp.lt.s32.totalorder %s30, 5
      %p509 = pnand %p507, %p508
      %p510 = pneg %p509
      // Predicated region
      $region65: #{net_forward.1} parent=5 // pred_check
        _
      $region66: #{net_forward.1} parent=5 // pred_check_branch
        %512 = sbr.rel (%p509) target = $region68
      $region67: #{net_forward.1} parent=5 // pred_region
        %s513 = ssub.s32 %s30, 1
        %s514 = sand.u32 %s64, 1
        %s515 = scalar_lea.sflag [#allocation4], %s514
        %s516 = sand.u32 %s64, 1
        %s517 = smul.addr %s516, 6144
        %s518 = scalar_lea.vmem [#allocation3], %s517
        // Predicated region
        $region69: #{net_forward.1} parent=67 // pred_check
          %p519 = pneg %p77
        $region70: #{net_forward.1} parent=67 // pred_check_branch
          %521 = sbr.rel (%p519) target = $region72
        $region71: #{net_forward.1} parent=67 // pred_region
          %522 = dma.done %s515, 98304
        $region72: #{net_forward.1} parent=67 // pred_fallthru
          _
        %s523 = sand.u32 %s35, 1
        %s524 = scalar_lea.sflag [#allocation6], %s523
        %s525 = sand.u32 %s90, 1
        %s526 = smul.addr %s525, 4
        %s527 = scalar_lea.vmem [#allocation5], %s526
        // Predicated region
        $region73: #{net_forward.1} parent=67 // pred_check
          %p528 = pneg %p103
        $region74: #{net_forward.1} parent=67 // pred_check_branch
          %530 = sbr.rel (%p528) target = $region76
        $region75: #{net_forward.1} parent=67 // pred_region
          %531 = dma.done %s524, 64
        $region76: #{net_forward.1} parent=67 // pred_fallthru
          _
        %s532 = sand.u32 %s35, 1
        %s533 = scalar_lea.sflag [#allocation6], %s532
        %s534 = sand.u32 %s116, 1
        %s535 = smul.addr %s534, 4
        %s536 = scalar_lea.vmem [#allocation7], %s535
        // Predicated region
        $region77: #{net_forward.1} parent=67 // pred_check
          %p537 = pneg %p129
        $region78: #{net_forward.1} parent=67 // pred_check_branch
          %539 = sbr.rel (%p537) target = $region80
        $region79: #{net_forward.1} parent=67 // pred_region
          %540 = dma.done %s533, 64
        $region80: #{net_forward.1} parent=67 // pred_fallthru
          _
        %s541 = sand.u32 %s35, 1
        %s542 = scalar_lea.sflag [#allocation9], %s541
        %s543 = sand.u32 %s142, 1
        %s544 = smul.addr %s543, 1024
        %s545 = scalar_lea.vmem [#allocation8], %s544
        // Predicated region
        $region81: #{net_forward.1} parent=67 // pred_check
          %p546 = pneg %p155
        $region82: #{net_forward.1} parent=67 // pred_check_branch
          %548 = sbr.rel (%p546) target = $region84
        $region83: #{net_forward.1} parent=67 // pred_region
          %549 = dma.done %s542, 16384
        $region84: #{net_forward.1} parent=67 // pred_fallthru
          _
        // Predicated region
        $region85: #{net_forward.1} parent=67 // pred_check
          %p550 = pneg %p176
        $region86: #{net_forward.1} parent=67 // pred_check_branch
          %552 = sbr.rel (%p550) target = $region88
        $region87: #{net_forward.1} parent=67 // pred_region
          %553 = dma.done [#allocation9], 128
        $region88: #{net_forward.1} parent=67 // pred_fallthru
          _
        // Predicated region
        $region89: #{net_forward.1} parent=67 // pred_check
          %p554 = pneg %p197
        $region90: #{net_forward.1} parent=67 // pred_check_branch
          %556 = sbr.rel (%p554) target = $region92
        $region91: #{net_forward.1} parent=67 // pred_region
          %557 = dma.done [#allocation12], 128
        $region92: #{net_forward.1} parent=67 // pred_fallthru
          _
        // Predicated region
        $region93: #{net_forward.1} parent=67 // pred_check
          %p558 = pneg %p218
        $region94: #{net_forward.1} parent=67 // pred_check_branch
          %560 = sbr.rel (%p558) target = $region96
        $region95: #{net_forward.1} parent=67 // pred_region
          %561 = dma.done [#allocation12], 16384
        $region96: #{net_forward.1} parent=67 // pred_fallthru
          _
        // Predicated region
        $region97: #{net_forward.1} parent=67 // pred_check
          %p562 = pneg %p239
        $region98: #{net_forward.1} parent=67 // pred_check_branch
          %564 = sbr.rel (%p562) target = $region100
        $region99: #{net_forward.1} parent=67 // pred_region
          %565 = dma.done [#allocation15], 64
        $region100: #{net_forward.1} parent=67 // pred_fallthru
          _
        // Predicated region
        $region101: #{net_forward.1} parent=67 // pred_check
          %p566 = pneg %p260
        $region102: #{net_forward.1} parent=67 // pred_check_branch
          %568 = sbr.rel (%p566) target = $region104
        $region103: #{net_forward.1} parent=67 // pred_region
          %569 = dma.done [#allocation15], 64
        $region104: #{net_forward.1} parent=67 // pred_fallthru
          _
        // Predicated region
        $region105: #{net_forward.1} parent=67 // pred_check
          %p570 = pneg %p281
        $region106: #{net_forward.1} parent=67 // pred_check_branch
          %572 = sbr.rel (%p570) target = $region108
        $region107: #{net_forward.1} parent=67 // pred_region
          %573 = dma.done [#allocation18], 4096
        $region108: #{net_forward.1} parent=67 // pred_fallthru
          _
        // Predicated region
        $region109: #{net_forward.1} parent=67 // pred_check
          %p574 = pneg %p302
        $region110: #{net_forward.1} parent=67 // pred_check_branch
          %576 = sbr.rel (%p574) target = $region112
        $region111: #{net_forward.1} parent=67 // pred_region
          %577 = dma.done [#allocation18], 16
        $region112: #{net_forward.1} parent=67 // pred_fallthru
          _
        %p578 = pneg %p51
        %p579 = pneg %p48
        %s580 = sand.u32 %s64, 1
        %s581 = scalar_lea.sflag [#allocation4], %s580
        %s582 = sand.u32 %s64, 1
        %s583 = smul.addr %s582, 6144
        %s584 = scalar_lea.vmem [#allocation3], %s583
        %p585 = pneg %p77
        %p586 = pneg %p74
        %s587 = sand.u32 %s35, 1
        %s588 = scalar_lea.sflag [#allocation6], %s587
        %s589 = sand.u32 %s90, 1
        %s590 = smul.addr %s589, 4
        %s591 = scalar_lea.vmem [#allocation5], %s590
        %p592 = pneg %p103
        %p593 = pneg %p100
        %s594 = sand.u32 %s35, 1
        %s595 = scalar_lea.sflag [#allocation6], %s594
        %s596 = sand.u32 %s116, 1
        %s597 = smul.addr %s596, 4
        %s598 = scalar_lea.vmem [#allocation7], %s597
        %p599 = pneg %p129
        %p600 = pneg %p126
        %s601 = sand.u32 %s35, 1
        %s602 = scalar_lea.sflag [#allocation9], %s601
        %s603 = sand.u32 %s142, 1
        %s604 = smul.addr %s603, 1024
        %s605 = scalar_lea.vmem [#allocation8], %s604
        %p606 = pneg %p155
        %p607 = pneg %p152
        %p608 = pneg %p176
        %p609 = pneg %p173
        %p610 = pneg %p197
        %p611 = pneg %p194
        %p612 = pneg %p218
        %p613 = pneg %p215
        %p614 = pneg %p239
        %p615 = pneg %p236
        %p616 = pneg %p260
        %p617 = pneg %p257
        %p618 = pneg %p281
        %p619 = pneg %p278
        %p620 = pneg %p302
        %p621 = pneg %p299
        %p622 = pneg %p323
        %p623 = pneg %p320
        %s624 = smul.u32 4, %s35
        %s625 = smul.u32 4, %s35
        %s626 = smul.u32 4, %s35
        %s627 = smul.u32 16, %s35
        %p629 = scmp.eq.s32.totalorder %s35, 0
        // Predicated region
        $region113: #{net_forward.1} parent=67 // pred_check
          %p630 = pneg %p629
        $region114: #{net_forward.1} parent=67 // pred_check_branch
          %632 = sbr.rel (%p630) target = $region116
        $region115: #{net_forward.1} parent=67 // pred_region
          %633 = vst [vmem:[#allocation2] sm:$0xff] 0.0
          %634 = vst [vmem:[#allocation2 + $0x8] sm:$0xff] 0.0
          %635 = vst [vmem:[#allocation2 + $0x10] sm:$0xff] 0.0
          %636 = vst [vmem:[#allocation2 + $0x18] sm:$0xff] 0.0
          %637 = vst [vmem:[#allocation2 + $0x20] sm:$0xff] 0.0
          %638 = vst [vmem:[#allocation2 + $0x28] sm:$0xff] 0.0
          %639 = vst [vmem:[#allocation2 + $0x30] sm:$0xff] 0.0
          %640 = vst [vmem:[#allocation2 + $0x38] sm:$0xff] 0.0
        $region116: #{net_forward.1} parent=67 // pred_fallthru
          _
        %v641 = vld [vmem:[%s0] sm:$0xff]
        %v642 = vld [vmem:[%s0 + $0x8] sm:$0xff]
        %v643 = vld [vmem:[%s0 + $0x10] sm:$0xff]
        %v644 = vld [vmem:[%s0 + $0x18] sm:$0xff]
        %v645 = vld [vmem:[%s0 + $0x20] sm:$0xff]
        %v646 = vld [vmem:[%s0 + $0x28] sm:$0xff]
        %v647 = vld [vmem:[%s0 + $0x30] sm:$0xff]
        %v648 = vld [vmem:[%s0 + $0x38] sm:$0xff]
        %v649 = vld [vmem:[%s0 + $0x40] sm:$0xff]
        %v650 = vld [vmem:[%s0 + $0x48] sm:$0xff]
        %v651 = vld [vmem:[%s0 + $0x50] sm:$0xff]
        %v652 = vld [vmem:[%s0 + $0x58] sm:$0xff]
        %v653 = vld [vmem:[%s0 + $0x60] sm:$0xff]
        %v654 = vld [vmem:[%s0 + $0x68] sm:$0xff]
        %v655 = vld [vmem:[%s0 + $0x70] sm:$0xff]
        %v656 = vld [vmem:[%s0 + $0x78] sm:$0xff]
        %v657 = vld [vmem:[%s0 + $0x80] sm:$0xff]
        %v658 = vld [vmem:[%s0 + $0x88] sm:$0xff]
        %v659 = vld [vmem:[%s0 + $0x90] sm:$0xff]
        %v660 = vld [vmem:[%s0 + $0x98] sm:$0xff]
        %v661 = vld [vmem:[%s0 + $0xa0] sm:$0xff]
        %v662 = vld [vmem:[%s0 + $0xa8] sm:$0xff]
        %v663 = vld [vmem:[%s0 + $0xb0] sm:$0xff]
        %v664 = vld [vmem:[%s0 + $0xb8] sm:$0xff]
        %v665 = vld [vmem:[%s518] sm:$0xff]
        %v666 = vld [vmem:[%s518 + $0x8] sm:$0xff]
        %v667 = vld [vmem:[%s518 + $0x10] sm:$0xff]
        %v668 = vld [vmem:[%s518 + $0x18] sm:$0xff]
        %v669 = vld [vmem:[%s518 + $0x20] sm:$0xff]
        %v670 = vld [vmem:[%s518 + $0x28] sm:$0xff]
        %v671 = vld [vmem:[%s518 + $0x30] sm:$0xff]
        %v672 = vld [vmem:[%s518 + $0x38] sm:$0xff]
        %v673 = vld [vmem:[%s518 + $0x40] sm:$0xff]
        %v674 = vld [vmem:[%s518 + $0x48] sm:$0xff]
        %v675 = vld [vmem:[%s518 + $0x50] sm:$0xff]
        %v676 = vld [vmem:[%s518 + $0x58] sm:$0xff]
        %v677 = vld [vmem:[%s518 + $0x60] sm:$0xff]
        %v678 = vld [vmem:[%s518 + $0x68] sm:$0xff]
        %v679 = vld [vmem:[%s518 + $0x70] sm:$0xff]
        %v680 = vld [vmem:[%s518 + $0x78] sm:$0xff]
        %v681 = vld [vmem:[%s518 + $0x80] sm:$0xff]
        %v682 = vld [vmem:[%s518 + $0x88] sm:$0xff]
        %v683 = vld [vmem:[%s518 + $0x90] sm:$0xff]
        %v684 = vld [vmem:[%s518 + $0x98] sm:$0xff]
        %v685 = vld [vmem:[%s518 + $0xa0] sm:$0xff]
        %v686 = vld [vmem:[%s518 + $0xa8] sm:$0xff]
        %v687 = vld [vmem:[%s518 + $0xb0] sm:$0xff]
        %v688 = vld [vmem:[%s518 + $0xb8] sm:$0xff]
        %v689 = vld [vmem:[%s518 + $0xc0] sm:$0xff]
        %v690 = vld [vmem:[%s518 + $0xc8] sm:$0xff]
        %v691 = vld [vmem:[%s518 + $0xd0] sm:$0xff]
        %v692 = vld [vmem:[%s518 + $0xd8] sm:$0xff]
        %v693 = vld [vmem:[%s518 + $0xe0] sm:$0xff]
        %v694 = vld [vmem:[%s518 + $0xe8] sm:$0xff]
        %v695 = vld [vmem:[%s518 + $0xf0] sm:$0xff]
        %v696 = vld [vmem:[%s518 + $0xf8] sm:$0xff]
        %v697 = vld [vmem:[%s518 + $0x100] sm:$0xff]
        %v698 = vld [vmem:[%s518 + $0x108] sm:$0xff]
        %v699 = vld [vmem:[%s518 + $0x110] sm:$0xff]
        %v700 = vld [vmem:[%s518 + $0x118] sm:$0xff]
        %v701 = vld [vmem:[%s518 + $0x120] sm:$0xff]
        %v702 = vld [vmem:[%s518 + $0x128] sm:$0xff]
        %v703 = vld [vmem:[%s518 + $0x130] sm:$0xff]
        %v704 = vld [vmem:[%s518 + $0x138] sm:$0xff]
        %v705 = vld [vmem:[%s518 + $0x140] sm:$0xff]
        %v706 = vld [vmem:[%s518 + $0x148] sm:$0xff]
        %v707 = vld [vmem:[%s518 + $0x150] sm:$0xff]
        %v708 = vld [vmem:[%s518 + $0x158] sm:$0xff]
        %v709 = vld [vmem:[%s518 + $0x160] sm:$0xff]
        %v710 = vld [vmem:[%s518 + $0x168] sm:$0xff]
        %v711 = vld [vmem:[%s518 + $0x170] sm:$0xff]
        %v712 = vld [vmem:[%s518 + $0x178] sm:$0xff]
        %v713 = vld [vmem:[%s518 + $0x180] sm:$0xff]
        %v714 = vld [vmem:[%s518 + $0x188] sm:$0xff]
        %v715 = vld [vmem:[%s518 + $0x190] sm:$0xff]
        %v716 = vld [vmem:[%s518 + $0x198] sm:$0xff]
        %v717 = vld [vmem:[%s518 + $0x1a0] sm:$0xff]
        %v718 = vld [vmem:[%s518 + $0x1a8] sm:$0xff]
        %v719 = vld [vmem:[%s518 + $0x1b0] sm:$0xff]
        %v720 = vld [vmem:[%s518 + $0x1b8] sm:$0xff]
        %v721 = vld [vmem:[%s518 + $0x1c0] sm:$0xff]
        %v722 = vld [vmem:[%s518 + $0x1c8] sm:$0xff]
        %v723 = vld [vmem:[%s518 + $0x1d0] sm:$0xff]
        %v724 = vld [vmem:[%s518 + $0x1d8] sm:$0xff]
        %v725 = vld [vmem:[%s518 + $0x1e0] sm:$0xff]
        %v726 = vld [vmem:[%s518 + $0x1e8] sm:$0xff]
        %v727 = vld [vmem:[%s518 + $0x1f0] sm:$0xff]
        %v728 = vld [vmem:[%s518 + $0x1f8] sm:$0xff]
        %v729 = vld [vmem:[%s518 + $0x200] sm:$0xff]
        %v730 = vld [vmem:[%s518 + $0x208] sm:$0xff]
        %v731 = vld [vmem:[%s518 + $0x210] sm:$0xff]
        %v732 = vld [vmem:[%s518 + $0x218] sm:$0xff]
        %v733 = vld [vmem:[%s518 + $0x220] sm:$0xff]
        %v734 = vld [vmem:[%s518 + $0x228] sm:$0xff]
        %v735 = vld [vmem:[%s518 + $0x230] sm:$0xff]
        %v736 = vld [vmem:[%s518 + $0x238] sm:$0xff]
        %v737 = vld [vmem:[%s518 + $0x240] sm:$0xff]
        %v738 = vld [vmem:[%s518 + $0x248] sm:$0xff]
        %v739 = vld [vmem:[%s518 + $0x250] sm:$0xff]
        %v740 = vld [vmem:[%s518 + $0x258] sm:$0xff]
        %v741 = vld [vmem:[%s518 + $0x260] sm:$0xff]
        %v742 = vld [vmem:[%s518 + $0x268] sm:$0xff]
        %v743 = vld [vmem:[%s518 + $0x270] sm:$0xff]
        %v744 = vld [vmem:[%s518 + $0x278] sm:$0xff]
        %v745 = vld [vmem:[%s518 + $0x280] sm:$0xff]
        %v746 = vld [vmem:[%s518 + $0x288] sm:$0xff]
        %v747 = vld [vmem:[%s518 + $0x290] sm:$0xff]
        %v748 = vld [vmem:[%s518 + $0x298] sm:$0xff]
        %v749 = vld [vmem:[%s518 + $0x2a0] sm:$0xff]
        %v750 = vld [vmem:[%s518 + $0x2a8] sm:$0xff]
        %v751 = vld [vmem:[%s518 + $0x2b0] sm:$0xff]
        %v752 = vld [vmem:[%s518 + $0x2b8] sm:$0xff]
        %v753 = vld [vmem:[%s518 + $0x2c0] sm:$0xff]
        %v754 = vld [vmem:[%s518 + $0x2c8] sm:$0xff]
        %v755 = vld [vmem:[%s518 + $0x2d0] sm:$0xff]
        %v756 = vld [vmem:[%s518 + $0x2d8] sm:$0xff]
        %v757 = vld [vmem:[%s518 + $0x2e0] sm:$0xff]
        %v758 = vld [vmem:[%s518 + $0x2e8] sm:$0xff]
        %v759 = vld [vmem:[%s518 + $0x2f0] sm:$0xff]
        %v760 = vld [vmem:[%s518 + $0x2f8] sm:$0xff]
        %v761 = vld [vmem:[%s518 + $0x300] sm:$0xff]
        %v762 = vld [vmem:[%s518 + $0x308] sm:$0xff]
        %v763 = vld [vmem:[%s518 + $0x310] sm:$0xff]
        %v764 = vld [vmem:[%s518 + $0x318] sm:$0xff]
        %v765 = vld [vmem:[%s518 + $0x320] sm:$0xff]
        %v766 = vld [vmem:[%s518 + $0x328] sm:$0xff]
        %v767 = vld [vmem:[%s518 + $0x330] sm:$0xff]
        %v768 = vld [vmem:[%s518 + $0x338] sm:$0xff]
        %v769 = vld [vmem:[%s518 + $0x340] sm:$0xff]
        %v770 = vld [vmem:[%s518 + $0x348] sm:$0xff]
        %v771 = vld [vmem:[%s518 + $0x350] sm:$0xff]
        %v772 = vld [vmem:[%s518 + $0x358] sm:$0xff]
        %v773 = vld [vmem:[%s518 + $0x360] sm:$0xff]
        %v774 = vld [vmem:[%s518 + $0x368] sm:$0xff]
        %v775 = vld [vmem:[%s518 + $0x370] sm:$0xff]
        %v776 = vld [vmem:[%s518 + $0x378] sm:$0xff]
        %v777 = vld [vmem:[%s518 + $0x380] sm:$0xff]
        %v778 = vld [vmem:[%s518 + $0x388] sm:$0xff]
        %v779 = vld [vmem:[%s518 + $0x390] sm:$0xff]
        %v780 = vld [vmem:[%s518 + $0x398] sm:$0xff]
        %v781 = vld [vmem:[%s518 + $0x3a0] sm:$0xff]
        %v782 = vld [vmem:[%s518 + $0x3a8] sm:$0xff]
        %v783 = vld [vmem:[%s518 + $0x3b0] sm:$0xff]
        %v784 = vld [vmem:[%s518 + $0x3b8] sm:$0xff]
        %v785 = vld [vmem:[%s518 + $0x3c0] sm:$0xff]
        %v786 = vld [vmem:[%s518 + $0x3c8] sm:$0xff]
        %v787 = vld [vmem:[%s518 + $0x3d0] sm:$0xff]
        %v788 = vld [vmem:[%s518 + $0x3d8] sm:$0xff]
        %v789 = vld [vmem:[%s518 + $0x3e0] sm:$0xff]
        %v790 = vld [vmem:[%s518 + $0x3e8] sm:$0xff]
        %v791 = vld [vmem:[%s518 + $0x3f0] sm:$0xff]
        %v792 = vld [vmem:[%s518 + $0x3f8] sm:$0xff]
        %v793 = vld [vmem:[%s518 + $0x400] sm:$0xff]
        %v794 = vld [vmem:[%s518 + $0x408] sm:$0xff]
        %v795 = vld [vmem:[%s518 + $0x410] sm:$0xff]
        %v796 = vld [vmem:[%s518 + $0x418] sm:$0xff]
        %v797 = vld [vmem:[%s518 + $0x420] sm:$0xff]
        %v798 = vld [vmem:[%s518 + $0x428] sm:$0xff]
        %v799 = vld [vmem:[%s518 + $0x430] sm:$0xff]
        %v800 = vld [vmem:[%s518 + $0x438] sm:$0xff]
        %v801 = vld [vmem:[%s518 + $0x440] sm:$0xff]
        %v802 = vld [vmem:[%s518 + $0x448] sm:$0xff]
        %v803 = vld [vmem:[%s518 + $0x450] sm:$0xff]
        %v804 = vld [vmem:[%s518 + $0x458] sm:$0xff]
        %v805 = vld [vmem:[%s518 + $0x460] sm:$0xff]
        %v806 = vld [vmem:[%s518 + $0x468] sm:$0xff]
        %v807 = vld [vmem:[%s518 + $0x470] sm:$0xff]
        %v808 = vld [vmem:[%s518 + $0x478] sm:$0xff]
        %v809 = vld [vmem:[%s518 + $0x480] sm:$0xff]
        %v810 = vld [vmem:[%s518 + $0x488] sm:$0xff]
        %v811 = vld [vmem:[%s518 + $0x490] sm:$0xff]
        %v812 = vld [vmem:[%s518 + $0x498] sm:$0xff]
        %v813 = vld [vmem:[%s518 + $0x4a0] sm:$0xff]
        %v814 = vld [vmem:[%s518 + $0x4a8] sm:$0xff]
        %v815 = vld [vmem:[%s518 + $0x4b0] sm:$0xff]
        %v816 = vld [vmem:[%s518 + $0x4b8] sm:$0xff]
        %v817 = vld [vmem:[%s518 + $0x4c0] sm:$0xff]
        %v818 = vld [vmem:[%s518 + $0x4c8] sm:$0xff]
        %v819 = vld [vmem:[%s518 + $0x4d0] sm:$0xff]
        %v820 = vld [vmem:[%s518 + $0x4d8] sm:$0xff]
        %v821 = vld [vmem:[%s518 + $0x4e0] sm:$0xff]
        %v822 = vld [vmem:[%s518 + $0x4e8] sm:$0xff]
        %v823 = vld [vmem:[%s518 + $0x4f0] sm:$0xff]
        %v824 = vld [vmem:[%s518 + $0x4f8] sm:$0xff]
        %v825 = vld [vmem:[%s518 + $0x500] sm:$0xff]
        %v826 = vld [vmem:[%s518 + $0x508] sm:$0xff]
        %v827 = vld [vmem:[%s518 + $0x510] sm:$0xff]
        %v828 = vld [vmem:[%s518 + $0x518] sm:$0xff]
        %v829 = vld [vmem:[%s518 + $0x520] sm:$0xff]
        %v830 = vld [vmem:[%s518 + $0x528] sm:$0xff]
        %v831 = vld [vmem:[%s518 + $0x530] sm:$0xff]
        %v832 = vld [vmem:[%s518 + $0x538] sm:$0xff]
        %v833 = vld [vmem:[%s518 + $0x540] sm:$0xff]
        %v834 = vld [vmem:[%s518 + $0x548] sm:$0xff]
        %v835 = vld [vmem:[%s518 + $0x550] sm:$0xff]
        %v836 = vld [vmem:[%s518 + $0x558] sm:$0xff]
        %v837 = vld [vmem:[%s518 + $0x560] sm:$0xff]
        %v838 = vld [vmem:[%s518 + $0x568] sm:$0xff]
        %v839 = vld [vmem:[%s518 + $0x570] sm:$0xff]
        %v840 = vld [vmem:[%s518 + $0x578] sm:$0xff]
        %v841 = vld [vmem:[%s518 + $0x580] sm:$0xff]
        %v842 = vld [vmem:[%s518 + $0x588] sm:$0xff]
        %v843 = vld [vmem:[%s518 + $0x590] sm:$0xff]
        %v844 = vld [vmem:[%s518 + $0x598] sm:$0xff]
        %v845 = vld [vmem:[%s518 + $0x5a0] sm:$0xff]
        %v846 = vld [vmem:[%s518 + $0x5a8] sm:$0xff]
        %v847 = vld [vmem:[%s518 + $0x5b0] sm:$0xff]
        %v848 = vld [vmem:[%s518 + $0x5b8] sm:$0xff]
        %v849 = vld [vmem:[%s518 + $0x5c0] sm:$0xff]
        %v850 = vld [vmem:[%s518 + $0x5c8] sm:$0xff]
        %v851 = vld [vmem:[%s518 + $0x5d0] sm:$0xff]
        %v852 = vld [vmem:[%s518 + $0x5d8] sm:$0xff]
        %v853 = vld [vmem:[%s518 + $0x5e0] sm:$0xff]
        %v854 = vld [vmem:[%s518 + $0x5e8] sm:$0xff]
        %v855 = vld [vmem:[%s518 + $0x5f0] sm:$0xff]
        %v856 = vld [vmem:[%s518 + $0x5f8] sm:$0xff]
        %v857 = vld [vmem:[%s518 + $0x600] sm:$0xff]
        %v858 = vld [vmem:[%s518 + $0x608] sm:$0xff]
        %v859 = vld [vmem:[%s518 + $0x610] sm:$0xff]
        %v860 = vld [vmem:[%s518 + $0x618] sm:$0xff]
        %v861 = vld [vmem:[%s518 + $0x620] sm:$0xff]
        %v862 = vld [vmem:[%s518 + $0x628] sm:$0xff]
        %v863 = vld [vmem:[%s518 + $0x630] sm:$0xff]
        %v864 = vld [vmem:[%s518 + $0x638] sm:$0xff]
        %v865 = vld [vmem:[%s518 + $0x640] sm:$0xff]
        %v866 = vld [vmem:[%s518 + $0x648] sm:$0xff]
        %v867 = vld [vmem:[%s518 + $0x650] sm:$0xff]
        %v868 = vld [vmem:[%s518 + $0x658] sm:$0xff]
        %v869 = vld [vmem:[%s518 + $0x660] sm:$0xff]
        %v870 = vld [vmem:[%s518 + $0x668] sm:$0xff]
        %v871 = vld [vmem:[%s518 + $0x670] sm:$0xff]
        %v872 = vld [vmem:[%s518 + $0x678] sm:$0xff]
        %v873 = vld [vmem:[%s518 + $0x680] sm:$0xff]
        %v874 = vld [vmem:[%s518 + $0x688] sm:$0xff]
        %v875 = vld [vmem:[%s518 + $0x690] sm:$0xff]
        %v876 = vld [vmem:[%s518 + $0x698] sm:$0xff]
        %v877 = vld [vmem:[%s518 + $0x6a0] sm:$0xff]
        %v878 = vld [vmem:[%s518 + $0x6a8] sm:$0xff]
        %v879 = vld [vmem:[%s518 + $0x6b0] sm:$0xff]
        %v880 = vld [vmem:[%s518 + $0x6b8] sm:$0xff]
        %v881 = vld [vmem:[%s518 + $0x6c0] sm:$0xff]
        %v882 = vld [vmem:[%s518 + $0x6c8] sm:$0xff]
        %v883 = vld [vmem:[%s518 + $0x6d0] sm:$0xff]
        %v884 = vld [vmem:[%s518 + $0x6d8] sm:$0xff]
        %v885 = vld [vmem:[%s518 + $0x6e0] sm:$0xff]
        %v886 = vld [vmem:[%s518 + $0x6e8] sm:$0xff]
        %v887 = vld [vmem:[%s518 + $0x6f0] sm:$0xff]
        %v888 = vld [vmem:[%s518 + $0x6f8] sm:$0xff]
        %v889 = vld [vmem:[%s518 + $0x700] sm:$0xff]
        %v890 = vld [vmem:[%s518 + $0x708] sm:$0xff]
        %v891 = vld [vmem:[%s518 + $0x710] sm:$0xff]
        %v892 = vld [vmem:[%s518 + $0x718] sm:$0xff]
        %v893 = vld [vmem:[%s518 + $0x720] sm:$0xff]
        %v894 = vld [vmem:[%s518 + $0x728] sm:$0xff]
        %v895 = vld [vmem:[%s518 + $0x730] sm:$0xff]
        %v896 = vld [vmem:[%s518 + $0x738] sm:$0xff]
        %v897 = vld [vmem:[%s518 + $0x740] sm:$0xff]
        %v898 = vld [vmem:[%s518 + $0x748] sm:$0xff]
        %v899 = vld [vmem:[%s518 + $0x750] sm:$0xff]
        %v900 = vld [vmem:[%s518 + $0x758] sm:$0xff]
        %v901 = vld [vmem:[%s518 + $0x760] sm:$0xff]
        %v902 = vld [vmem:[%s518 + $0x768] sm:$0xff]
        %v903 = vld [vmem:[%s518 + $0x770] sm:$0xff]
        %v904 = vld [vmem:[%s518 + $0x778] sm:$0xff]
        %v905 = vld [vmem:[%s518 + $0x780] sm:$0xff]
        %v906 = vld [vmem:[%s518 + $0x788] sm:$0xff]
        %v907 = vld [vmem:[%s518 + $0x790] sm:$0xff]
        %v908 = vld [vmem:[%s518 + $0x798] sm:$0xff]
        %v909 = vld [vmem:[%s518 + $0x7a0] sm:$0xff]
        %v910 = vld [vmem:[%s518 + $0x7a8] sm:$0xff]
        %v911 = vld [vmem:[%s518 + $0x7b0] sm:$0xff]
        %v912 = vld [vmem:[%s518 + $0x7b8] sm:$0xff]
        %v913 = vld [vmem:[%s518 + $0x7c0] sm:$0xff]
        %v914 = vld [vmem:[%s518 + $0x7c8] sm:$0xff]
        %v915 = vld [vmem:[%s518 + $0x7d0] sm:$0xff]
        %v916 = vld [vmem:[%s518 + $0x7d8] sm:$0xff]
        %v917 = vld [vmem:[%s518 + $0x7e0] sm:$0xff]
        %v918 = vld [vmem:[%s518 + $0x7e8] sm:$0xff]
        %v919 = vld [vmem:[%s518 + $0x7f0] sm:$0xff]
        %v920 = vld [vmem:[%s518 + $0x7f8] sm:$0xff]
        %v921 = vld [vmem:[%s518 + $0x800] sm:$0xff]
        %v922 = vld [vmem:[%s518 + $0x808] sm:$0xff]
        %v923 = vld [vmem:[%s518 + $0x810] sm:$0xff]
        %v924 = vld [vmem:[%s518 + $0x818] sm:$0xff]
        %v925 = vld [vmem:[%s518 + $0x820] sm:$0xff]
        %v926 = vld [vmem:[%s518 + $0x828] sm:$0xff]
        %v927 = vld [vmem:[%s518 + $0x830] sm:$0xff]
        %v928 = vld [vmem:[%s518 + $0x838] sm:$0xff]
        %v929 = vld [vmem:[%s518 + $0x840] sm:$0xff]
        %v930 = vld [vmem:[%s518 + $0x848] sm:$0xff]
        %v931 = vld [vmem:[%s518 + $0x850] sm:$0xff]
        %v932 = vld [vmem:[%s518 + $0x858] sm:$0xff]
        %v933 = vld [vmem:[%s518 + $0x860] sm:$0xff]
        %v934 = vld [vmem:[%s518 + $0x868] sm:$0xff]
        %v935 = vld [vmem:[%s518 + $0x870] sm:$0xff]
        %v936 = vld [vmem:[%s518 + $0x878] sm:$0xff]
        %v937 = vld [vmem:[%s518 + $0x880] sm:$0xff]
        %v938 = vld [vmem:[%s518 + $0x888] sm:$0xff]
        %v939 = vld [vmem:[%s518 + $0x890] sm:$0xff]
        %v940 = vld [vmem:[%s518 + $0x898] sm:$0xff]
        %v941 = vld [vmem:[%s518 + $0x8a0] sm:$0xff]
        %v942 = vld [vmem:[%s518 + $0x8a8] sm:$0xff]
        %v943 = vld [vmem:[%s518 + $0x8b0] sm:$0xff]
        %v944 = vld [vmem:[%s518 + $0x8b8] sm:$0xff]
        %v945 = vld [vmem:[%s518 + $0x8c0] sm:$0xff]
        %v946 = vld [vmem:[%s518 + $0x8c8] sm:$0xff]
        %v947 = vld [vmem:[%s518 + $0x8d0] sm:$0xff]
        %v948 = vld [vmem:[%s518 + $0x8d8] sm:$0xff]
        %v949 = vld [vmem:[%s518 + $0x8e0] sm:$0xff]
        %v950 = vld [vmem:[%s518 + $0x8e8] sm:$0xff]
        %v951 = vld [vmem:[%s518 + $0x8f0] sm:$0xff]
        %v952 = vld [vmem:[%s518 + $0x8f8] sm:$0xff]
        %v953 = vld [vmem:[%s518 + $0x900] sm:$0xff]
        %v954 = vld [vmem:[%s518 + $0x908] sm:$0xff]
        %v955 = vld [vmem:[%s518 + $0x910] sm:$0xff]
        %v956 = vld [vmem:[%s518 + $0x918] sm:$0xff]
        %v957 = vld [vmem:[%s518 + $0x920] sm:$0xff]
        %v958 = vld [vmem:[%s518 + $0x928] sm:$0xff]
        %v959 = vld [vmem:[%s518 + $0x930] sm:$0xff]
        %v960 = vld [vmem:[%s518 + $0x938] sm:$0xff]
        %v961 = vld [vmem:[%s518 + $0x940] sm:$0xff]
        %v962 = vld [vmem:[%s518 + $0x948] sm:$0xff]
        %v963 = vld [vmem:[%s518 + $0x950] sm:$0xff]
        %v964 = vld [vmem:[%s518 + $0x958] sm:$0xff]
        %v965 = vld [vmem:[%s518 + $0x960] sm:$0xff]
        %v966 = vld [vmem:[%s518 + $0x968] sm:$0xff]
        %v967 = vld [vmem:[%s518 + $0x970] sm:$0xff]
        %v968 = vld [vmem:[%s518 + $0x978] sm:$0xff]
        %v969 = vld [vmem:[%s518 + $0x980] sm:$0xff]
        %v970 = vld [vmem:[%s518 + $0x988] sm:$0xff]
        %v971 = vld [vmem:[%s518 + $0x990] sm:$0xff]
        %v972 = vld [vmem:[%s518 + $0x998] sm:$0xff]
        %v973 = vld [vmem:[%s518 + $0x9a0] sm:$0xff]
        %v974 = vld [vmem:[%s518 + $0x9a8] sm:$0xff]
        %v975 = vld [vmem:[%s518 + $0x9b0] sm:$0xff]
        %v976 = vld [vmem:[%s518 + $0x9b8] sm:$0xff]
        %v977 = vld [vmem:[%s518 + $0x9c0] sm:$0xff]
        %v978 = vld [vmem:[%s518 + $0x9c8] sm:$0xff]
        %v979 = vld [vmem:[%s518 + $0x9d0] sm:$0xff]
        %v980 = vld [vmem:[%s518 + $0x9d8] sm:$0xff]
        %v981 = vld [vmem:[%s518 + $0x9e0] sm:$0xff]
        %v982 = vld [vmem:[%s518 + $0x9e8] sm:$0xff]
        %v983 = vld [vmem:[%s518 + $0x9f0] sm:$0xff]
        %v984 = vld [vmem:[%s518 + $0x9f8] sm:$0xff]
        %v985 = vld [vmem:[%s518 + $0xa00] sm:$0xff]
        %v986 = vld [vmem:[%s518 + $0xa08] sm:$0xff]
        %v987 = vld [vmem:[%s518 + $0xa10] sm:$0xff]
        %v988 = vld [vmem:[%s518 + $0xa18] sm:$0xff]
        %v989 = vld [vmem:[%s518 + $0xa20] sm:$0xff]
        %v990 = vld [vmem:[%s518 + $0xa28] sm:$0xff]
        %v991 = vld [vmem:[%s518 + $0xa30] sm:$0xff]
        %v992 = vld [vmem:[%s518 + $0xa38] sm:$0xff]
        %v993 = vld [vmem:[%s518 + $0xa40] sm:$0xff]
        %v994 = vld [vmem:[%s518 + $0xa48] sm:$0xff]
        %v995 = vld [vmem:[%s518 + $0xa50] sm:$0xff]
        %v996 = vld [vmem:[%s518 + $0xa58] sm:$0xff]
        %v997 = vld [vmem:[%s518 + $0xa60] sm:$0xff]
        %v998 = vld [vmem:[%s518 + $0xa68] sm:$0xff]
        %v999 = vld [vmem:[%s518 + $0xa70] sm:$0xff]
        %v1000 = vld [vmem:[%s518 + $0xa78] sm:$0xff]
        %v1001 = vld [vmem:[%s518 + $0xa80] sm:$0xff]
        %v1002 = vld [vmem:[%s518 + $0xa88] sm:$0xff]
        %v1003 = vld [vmem:[%s518 + $0xa90] sm:$0xff]
        %v1004 = vld [vmem:[%s518 + $0xa98] sm:$0xff]
        %v1005 = vld [vmem:[%s518 + $0xaa0] sm:$0xff]
        %v1006 = vld [vmem:[%s518 + $0xaa8] sm:$0xff]
        %v1007 = vld [vmem:[%s518 + $0xab0] sm:$0xff]
        %v1008 = vld [vmem:[%s518 + $0xab8] sm:$0xff]
        %v1009 = vld [vmem:[%s518 + $0xac0] sm:$0xff]
        %v1010 = vld [vmem:[%s518 + $0xac8] sm:$0xff]
        %v1011 = vld [vmem:[%s518 + $0xad0] sm:$0xff]
        %v1012 = vld [vmem:[%s518 + $0xad8] sm:$0xff]
        %v1013 = vld [vmem:[%s518 + $0xae0] sm:$0xff]
        %v1014 = vld [vmem:[%s518 + $0xae8] sm:$0xff]
        %v1015 = vld [vmem:[%s518 + $0xaf0] sm:$0xff]
        %v1016 = vld [vmem:[%s518 + $0xaf8] sm:$0xff]
        %v1017 = vld [vmem:[%s518 + $0xb00] sm:$0xff]
        %v1018 = vld [vmem:[%s518 + $0xb08] sm:$0xff]
        %v1019 = vld [vmem:[%s518 + $0xb10] sm:$0xff]
        %v1020 = vld [vmem:[%s518 + $0xb18] sm:$0xff]
        %v1021 = vld [vmem:[%s518 + $0xb20] sm:$0xff]
        %v1022 = vld [vmem:[%s518 + $0xb28] sm:$0xff]
        %v1023 = vld [vmem:[%s518 + $0xb30] sm:$0xff]
        %v1024 = vld [vmem:[%s518 + $0xb38] sm:$0xff]
        %v1025 = vld [vmem:[%s518 + $0xb40] sm:$0xff]
        %v1026 = vld [vmem:[%s518 + $0xb48] sm:$0xff]
        %v1027 = vld [vmem:[%s518 + $0xb50] sm:$0xff]
        %v1028 = vld [vmem:[%s518 + $0xb58] sm:$0xff]
        %v1029 = vld [vmem:[%s518 + $0xb60] sm:$0xff]
        %v1030 = vld [vmem:[%s518 + $0xb68] sm:$0xff]
        %v1031 = vld [vmem:[%s518 + $0xb70] sm:$0xff]
        %v1032 = vld [vmem:[%s518 + $0xb78] sm:$0xff]
        %v1033 = vld [vmem:[%s518 + $0xb80] sm:$0xff]
        %v1034 = vld [vmem:[%s518 + $0xb88] sm:$0xff]
        %v1035 = vld [vmem:[%s518 + $0xb90] sm:$0xff]
        %v1036 = vld [vmem:[%s518 + $0xb98] sm:$0xff]
        %v1037 = vld [vmem:[%s518 + $0xba0] sm:$0xff]
        %v1038 = vld [vmem:[%s518 + $0xba8] sm:$0xff]
        %v1039 = vld [vmem:[%s518 + $0xbb0] sm:$0xff]
        %v1040 = vld [vmem:[%s518 + $0xbb8] sm:$0xff]
        %v1041 = vld [vmem:[%s518 + $0xbc0] sm:$0xff]
        %v1042 = vld [vmem:[%s518 + $0xbc8] sm:$0xff]
        %v1043 = vld [vmem:[%s518 + $0xbd0] sm:$0xff]
        %v1044 = vld [vmem:[%s518 + $0xbd8] sm:$0xff]
        %v1045 = vld [vmem:[%s518 + $0xbe0] sm:$0xff]
        %v1046 = vld [vmem:[%s518 + $0xbe8] sm:$0xff]
        %v1047 = vld [vmem:[%s518 + $0xbf0] sm:$0xff]
        %v1048 = vld [vmem:[%s518 + $0xbf8] sm:$0xff]
        %v1049 = vld [vmem:[%s518 + $0xc00] sm:$0xff]
        %v1050 = vld [vmem:[%s518 + $0xc08] sm:$0xff]
        %v1051 = vld [vmem:[%s518 + $0xc10] sm:$0xff]
        %v1052 = vld [vmem:[%s518 + $0xc18] sm:$0xff]
        %v1053 = vld [vmem:[%s518 + $0xc20] sm:$0xff]
        %v1054 = vld [vmem:[%s518 + $0xc28] sm:$0xff]
        %v1055 = vld [vmem:[%s518 + $0xc30] sm:$0xff]
        %v1056 = vld [vmem:[%s518 + $0xc38] sm:$0xff]
        %v1057 = vld [vmem:[%s518 + $0xc40] sm:$0xff]
        %v1058 = vld [vmem:[%s518 + $0xc48] sm:$0xff]
        %v1059 = vld [vmem:[%s518 + $0xc50] sm:$0xff]
        %v1060 = vld [vmem:[%s518 + $0xc58] sm:$0xff]
        %v1061 = vld [vmem:[%s518 + $0xc60] sm:$0xff]
        %v1062 = vld [vmem:[%s518 + $0xc68] sm:$0xff]
        %v1063 = vld [vmem:[%s518 + $0xc70] sm:$0xff]
        %v1064 = vld [vmem:[%s518 + $0xc78] sm:$0xff]
        %v1065 = vld [vmem:[%s518 + $0xc80] sm:$0xff]
        %v1066 = vld [vmem:[%s518 + $0xc88] sm:$0xff]
        %v1067 = vld [vmem:[%s518 + $0xc90] sm:$0xff]
        %v1068 = vld [vmem:[%s518 + $0xc98] sm:$0xff]
        %v1069 = vld [vmem:[%s518 + $0xca0] sm:$0xff]
        %v1070 = vld [vmem:[%s518 + $0xca8] sm:$0xff]
        %v1071 = vld [vmem:[%s518 + $0xcb0] sm:$0xff]
        %v1072 = vld [vmem:[%s518 + $0xcb8] sm:$0xff]
        %v1073 = vld [vmem:[%s518 + $0xcc0] sm:$0xff]
        %v1074 = vld [vmem:[%s518 + $0xcc8] sm:$0xff]
        %v1075 = vld [vmem:[%s518 + $0xcd0] sm:$0xff]
        %v1076 = vld [vmem:[%s518 + $0xcd8] sm:$0xff]
        %v1077 = vld [vmem:[%s518 + $0xce0] sm:$0xff]
        %v1078 = vld [vmem:[%s518 + $0xce8] sm:$0xff]
        %v1079 = vld [vmem:[%s518 + $0xcf0] sm:$0xff]
        %v1080 = vld [vmem:[%s518 + $0xcf8] sm:$0xff]
        %v1081 = vld [vmem:[%s518 + $0xd00] sm:$0xff]
        %v1082 = vld [vmem:[%s518 + $0xd08] sm:$0xff]
        %v1083 = vld [vmem:[%s518 + $0xd10] sm:$0xff]
        %v1084 = vld [vmem:[%s518 + $0xd18] sm:$0xff]
        %v1085 = vld [vmem:[%s518 + $0xd20] sm:$0xff]
        %v1086 = vld [vmem:[%s518 + $0xd28] sm:$0xff]
        %v1087 = vld [vmem:[%s518 + $0xd30] sm:$0xff]
        %v1088 = vld [vmem:[%s518 + $0xd38] sm:$0xff]
        %v1089 = vld [vmem:[%s518 + $0xd40] sm:$0xff]
        %v1090 = vld [vmem:[%s518 + $0xd48] sm:$0xff]
        %v1091 = vld [vmem:[%s518 + $0xd50] sm:$0xff]
        %v1092 = vld [vmem:[%s518 + $0xd58] sm:$0xff]
        %v1093 = vld [vmem:[%s518 + $0xd60] sm:$0xff]
        %v1094 = vld [vmem:[%s518 + $0xd68] sm:$0xff]
        %v1095 = vld [vmem:[%s518 + $0xd70] sm:$0xff]
        %v1096 = vld [vmem:[%s518 + $0xd78] sm:$0xff]
        %v1097 = vld [vmem:[%s518 + $0xd80] sm:$0xff]
        %v1098 = vld [vmem:[%s518 + $0xd88] sm:$0xff]
        %v1099 = vld [vmem:[%s518 + $0xd90] sm:$0xff]
        %v1100 = vld [vmem:[%s518 + $0xd98] sm:$0xff]
        %v1101 = vld [vmem:[%s518 + $0xda0] sm:$0xff]
        %v1102 = vld [vmem:[%s518 + $0xda8] sm:$0xff]
        %v1103 = vld [vmem:[%s518 + $0xdb0] sm:$0xff]
        %v1104 = vld [vmem:[%s518 + $0xdb8] sm:$0xff]
        %v1105 = vld [vmem:[%s518 + $0xdc0] sm:$0xff]
        %v1106 = vld [vmem:[%s518 + $0xdc8] sm:$0xff]
        %v1107 = vld [vmem:[%s518 + $0xdd0] sm:$0xff]
        %v1108 = vld [vmem:[%s518 + $0xdd8] sm:$0xff]
        %v1109 = vld [vmem:[%s518 + $0xde0] sm:$0xff]
        %v1110 = vld [vmem:[%s518 + $0xde8] sm:$0xff]
        %v1111 = vld [vmem:[%s518 + $0xdf0] sm:$0xff]
        %v1112 = vld [vmem:[%s518 + $0xdf8] sm:$0xff]
        %v1113 = vld [vmem:[%s518 + $0xe00] sm:$0xff]
        %v1114 = vld [vmem:[%s518 + $0xe08] sm:$0xff]
        %v1115 = vld [vmem:[%s518 + $0xe10] sm:$0xff]
        %v1116 = vld [vmem:[%s518 + $0xe18] sm:$0xff]
        %v1117 = vld [vmem:[%s518 + $0xe20] sm:$0xff]
        %v1118 = vld [vmem:[%s518 + $0xe28] sm:$0xff]
        %v1119 = vld [vmem:[%s518 + $0xe30] sm:$0xff]
        %v1120 = vld [vmem:[%s518 + $0xe38] sm:$0xff]
        %v1121 = vld [vmem:[%s518 + $0xe40] sm:$0xff]
        %v1122 = vld [vmem:[%s518 + $0xe48] sm:$0xff]
        %v1123 = vld [vmem:[%s518 + $0xe50] sm:$0xff]
        %v1124 = vld [vmem:[%s518 + $0xe58] sm:$0xff]
        %v1125 = vld [vmem:[%s518 + $0xe60] sm:$0xff]
        %v1126 = vld [vmem:[%s518 + $0xe68] sm:$0xff]
        %v1127 = vld [vmem:[%s518 + $0xe70] sm:$0xff]
        %v1128 = vld [vmem:[%s518 + $0xe78] sm:$0xff]
        %v1129 = vld [vmem:[%s518 + $0xe80] sm:$0xff]
        %v1130 = vld [vmem:[%s518 + $0xe88] sm:$0xff]
        %v1131 = vld [vmem:[%s518 + $0xe90] sm:$0xff]
        %v1132 = vld [vmem:[%s518 + $0xe98] sm:$0xff]
        %v1133 = vld [vmem:[%s518 + $0xea0] sm:$0xff]
        %v1134 = vld [vmem:[%s518 + $0xea8] sm:$0xff]
        %v1135 = vld [vmem:[%s518 + $0xeb0] sm:$0xff]
        %v1136 = vld [vmem:[%s518 + $0xeb8] sm:$0xff]
        %v1137 = vld [vmem:[%s518 + $0xec0] sm:$0xff]
        %v1138 = vld [vmem:[%s518 + $0xec8] sm:$0xff]
        %v1139 = vld [vmem:[%s518 + $0xed0] sm:$0xff]
        %v1140 = vld [vmem:[%s518 + $0xed8] sm:$0xff]
        %v1141 = vld [vmem:[%s518 + $0xee0] sm:$0xff]
        %v1142 = vld [vmem:[%s518 + $0xee8] sm:$0xff]
        %v1143 = vld [vmem:[%s518 + $0xef0] sm:$0xff]
        %v1144 = vld [vmem:[%s518 + $0xef8] sm:$0xff]
        %v1145 = vld [vmem:[%s518 + $0xf00] sm:$0xff]
        %v1146 = vld [vmem:[%s518 + $0xf08] sm:$0xff]
        %v1147 = vld [vmem:[%s518 + $0xf10] sm:$0xff]
        %v1148 = vld [vmem:[%s518 + $0xf18] sm:$0xff]
        %v1149 = vld [vmem:[%s518 + $0xf20] sm:$0xff]
        %v1150 = vld [vmem:[%s518 + $0xf28] sm:$0xff]
        %v1151 = vld [vmem:[%s518 + $0xf30] sm:$0xff]
        %v1152 = vld [vmem:[%s518 + $0xf38] sm:$0xff]
        %v1153 = vld [vmem:[%s518 + $0xf40] sm:$0xff]
        %v1154 = vld [vmem:[%s518 + $0xf48] sm:$0xff]
        %v1155 = vld [vmem:[%s518 + $0xf50] sm:$0xff]
        %v1156 = vld [vmem:[%s518 + $0xf58] sm:$0xff]
        %v1157 = vld [vmem:[%s518 + $0xf60] sm:$0xff]
        %v1158 = vld [vmem:[%s518 + $0xf68] sm:$0xff]
        %v1159 = vld [vmem:[%s518 + $0xf70] sm:$0xff]
        %v1160 = vld [vmem:[%s518 + $0xf78] sm:$0xff]
        %v1161 = vld [vmem:[%s518 + $0xf80] sm:$0xff]
        %v1162 = vld [vmem:[%s518 + $0xf88] sm:$0xff]
        %v1163 = vld [vmem:[%s518 + $0xf90] sm:$0xff]
        %v1164 = vld [vmem:[%s518 + $0xf98] sm:$0xff]
        %v1165 = vld [vmem:[%s518 + $0xfa0] sm:$0xff]
        %v1166 = vld [vmem:[%s518 + $0xfa8] sm:$0xff]
        %v1167 = vld [vmem:[%s518 + $0xfb0] sm:$0xff]
        %v1168 = vld [vmem:[%s518 + $0xfb8] sm:$0xff]
        %v1169 = vld [vmem:[%s518 + $0xfc0] sm:$0xff]
        %v1170 = vld [vmem:[%s518 + $0xfc8] sm:$0xff]
        %v1171 = vld [vmem:[%s518 + $0xfd0] sm:$0xff]
        %v1172 = vld [vmem:[%s518 + $0xfd8] sm:$0xff]
        %v1173 = vld [vmem:[%s518 + $0xfe0] sm:$0xff]
        %v1174 = vld [vmem:[%s518 + $0xfe8] sm:$0xff]
        %v1175 = vld [vmem:[%s518 + $0xff0] sm:$0xff]
        %v1176 = vld [vmem:[%s518 + $0xff8] sm:$0xff]
        %v1177 = vld [vmem:[%s518 + $0x1000] sm:$0xff]
        %v1178 = vld [vmem:[%s518 + $0x1008] sm:$0xff]
        %v1179 = vld [vmem:[%s518 + $0x1010] sm:$0xff]
        %v1180 = vld [vmem:[%s518 + $0x1018] sm:$0xff]
        %v1181 = vld [vmem:[%s518 + $0x1020] sm:$0xff]
        %v1182 = vld [vmem:[%s518 + $0x1028] sm:$0xff]
        %v1183 = vld [vmem:[%s518 + $0x1030] sm:$0xff]
        %v1184 = vld [vmem:[%s518 + $0x1038] sm:$0xff]
        %v1185 = vld [vmem:[%s518 + $0x1040] sm:$0xff]
        %v1186 = vld [vmem:[%s518 + $0x1048] sm:$0xff]
        %v1187 = vld [vmem:[%s518 + $0x1050] sm:$0xff]
        %v1188 = vld [vmem:[%s518 + $0x1058] sm:$0xff]
        %v1189 = vld [vmem:[%s518 + $0x1060] sm:$0xff]
        %v1190 = vld [vmem:[%s518 + $0x1068] sm:$0xff]
        %v1191 = vld [vmem:[%s518 + $0x1070] sm:$0xff]
        %v1192 = vld [vmem:[%s518 + $0x1078] sm:$0xff]
        %v1193 = vld [vmem:[%s518 + $0x1080] sm:$0xff]
        %v1194 = vld [vmem:[%s518 + $0x1088] sm:$0xff]
        %v1195 = vld [vmem:[%s518 + $0x1090] sm:$0xff]
        %v1196 = vld [vmem:[%s518 + $0x1098] sm:$0xff]
        %v1197 = vld [vmem:[%s518 + $0x10a0] sm:$0xff]
        %v1198 = vld [vmem:[%s518 + $0x10a8] sm:$0xff]
        %v1199 = vld [vmem:[%s518 + $0x10b0] sm:$0xff]
        %v1200 = vld [vmem:[%s518 + $0x10b8] sm:$0xff]
        %v1201 = vld [vmem:[%s518 + $0x10c0] sm:$0xff]
        %v1202 = vld [vmem:[%s518 + $0x10c8] sm:$0xff]
        %v1203 = vld [vmem:[%s518 + $0x10d0] sm:$0xff]
        %v1204 = vld [vmem:[%s518 + $0x10d8] sm:$0xff]
        %v1205 = vld [vmem:[%s518 + $0x10e0] sm:$0xff]
        %v1206 = vld [vmem:[%s518 + $0x10e8] sm:$0xff]
        %v1207 = vld [vmem:[%s518 + $0x10f0] sm:$0xff]
        %v1208 = vld [vmem:[%s518 + $0x10f8] sm:$0xff]
        %v1209 = vld [vmem:[%s518 + $0x1100] sm:$0xff]
        %v1210 = vld [vmem:[%s518 + $0x1108] sm:$0xff]
        %v1211 = vld [vmem:[%s518 + $0x1110] sm:$0xff]
        %v1212 = vld [vmem:[%s518 + $0x1118] sm:$0xff]
        %v1213 = vld [vmem:[%s518 + $0x1120] sm:$0xff]
        %v1214 = vld [vmem:[%s518 + $0x1128] sm:$0xff]
        %v1215 = vld [vmem:[%s518 + $0x1130] sm:$0xff]
        %v1216 = vld [vmem:[%s518 + $0x1138] sm:$0xff]
        %v1217 = vld [vmem:[%s518 + $0x1140] sm:$0xff]
        %v1218 = vld [vmem:[%s518 + $0x1148] sm:$0xff]
        %v1219 = vld [vmem:[%s518 + $0x1150] sm:$0xff]
        %v1220 = vld [vmem:[%s518 + $0x1158] sm:$0xff]
        %v1221 = vld [vmem:[%s518 + $0x1160] sm:$0xff]
        %v1222 = vld [vmem:[%s518 + $0x1168] sm:$0xff]
        %v1223 = vld [vmem:[%s518 + $0x1170] sm:$0xff]
        %v1224 = vld [vmem:[%s518 + $0x1178] sm:$0xff]
        %v1225 = vld [vmem:[%s518 + $0x1180] sm:$0xff]
        %v1226 = vld [vmem:[%s518 + $0x1188] sm:$0xff]
        %v1227 = vld [vmem:[%s518 + $0x1190] sm:$0xff]
        %v1228 = vld [vmem:[%s518 + $0x1198] sm:$0xff]
        %v1229 = vld [vmem:[%s518 + $0x11a0] sm:$0xff]
        %v1230 = vld [vmem:[%s518 + $0x11a8] sm:$0xff]
        %v1231 = vld [vmem:[%s518 + $0x11b0] sm:$0xff]
        %v1232 = vld [vmem:[%s518 + $0x11b8] sm:$0xff]
        %v1233 = vld [vmem:[%s518 + $0x11c0] sm:$0xff]
        %v1234 = vld [vmem:[%s518 + $0x11c8] sm:$0xff]
        %v1235 = vld [vmem:[%s518 + $0x11d0] sm:$0xff]
        %v1236 = vld [vmem:[%s518 + $0x11d8] sm:$0xff]
        %v1237 = vld [vmem:[%s518 + $0x11e0] sm:$0xff]
        %v1238 = vld [vmem:[%s518 + $0x11e8] sm:$0xff]
        %v1239 = vld [vmem:[%s518 + $0x11f0] sm:$0xff]
        %v1240 = vld [vmem:[%s518 + $0x11f8] sm:$0xff]
        %v1241 = vld [vmem:[%s518 + $0x1200] sm:$0xff]
        %v1242 = vld [vmem:[%s518 + $0x1208] sm:$0xff]
        %v1243 = vld [vmem:[%s518 + $0x1210] sm:$0xff]
        %v1244 = vld [vmem:[%s518 + $0x1218] sm:$0xff]
        %v1245 = vld [vmem:[%s518 + $0x1220] sm:$0xff]
        %v1246 = vld [vmem:[%s518 + $0x1228] sm:$0xff]
        %v1247 = vld [vmem:[%s518 + $0x1230] sm:$0xff]
        %v1248 = vld [vmem:[%s518 + $0x1238] sm:$0xff]
        %v1249 = vld [vmem:[%s518 + $0x1240] sm:$0xff]
        %v1250 = vld [vmem:[%s518 + $0x1248] sm:$0xff]
        %v1251 = vld [vmem:[%s518 + $0x1250] sm:$0xff]
        %v1252 = vld [vmem:[%s518 + $0x1258] sm:$0xff]
        %v1253 = vld [vmem:[%s518 + $0x1260] sm:$0xff]
        %v1254 = vld [vmem:[%s518 + $0x1268] sm:$0xff]
        %v1255 = vld [vmem:[%s518 + $0x1270] sm:$0xff]
        %v1256 = vld [vmem:[%s518 + $0x1278] sm:$0xff]
        %v1257 = vld [vmem:[%s518 + $0x1280] sm:$0xff]
        %v1258 = vld [vmem:[%s518 + $0x1288] sm:$0xff]
        %v1259 = vld [vmem:[%s518 + $0x1290] sm:$0xff]
        %v1260 = vld [vmem:[%s518 + $0x1298] sm:$0xff]
        %v1261 = vld [vmem:[%s518 + $0x12a0] sm:$0xff]
        %v1262 = vld [vmem:[%s518 + $0x12a8] sm:$0xff]
        %v1263 = vld [vmem:[%s518 + $0x12b0] sm:$0xff]
        %v1264 = vld [vmem:[%s518 + $0x12b8] sm:$0xff]
        %v1265 = vld [vmem:[%s518 + $0x12c0] sm:$0xff]
        %v1266 = vld [vmem:[%s518 + $0x12c8] sm:$0xff]
        %v1267 = vld [vmem:[%s518 + $0x12d0] sm:$0xff]
        %v1268 = vld [vmem:[%s518 + $0x12d8] sm:$0xff]
        %v1269 = vld [vmem:[%s518 + $0x12e0] sm:$0xff]
        %v1270 = vld [vmem:[%s518 + $0x12e8] sm:$0xff]
        %v1271 = vld [vmem:[%s518 + $0x12f0] sm:$0xff]
        %v1272 = vld [vmem:[%s518 + $0x12f8] sm:$0xff]
        %v1273 = vld [vmem:[%s518 + $0x1300] sm:$0xff]
        %v1274 = vld [vmem:[%s518 + $0x1308] sm:$0xff]
        %v1275 = vld [vmem:[%s518 + $0x1310] sm:$0xff]
        %v1276 = vld [vmem:[%s518 + $0x1318] sm:$0xff]
        %v1277 = vld [vmem:[%s518 + $0x1320] sm:$0xff]
        %v1278 = vld [vmem:[%s518 + $0x1328] sm:$0xff]
        %v1279 = vld [vmem:[%s518 + $0x1330] sm:$0xff]
        %v1280 = vld [vmem:[%s518 + $0x1338] sm:$0xff]
        %v1281 = vld [vmem:[%s518 + $0x1340] sm:$0xff]
        %v1282 = vld [vmem:[%s518 + $0x1348] sm:$0xff]
        %v1283 = vld [vmem:[%s518 + $0x1350] sm:$0xff]
        %v1284 = vld [vmem:[%s518 + $0x1358] sm:$0xff]
        %v1285 = vld [vmem:[%s518 + $0x1360] sm:$0xff]
        %v1286 = vld [vmem:[%s518 + $0x1368] sm:$0xff]
        %v1287 = vld [vmem:[%s518 + $0x1370] sm:$0xff]
        %v1288 = vld [vmem:[%s518 + $0x1378] sm:$0xff]
        %v1289 = vld [vmem:[%s518 + $0x1380] sm:$0xff]
        %v1290 = vld [vmem:[%s518 + $0x1388] sm:$0xff]
        %v1291 = vld [vmem:[%s518 + $0x1390] sm:$0xff]
        %v1292 = vld [vmem:[%s518 + $0x1398] sm:$0xff]
        %v1293 = vld [vmem:[%s518 + $0x13a0] sm:$0xff]
        %v1294 = vld [vmem:[%s518 + $0x13a8] sm:$0xff]
        %v1295 = vld [vmem:[%s518 + $0x13b0] sm:$0xff]
        %v1296 = vld [vmem:[%s518 + $0x13b8] sm:$0xff]
        %v1297 = vld [vmem:[%s518 + $0x13c0] sm:$0xff]
        %v1298 = vld [vmem:[%s518 + $0x13c8] sm:$0xff]
        %v1299 = vld [vmem:[%s518 + $0x13d0] sm:$0xff]
        %v1300 = vld [vmem:[%s518 + $0x13d8] sm:$0xff]
        %v1301 = vld [vmem:[%s518 + $0x13e0] sm:$0xff]
        %v1302 = vld [vmem:[%s518 + $0x13e8] sm:$0xff]
        %v1303 = vld [vmem:[%s518 + $0x13f0] sm:$0xff]
        %v1304 = vld [vmem:[%s518 + $0x13f8] sm:$0xff]
        %v1305 = vld [vmem:[%s518 + $0x1400] sm:$0xff]
        %v1306 = vld [vmem:[%s518 + $0x1408] sm:$0xff]
        %v1307 = vld [vmem:[%s518 + $0x1410] sm:$0xff]
        %v1308 = vld [vmem:[%s518 + $0x1418] sm:$0xff]
        %v1309 = vld [vmem:[%s518 + $0x1420] sm:$0xff]
        %v1310 = vld [vmem:[%s518 + $0x1428] sm:$0xff]
        %v1311 = vld [vmem:[%s518 + $0x1430] sm:$0xff]
        %v1312 = vld [vmem:[%s518 + $0x1438] sm:$0xff]
        %v1313 = vld [vmem:[%s518 + $0x1440] sm:$0xff]
        %v1314 = vld [vmem:[%s518 + $0x1448] sm:$0xff]
        %v1315 = vld [vmem:[%s518 + $0x1450] sm:$0xff]
        %v1316 = vld [vmem:[%s518 + $0x1458] sm:$0xff]
        %v1317 = vld [vmem:[%s518 + $0x1460] sm:$0xff]
        %v1318 = vld [vmem:[%s518 + $0x1468] sm:$0xff]
        %v1319 = vld [vmem:[%s518 + $0x1470] sm:$0xff]
        %v1320 = vld [vmem:[%s518 + $0x1478] sm:$0xff]
        %v1321 = vld [vmem:[%s518 + $0x1480] sm:$0xff]
        %v1322 = vld [vmem:[%s518 + $0x1488] sm:$0xff]
        %v1323 = vld [vmem:[%s518 + $0x1490] sm:$0xff]
        %v1324 = vld [vmem:[%s518 + $0x1498] sm:$0xff]
        %v1325 = vld [vmem:[%s518 + $0x14a0] sm:$0xff]
        %v1326 = vld [vmem:[%s518 + $0x14a8] sm:$0xff]
        %v1327 = vld [vmem:[%s518 + $0x14b0] sm:$0xff]
        %v1328 = vld [vmem:[%s518 + $0x14b8] sm:$0xff]
        %v1329 = vld [vmem:[%s518 + $0x14c0] sm:$0xff]
        %v1330 = vld [vmem:[%s518 + $0x14c8] sm:$0xff]
        %v1331 = vld [vmem:[%s518 + $0x14d0] sm:$0xff]
        %v1332 = vld [vmem:[%s518 + $0x14d8] sm:$0xff]
        %v1333 = vld [vmem:[%s518 + $0x14e0] sm:$0xff]
        %v1334 = vld [vmem:[%s518 + $0x14e8] sm:$0xff]
        %v1335 = vld [vmem:[%s518 + $0x14f0] sm:$0xff]
        %v1336 = vld [vmem:[%s518 + $0x14f8] sm:$0xff]
        %v1337 = vld [vmem:[%s518 + $0x1500] sm:$0xff]
        %v1338 = vld [vmem:[%s518 + $0x1508] sm:$0xff]
        %v1339 = vld [vmem:[%s518 + $0x1510] sm:$0xff]
        %v1340 = vld [vmem:[%s518 + $0x1518] sm:$0xff]
        %v1341 = vld [vmem:[%s518 + $0x1520] sm:$0xff]
        %v1342 = vld [vmem:[%s518 + $0x1528] sm:$0xff]
        %v1343 = vld [vmem:[%s518 + $0x1530] sm:$0xff]
        %v1344 = vld [vmem:[%s518 + $0x1538] sm:$0xff]
        %v1345 = vld [vmem:[%s518 + $0x1540] sm:$0xff]
        %v1346 = vld [vmem:[%s518 + $0x1548] sm:$0xff]
        %v1347 = vld [vmem:[%s518 + $0x1550] sm:$0xff]
        %v1348 = vld [vmem:[%s518 + $0x1558] sm:$0xff]
        %v1349 = vld [vmem:[%s518 + $0x1560] sm:$0xff]
        %v1350 = vld [vmem:[%s518 + $0x1568] sm:$0xff]
        %v1351 = vld [vmem:[%s518 + $0x1570] sm:$0xff]
        %v1352 = vld [vmem:[%s518 + $0x1578] sm:$0xff]
        %v1353 = vld [vmem:[%s518 + $0x1580] sm:$0xff]
        %v1354 = vld [vmem:[%s518 + $0x1588] sm:$0xff]
        %v1355 = vld [vmem:[%s518 + $0x1590] sm:$0xff]
        %v1356 = vld [vmem:[%s518 + $0x1598] sm:$0xff]
        %v1357 = vld [vmem:[%s518 + $0x15a0] sm:$0xff]
        %v1358 = vld [vmem:[%s518 + $0x15a8] sm:$0xff]
        %v1359 = vld [vmem:[%s518 + $0x15b0] sm:$0xff]
        %v1360 = vld [vmem:[%s518 + $0x15b8] sm:$0xff]
        %v1361 = vld [vmem:[%s518 + $0x15c0] sm:$0xff]
        %v1362 = vld [vmem:[%s518 + $0x15c8] sm:$0xff]
        %v1363 = vld [vmem:[%s518 + $0x15d0] sm:$0xff]
        %v1364 = vld [vmem:[%s518 + $0x15d8] sm:$0xff]
        %v1365 = vld [vmem:[%s518 + $0x15e0] sm:$0xff]
        %v1366 = vld [vmem:[%s518 + $0x15e8] sm:$0xff]
        %v1367 = vld [vmem:[%s518 + $0x15f0] sm:$0xff]
        %v1368 = vld [vmem:[%s518 + $0x15f8] sm:$0xff]
        %v1369 = vld [vmem:[%s518 + $0x1600] sm:$0xff]
        %v1370 = vld [vmem:[%s518 + $0x1608] sm:$0xff]
        %v1371 = vld [vmem:[%s518 + $0x1610] sm:$0xff]
        %v1372 = vld [vmem:[%s518 + $0x1618] sm:$0xff]
        %v1373 = vld [vmem:[%s518 + $0x1620] sm:$0xff]
        %v1374 = vld [vmem:[%s518 + $0x1628] sm:$0xff]
        %v1375 = vld [vmem:[%s518 + $0x1630] sm:$0xff]
        %v1376 = vld [vmem:[%s518 + $0x1638] sm:$0xff]
        %v1377 = vld [vmem:[%s518 + $0x1640] sm:$0xff]
        %v1378 = vld [vmem:[%s518 + $0x1648] sm:$0xff]
        %v1379 = vld [vmem:[%s518 + $0x1650] sm:$0xff]
        %v1380 = vld [vmem:[%s518 + $0x1658] sm:$0xff]
        %v1381 = vld [vmem:[%s518 + $0x1660] sm:$0xff]
        %v1382 = vld [vmem:[%s518 + $0x1668] sm:$0xff]
        %v1383 = vld [vmem:[%s518 + $0x1670] sm:$0xff]
        %v1384 = vld [vmem:[%s518 + $0x1678] sm:$0xff]
        %v1385 = vld [vmem:[%s518 + $0x1680] sm:$0xff]
        %v1386 = vld [vmem:[%s518 + $0x1688] sm:$0xff]
        %v1387 = vld [vmem:[%s518 + $0x1690] sm:$0xff]
        %v1388 = vld [vmem:[%s518 + $0x1698] sm:$0xff]
        %v1389 = vld [vmem:[%s518 + $0x16a0] sm:$0xff]
        %v1390 = vld [vmem:[%s518 + $0x16a8] sm:$0xff]
        %v1391 = vld [vmem:[%s518 + $0x16b0] sm:$0xff]
        %v1392 = vld [vmem:[%s518 + $0x16b8] sm:$0xff]
        %v1393 = vld [vmem:[%s518 + $0x16c0] sm:$0xff]
        %v1394 = vld [vmem:[%s518 + $0x16c8] sm:$0xff]
        %v1395 = vld [vmem:[%s518 + $0x16d0] sm:$0xff]
        %v1396 = vld [vmem:[%s518 + $0x16d8] sm:$0xff]
        %v1397 = vld [vmem:[%s518 + $0x16e0] sm:$0xff]
        %v1398 = vld [vmem:[%s518 + $0x16e8] sm:$0xff]
        %v1399 = vld [vmem:[%s518 + $0x16f0] sm:$0xff]
        %v1400 = vld [vmem:[%s518 + $0x16f8] sm:$0xff]
        %v1401 = vld [vmem:[%s518 + $0x1700] sm:$0xff]
        %v1402 = vld [vmem:[%s518 + $0x1708] sm:$0xff]
        %v1403 = vld [vmem:[%s518 + $0x1710] sm:$0xff]
        %v1404 = vld [vmem:[%s518 + $0x1718] sm:$0xff]
        %v1405 = vld [vmem:[%s518 + $0x1720] sm:$0xff]
        %v1406 = vld [vmem:[%s518 + $0x1728] sm:$0xff]
        %v1407 = vld [vmem:[%s518 + $0x1730] sm:$0xff]
        %v1408 = vld [vmem:[%s518 + $0x1738] sm:$0xff]
        %v1409 = vld [vmem:[%s518 + $0x1740] sm:$0xff]
        %v1410 = vld [vmem:[%s518 + $0x1748] sm:$0xff]
        %v1411 = vld [vmem:[%s518 + $0x1750] sm:$0xff]
        %v1412 = vld [vmem:[%s518 + $0x1758] sm:$0xff]
        %v1413 = vld [vmem:[%s518 + $0x1760] sm:$0xff]
        %v1414 = vld [vmem:[%s518 + $0x1768] sm:$0xff]
        %v1415 = vld [vmem:[%s518 + $0x1770] sm:$0xff]
        %v1416 = vld [vmem:[%s518 + $0x1778] sm:$0xff]
        %v1417 = vld [vmem:[%s518 + $0x1780] sm:$0xff]
        %v1418 = vld [vmem:[%s518 + $0x1788] sm:$0xff]
        %v1419 = vld [vmem:[%s518 + $0x1790] sm:$0xff]
        %v1420 = vld [vmem:[%s518 + $0x1798] sm:$0xff]
        %v1421 = vld [vmem:[%s518 + $0x17a0] sm:$0xff]
        %v1422 = vld [vmem:[%s518 + $0x17a8] sm:$0xff]
        %v1423 = vld [vmem:[%s518 + $0x17b0] sm:$0xff]
        %v1424 = vld [vmem:[%s518 + $0x17b8] sm:$0xff]
        %v1425 = vld [vmem:[%s518 + $0x17c0] sm:$0xff]
        %v1426 = vld [vmem:[%s518 + $0x17c8] sm:$0xff]
        %v1427 = vld [vmem:[%s518 + $0x17d0] sm:$0xff]
        %v1428 = vld [vmem:[%s518 + $0x17d8] sm:$0xff]
        %v1429 = vld [vmem:[%s518 + $0x17e0] sm:$0xff]
        %v1430 = vld [vmem:[%s518 + $0x17e8] sm:$0xff]
        %v1431 = vld [vmem:[%s518 + $0x17f0] sm:$0xff]
        %v1432 = vld [vmem:[%s518 + $0x17f8] sm:$0xff]
        %v1433 = vunpack.c.l.s8.bf16 %v665
        %v1434 = vunpack.c.l.s8.bf16 %v666
        %v1435 = vunpack.c.l.s8.bf16 %v667
        %v1436 = vunpack.c.l.s8.bf16 %v668
        %v1437 = vunpack.c.h.s8.bf16 %v665
        %v1438 = vunpack.c.h.s8.bf16 %v666
        %v1439 = vunpack.c.h.s8.bf16 %v667
        %v1440 = vunpack.c.h.s8.bf16 %v668
        %v1441 = vunpack.c.l.s8.bf16 %v669
        %v1442 = vunpack.c.l.s8.bf16 %v670
        %v1443 = vunpack.c.l.s8.bf16 %v671
        %v1444 = vunpack.c.l.s8.bf16 %v672
        %v1445 = vunpack.c.h.s8.bf16 %v669
        %v1446 = vunpack.c.h.s8.bf16 %v670
        %v1447 = vunpack.c.h.s8.bf16 %v671
        %v1448 = vunpack.c.h.s8.bf16 %v672
        %v1449 = vunpack.c.l.s8.bf16 %v673
        %v1450 = vunpack.c.l.s8.bf16 %v674
        %v1451 = vunpack.c.l.s8.bf16 %v675
        %v1452 = vunpack.c.l.s8.bf16 %v676
        %v1453 = vunpack.c.h.s8.bf16 %v673
        %v1454 = vunpack.c.h.s8.bf16 %v674
        %v1455 = vunpack.c.h.s8.bf16 %v675
        %v1456 = vunpack.c.h.s8.bf16 %v676
        %v1457 = vunpack.c.l.s8.bf16 %v677
        %v1458 = vunpack.c.l.s8.bf16 %v678
        %v1459 = vunpack.c.l.s8.bf16 %v679
        %v1460 = vunpack.c.l.s8.bf16 %v680
        %v1461 = vunpack.c.h.s8.bf16 %v677
        %v1462 = vunpack.c.h.s8.bf16 %v678
        %v1463 = vunpack.c.h.s8.bf16 %v679
        %v1464 = vunpack.c.h.s8.bf16 %v680
        %v1465 = vunpack.c.l.s8.bf16 %v681
        %v1466 = vunpack.c.l.s8.bf16 %v682
        %v1467 = vunpack.c.l.s8.bf16 %v683
        %v1468 = vunpack.c.l.s8.bf16 %v684
        %v1469 = vunpack.c.h.s8.bf16 %v681
        %v1470 = vunpack.c.h.s8.bf16 %v682
        %v1471 = vunpack.c.h.s8.bf16 %v683
        %v1472 = vunpack.c.h.s8.bf16 %v684
        %v1473 = vunpack.c.l.s8.bf16 %v685
        %v1474 = vunpack.c.l.s8.bf16 %v686
        %v1475 = vunpack.c.l.s8.bf16 %v687
        %v1476 = vunpack.c.l.s8.bf16 %v688
        %v1477 = vunpack.c.h.s8.bf16 %v685
        %v1478 = vunpack.c.h.s8.bf16 %v686
        %v1479 = vunpack.c.h.s8.bf16 %v687
        %v1480 = vunpack.c.h.s8.bf16 %v688
        %v1481 = vunpack.c.l.s8.bf16 %v689
        %v1482 = vunpack.c.l.s8.bf16 %v690
        %v1483 = vunpack.c.l.s8.bf16 %v691
        %v1484 = vunpack.c.l.s8.bf16 %v692
        %v1485 = vunpack.c.h.s8.bf16 %v689
        %v1486 = vunpack.c.h.s8.bf16 %v690
        %v1487 = vunpack.c.h.s8.bf16 %v691
        %v1488 = vunpack.c.h.s8.bf16 %v692
        %v1489 = vunpack.c.l.s8.bf16 %v693
        %v1490 = vunpack.c.l.s8.bf16 %v694
        %v1491 = vunpack.c.l.s8.bf16 %v695
        %v1492 = vunpack.c.l.s8.bf16 %v696
        %v1493 = vunpack.c.h.s8.bf16 %v693
        %v1494 = vunpack.c.h.s8.bf16 %v694
        %v1495 = vunpack.c.h.s8.bf16 %v695
        %v1496 = vunpack.c.h.s8.bf16 %v696
        %v1497 = vunpack.c.l.s8.bf16 %v697
        %v1498 = vunpack.c.l.s8.bf16 %v698
        %v1499 = vunpack.c.l.s8.bf16 %v699
        %v1500 = vunpack.c.l.s8.bf16 %v700
        %v1501 = vunpack.c.h.s8.bf16 %v697
        %v1502 = vunpack.c.h.s8.bf16 %v698
        %v1503 = vunpack.c.h.s8.bf16 %v699
        %v1504 = vunpack.c.h.s8.bf16 %v700
        %v1505 = vunpack.c.l.s8.bf16 %v701
        %v1506 = vunpack.c.l.s8.bf16 %v702
        %v1507 = vunpack.c.l.s8.bf16 %v703
        %v1508 = vunpack.c.l.s8.bf16 %v704
        %v1509 = vunpack.c.h.s8.bf16 %v701
        %v1510 = vunpack.c.h.s8.bf16 %v702
        %v1511 = vunpack.c.h.s8.bf16 %v703
        %v1512 = vunpack.c.h.s8.bf16 %v704
        %v1513 = vunpack.c.l.s8.bf16 %v705
        %v1514 = vunpack.c.l.s8.bf16 %v706
        %v1515 = vunpack.c.l.s8.bf16 %v707
        %v1516 = vunpack.c.l.s8.bf16 %v708
        %v1517 = vunpack.c.h.s8.bf16 %v705
        %v1518 = vunpack.c.h.s8.bf16 %v706
        %v1519 = vunpack.c.h.s8.bf16 %v707
        %v1520 = vunpack.c.h.s8.bf16 %v708
        %v1521 = vunpack.c.l.s8.bf16 %v709
        %v1522 = vunpack.c.l.s8.bf16 %v710
        %v1523 = vunpack.c.l.s8.bf16 %v711
        %v1524 = vunpack.c.l.s8.bf16 %v712
        %v1525 = vunpack.c.h.s8.bf16 %v709
        %v1526 = vunpack.c.h.s8.bf16 %v710
        %v1527 = vunpack.c.h.s8.bf16 %v711
        %v1528 = vunpack.c.h.s8.bf16 %v712
        %v1529 = vunpack.c.l.s8.bf16 %v713
        %v1530 = vunpack.c.l.s8.bf16 %v714
        %v1531 = vunpack.c.l.s8.bf16 %v715
        %v1532 = vunpack.c.l.s8.bf16 %v716
        %v1533 = vunpack.c.h.s8.bf16 %v713
        %v1534 = vunpack.c.h.s8.bf16 %v714
        %v1535 = vunpack.c.h.s8.bf16 %v715
        %v1536 = vunpack.c.h.s8.bf16 %v716
        %v1537 = vunpack.c.l.s8.bf16 %v717
        %v1538 = vunpack.c.l.s8.bf16 %v718
        %v1539 = vunpack.c.l.s8.bf16 %v719
        %v1540 = vunpack.c.l.s8.bf16 %v720
        %v1541 = vunpack.c.h.s8.bf16 %v717
        %v1542 = vunpack.c.h.s8.bf16 %v718
        %v1543 = vunpack.c.h.s8.bf16 %v719
        %v1544 = vunpack.c.h.s8.bf16 %v720
        %v1545 = vunpack.c.l.s8.bf16 %v721
        %v1546 = vunpack.c.l.s8.bf16 %v722
        %v1547 = vunpack.c.l.s8.bf16 %v723
        %v1548 = vunpack.c.l.s8.bf16 %v724
        %v1549 = vunpack.c.h.s8.bf16 %v721
        %v1550 = vunpack.c.h.s8.bf16 %v722
        %v1551 = vunpack.c.h.s8.bf16 %v723
        %v1552 = vunpack.c.h.s8.bf16 %v724
        %v1553 = vunpack.c.l.s8.bf16 %v725
        %v1554 = vunpack.c.l.s8.bf16 %v726
        %v1555 = vunpack.c.l.s8.bf16 %v727
        %v1556 = vunpack.c.l.s8.bf16 %v728
        %v1557 = vunpack.c.h.s8.bf16 %v725
        %v1558 = vunpack.c.h.s8.bf16 %v726
        %v1559 = vunpack.c.h.s8.bf16 %v727
        %v1560 = vunpack.c.h.s8.bf16 %v728
        %v1561 = vunpack.c.l.s8.bf16 %v729
        %v1562 = vunpack.c.l.s8.bf16 %v730
        %v1563 = vunpack.c.l.s8.bf16 %v731
        %v1564 = vunpack.c.l.s8.bf16 %v732
        %v1565 = vunpack.c.h.s8.bf16 %v729
        %v1566 = vunpack.c.h.s8.bf16 %v730
        %v1567 = vunpack.c.h.s8.bf16 %v731
        %v1568 = vunpack.c.h.s8.bf16 %v732
        %v1569 = vunpack.c.l.s8.bf16 %v733
        %v1570 = vunpack.c.l.s8.bf16 %v734
        %v1571 = vunpack.c.l.s8.bf16 %v735
        %v1572 = vunpack.c.l.s8.bf16 %v736
        %v1573 = vunpack.c.h.s8.bf16 %v733
        %v1574 = vunpack.c.h.s8.bf16 %v734
        %v1575 = vunpack.c.h.s8.bf16 %v735
        %v1576 = vunpack.c.h.s8.bf16 %v736
        %v1577 = vunpack.c.l.s8.bf16 %v737
        %v1578 = vunpack.c.l.s8.bf16 %v738
        %v1579 = vunpack.c.l.s8.bf16 %v739
        %v1580 = vunpack.c.l.s8.bf16 %v740
        %v1581 = vunpack.c.h.s8.bf16 %v737
        %v1582 = vunpack.c.h.s8.bf16 %v738
        %v1583 = vunpack.c.h.s8.bf16 %v739
        %v1584 = vunpack.c.h.s8.bf16 %v740
        %v1585 = vunpack.c.l.s8.bf16 %v741
        %v1586 = vunpack.c.l.s8.bf16 %v742
        %v1587 = vunpack.c.l.s8.bf16 %v743
        %v1588 = vunpack.c.l.s8.bf16 %v744
        %v1589 = vunpack.c.h.s8.bf16 %v741
        %v1590 = vunpack.c.h.s8.bf16 %v742
        %v1591 = vunpack.c.h.s8.bf16 %v743
        %v1592 = vunpack.c.h.s8.bf16 %v744
        %v1593 = vunpack.c.l.s8.bf16 %v745
        %v1594 = vunpack.c.l.s8.bf16 %v746
        %v1595 = vunpack.c.l.s8.bf16 %v747
        %v1596 = vunpack.c.l.s8.bf16 %v748
        %v1597 = vunpack.c.h.s8.bf16 %v745
        %v1598 = vunpack.c.h.s8.bf16 %v746
        %v1599 = vunpack.c.h.s8.bf16 %v747
        %v1600 = vunpack.c.h.s8.bf16 %v748
        %v1601 = vunpack.c.l.s8.bf16 %v749
        %v1602 = vunpack.c.l.s8.bf16 %v750
        %v1603 = vunpack.c.l.s8.bf16 %v751
        %v1604 = vunpack.c.l.s8.bf16 %v752
        %v1605 = vunpack.c.h.s8.bf16 %v749
        %v1606 = vunpack.c.h.s8.bf16 %v750
        %v1607 = vunpack.c.h.s8.bf16 %v751
        %v1608 = vunpack.c.h.s8.bf16 %v752
        %v1609 = vunpack.c.l.s8.bf16 %v753
        %v1610 = vunpack.c.l.s8.bf16 %v754
        %v1611 = vunpack.c.l.s8.bf16 %v755
        %v1612 = vunpack.c.l.s8.bf16 %v756
        %v1613 = vunpack.c.h.s8.bf16 %v753
        %v1614 = vunpack.c.h.s8.bf16 %v754
        %v1615 = vunpack.c.h.s8.bf16 %v755
        %v1616 = vunpack.c.h.s8.bf16 %v756
        %v1617 = vunpack.c.l.s8.bf16 %v757
        %v1618 = vunpack.c.l.s8.bf16 %v758
        %v1619 = vunpack.c.l.s8.bf16 %v759
        %v1620 = vunpack.c.l.s8.bf16 %v760
        %v1621 = vunpack.c.h.s8.bf16 %v757
        %v1622 = vunpack.c.h.s8.bf16 %v758
        %v1623 = vunpack.c.h.s8.bf16 %v759
        %v1624 = vunpack.c.h.s8.bf16 %v760
        %v1625 = vunpack.c.l.s8.bf16 %v761
        %v1626 = vunpack.c.l.s8.bf16 %v762
        %v1627 = vunpack.c.l.s8.bf16 %v763
        %v1628 = vunpack.c.l.s8.bf16 %v764
        %v1629 = vunpack.c.h.s8.bf16 %v761
        %v1630 = vunpack.c.h.s8.bf16 %v762
        %v1631 = vunpack.c.h.s8.bf16 %v763
        %v1632 = vunpack.c.h.s8.bf16 %v764
        %v1633 = vunpack.c.l.s8.bf16 %v765
        %v1634 = vunpack.c.l.s8.bf16 %v766
        %v1635 = vunpack.c.l.s8.bf16 %v767
        %v1636 = vunpack.c.l.s8.bf16 %v768
        %v1637 = vunpack.c.h.s8.bf16 %v765
        %v1638 = vunpack.c.h.s8.bf16 %v766
        %v1639 = vunpack.c.h.s8.bf16 %v767
        %v1640 = vunpack.c.h.s8.bf16 %v768
        %v1641 = vunpack.c.l.s8.bf16 %v769
        %v1642 = vunpack.c.l.s8.bf16 %v770
        %v1643 = vunpack.c.l.s8.bf16 %v771
        %v1644 = vunpack.c.l.s8.bf16 %v772
        %v1645 = vunpack.c.h.s8.bf16 %v769
        %v1646 = vunpack.c.h.s8.bf16 %v770
        %v1647 = vunpack.c.h.s8.bf16 %v771
        %v1648 = vunpack.c.h.s8.bf16 %v772
        %v1649 = vunpack.c.l.s8.bf16 %v773
        %v1650 = vunpack.c.l.s8.bf16 %v774
        %v1651 = vunpack.c.l.s8.bf16 %v775
        %v1652 = vunpack.c.l.s8.bf16 %v776
        %v1653 = vunpack.c.h.s8.bf16 %v773
        %v1654 = vunpack.c.h.s8.bf16 %v774
        %v1655 = vunpack.c.h.s8.bf16 %v775
        %v1656 = vunpack.c.h.s8.bf16 %v776
        %v1657 = vunpack.c.l.s8.bf16 %v777
        %v1658 = vunpack.c.l.s8.bf16 %v778
        %v1659 = vunpack.c.l.s8.bf16 %v779
        %v1660 = vunpack.c.l.s8.bf16 %v780
        %v1661 = vunpack.c.h.s8.bf16 %v777
        %v1662 = vunpack.c.h.s8.bf16 %v778
        %v1663 = vunpack.c.h.s8.bf16 %v779
        %v1664 = vunpack.c.h.s8.bf16 %v780
        %v1665 = vunpack.c.l.s8.bf16 %v781
        %v1666 = vunpack.c.l.s8.bf16 %v782
        %v1667 = vunpack.c.l.s8.bf16 %v783
        %v1668 = vunpack.c.l.s8.bf16 %v784
        %v1669 = vunpack.c.h.s8.bf16 %v781
        %v1670 = vunpack.c.h.s8.bf16 %v782
        %v1671 = vunpack.c.h.s8.bf16 %v783
        %v1672 = vunpack.c.h.s8.bf16 %v784
        %v1673 = vunpack.c.l.s8.bf16 %v785
        %v1674 = vunpack.c.l.s8.bf16 %v786
        %v1675 = vunpack.c.l.s8.bf16 %v787
        %v1676 = vunpack.c.l.s8.bf16 %v788
        %v1677 = vunpack.c.h.s8.bf16 %v785
        %v1678 = vunpack.c.h.s8.bf16 %v786
        %v1679 = vunpack.c.h.s8.bf16 %v787
        %v1680 = vunpack.c.h.s8.bf16 %v788
        %v1681 = vunpack.c.l.s8.bf16 %v789
        %v1682 = vunpack.c.l.s8.bf16 %v790
        %v1683 = vunpack.c.l.s8.bf16 %v791
        %v1684 = vunpack.c.l.s8.bf16 %v792
        %v1685 = vunpack.c.h.s8.bf16 %v789
        %v1686 = vunpack.c.h.s8.bf16 %v790
        %v1687 = vunpack.c.h.s8.bf16 %v791
        %v1688 = vunpack.c.h.s8.bf16 %v792
        %v1689 = vunpack.c.l.s8.bf16 %v793
        %v1690 = vunpack.c.l.s8.bf16 %v794
        %v1691 = vunpack.c.l.s8.bf16 %v795
        %v1692 = vunpack.c.l.s8.bf16 %v796
        %v1693 = vunpack.c.h.s8.bf16 %v793
        %v1694 = vunpack.c.h.s8.bf16 %v794
        %v1695 = vunpack.c.h.s8.bf16 %v795
        %v1696 = vunpack.c.h.s8.bf16 %v796
        %v1697 = vunpack.c.l.s8.bf16 %v797
        %v1698 = vunpack.c.l.s8.bf16 %v798
        %v1699 = vunpack.c.l.s8.bf16 %v799
        %v1700 = vunpack.c.l.s8.bf16 %v800
        %v1701 = vunpack.c.h.s8.bf16 %v797
        %v1702 = vunpack.c.h.s8.bf16 %v798
        %v1703 = vunpack.c.h.s8.bf16 %v799
        %v1704 = vunpack.c.h.s8.bf16 %v800
        %v1705 = vunpack.c.l.s8.bf16 %v801
        %v1706 = vunpack.c.l.s8.bf16 %v802
        %v1707 = vunpack.c.l.s8.bf16 %v803
        %v1708 = vunpack.c.l.s8.bf16 %v804
        %v1709 = vunpack.c.h.s8.bf16 %v801
        %v1710 = vunpack.c.h.s8.bf16 %v802
        %v1711 = vunpack.c.h.s8.bf16 %v803
        %v1712 = vunpack.c.h.s8.bf16 %v804
        %v1713 = vunpack.c.l.s8.bf16 %v805
        %v1714 = vunpack.c.l.s8.bf16 %v806
        %v1715 = vunpack.c.l.s8.bf16 %v807
        %v1716 = vunpack.c.l.s8.bf16 %v808
        %v1717 = vunpack.c.h.s8.bf16 %v805
        %v1718 = vunpack.c.h.s8.bf16 %v806
        %v1719 = vunpack.c.h.s8.bf16 %v807
        %v1720 = vunpack.c.h.s8.bf16 %v808
        %v1721 = vunpack.c.l.s8.bf16 %v809
        %v1722 = vunpack.c.l.s8.bf16 %v810
        %v1723 = vunpack.c.l.s8.bf16 %v811
        %v1724 = vunpack.c.l.s8.bf16 %v812
        %v1725 = vunpack.c.h.s8.bf16 %v809
        %v1726 = vunpack.c.h.s8.bf16 %v810
        %v1727 = vunpack.c.h.s8.bf16 %v811
        %v1728 = vunpack.c.h.s8.bf16 %v812
        %v1729 = vunpack.c.l.s8.bf16 %v813
        %v1730 = vunpack.c.l.s8.bf16 %v814
        %v1731 = vunpack.c.l.s8.bf16 %v815
        %v1732 = vunpack.c.l.s8.bf16 %v816
        %v1733 = vunpack.c.h.s8.bf16 %v813
        %v1734 = vunpack.c.h.s8.bf16 %v814
        %v1735 = vunpack.c.h.s8.bf16 %v815
        %v1736 = vunpack.c.h.s8.bf16 %v816
        %v1737 = vunpack.c.l.s8.bf16 %v817
        %v1738 = vunpack.c.l.s8.bf16 %v818
        %v1739 = vunpack.c.l.s8.bf16 %v819
        %v1740 = vunpack.c.l.s8.bf16 %v820
        %v1741 = vunpack.c.h.s8.bf16 %v817
        %v1742 = vunpack.c.h.s8.bf16 %v818
        %v1743 = vunpack.c.h.s8.bf16 %v819
        %v1744 = vunpack.c.h.s8.bf16 %v820
        %v1745 = vunpack.c.l.s8.bf16 %v821
        %v1746 = vunpack.c.l.s8.bf16 %v822
        %v1747 = vunpack.c.l.s8.bf16 %v823
        %v1748 = vunpack.c.l.s8.bf16 %v824
        %v1749 = vunpack.c.h.s8.bf16 %v821
        %v1750 = vunpack.c.h.s8.bf16 %v822
        %v1751 = vunpack.c.h.s8.bf16 %v823
        %v1752 = vunpack.c.h.s8.bf16 %v824
        %v1753 = vunpack.c.l.s8.bf16 %v825
        %v1754 = vunpack.c.l.s8.bf16 %v826
        %v1755 = vunpack.c.l.s8.bf16 %v827
        %v1756 = vunpack.c.l.s8.bf16 %v828
        %v1757 = vunpack.c.h.s8.bf16 %v825
        %v1758 = vunpack.c.h.s8.bf16 %v826
        %v1759 = vunpack.c.h.s8.bf16 %v827
        %v1760 = vunpack.c.h.s8.bf16 %v828
        %v1761 = vunpack.c.l.s8.bf16 %v829
        %v1762 = vunpack.c.l.s8.bf16 %v830
        %v1763 = vunpack.c.l.s8.bf16 %v831
        %v1764 = vunpack.c.l.s8.bf16 %v832
        %v1765 = vunpack.c.h.s8.bf16 %v829
        %v1766 = vunpack.c.h.s8.bf16 %v830
        %v1767 = vunpack.c.h.s8.bf16 %v831
        %v1768 = vunpack.c.h.s8.bf16 %v832
        %v1769 = vunpack.c.l.s8.bf16 %v833
        %v1770 = vunpack.c.l.s8.bf16 %v834
        %v1771 = vunpack.c.l.s8.bf16 %v835
        %v1772 = vunpack.c.l.s8.bf16 %v836
        %v1773 = vunpack.c.h.s8.bf16 %v833
        %v1774 = vunpack.c.h.s8.bf16 %v834
        %v1775 = vunpack.c.h.s8.bf16 %v835
        %v1776 = vunpack.c.h.s8.bf16 %v836
        %v1777 = vunpack.c.l.s8.bf16 %v837
        %v1778 = vunpack.c.l.s8.bf16 %v838
        %v1779 = vunpack.c.l.s8.bf16 %v839
        %v1780 = vunpack.c.l.s8.bf16 %v840
        %v1781 = vunpack.c.h.s8.bf16 %v837
        %v1782 = vunpack.c.h.s8.bf16 %v838
        %v1783 = vunpack.c.h.s8.bf16 %v839
        %v1784 = vunpack.c.h.s8.bf16 %v840
        %v1785 = vunpack.c.l.s8.bf16 %v841
        %v1786 = vunpack.c.l.s8.bf16 %v842
        %v1787 = vunpack.c.l.s8.bf16 %v843
        %v1788 = vunpack.c.l.s8.bf16 %v844
        %v1789 = vunpack.c.h.s8.bf16 %v841
        %v1790 = vunpack.c.h.s8.bf16 %v842
        %v1791 = vunpack.c.h.s8.bf16 %v843
        %v1792 = vunpack.c.h.s8.bf16 %v844
        %v1793 = vunpack.c.l.s8.bf16 %v845
        %v1794 = vunpack.c.l.s8.bf16 %v846
        %v1795 = vunpack.c.l.s8.bf16 %v847
        %v1796 = vunpack.c.l.s8.bf16 %v848
        %v1797 = vunpack.c.h.s8.bf16 %v845
        %v1798 = vunpack.c.h.s8.bf16 %v846
        %v1799 = vunpack.c.h.s8.bf16 %v847
        %v1800 = vunpack.c.h.s8.bf16 %v848
        %v1801 = vunpack.c.l.s8.bf16 %v849
        %v1802 = vunpack.c.l.s8.bf16 %v850
        %v1803 = vunpack.c.l.s8.bf16 %v851
        %v1804 = vunpack.c.l.s8.bf16 %v852
        %v1805 = vunpack.c.h.s8.bf16 %v849
        %v1806 = vunpack.c.h.s8.bf16 %v850
        %v1807 = vunpack.c.h.s8.bf16 %v851
        %v1808 = vunpack.c.h.s8.bf16 %v852
        %v1809 = vunpack.c.l.s8.bf16 %v853
        %v1810 = vunpack.c.l.s8.bf16 %v854
        %v1811 = vunpack.c.l.s8.bf16 %v855
        %v1812 = vunpack.c.l.s8.bf16 %v856
        %v1813 = vunpack.c.h.s8.bf16 %v853
        %v1814 = vunpack.c.h.s8.bf16 %v854
        %v1815 = vunpack.c.h.s8.bf16 %v855
        %v1816 = vunpack.c.h.s8.bf16 %v856
        %v1817 = vunpack.c.l.s8.bf16 %v857
        %v1818 = vunpack.c.l.s8.bf16 %v858
        %v1819 = vunpack.c.l.s8.bf16 %v859
        %v1820 = vunpack.c.l.s8.bf16 %v860
        %v1821 = vunpack.c.h.s8.bf16 %v857
        %v1822 = vunpack.c.h.s8.bf16 %v858
        %v1823 = vunpack.c.h.s8.bf16 %v859
        %v1824 = vunpack.c.h.s8.bf16 %v860
        %v1825 = vunpack.c.l.s8.bf16 %v861
        %v1826 = vunpack.c.l.s8.bf16 %v862
        %v1827 = vunpack.c.l.s8.bf16 %v863
        %v1828 = vunpack.c.l.s8.bf16 %v864
        %v1829 = vunpack.c.h.s8.bf16 %v861
        %v1830 = vunpack.c.h.s8.bf16 %v862
        %v1831 = vunpack.c.h.s8.bf16 %v863
        %v1832 = vunpack.c.h.s8.bf16 %v864
        %v1833 = vunpack.c.l.s8.bf16 %v865
        %v1834 = vunpack.c.l.s8.bf16 %v866
        %v1835 = vunpack.c.l.s8.bf16 %v867
        %v1836 = vunpack.c.l.s8.bf16 %v868
        %v1837 = vunpack.c.h.s8.bf16 %v865
        %v1838 = vunpack.c.h.s8.bf16 %v866
        %v1839 = vunpack.c.h.s8.bf16 %v867
        %v1840 = vunpack.c.h.s8.bf16 %v868
        %v1841 = vunpack.c.l.s8.bf16 %v869
        %v1842 = vunpack.c.l.s8.bf16 %v870
        %v1843 = vunpack.c.l.s8.bf16 %v871
        %v1844 = vunpack.c.l.s8.bf16 %v872
        %v1845 = vunpack.c.h.s8.bf16 %v869
        %v1846 = vunpack.c.h.s8.bf16 %v870
        %v1847 = vunpack.c.h.s8.bf16 %v871
        %v1848 = vunpack.c.h.s8.bf16 %v872
        %v1849 = vunpack.c.l.s8.bf16 %v873
        %v1850 = vunpack.c.l.s8.bf16 %v874
        %v1851 = vunpack.c.l.s8.bf16 %v875
        %v1852 = vunpack.c.l.s8.bf16 %v876
        %v1853 = vunpack.c.h.s8.bf16 %v873
        %v1854 = vunpack.c.h.s8.bf16 %v874
        %v1855 = vunpack.c.h.s8.bf16 %v875
        %v1856 = vunpack.c.h.s8.bf16 %v876
        %v1857 = vunpack.c.l.s8.bf16 %v877
        %v1858 = vunpack.c.l.s8.bf16 %v878
        %v1859 = vunpack.c.l.s8.bf16 %v879
        %v1860 = vunpack.c.l.s8.bf16 %v880
        %v1861 = vunpack.c.h.s8.bf16 %v877
        %v1862 = vunpack.c.h.s8.bf16 %v878
        %v1863 = vunpack.c.h.s8.bf16 %v879
        %v1864 = vunpack.c.h.s8.bf16 %v880
        %v1865 = vunpack.c.l.s8.bf16 %v881
        %v1866 = vunpack.c.l.s8.bf16 %v882
        %v1867 = vunpack.c.l.s8.bf16 %v883
        %v1868 = vunpack.c.l.s8.bf16 %v884
        %v1869 = vunpack.c.h.s8.bf16 %v881
        %v1870 = vunpack.c.h.s8.bf16 %v882
        %v1871 = vunpack.c.h.s8.bf16 %v883
        %v1872 = vunpack.c.h.s8.bf16 %v884
        %v1873 = vunpack.c.l.s8.bf16 %v885
        %v1874 = vunpack.c.l.s8.bf16 %v886
        %v1875 = vunpack.c.l.s8.bf16 %v887
        %v1876 = vunpack.c.l.s8.bf16 %v888
        %v1877 = vunpack.c.h.s8.bf16 %v885
        %v1878 = vunpack.c.h.s8.bf16 %v886
        %v1879 = vunpack.c.h.s8.bf16 %v887
        %v1880 = vunpack.c.h.s8.bf16 %v888
        %v1881 = vunpack.c.l.s8.bf16 %v889
        %v1882 = vunpack.c.l.s8.bf16 %v890
        %v1883 = vunpack.c.l.s8.bf16 %v891
        %v1884 = vunpack.c.l.s8.bf16 %v892
        %v1885 = vunpack.c.h.s8.bf16 %v889
        %v1886 = vunpack.c.h.s8.bf16 %v890
        %v1887 = vunpack.c.h.s8.bf16 %v891
        %v1888 = vunpack.c.h.s8.bf16 %v892
        %v1889 = vunpack.c.l.s8.bf16 %v893
        %v1890 = vunpack.c.l.s8.bf16 %v894
        %v1891 = vunpack.c.l.s8.bf16 %v895
        %v1892 = vunpack.c.l.s8.bf16 %v896
        %v1893 = vunpack.c.h.s8.bf16 %v893
        %v1894 = vunpack.c.h.s8.bf16 %v894
        %v1895 = vunpack.c.h.s8.bf16 %v895
        %v1896 = vunpack.c.h.s8.bf16 %v896
        %v1897 = vunpack.c.l.s8.bf16 %v897
        %v1898 = vunpack.c.l.s8.bf16 %v898
        %v1899 = vunpack.c.l.s8.bf16 %v899
        %v1900 = vunpack.c.l.s8.bf16 %v900
        %v1901 = vunpack.c.h.s8.bf16 %v897
        %v1902 = vunpack.c.h.s8.bf16 %v898
        %v1903 = vunpack.c.h.s8.bf16 %v899
        %v1904 = vunpack.c.h.s8.bf16 %v900
        %v1905 = vunpack.c.l.s8.bf16 %v901
        %v1906 = vunpack.c.l.s8.bf16 %v902
        %v1907 = vunpack.c.l.s8.bf16 %v903
        %v1908 = vunpack.c.l.s8.bf16 %v904
        %v1909 = vunpack.c.h.s8.bf16 %v901
        %v1910 = vunpack.c.h.s8.bf16 %v902
        %v1911 = vunpack.c.h.s8.bf16 %v903
        %v1912 = vunpack.c.h.s8.bf16 %v904
        %v1913 = vunpack.c.l.s8.bf16 %v905
        %v1914 = vunpack.c.l.s8.bf16 %v906
        %v1915 = vunpack.c.l.s8.bf16 %v907
        %v1916 = vunpack.c.l.s8.bf16 %v908
        %v1917 = vunpack.c.h.s8.bf16 %v905
        %v1918 = vunpack.c.h.s8.bf16 %v906
        %v1919 = vunpack.c.h.s8.bf16 %v907
        %v1920 = vunpack.c.h.s8.bf16 %v908
        %v1921 = vunpack.c.l.s8.bf16 %v909
        %v1922 = vunpack.c.l.s8.bf16 %v910
        %v1923 = vunpack.c.l.s8.bf16 %v911
        %v1924 = vunpack.c.l.s8.bf16 %v912
        %v1925 = vunpack.c.h.s8.bf16 %v909
        %v1926 = vunpack.c.h.s8.bf16 %v910
        %v1927 = vunpack.c.h.s8.bf16 %v911
        %v1928 = vunpack.c.h.s8.bf16 %v912
        %v1929 = vunpack.c.l.s8.bf16 %v913
        %v1930 = vunpack.c.l.s8.bf16 %v914
        %v1931 = vunpack.c.l.s8.bf16 %v915
        %v1932 = vunpack.c.l.s8.bf16 %v916
        %v1933 = vunpack.c.h.s8.bf16 %v913
        %v1934 = vunpack.c.h.s8.bf16 %v914
        %v1935 = vunpack.c.h.s8.bf16 %v915
        %v1936 = vunpack.c.h.s8.bf16 %v916
        %v1937 = vunpack.c.l.s8.bf16 %v917
        %v1938 = vunpack.c.l.s8.bf16 %v918
        %v1939 = vunpack.c.l.s8.bf16 %v919
        %v1940 = vunpack.c.l.s8.bf16 %v920
        %v1941 = vunpack.c.h.s8.bf16 %v917
        %v1942 = vunpack.c.h.s8.bf16 %v918
        %v1943 = vunpack.c.h.s8.bf16 %v919
        %v1944 = vunpack.c.h.s8.bf16 %v920
        %v1945 = vunpack.c.l.s8.bf16 %v921
        %v1946 = vunpack.c.l.s8.bf16 %v922
        %v1947 = vunpack.c.l.s8.bf16 %v923
        %v1948 = vunpack.c.l.s8.bf16 %v924
        %v1949 = vunpack.c.h.s8.bf16 %v921
        %v1950 = vunpack.c.h.s8.bf16 %v922
        %v1951 = vunpack.c.h.s8.bf16 %v923
        %v1952 = vunpack.c.h.s8.bf16 %v924
        %v1953 = vunpack.c.l.s8.bf16 %v925
        %v1954 = vunpack.c.l.s8.bf16 %v926
        %v1955 = vunpack.c.l.s8.bf16 %v927
        %v1956 = vunpack.c.l.s8.bf16 %v928
        %v1957 = vunpack.c.h.s8.bf16 %v925
        %v1958 = vunpack.c.h.s8.bf16 %v926
        %v1959 = vunpack.c.h.s8.bf16 %v927
        %v1960 = vunpack.c.h.s8.bf16 %v928
        %v1961 = vunpack.c.l.s8.bf16 %v929
        %v1962 = vunpack.c.l.s8.bf16 %v930
        %v1963 = vunpack.c.l.s8.bf16 %v931
        %v1964 = vunpack.c.l.s8.bf16 %v932
        %v1965 = vunpack.c.h.s8.bf16 %v929
        %v1966 = vunpack.c.h.s8.bf16 %v930
        %v1967 = vunpack.c.h.s8.bf16 %v931
        %v1968 = vunpack.c.h.s8.bf16 %v932
        %v1969 = vunpack.c.l.s8.bf16 %v933
        %v1970 = vunpack.c.l.s8.bf16 %v934
        %v1971 = vunpack.c.l.s8.bf16 %v935
        %v1972 = vunpack.c.l.s8.bf16 %v936
        %v1973 = vunpack.c.h.s8.bf16 %v933
        %v1974 = vunpack.c.h.s8.bf16 %v934
        %v1975 = vunpack.c.h.s8.bf16 %v935
        %v1976 = vunpack.c.h.s8.bf16 %v936
        %v1977 = vunpack.c.l.s8.bf16 %v937
        %v1978 = vunpack.c.l.s8.bf16 %v938
        %v1979 = vunpack.c.l.s8.bf16 %v939
        %v1980 = vunpack.c.l.s8.bf16 %v940
        %v1981 = vunpack.c.h.s8.bf16 %v937
        %v1982 = vunpack.c.h.s8.bf16 %v938
        %v1983 = vunpack.c.h.s8.bf16 %v939
        %v1984 = vunpack.c.h.s8.bf16 %v940
        %v1985 = vunpack.c.l.s8.bf16 %v941
        %v1986 = vunpack.c.l.s8.bf16 %v942
        %v1987 = vunpack.c.l.s8.bf16 %v943
        %v1988 = vunpack.c.l.s8.bf16 %v944
        %v1989 = vunpack.c.h.s8.bf16 %v941
        %v1990 = vunpack.c.h.s8.bf16 %v942
        %v1991 = vunpack.c.h.s8.bf16 %v943
        %v1992 = vunpack.c.h.s8.bf16 %v944
        %v1993 = vunpack.c.l.s8.bf16 %v945
        %v1994 = vunpack.c.l.s8.bf16 %v946
        %v1995 = vunpack.c.l.s8.bf16 %v947
        %v1996 = vunpack.c.l.s8.bf16 %v948
        %v1997 = vunpack.c.h.s8.bf16 %v945
        %v1998 = vunpack.c.h.s8.bf16 %v946
        %v1999 = vunpack.c.h.s8.bf16 %v947
        %v2000 = vunpack.c.h.s8.bf16 %v948
        %v2001 = vunpack.c.l.s8.bf16 %v949
        %v2002 = vunpack.c.l.s8.bf16 %v950
        %v2003 = vunpack.c.l.s8.bf16 %v951
        %v2004 = vunpack.c.l.s8.bf16 %v952
        %v2005 = vunpack.c.h.s8.bf16 %v949
        %v2006 = vunpack.c.h.s8.bf16 %v950
        %v2007 = vunpack.c.h.s8.bf16 %v951
        %v2008 = vunpack.c.h.s8.bf16 %v952
        %v2009 = vunpack.c.l.s8.bf16 %v953
        %v2010 = vunpack.c.l.s8.bf16 %v954
        %v2011 = vunpack.c.l.s8.bf16 %v955
        %v2012 = vunpack.c.l.s8.bf16 %v956
        %v2013 = vunpack.c.h.s8.bf16 %v953
        %v2014 = vunpack.c.h.s8.bf16 %v954
        %v2015 = vunpack.c.h.s8.bf16 %v955
        %v2016 = vunpack.c.h.s8.bf16 %v956
        %v2017 = vunpack.c.l.s8.bf16 %v957
        %v2018 = vunpack.c.l.s8.bf16 %v958
        %v2019 = vunpack.c.l.s8.bf16 %v959
        %v2020 = vunpack.c.l.s8.bf16 %v960
        %v2021 = vunpack.c.h.s8.bf16 %v957
        %v2022 = vunpack.c.h.s8.bf16 %v958
        %v2023 = vunpack.c.h.s8.bf16 %v959
        %v2024 = vunpack.c.h.s8.bf16 %v960
        %v2025 = vunpack.c.l.s8.bf16 %v961
        %v2026 = vunpack.c.l.s8.bf16 %v962
        %v2027 = vunpack.c.l.s8.bf16 %v963
        %v2028 = vunpack.c.l.s8.bf16 %v964
        %v2029 = vunpack.c.h.s8.bf16 %v961
        %v2030 = vunpack.c.h.s8.bf16 %v962
        %v2031 = vunpack.c.h.s8.bf16 %v963
        %v2032 = vunpack.c.h.s8.bf16 %v964
        %v2033 = vunpack.c.l.s8.bf16 %v965
        %v2034 = vunpack.c.l.s8.bf16 %v966
        %v2035 = vunpack.c.l.s8.bf16 %v967
        %v2036 = vunpack.c.l.s8.bf16 %v968
        %v2037 = vunpack.c.h.s8.bf16 %v965
        %v2038 = vunpack.c.h.s8.bf16 %v966
        %v2039 = vunpack.c.h.s8.bf16 %v967
        %v2040 = vunpack.c.h.s8.bf16 %v968
        %v2041 = vunpack.c.l.s8.bf16 %v969
        %v2042 = vunpack.c.l.s8.bf16 %v970
        %v2043 = vunpack.c.l.s8.bf16 %v971
        %v2044 = vunpack.c.l.s8.bf16 %v972
        %v2045 = vunpack.c.h.s8.bf16 %v969
        %v2046 = vunpack.c.h.s8.bf16 %v970
        %v2047 = vunpack.c.h.s8.bf16 %v971
        %v2048 = vunpack.c.h.s8.bf16 %v972
        %v2049 = vunpack.c.l.s8.bf16 %v973
        %v2050 = vunpack.c.l.s8.bf16 %v974
        %v2051 = vunpack.c.l.s8.bf16 %v975
        %v2052 = vunpack.c.l.s8.bf16 %v976
        %v2053 = vunpack.c.h.s8.bf16 %v973
        %v2054 = vunpack.c.h.s8.bf16 %v974
        %v2055 = vunpack.c.h.s8.bf16 %v975
        %v2056 = vunpack.c.h.s8.bf16 %v976
        %v2057 = vunpack.c.l.s8.bf16 %v977
        %v2058 = vunpack.c.l.s8.bf16 %v978
        %v2059 = vunpack.c.l.s8.bf16 %v979
        %v2060 = vunpack.c.l.s8.bf16 %v980
        %v2061 = vunpack.c.h.s8.bf16 %v977
        %v2062 = vunpack.c.h.s8.bf16 %v978
        %v2063 = vunpack.c.h.s8.bf16 %v979
        %v2064 = vunpack.c.h.s8.bf16 %v980
        %v2065 = vunpack.c.l.s8.bf16 %v981
        %v2066 = vunpack.c.l.s8.bf16 %v982
        %v2067 = vunpack.c.l.s8.bf16 %v983
        %v2068 = vunpack.c.l.s8.bf16 %v984
        %v2069 = vunpack.c.h.s8.bf16 %v981
        %v2070 = vunpack.c.h.s8.bf16 %v982
        %v2071 = vunpack.c.h.s8.bf16 %v983
        %v2072 = vunpack.c.h.s8.bf16 %v984
        %v2073 = vunpack.c.l.s8.bf16 %v985
        %v2074 = vunpack.c.l.s8.bf16 %v986
        %v2075 = vunpack.c.l.s8.bf16 %v987
        %v2076 = vunpack.c.l.s8.bf16 %v988
        %v2077 = vunpack.c.h.s8.bf16 %v985
        %v2078 = vunpack.c.h.s8.bf16 %v986
        %v2079 = vunpack.c.h.s8.bf16 %v987
        %v2080 = vunpack.c.h.s8.bf16 %v988
        %v2081 = vunpack.c.l.s8.bf16 %v989
        %v2082 = vunpack.c.l.s8.bf16 %v990
        %v2083 = vunpack.c.l.s8.bf16 %v991
        %v2084 = vunpack.c.l.s8.bf16 %v992
        %v2085 = vunpack.c.h.s8.bf16 %v989
        %v2086 = vunpack.c.h.s8.bf16 %v990
        %v2087 = vunpack.c.h.s8.bf16 %v991
        %v2088 = vunpack.c.h.s8.bf16 %v992
        %v2089 = vunpack.c.l.s8.bf16 %v993
        %v2090 = vunpack.c.l.s8.bf16 %v994
        %v2091 = vunpack.c.l.s8.bf16 %v995
        %v2092 = vunpack.c.l.s8.bf16 %v996
        %v2093 = vunpack.c.h.s8.bf16 %v993
        %v2094 = vunpack.c.h.s8.bf16 %v994
        %v2095 = vunpack.c.h.s8.bf16 %v995
        %v2096 = vunpack.c.h.s8.bf16 %v996
        %v2097 = vunpack.c.l.s8.bf16 %v997
        %v2098 = vunpack.c.l.s8.bf16 %v998
        %v2099 = vunpack.c.l.s8.bf16 %v999
        %v2100 = vunpack.c.l.s8.bf16 %v1000
        %v2101 = vunpack.c.h.s8.bf16 %v997
        %v2102 = vunpack.c.h.s8.bf16 %v998
        %v2103 = vunpack.c.h.s8.bf16 %v999
        %v2104 = vunpack.c.h.s8.bf16 %v1000
        %v2105 = vunpack.c.l.s8.bf16 %v1001
        %v2106 = vunpack.c.l.s8.bf16 %v1002
        %v2107 = vunpack.c.l.s8.bf16 %v1003
        %v2108 = vunpack.c.l.s8.bf16 %v1004
        %v2109 = vunpack.c.h.s8.bf16 %v1001
        %v2110 = vunpack.c.h.s8.bf16 %v1002
        %v2111 = vunpack.c.h.s8.bf16 %v1003
        %v2112 = vunpack.c.h.s8.bf16 %v1004
        %v2113 = vunpack.c.l.s8.bf16 %v1005
        %v2114 = vunpack.c.l.s8.bf16 %v1006
        %v2115 = vunpack.c.l.s8.bf16 %v1007
        %v2116 = vunpack.c.l.s8.bf16 %v1008
        %v2117 = vunpack.c.h.s8.bf16 %v1005
        %v2118 = vunpack.c.h.s8.bf16 %v1006
        %v2119 = vunpack.c.h.s8.bf16 %v1007
        %v2120 = vunpack.c.h.s8.bf16 %v1008
        %v2121 = vunpack.c.l.s8.bf16 %v1009
        %v2122 = vunpack.c.l.s8.bf16 %v1010
        %v2123 = vunpack.c.l.s8.bf16 %v1011
        %v2124 = vunpack.c.l.s8.bf16 %v1012
        %v2125 = vunpack.c.h.s8.bf16 %v1009
        %v2126 = vunpack.c.h.s8.bf16 %v1010
        %v2127 = vunpack.c.h.s8.bf16 %v1011
        %v2128 = vunpack.c.h.s8.bf16 %v1012
        %v2129 = vunpack.c.l.s8.bf16 %v1013
        %v2130 = vunpack.c.l.s8.bf16 %v1014
        %v2131 = vunpack.c.l.s8.bf16 %v1015
        %v2132 = vunpack.c.l.s8.bf16 %v1016
        %v2133 = vunpack.c.h.s8.bf16 %v1013
        %v2134 = vunpack.c.h.s8.bf16 %v1014
        %v2135 = vunpack.c.h.s8.bf16 %v1015
        %v2136 = vunpack.c.h.s8.bf16 %v1016
        %v2137 = vunpack.c.l.s8.bf16 %v1017
        %v2138 = vunpack.c.l.s8.bf16 %v1018
        %v2139 = vunpack.c.l.s8.bf16 %v1019
        %v2140 = vunpack.c.l.s8.bf16 %v1020
        %v2141 = vunpack.c.h.s8.bf16 %v1017
        %v2142 = vunpack.c.h.s8.bf16 %v1018
        %v2143 = vunpack.c.h.s8.bf16 %v1019
        %v2144 = vunpack.c.h.s8.bf16 %v1020
        %v2145 = vunpack.c.l.s8.bf16 %v1021
        %v2146 = vunpack.c.l.s8.bf16 %v1022
        %v2147 = vunpack.c.l.s8.bf16 %v1023
        %v2148 = vunpack.c.l.s8.bf16 %v1024
        %v2149 = vunpack.c.h.s8.bf16 %v1021
        %v2150 = vunpack.c.h.s8.bf16 %v1022
        %v2151 = vunpack.c.h.s8.bf16 %v1023
        %v2152 = vunpack.c.h.s8.bf16 %v1024
        %v2153 = vunpack.c.l.s8.bf16 %v1025
        %v2154 = vunpack.c.l.s8.bf16 %v1026
        %v2155 = vunpack.c.l.s8.bf16 %v1027
        %v2156 = vunpack.c.l.s8.bf16 %v1028
        %v2157 = vunpack.c.h.s8.bf16 %v1025
        %v2158 = vunpack.c.h.s8.bf16 %v1026
        %v2159 = vunpack.c.h.s8.bf16 %v1027
        %v2160 = vunpack.c.h.s8.bf16 %v1028
        %v2161 = vunpack.c.l.s8.bf16 %v1029
        %v2162 = vunpack.c.l.s8.bf16 %v1030
        %v2163 = vunpack.c.l.s8.bf16 %v1031
        %v2164 = vunpack.c.l.s8.bf16 %v1032
        %v2165 = vunpack.c.h.s8.bf16 %v1029
        %v2166 = vunpack.c.h.s8.bf16 %v1030
        %v2167 = vunpack.c.h.s8.bf16 %v1031
        %v2168 = vunpack.c.h.s8.bf16 %v1032
        %v2169 = vunpack.c.l.s8.bf16 %v1033
        %v2170 = vunpack.c.l.s8.bf16 %v1034
        %v2171 = vunpack.c.l.s8.bf16 %v1035
        %v2172 = vunpack.c.l.s8.bf16 %v1036
        %v2173 = vunpack.c.h.s8.bf16 %v1033
        %v2174 = vunpack.c.h.s8.bf16 %v1034
        %v2175 = vunpack.c.h.s8.bf16 %v1035
        %v2176 = vunpack.c.h.s8.bf16 %v1036
        %v2177 = vunpack.c.l.s8.bf16 %v1037
        %v2178 = vunpack.c.l.s8.bf16 %v1038
        %v2179 = vunpack.c.l.s8.bf16 %v1039
        %v2180 = vunpack.c.l.s8.bf16 %v1040
        %v2181 = vunpack.c.h.s8.bf16 %v1037
        %v2182 = vunpack.c.h.s8.bf16 %v1038
        %v2183 = vunpack.c.h.s8.bf16 %v1039
        %v2184 = vunpack.c.h.s8.bf16 %v1040
        %v2185 = vunpack.c.l.s8.bf16 %v1041
        %v2186 = vunpack.c.l.s8.bf16 %v1042
        %v2187 = vunpack.c.l.s8.bf16 %v1043
        %v2188 = vunpack.c.l.s8.bf16 %v1044
        %v2189 = vunpack.c.h.s8.bf16 %v1041
        %v2190 = vunpack.c.h.s8.bf16 %v1042
        %v2191 = vunpack.c.h.s8.bf16 %v1043
        %v2192 = vunpack.c.h.s8.bf16 %v1044
        %v2193 = vunpack.c.l.s8.bf16 %v1045
        %v2194 = vunpack.c.l.s8.bf16 %v1046
        %v2195 = vunpack.c.l.s8.bf16 %v1047
        %v2196 = vunpack.c.l.s8.bf16 %v1048
        %v2197 = vunpack.c.h.s8.bf16 %v1045
        %v2198 = vunpack.c.h.s8.bf16 %v1046
        %v2199 = vunpack.c.h.s8.bf16 %v1047
        %v2200 = vunpack.c.h.s8.bf16 %v1048
        %v2201 = vunpack.c.l.s8.bf16 %v1049
        %v2202 = vunpack.c.l.s8.bf16 %v1050
        %v2203 = vunpack.c.l.s8.bf16 %v1051
        %v2204 = vunpack.c.l.s8.bf16 %v1052
        %v2205 = vunpack.c.h.s8.bf16 %v1049
        %v2206 = vunpack.c.h.s8.bf16 %v1050
        %v2207 = vunpack.c.h.s8.bf16 %v1051
        %v2208 = vunpack.c.h.s8.bf16 %v1052
        %v2209 = vunpack.c.l.s8.bf16 %v1053
        %v2210 = vunpack.c.l.s8.bf16 %v1054
        %v2211 = vunpack.c.l.s8.bf16 %v1055
        %v2212 = vunpack.c.l.s8.bf16 %v1056
        %v2213 = vunpack.c.h.s8.bf16 %v1053
        %v2214 = vunpack.c.h.s8.bf16 %v1054
        %v2215 = vunpack.c.h.s8.bf16 %v1055
        %v2216 = vunpack.c.h.s8.bf16 %v1056
        %v2217 = vunpack.c.l.s8.bf16 %v1057
        %v2218 = vunpack.c.l.s8.bf16 %v1058
        %v2219 = vunpack.c.l.s8.bf16 %v1059
        %v2220 = vunpack.c.l.s8.bf16 %v1060
        %v2221 = vunpack.c.h.s8.bf16 %v1057
        %v2222 = vunpack.c.h.s8.bf16 %v1058
        %v2223 = vunpack.c.h.s8.bf16 %v1059
        %v2224 = vunpack.c.h.s8.bf16 %v1060
        %v2225 = vunpack.c.l.s8.bf16 %v1061
        %v2226 = vunpack.c.l.s8.bf16 %v1062
        %v2227 = vunpack.c.l.s8.bf16 %v1063
        %v2228 = vunpack.c.l.s8.bf16 %v1064
        %v2229 = vunpack.c.h.s8.bf16 %v1061
        %v2230 = vunpack.c.h.s8.bf16 %v1062
        %v2231 = vunpack.c.h.s8.bf16 %v1063
        %v2232 = vunpack.c.h.s8.bf16 %v1064
        %v2233 = vunpack.c.l.s8.bf16 %v1065
        %v2234 = vunpack.c.l.s8.bf16 %v1066
        %v2235 = vunpack.c.l.s8.bf16 %v1067
        %v2236 = vunpack.c.l.s8.bf16 %v1068
        %v2237 = vunpack.c.h.s8.bf16 %v1065
        %v2238 = vunpack.c.h.s8.bf16 %v1066
        %v2239 = vunpack.c.h.s8.bf16 %v1067
        %v2240 = vunpack.c.h.s8.bf16 %v1068
        %v2241 = vunpack.c.l.s8.bf16 %v1069
        %v2242 = vunpack.c.l.s8.bf16 %v1070
        %v2243 = vunpack.c.l.s8.bf16 %v1071
        %v2244 = vunpack.c.l.s8.bf16 %v1072
        %v2245 = vunpack.c.h.s8.bf16 %v1069
        %v2246 = vunpack.c.h.s8.bf16 %v1070
        %v2247 = vunpack.c.h.s8.bf16 %v1071
        %v2248 = vunpack.c.h.s8.bf16 %v1072
        %v2249 = vunpack.c.l.s8.bf16 %v1073
        %v2250 = vunpack.c.l.s8.bf16 %v1074
        %v2251 = vunpack.c.l.s8.bf16 %v1075
        %v2252 = vunpack.c.l.s8.bf16 %v1076
        %v2253 = vunpack.c.h.s8.bf16 %v1073
        %v2254 = vunpack.c.h.s8.bf16 %v1074
        %v2255 = vunpack.c.h.s8.bf16 %v1075
        %v2256 = vunpack.c.h.s8.bf16 %v1076
        %v2257 = vunpack.c.l.s8.bf16 %v1077
        %v2258 = vunpack.c.l.s8.bf16 %v1078
        %v2259 = vunpack.c.l.s8.bf16 %v1079
        %v2260 = vunpack.c.l.s8.bf16 %v1080
        %v2261 = vunpack.c.h.s8.bf16 %v1077
        %v2262 = vunpack.c.h.s8.bf16 %v1078
        %v2263 = vunpack.c.h.s8.bf16 %v1079
        %v2264 = vunpack.c.h.s8.bf16 %v1080
        %v2265 = vunpack.c.l.s8.bf16 %v1081
        %v2266 = vunpack.c.l.s8.bf16 %v1082
        %v2267 = vunpack.c.l.s8.bf16 %v1083
        %v2268 = vunpack.c.l.s8.bf16 %v1084
        %v2269 = vunpack.c.h.s8.bf16 %v1081
        %v2270 = vunpack.c.h.s8.bf16 %v1082
        %v2271 = vunpack.c.h.s8.bf16 %v1083
        %v2272 = vunpack.c.h.s8.bf16 %v1084
        %v2273 = vunpack.c.l.s8.bf16 %v1085
        %v2274 = vunpack.c.l.s8.bf16 %v1086
        %v2275 = vunpack.c.l.s8.bf16 %v1087
        %v2276 = vunpack.c.l.s8.bf16 %v1088
        %v2277 = vunpack.c.h.s8.bf16 %v1085
        %v2278 = vunpack.c.h.s8.bf16 %v1086
        %v2279 = vunpack.c.h.s8.bf16 %v1087
        %v2280 = vunpack.c.h.s8.bf16 %v1088
        %v2281 = vunpack.c.l.s8.bf16 %v1089
        %v2282 = vunpack.c.l.s8.bf16 %v1090
        %v2283 = vunpack.c.l.s8.bf16 %v1091
        %v2284 = vunpack.c.l.s8.bf16 %v1092
        %v2285 = vunpack.c.h.s8.bf16 %v1089
        %v2286 = vunpack.c.h.s8.bf16 %v1090
        %v2287 = vunpack.c.h.s8.bf16 %v1091
        %v2288 = vunpack.c.h.s8.bf16 %v1092
        %v2289 = vunpack.c.l.s8.bf16 %v1093
        %v2290 = vunpack.c.l.s8.bf16 %v1094
        %v2291 = vunpack.c.l.s8.bf16 %v1095
        %v2292 = vunpack.c.l.s8.bf16 %v1096
        %v2293 = vunpack.c.h.s8.bf16 %v1093
        %v2294 = vunpack.c.h.s8.bf16 %v1094
        %v2295 = vunpack.c.h.s8.bf16 %v1095
        %v2296 = vunpack.c.h.s8.bf16 %v1096
        %v2297 = vunpack.c.l.s8.bf16 %v1097
        %v2298 = vunpack.c.l.s8.bf16 %v1098
        %v2299 = vunpack.c.l.s8.bf16 %v1099
        %v2300 = vunpack.c.l.s8.bf16 %v1100
        %v2301 = vunpack.c.h.s8.bf16 %v1097
        %v2302 = vunpack.c.h.s8.bf16 %v1098
        %v2303 = vunpack.c.h.s8.bf16 %v1099
        %v2304 = vunpack.c.h.s8.bf16 %v1100
        %v2305 = vunpack.c.l.s8.bf16 %v1101
        %v2306 = vunpack.c.l.s8.bf16 %v1102
        %v2307 = vunpack.c.l.s8.bf16 %v1103
        %v2308 = vunpack.c.l.s8.bf16 %v1104
        %v2309 = vunpack.c.h.s8.bf16 %v1101
        %v2310 = vunpack.c.h.s8.bf16 %v1102
        %v2311 = vunpack.c.h.s8.bf16 %v1103
        %v2312 = vunpack.c.h.s8.bf16 %v1104
        %v2313 = vunpack.c.l.s8.bf16 %v1105
        %v2314 = vunpack.c.l.s8.bf16 %v1106
        %v2315 = vunpack.c.l.s8.bf16 %v1107
        %v2316 = vunpack.c.l.s8.bf16 %v1108
        %v2317 = vunpack.c.h.s8.bf16 %v1105
        %v2318 = vunpack.c.h.s8.bf16 %v1106
        %v2319 = vunpack.c.h.s8.bf16 %v1107
        %v2320 = vunpack.c.h.s8.bf16 %v1108
        %v2321 = vunpack.c.l.s8.bf16 %v1109
        %v2322 = vunpack.c.l.s8.bf16 %v1110
        %v2323 = vunpack.c.l.s8.bf16 %v1111
        %v2324 = vunpack.c.l.s8.bf16 %v1112
        %v2325 = vunpack.c.h.s8.bf16 %v1109
        %v2326 = vunpack.c.h.s8.bf16 %v1110
        %v2327 = vunpack.c.h.s8.bf16 %v1111
        %v2328 = vunpack.c.h.s8.bf16 %v1112
        %v2329 = vunpack.c.l.s8.bf16 %v1113
        %v2330 = vunpack.c.l.s8.bf16 %v1114
        %v2331 = vunpack.c.l.s8.bf16 %v1115
        %v2332 = vunpack.c.l.s8.bf16 %v1116
        %v2333 = vunpack.c.h.s8.bf16 %v1113
        %v2334 = vunpack.c.h.s8.bf16 %v1114
        %v2335 = vunpack.c.h.s8.bf16 %v1115
        %v2336 = vunpack.c.h.s8.bf16 %v1116
        %v2337 = vunpack.c.l.s8.bf16 %v1117
        %v2338 = vunpack.c.l.s8.bf16 %v1118
        %v2339 = vunpack.c.l.s8.bf16 %v1119
        %v2340 = vunpack.c.l.s8.bf16 %v1120
        %v2341 = vunpack.c.h.s8.bf16 %v1117
        %v2342 = vunpack.c.h.s8.bf16 %v1118
        %v2343 = vunpack.c.h.s8.bf16 %v1119
        %v2344 = vunpack.c.h.s8.bf16 %v1120
        %v2345 = vunpack.c.l.s8.bf16 %v1121
        %v2346 = vunpack.c.l.s8.bf16 %v1122
        %v2347 = vunpack.c.l.s8.bf16 %v1123
        %v2348 = vunpack.c.l.s8.bf16 %v1124
        %v2349 = vunpack.c.h.s8.bf16 %v1121
        %v2350 = vunpack.c.h.s8.bf16 %v1122
        %v2351 = vunpack.c.h.s8.bf16 %v1123
        %v2352 = vunpack.c.h.s8.bf16 %v1124
        %v2353 = vunpack.c.l.s8.bf16 %v1125
        %v2354 = vunpack.c.l.s8.bf16 %v1126
        %v2355 = vunpack.c.l.s8.bf16 %v1127
        %v2356 = vunpack.c.l.s8.bf16 %v1128
        %v2357 = vunpack.c.h.s8.bf16 %v1125
        %v2358 = vunpack.c.h.s8.bf16 %v1126
        %v2359 = vunpack.c.h.s8.bf16 %v1127
        %v2360 = vunpack.c.h.s8.bf16 %v1128
        %v2361 = vunpack.c.l.s8.bf16 %v1129
        %v2362 = vunpack.c.l.s8.bf16 %v1130
        %v2363 = vunpack.c.l.s8.bf16 %v1131
        %v2364 = vunpack.c.l.s8.bf16 %v1132
        %v2365 = vunpack.c.h.s8.bf16 %v1129
        %v2366 = vunpack.c.h.s8.bf16 %v1130
        %v2367 = vunpack.c.h.s8.bf16 %v1131
        %v2368 = vunpack.c.h.s8.bf16 %v1132
        %v2369 = vunpack.c.l.s8.bf16 %v1133
        %v2370 = vunpack.c.l.s8.bf16 %v1134
        %v2371 = vunpack.c.l.s8.bf16 %v1135
        %v2372 = vunpack.c.l.s8.bf16 %v1136
        %v2373 = vunpack.c.h.s8.bf16 %v1133
        %v2374 = vunpack.c.h.s8.bf16 %v1134
        %v2375 = vunpack.c.h.s8.bf16 %v1135
        %v2376 = vunpack.c.h.s8.bf16 %v1136
        %v2377 = vunpack.c.l.s8.bf16 %v1137
        %v2378 = vunpack.c.l.s8.bf16 %v1138
        %v2379 = vunpack.c.l.s8.bf16 %v1139
        %v2380 = vunpack.c.l.s8.bf16 %v1140
        %v2381 = vunpack.c.h.s8.bf16 %v1137
        %v2382 = vunpack.c.h.s8.bf16 %v1138
        %v2383 = vunpack.c.h.s8.bf16 %v1139
        %v2384 = vunpack.c.h.s8.bf16 %v1140
        %v2385 = vunpack.c.l.s8.bf16 %v1141
        %v2386 = vunpack.c.l.s8.bf16 %v1142
        %v2387 = vunpack.c.l.s8.bf16 %v1143
        %v2388 = vunpack.c.l.s8.bf16 %v1144
        %v2389 = vunpack.c.h.s8.bf16 %v1141
        %v2390 = vunpack.c.h.s8.bf16 %v1142
        %v2391 = vunpack.c.h.s8.bf16 %v1143
        %v2392 = vunpack.c.h.s8.bf16 %v1144
        %v2393 = vunpack.c.l.s8.bf16 %v1145
        %v2394 = vunpack.c.l.s8.bf16 %v1146
        %v2395 = vunpack.c.l.s8.bf16 %v1147
        %v2396 = vunpack.c.l.s8.bf16 %v1148
        %v2397 = vunpack.c.h.s8.bf16 %v1145
        %v2398 = vunpack.c.h.s8.bf16 %v1146
        %v2399 = vunpack.c.h.s8.bf16 %v1147
        %v2400 = vunpack.c.h.s8.bf16 %v1148
        %v2401 = vunpack.c.l.s8.bf16 %v1149
        %v2402 = vunpack.c.l.s8.bf16 %v1150
        %v2403 = vunpack.c.l.s8.bf16 %v1151
        %v2404 = vunpack.c.l.s8.bf16 %v1152
        %v2405 = vunpack.c.h.s8.bf16 %v1149
        %v2406 = vunpack.c.h.s8.bf16 %v1150
        %v2407 = vunpack.c.h.s8.bf16 %v1151
        %v2408 = vunpack.c.h.s8.bf16 %v1152
        %v2409 = vunpack.c.l.s8.bf16 %v1153
        %v2410 = vunpack.c.l.s8.bf16 %v1154
        %v2411 = vunpack.c.l.s8.bf16 %v1155
        %v2412 = vunpack.c.l.s8.bf16 %v1156
        %v2413 = vunpack.c.h.s8.bf16 %v1153
        %v2414 = vunpack.c.h.s8.bf16 %v1154
        %v2415 = vunpack.c.h.s8.bf16 %v1155
        %v2416 = vunpack.c.h.s8.bf16 %v1156
        %v2417 = vunpack.c.l.s8.bf16 %v1157
        %v2418 = vunpack.c.l.s8.bf16 %v1158
        %v2419 = vunpack.c.l.s8.bf16 %v1159
        %v2420 = vunpack.c.l.s8.bf16 %v1160
        %v2421 = vunpack.c.h.s8.bf16 %v1157
        %v2422 = vunpack.c.h.s8.bf16 %v1158
        %v2423 = vunpack.c.h.s8.bf16 %v1159
        %v2424 = vunpack.c.h.s8.bf16 %v1160
        %v2425 = vunpack.c.l.s8.bf16 %v1161
        %v2426 = vunpack.c.l.s8.bf16 %v1162
        %v2427 = vunpack.c.l.s8.bf16 %v1163
        %v2428 = vunpack.c.l.s8.bf16 %v1164
        %v2429 = vunpack.c.h.s8.bf16 %v1161
        %v2430 = vunpack.c.h.s8.bf16 %v1162
        %v2431 = vunpack.c.h.s8.bf16 %v1163
        %v2432 = vunpack.c.h.s8.bf16 %v1164
        %v2433 = vunpack.c.l.s8.bf16 %v1165
        %v2434 = vunpack.c.l.s8.bf16 %v1166
        %v2435 = vunpack.c.l.s8.bf16 %v1167
        %v2436 = vunpack.c.l.s8.bf16 %v1168
        %v2437 = vunpack.c.h.s8.bf16 %v1165
        %v2438 = vunpack.c.h.s8.bf16 %v1166
        %v2439 = vunpack.c.h.s8.bf16 %v1167
        %v2440 = vunpack.c.h.s8.bf16 %v1168
        %v2441 = vunpack.c.l.s8.bf16 %v1169
        %v2442 = vunpack.c.l.s8.bf16 %v1170
        %v2443 = vunpack.c.l.s8.bf16 %v1171
        %v2444 = vunpack.c.l.s8.bf16 %v1172
        %v2445 = vunpack.c.h.s8.bf16 %v1169
        %v2446 = vunpack.c.h.s8.bf16 %v1170
        %v2447 = vunpack.c.h.s8.bf16 %v1171
        %v2448 = vunpack.c.h.s8.bf16 %v1172
        %v2449 = vunpack.c.l.s8.bf16 %v1173
        %v2450 = vunpack.c.l.s8.bf16 %v1174
        %v2451 = vunpack.c.l.s8.bf16 %v1175
        %v2452 = vunpack.c.l.s8.bf16 %v1176
        %v2453 = vunpack.c.h.s8.bf16 %v1173
        %v2454 = vunpack.c.h.s8.bf16 %v1174
        %v2455 = vunpack.c.h.s8.bf16 %v1175
        %v2456 = vunpack.c.h.s8.bf16 %v1176
        %v2457 = vunpack.c.l.s8.bf16 %v1177
        %v2458 = vunpack.c.l.s8.bf16 %v1178
        %v2459 = vunpack.c.l.s8.bf16 %v1179
        %v2460 = vunpack.c.l.s8.bf16 %v1180
        %v2461 = vunpack.c.h.s8.bf16 %v1177
        %v2462 = vunpack.c.h.s8.bf16 %v1178
        %v2463 = vunpack.c.h.s8.bf16 %v1179
        %v2464 = vunpack.c.h.s8.bf16 %v1180
        %v2465 = vunpack.c.l.s8.bf16 %v1181
        %v2466 = vunpack.c.l.s8.bf16 %v1182
        %v2467 = vunpack.c.l.s8.bf16 %v1183
        %v2468 = vunpack.c.l.s8.bf16 %v1184
        %v2469 = vunpack.c.h.s8.bf16 %v1181
        %v2470 = vunpack.c.h.s8.bf16 %v1182
        %v2471 = vunpack.c.h.s8.bf16 %v1183
        %v2472 = vunpack.c.h.s8.bf16 %v1184
        %v2473 = vunpack.c.l.s8.bf16 %v1185
        %v2474 = vunpack.c.l.s8.bf16 %v1186
        %v2475 = vunpack.c.l.s8.bf16 %v1187
        %v2476 = vunpack.c.l.s8.bf16 %v1188
        %v2477 = vunpack.c.h.s8.bf16 %v1185
        %v2478 = vunpack.c.h.s8.bf16 %v1186
        %v2479 = vunpack.c.h.s8.bf16 %v1187
        %v2480 = vunpack.c.h.s8.bf16 %v1188
        %v2481 = vunpack.c.l.s8.bf16 %v1189
        %v2482 = vunpack.c.l.s8.bf16 %v1190
        %v2483 = vunpack.c.l.s8.bf16 %v1191
        %v2484 = vunpack.c.l.s8.bf16 %v1192
        %v2485 = vunpack.c.h.s8.bf16 %v1189
        %v2486 = vunpack.c.h.s8.bf16 %v1190
        %v2487 = vunpack.c.h.s8.bf16 %v1191
        %v2488 = vunpack.c.h.s8.bf16 %v1192
        %v2489 = vunpack.c.l.s8.bf16 %v1193
        %v2490 = vunpack.c.l.s8.bf16 %v1194
        %v2491 = vunpack.c.l.s8.bf16 %v1195
        %v2492 = vunpack.c.l.s8.bf16 %v1196
        %v2493 = vunpack.c.h.s8.bf16 %v1193
        %v2494 = vunpack.c.h.s8.bf16 %v1194
        %v2495 = vunpack.c.h.s8.bf16 %v1195
        %v2496 = vunpack.c.h.s8.bf16 %v1196
        %v2497 = vunpack.c.l.s8.bf16 %v1197
        %v2498 = vunpack.c.l.s8.bf16 %v1198
        %v2499 = vunpack.c.l.s8.bf16 %v1199
        %v2500 = vunpack.c.l.s8.bf16 %v1200
        %v2501 = vunpack.c.h.s8.bf16 %v1197
        %v2502 = vunpack.c.h.s8.bf16 %v1198
        %v2503 = vunpack.c.h.s8.bf16 %v1199
        %v2504 = vunpack.c.h.s8.bf16 %v1200
        %v2505 = vunpack.c.l.s8.bf16 %v1201
        %v2506 = vunpack.c.l.s8.bf16 %v1202
        %v2507 = vunpack.c.l.s8.bf16 %v1203
        %v2508 = vunpack.c.l.s8.bf16 %v1204
        %v2509 = vunpack.c.h.s8.bf16 %v1201
        %v2510 = vunpack.c.h.s8.bf16 %v1202
        %v2511 = vunpack.c.h.s8.bf16 %v1203
        %v2512 = vunpack.c.h.s8.bf16 %v1204
        %v2513 = vunpack.c.l.s8.bf16 %v1205
        %v2514 = vunpack.c.l.s8.bf16 %v1206
        %v2515 = vunpack.c.l.s8.bf16 %v1207
        %v2516 = vunpack.c.l.s8.bf16 %v1208
        %v2517 = vunpack.c.h.s8.bf16 %v1205
        %v2518 = vunpack.c.h.s8.bf16 %v1206
        %v2519 = vunpack.c.h.s8.bf16 %v1207
        %v2520 = vunpack.c.h.s8.bf16 %v1208
        %v2521 = vunpack.c.l.s8.bf16 %v1209
        %v2522 = vunpack.c.l.s8.bf16 %v1210
        %v2523 = vunpack.c.l.s8.bf16 %v1211
        %v2524 = vunpack.c.l.s8.bf16 %v1212
        %v2525 = vunpack.c.h.s8.bf16 %v1209
        %v2526 = vunpack.c.h.s8.bf16 %v1210
        %v2527 = vunpack.c.h.s8.bf16 %v1211
        %v2528 = vunpack.c.h.s8.bf16 %v1212
        %v2529 = vunpack.c.l.s8.bf16 %v1213
        %v2530 = vunpack.c.l.s8.bf16 %v1214
        %v2531 = vunpack.c.l.s8.bf16 %v1215
        %v2532 = vunpack.c.l.s8.bf16 %v1216
        %v2533 = vunpack.c.h.s8.bf16 %v1213
        %v2534 = vunpack.c.h.s8.bf16 %v1214
        %v2535 = vunpack.c.h.s8.bf16 %v1215
        %v2536 = vunpack.c.h.s8.bf16 %v1216
        %v2537 = vunpack.c.l.s8.bf16 %v1217
        %v2538 = vunpack.c.l.s8.bf16 %v1218
        %v2539 = vunpack.c.l.s8.bf16 %v1219
        %v2540 = vunpack.c.l.s8.bf16 %v1220
        %v2541 = vunpack.c.h.s8.bf16 %v1217
        %v2542 = vunpack.c.h.s8.bf16 %v1218
        %v2543 = vunpack.c.h.s8.bf16 %v1219
        %v2544 = vunpack.c.h.s8.bf16 %v1220
        %v2545 = vunpack.c.l.s8.bf16 %v1221
        %v2546 = vunpack.c.l.s8.bf16 %v1222
        %v2547 = vunpack.c.l.s8.bf16 %v1223
        %v2548 = vunpack.c.l.s8.bf16 %v1224
        %v2549 = vunpack.c.h.s8.bf16 %v1221
        %v2550 = vunpack.c.h.s8.bf16 %v1222
        %v2551 = vunpack.c.h.s8.bf16 %v1223
        %v2552 = vunpack.c.h.s8.bf16 %v1224
        %v2553 = vunpack.c.l.s8.bf16 %v1225
        %v2554 = vunpack.c.l.s8.bf16 %v1226
        %v2555 = vunpack.c.l.s8.bf16 %v1227
        %v2556 = vunpack.c.l.s8.bf16 %v1228
        %v2557 = vunpack.c.h.s8.bf16 %v1225
        %v2558 = vunpack.c.h.s8.bf16 %v1226
        %v2559 = vunpack.c.h.s8.bf16 %v1227
        %v2560 = vunpack.c.h.s8.bf16 %v1228
        %v2561 = vunpack.c.l.s8.bf16 %v1229
        %v2562 = vunpack.c.l.s8.bf16 %v1230
        %v2563 = vunpack.c.l.s8.bf16 %v1231
        %v2564 = vunpack.c.l.s8.bf16 %v1232
        %v2565 = vunpack.c.h.s8.bf16 %v1229
        %v2566 = vunpack.c.h.s8.bf16 %v1230
        %v2567 = vunpack.c.h.s8.bf16 %v1231
        %v2568 = vunpack.c.h.s8.bf16 %v1232
        %v2569 = vunpack.c.l.s8.bf16 %v1233
        %v2570 = vunpack.c.l.s8.bf16 %v1234
        %v2571 = vunpack.c.l.s8.bf16 %v1235
        %v2572 = vunpack.c.l.s8.bf16 %v1236
        %v2573 = vunpack.c.h.s8.bf16 %v1233
        %v2574 = vunpack.c.h.s8.bf16 %v1234
        %v2575 = vunpack.c.h.s8.bf16 %v1235
        %v2576 = vunpack.c.h.s8.bf16 %v1236
        %v2577 = vunpack.c.l.s8.bf16 %v1237
        %v2578 = vunpack.c.l.s8.bf16 %v1238
        %v2579 = vunpack.c.l.s8.bf16 %v1239
        %v2580 = vunpack.c.l.s8.bf16 %v1240
        %v2581 = vunpack.c.h.s8.bf16 %v1237
        %v2582 = vunpack.c.h.s8.bf16 %v1238
        %v2583 = vunpack.c.h.s8.bf16 %v1239
        %v2584 = vunpack.c.h.s8.bf16 %v1240
        %v2585 = vunpack.c.l.s8.bf16 %v1241
        %v2586 = vunpack.c.l.s8.bf16 %v1242
        %v2587 = vunpack.c.l.s8.bf16 %v1243
        %v2588 = vunpack.c.l.s8.bf16 %v1244
        %v2589 = vunpack.c.h.s8.bf16 %v1241
        %v2590 = vunpack.c.h.s8.bf16 %v1242
        %v2591 = vunpack.c.h.s8.bf16 %v1243
        %v2592 = vunpack.c.h.s8.bf16 %v1244
        %v2593 = vunpack.c.l.s8.bf16 %v1245
        %v2594 = vunpack.c.l.s8.bf16 %v1246
        %v2595 = vunpack.c.l.s8.bf16 %v1247
        %v2596 = vunpack.c.l.s8.bf16 %v1248
        %v2597 = vunpack.c.h.s8.bf16 %v1245
        %v2598 = vunpack.c.h.s8.bf16 %v1246
        %v2599 = vunpack.c.h.s8.bf16 %v1247
        %v2600 = vunpack.c.h.s8.bf16 %v1248
        %v2601 = vunpack.c.l.s8.bf16 %v1249
        %v2602 = vunpack.c.l.s8.bf16 %v1250
        %v2603 = vunpack.c.l.s8.bf16 %v1251
        %v2604 = vunpack.c.l.s8.bf16 %v1252
        %v2605 = vunpack.c.h.s8.bf16 %v1249
        %v2606 = vunpack.c.h.s8.bf16 %v1250
        %v2607 = vunpack.c.h.s8.bf16 %v1251
        %v2608 = vunpack.c.h.s8.bf16 %v1252
        %v2609 = vunpack.c.l.s8.bf16 %v1253
        %v2610 = vunpack.c.l.s8.bf16 %v1254
        %v2611 = vunpack.c.l.s8.bf16 %v1255
        %v2612 = vunpack.c.l.s8.bf16 %v1256
        %v2613 = vunpack.c.h.s8.bf16 %v1253
        %v2614 = vunpack.c.h.s8.bf16 %v1254
        %v2615 = vunpack.c.h.s8.bf16 %v1255
        %v2616 = vunpack.c.h.s8.bf16 %v1256
        %v2617 = vunpack.c.l.s8.bf16 %v1257
        %v2618 = vunpack.c.l.s8.bf16 %v1258
        %v2619 = vunpack.c.l.s8.bf16 %v1259
        %v2620 = vunpack.c.l.s8.bf16 %v1260
        %v2621 = vunpack.c.h.s8.bf16 %v1257
        %v2622 = vunpack.c.h.s8.bf16 %v1258
        %v2623 = vunpack.c.h.s8.bf16 %v1259
        %v2624 = vunpack.c.h.s8.bf16 %v1260
        %v2625 = vunpack.c.l.s8.bf16 %v1261
        %v2626 = vunpack.c.l.s8.bf16 %v1262
        %v2627 = vunpack.c.l.s8.bf16 %v1263
        %v2628 = vunpack.c.l.s8.bf16 %v1264
        %v2629 = vunpack.c.h.s8.bf16 %v1261
        %v2630 = vunpack.c.h.s8.bf16 %v1262
        %v2631 = vunpack.c.h.s8.bf16 %v1263
        %v2632 = vunpack.c.h.s8.bf16 %v1264
        %v2633 = vunpack.c.l.s8.bf16 %v1265
        %v2634 = vunpack.c.l.s8.bf16 %v1266
        %v2635 = vunpack.c.l.s8.bf16 %v1267
        %v2636 = vunpack.c.l.s8.bf16 %v1268
        %v2637 = vunpack.c.h.s8.bf16 %v1265
        %v2638 = vunpack.c.h.s8.bf16 %v1266
        %v2639 = vunpack.c.h.s8.bf16 %v1267
        %v2640 = vunpack.c.h.s8.bf16 %v1268
        %v2641 = vunpack.c.l.s8.bf16 %v1269
        %v2642 = vunpack.c.l.s8.bf16 %v1270
        %v2643 = vunpack.c.l.s8.bf16 %v1271
        %v2644 = vunpack.c.l.s8.bf16 %v1272
        %v2645 = vunpack.c.h.s8.bf16 %v1269
        %v2646 = vunpack.c.h.s8.bf16 %v1270
        %v2647 = vunpack.c.h.s8.bf16 %v1271
        %v2648 = vunpack.c.h.s8.bf16 %v1272
        %v2649 = vunpack.c.l.s8.bf16 %v1273
        %v2650 = vunpack.c.l.s8.bf16 %v1274
        %v2651 = vunpack.c.l.s8.bf16 %v1275
        %v2652 = vunpack.c.l.s8.bf16 %v1276
        %v2653 = vunpack.c.h.s8.bf16 %v1273
        %v2654 = vunpack.c.h.s8.bf16 %v1274
        %v2655 = vunpack.c.h.s8.bf16 %v1275
        %v2656 = vunpack.c.h.s8.bf16 %v1276
        %v2657 = vunpack.c.l.s8.bf16 %v1277
        %v2658 = vunpack.c.l.s8.bf16 %v1278
        %v2659 = vunpack.c.l.s8.bf16 %v1279
        %v2660 = vunpack.c.l.s8.bf16 %v1280
        %v2661 = vunpack.c.h.s8.bf16 %v1277
        %v2662 = vunpack.c.h.s8.bf16 %v1278
        %v2663 = vunpack.c.h.s8.bf16 %v1279
        %v2664 = vunpack.c.h.s8.bf16 %v1280
        %v2665 = vunpack.c.l.s8.bf16 %v1281
        %v2666 = vunpack.c.l.s8.bf16 %v1282
        %v2667 = vunpack.c.l.s8.bf16 %v1283
        %v2668 = vunpack.c.l.s8.bf16 %v1284
        %v2669 = vunpack.c.h.s8.bf16 %v1281
        %v2670 = vunpack.c.h.s8.bf16 %v1282
        %v2671 = vunpack.c.h.s8.bf16 %v1283
        %v2672 = vunpack.c.h.s8.bf16 %v1284
        %v2673 = vunpack.c.l.s8.bf16 %v1285
        %v2674 = vunpack.c.l.s8.bf16 %v1286
        %v2675 = vunpack.c.l.s8.bf16 %v1287
        %v2676 = vunpack.c.l.s8.bf16 %v1288
        %v2677 = vunpack.c.h.s8.bf16 %v1285
        %v2678 = vunpack.c.h.s8.bf16 %v1286
        %v2679 = vunpack.c.h.s8.bf16 %v1287
        %v2680 = vunpack.c.h.s8.bf16 %v1288
        %v2681 = vunpack.c.l.s8.bf16 %v1289
        %v2682 = vunpack.c.l.s8.bf16 %v1290
        %v2683 = vunpack.c.l.s8.bf16 %v1291
        %v2684 = vunpack.c.l.s8.bf16 %v1292
        %v2685 = vunpack.c.h.s8.bf16 %v1289
        %v2686 = vunpack.c.h.s8.bf16 %v1290
        %v2687 = vunpack.c.h.s8.bf16 %v1291
        %v2688 = vunpack.c.h.s8.bf16 %v1292
        %v2689 = vunpack.c.l.s8.bf16 %v1293
        %v2690 = vunpack.c.l.s8.bf16 %v1294
        %v2691 = vunpack.c.l.s8.bf16 %v1295
        %v2692 = vunpack.c.l.s8.bf16 %v1296
        %v2693 = vunpack.c.h.s8.bf16 %v1293
        %v2694 = vunpack.c.h.s8.bf16 %v1294
        %v2695 = vunpack.c.h.s8.bf16 %v1295
        %v2696 = vunpack.c.h.s8.bf16 %v1296
        %v2697 = vunpack.c.l.s8.bf16 %v1297
        %v2698 = vunpack.c.l.s8.bf16 %v1298
        %v2699 = vunpack.c.l.s8.bf16 %v1299
        %v2700 = vunpack.c.l.s8.bf16 %v1300
        %v2701 = vunpack.c.h.s8.bf16 %v1297
        %v2702 = vunpack.c.h.s8.bf16 %v1298
        %v2703 = vunpack.c.h.s8.bf16 %v1299
        %v2704 = vunpack.c.h.s8.bf16 %v1300
        %v2705 = vunpack.c.l.s8.bf16 %v1301
        %v2706 = vunpack.c.l.s8.bf16 %v1302
        %v2707 = vunpack.c.l.s8.bf16 %v1303
        %v2708 = vunpack.c.l.s8.bf16 %v1304
        %v2709 = vunpack.c.h.s8.bf16 %v1301
        %v2710 = vunpack.c.h.s8.bf16 %v1302
        %v2711 = vunpack.c.h.s8.bf16 %v1303
        %v2712 = vunpack.c.h.s8.bf16 %v1304
        %v2713 = vunpack.c.l.s8.bf16 %v1305
        %v2714 = vunpack.c.l.s8.bf16 %v1306
        %v2715 = vunpack.c.l.s8.bf16 %v1307
        %v2716 = vunpack.c.l.s8.bf16 %v1308
        %v2717 = vunpack.c.h.s8.bf16 %v1305
        %v2718 = vunpack.c.h.s8.bf16 %v1306
        %v2719 = vunpack.c.h.s8.bf16 %v1307
        %v2720 = vunpack.c.h.s8.bf16 %v1308
        %v2721 = vunpack.c.l.s8.bf16 %v1309
        %v2722 = vunpack.c.l.s8.bf16 %v1310
        %v2723 = vunpack.c.l.s8.bf16 %v1311
        %v2724 = vunpack.c.l.s8.bf16 %v1312
        %v2725 = vunpack.c.h.s8.bf16 %v1309
        %v2726 = vunpack.c.h.s8.bf16 %v1310
        %v2727 = vunpack.c.h.s8.bf16 %v1311
        %v2728 = vunpack.c.h.s8.bf16 %v1312
        %v2729 = vunpack.c.l.s8.bf16 %v1313
        %v2730 = vunpack.c.l.s8.bf16 %v1314
        %v2731 = vunpack.c.l.s8.bf16 %v1315
        %v2732 = vunpack.c.l.s8.bf16 %v1316
        %v2733 = vunpack.c.h.s8.bf16 %v1313
        %v2734 = vunpack.c.h.s8.bf16 %v1314
        %v2735 = vunpack.c.h.s8.bf16 %v1315
        %v2736 = vunpack.c.h.s8.bf16 %v1316
        %v2737 = vunpack.c.l.s8.bf16 %v1317
        %v2738 = vunpack.c.l.s8.bf16 %v1318
        %v2739 = vunpack.c.l.s8.bf16 %v1319
        %v2740 = vunpack.c.l.s8.bf16 %v1320
        %v2741 = vunpack.c.h.s8.bf16 %v1317
        %v2742 = vunpack.c.h.s8.bf16 %v1318
        %v2743 = vunpack.c.h.s8.bf16 %v1319
        %v2744 = vunpack.c.h.s8.bf16 %v1320
        %v2745 = vunpack.c.l.s8.bf16 %v1321
        %v2746 = vunpack.c.l.s8.bf16 %v1322
        %v2747 = vunpack.c.l.s8.bf16 %v1323
        %v2748 = vunpack.c.l.s8.bf16 %v1324
        %v2749 = vunpack.c.h.s8.bf16 %v1321
        %v2750 = vunpack.c.h.s8.bf16 %v1322
        %v2751 = vunpack.c.h.s8.bf16 %v1323
        %v2752 = vunpack.c.h.s8.bf16 %v1324
        %v2753 = vunpack.c.l.s8.bf16 %v1325
        %v2754 = vunpack.c.l.s8.bf16 %v1326
        %v2755 = vunpack.c.l.s8.bf16 %v1327
        %v2756 = vunpack.c.l.s8.bf16 %v1328
        %v2757 = vunpack.c.h.s8.bf16 %v1325
        %v2758 = vunpack.c.h.s8.bf16 %v1326
        %v2759 = vunpack.c.h.s8.bf16 %v1327
        %v2760 = vunpack.c.h.s8.bf16 %v1328
        %v2761 = vunpack.c.l.s8.bf16 %v1329
        %v2762 = vunpack.c.l.s8.bf16 %v1330
        %v2763 = vunpack.c.l.s8.bf16 %v1331
        %v2764 = vunpack.c.l.s8.bf16 %v1332
        %v2765 = vunpack.c.h.s8.bf16 %v1329
        %v2766 = vunpack.c.h.s8.bf16 %v1330
        %v2767 = vunpack.c.h.s8.bf16 %v1331
        %v2768 = vunpack.c.h.s8.bf16 %v1332
        %v2769 = vunpack.c.l.s8.bf16 %v1333
        %v2770 = vunpack.c.l.s8.bf16 %v1334
        %v2771 = vunpack.c.l.s8.bf16 %v1335
        %v2772 = vunpack.c.l.s8.bf16 %v1336
        %v2773 = vunpack.c.h.s8.bf16 %v1333
        %v2774 = vunpack.c.h.s8.bf16 %v1334
        %v2775 = vunpack.c.h.s8.bf16 %v1335
        %v2776 = vunpack.c.h.s8.bf16 %v1336
        %v2777 = vunpack.c.l.s8.bf16 %v1337
        %v2778 = vunpack.c.l.s8.bf16 %v1338
        %v2779 = vunpack.c.l.s8.bf16 %v1339
        %v2780 = vunpack.c.l.s8.bf16 %v1340
        %v2781 = vunpack.c.h.s8.bf16 %v1337
        %v2782 = vunpack.c.h.s8.bf16 %v1338
        %v2783 = vunpack.c.h.s8.bf16 %v1339
        %v2784 = vunpack.c.h.s8.bf16 %v1340
        %v2785 = vunpack.c.l.s8.bf16 %v1341
        %v2786 = vunpack.c.l.s8.bf16 %v1342
        %v2787 = vunpack.c.l.s8.bf16 %v1343
        %v2788 = vunpack.c.l.s8.bf16 %v1344
        %v2789 = vunpack.c.h.s8.bf16 %v1341
        %v2790 = vunpack.c.h.s8.bf16 %v1342
        %v2791 = vunpack.c.h.s8.bf16 %v1343
        %v2792 = vunpack.c.h.s8.bf16 %v1344
        %v2793 = vunpack.c.l.s8.bf16 %v1345
        %v2794 = vunpack.c.l.s8.bf16 %v1346
        %v2795 = vunpack.c.l.s8.bf16 %v1347
        %v2796 = vunpack.c.l.s8.bf16 %v1348
        %v2797 = vunpack.c.h.s8.bf16 %v1345
        %v2798 = vunpack.c.h.s8.bf16 %v1346
        %v2799 = vunpack.c.h.s8.bf16 %v1347
        %v2800 = vunpack.c.h.s8.bf16 %v1348
        %v2801 = vunpack.c.l.s8.bf16 %v1349
        %v2802 = vunpack.c.l.s8.bf16 %v1350
        %v2803 = vunpack.c.l.s8.bf16 %v1351
        %v2804 = vunpack.c.l.s8.bf16 %v1352
        %v2805 = vunpack.c.h.s8.bf16 %v1349
        %v2806 = vunpack.c.h.s8.bf16 %v1350
        %v2807 = vunpack.c.h.s8.bf16 %v1351
        %v2808 = vunpack.c.h.s8.bf16 %v1352
        %v2809 = vunpack.c.l.s8.bf16 %v1353
        %v2810 = vunpack.c.l.s8.bf16 %v1354
        %v2811 = vunpack.c.l.s8.bf16 %v1355
        %v2812 = vunpack.c.l.s8.bf16 %v1356
        %v2813 = vunpack.c.h.s8.bf16 %v1353
        %v2814 = vunpack.c.h.s8.bf16 %v1354
        %v2815 = vunpack.c.h.s8.bf16 %v1355
        %v2816 = vunpack.c.h.s8.bf16 %v1356
        %v2817 = vunpack.c.l.s8.bf16 %v1357
        %v2818 = vunpack.c.l.s8.bf16 %v1358
        %v2819 = vunpack.c.l.s8.bf16 %v1359
        %v2820 = vunpack.c.l.s8.bf16 %v1360
        %v2821 = vunpack.c.h.s8.bf16 %v1357
        %v2822 = vunpack.c.h.s8.bf16 %v1358
        %v2823 = vunpack.c.h.s8.bf16 %v1359
        %v2824 = vunpack.c.h.s8.bf16 %v1360
        %v2825 = vunpack.c.l.s8.bf16 %v1361
        %v2826 = vunpack.c.l.s8.bf16 %v1362
        %v2827 = vunpack.c.l.s8.bf16 %v1363
        %v2828 = vunpack.c.l.s8.bf16 %v1364
        %v2829 = vunpack.c.h.s8.bf16 %v1361
        %v2830 = vunpack.c.h.s8.bf16 %v1362
        %v2831 = vunpack.c.h.s8.bf16 %v1363
        %v2832 = vunpack.c.h.s8.bf16 %v1364
        %v2833 = vunpack.c.l.s8.bf16 %v1365
        %v2834 = vunpack.c.l.s8.bf16 %v1366
        %v2835 = vunpack.c.l.s8.bf16 %v1367
        %v2836 = vunpack.c.l.s8.bf16 %v1368
        %v2837 = vunpack.c.h.s8.bf16 %v1365
        %v2838 = vunpack.c.h.s8.bf16 %v1366
        %v2839 = vunpack.c.h.s8.bf16 %v1367
        %v2840 = vunpack.c.h.s8.bf16 %v1368
        %v2841 = vunpack.c.l.s8.bf16 %v1369
        %v2842 = vunpack.c.l.s8.bf16 %v1370
        %v2843 = vunpack.c.l.s8.bf16 %v1371
        %v2844 = vunpack.c.l.s8.bf16 %v1372
        %v2845 = vunpack.c.h.s8.bf16 %v1369
        %v2846 = vunpack.c.h.s8.bf16 %v1370
        %v2847 = vunpack.c.h.s8.bf16 %v1371
        %v2848 = vunpack.c.h.s8.bf16 %v1372
        %v2849 = vunpack.c.l.s8.bf16 %v1373
        %v2850 = vunpack.c.l.s8.bf16 %v1374
        %v2851 = vunpack.c.l.s8.bf16 %v1375
        %v2852 = vunpack.c.l.s8.bf16 %v1376
        %v2853 = vunpack.c.h.s8.bf16 %v1373
        %v2854 = vunpack.c.h.s8.bf16 %v1374
        %v2855 = vunpack.c.h.s8.bf16 %v1375
        %v2856 = vunpack.c.h.s8.bf16 %v1376
        %v2857 = vunpack.c.l.s8.bf16 %v1377
        %v2858 = vunpack.c.l.s8.bf16 %v1378
        %v2859 = vunpack.c.l.s8.bf16 %v1379
        %v2860 = vunpack.c.l.s8.bf16 %v1380
        %v2861 = vunpack.c.h.s8.bf16 %v1377
        %v2862 = vunpack.c.h.s8.bf16 %v1378
        %v2863 = vunpack.c.h.s8.bf16 %v1379
        %v2864 = vunpack.c.h.s8.bf16 %v1380
        %v2865 = vunpack.c.l.s8.bf16 %v1381
        %v2866 = vunpack.c.l.s8.bf16 %v1382
        %v2867 = vunpack.c.l.s8.bf16 %v1383
        %v2868 = vunpack.c.l.s8.bf16 %v1384
        %v2869 = vunpack.c.h.s8.bf16 %v1381
        %v2870 = vunpack.c.h.s8.bf16 %v1382
        %v2871 = vunpack.c.h.s8.bf16 %v1383
        %v2872 = vunpack.c.h.s8.bf16 %v1384
        %v2873 = vunpack.c.l.s8.bf16 %v1385
        %v2874 = vunpack.c.l.s8.bf16 %v1386
        %v2875 = vunpack.c.l.s8.bf16 %v1387
        %v2876 = vunpack.c.l.s8.bf16 %v1388
        %v2877 = vunpack.c.h.s8.bf16 %v1385
        %v2878 = vunpack.c.h.s8.bf16 %v1386
        %v2879 = vunpack.c.h.s8.bf16 %v1387
        %v2880 = vunpack.c.h.s8.bf16 %v1388
        %v2881 = vunpack.c.l.s8.bf16 %v1389
        %v2882 = vunpack.c.l.s8.bf16 %v1390
        %v2883 = vunpack.c.l.s8.bf16 %v1391
        %v2884 = vunpack.c.l.s8.bf16 %v1392
        %v2885 = vunpack.c.h.s8.bf16 %v1389
        %v2886 = vunpack.c.h.s8.bf16 %v1390
        %v2887 = vunpack.c.h.s8.bf16 %v1391
        %v2888 = vunpack.c.h.s8.bf16 %v1392
        %v2889 = vunpack.c.l.s8.bf16 %v1393
        %v2890 = vunpack.c.l.s8.bf16 %v1394
        %v2891 = vunpack.c.l.s8.bf16 %v1395
        %v2892 = vunpack.c.l.s8.bf16 %v1396
        %v2893 = vunpack.c.h.s8.bf16 %v1393
        %v2894 = vunpack.c.h.s8.bf16 %v1394
        %v2895 = vunpack.c.h.s8.bf16 %v1395
        %v2896 = vunpack.c.h.s8.bf16 %v1396
        %v2897 = vunpack.c.l.s8.bf16 %v1397
        %v2898 = vunpack.c.l.s8.bf16 %v1398
        %v2899 = vunpack.c.l.s8.bf16 %v1399
        %v2900 = vunpack.c.l.s8.bf16 %v1400
        %v2901 = vunpack.c.h.s8.bf16 %v1397
        %v2902 = vunpack.c.h.s8.bf16 %v1398
        %v2903 = vunpack.c.h.s8.bf16 %v1399
        %v2904 = vunpack.c.h.s8.bf16 %v1400
        %v2905 = vunpack.c.l.s8.bf16 %v1401
        %v2906 = vunpack.c.l.s8.bf16 %v1402
        %v2907 = vunpack.c.l.s8.bf16 %v1403
        %v2908 = vunpack.c.l.s8.bf16 %v1404
        %v2909 = vunpack.c.h.s8.bf16 %v1401
        %v2910 = vunpack.c.h.s8.bf16 %v1402
        %v2911 = vunpack.c.h.s8.bf16 %v1403
        %v2912 = vunpack.c.h.s8.bf16 %v1404
        %v2913 = vunpack.c.l.s8.bf16 %v1405
        %v2914 = vunpack.c.l.s8.bf16 %v1406
        %v2915 = vunpack.c.l.s8.bf16 %v1407
        %v2916 = vunpack.c.l.s8.bf16 %v1408
        %v2917 = vunpack.c.h.s8.bf16 %v1405
        %v2918 = vunpack.c.h.s8.bf16 %v1406
        %v2919 = vunpack.c.h.s8.bf16 %v1407
        %v2920 = vunpack.c.h.s8.bf16 %v1408
        %v2921 = vunpack.c.l.s8.bf16 %v1409
        %v2922 = vunpack.c.l.s8.bf16 %v1410
        %v2923 = vunpack.c.l.s8.bf16 %v1411
        %v2924 = vunpack.c.l.s8.bf16 %v1412
        %v2925 = vunpack.c.h.s8.bf16 %v1409
        %v2926 = vunpack.c.h.s8.bf16 %v1410
        %v2927 = vunpack.c.h.s8.bf16 %v1411
        %v2928 = vunpack.c.h.s8.bf16 %v1412
        %v2929 = vunpack.c.l.s8.bf16 %v1413
        %v2930 = vunpack.c.l.s8.bf16 %v1414
        %v2931 = vunpack.c.l.s8.bf16 %v1415
        %v2932 = vunpack.c.l.s8.bf16 %v1416
        %v2933 = vunpack.c.h.s8.bf16 %v1413
        %v2934 = vunpack.c.h.s8.bf16 %v1414
        %v2935 = vunpack.c.h.s8.bf16 %v1415
        %v2936 = vunpack.c.h.s8.bf16 %v1416
        %v2937 = vunpack.c.l.s8.bf16 %v1417
        %v2938 = vunpack.c.l.s8.bf16 %v1418
        %v2939 = vunpack.c.l.s8.bf16 %v1419
        %v2940 = vunpack.c.l.s8.bf16 %v1420
        %v2941 = vunpack.c.h.s8.bf16 %v1417
        %v2942 = vunpack.c.h.s8.bf16 %v1418
        %v2943 = vunpack.c.h.s8.bf16 %v1419
        %v2944 = vunpack.c.h.s8.bf16 %v1420
        %v2945 = vunpack.c.l.s8.bf16 %v1421
        %v2946 = vunpack.c.l.s8.bf16 %v1422
        %v2947 = vunpack.c.l.s8.bf16 %v1423
        %v2948 = vunpack.c.l.s8.bf16 %v1424
        %v2949 = vunpack.c.h.s8.bf16 %v1421
        %v2950 = vunpack.c.h.s8.bf16 %v1422
        %v2951 = vunpack.c.h.s8.bf16 %v1423
        %v2952 = vunpack.c.h.s8.bf16 %v1424
        %v2953 = vunpack.c.l.s8.bf16 %v1425
        %v2954 = vunpack.c.l.s8.bf16 %v1426
        %v2955 = vunpack.c.l.s8.bf16 %v1427
        %v2956 = vunpack.c.l.s8.bf16 %v1428
        %v2957 = vunpack.c.h.s8.bf16 %v1425
        %v2958 = vunpack.c.h.s8.bf16 %v1426
        %v2959 = vunpack.c.h.s8.bf16 %v1427
        %v2960 = vunpack.c.h.s8.bf16 %v1428
        %v2961 = vunpack.c.l.s8.bf16 %v1429
        %v2962 = vunpack.c.l.s8.bf16 %v1430
        %v2963 = vunpack.c.l.s8.bf16 %v1431
        %v2964 = vunpack.c.l.s8.bf16 %v1432
        %v2965 = vunpack.c.h.s8.bf16 %v1429
        %v2966 = vunpack.c.h.s8.bf16 %v1430
        %v2967 = vunpack.c.h.s8.bf16 %v1431
        %v2968 = vunpack.c.h.s8.bf16 %v1432
        %v2993 = vunpack.c.l.b16 %v641
        %v2994 = vunpack.c.h.b16 %v641
        %v2995 = vunpack.c.l.b16 %v642
        %v2996 = vunpack.c.h.b16 %v642
        %v2997 = vunpack.c.l.b16 %v643
        %v2998 = vunpack.c.h.b16 %v643
        %v2999 = vunpack.c.l.b16 %v644
        %v3000 = vunpack.c.h.b16 %v644
        %v3001 = vunpack.c.l.b16 %v645
        %v3002 = vunpack.c.h.b16 %v645
        %v3003 = vunpack.c.l.b16 %v646
        %v3004 = vunpack.c.h.b16 %v646
        %v3005 = vunpack.c.l.b16 %v647
        %v3006 = vunpack.c.h.b16 %v647
        %v3007 = vunpack.c.l.b16 %v648
        %v3008 = vunpack.c.h.b16 %v648
        %v3009 = vunpack.c.l.b16 %v649
        %v3010 = vunpack.c.h.b16 %v649
        %v3011 = vunpack.c.l.b16 %v650
        %v3012 = vunpack.c.h.b16 %v650
        %v3013 = vunpack.c.l.b16 %v651
        %v3014 = vunpack.c.h.b16 %v651
        %v3015 = vunpack.c.l.b16 %v652
        %v3016 = vunpack.c.h.b16 %v652
        %v3017 = vunpack.c.l.b16 %v653
        %v3018 = vunpack.c.h.b16 %v653
        %v3019 = vunpack.c.l.b16 %v654
        %v3020 = vunpack.c.h.b16 %v654
        %v3021 = vunpack.c.l.b16 %v655
        %v3022 = vunpack.c.h.b16 %v655
        %v3023 = vunpack.c.l.b16 %v656
        %v3024 = vunpack.c.h.b16 %v656
        %v3025 = vunpack.c.l.b16 %v657
        %v3026 = vunpack.c.h.b16 %v657
        %v3027 = vunpack.c.l.b16 %v658
        %v3028 = vunpack.c.h.b16 %v658
        %v3029 = vunpack.c.l.b16 %v659
        %v3030 = vunpack.c.h.b16 %v659
        %v3031 = vunpack.c.l.b16 %v660
        %v3032 = vunpack.c.h.b16 %v660
        %v3033 = vunpack.c.l.b16 %v661
        %v3034 = vunpack.c.h.b16 %v661
        %v3035 = vunpack.c.l.b16 %v662
        %v3036 = vunpack.c.h.b16 %v662
        %v3037 = vunpack.c.l.b16 %v663
        %v3038 = vunpack.c.h.b16 %v663
        %v3039 = vunpack.c.l.b16 %v664
        %v3040 = vunpack.c.h.b16 %v664
        %v3041 = vpack.c.b16 %v2993, %v2993
        %v3042 = vpack.c.b16 %v2994, %v2994
        %v3043 = vpack.c.b16 %v2995, %v2995
        %v3044 = vpack.c.b16 %v2996, %v2996
        %v3045 = vpack.c.b16 %v2997, %v2997
        %v3046 = vpack.c.b16 %v2998, %v2998
        %v3047 = vpack.c.b16 %v2999, %v2999
        %v3048 = vpack.c.b16 %v3000, %v3000
        %v3049 = vpack.c.b16 %v3001, %v3001
        %v3050 = vpack.c.b16 %v3002, %v3002
        %v3051 = vpack.c.b16 %v3003, %v3003
        %v3052 = vpack.c.b16 %v3004, %v3004
        %v3053 = vpack.c.b16 %v3005, %v3005
        %v3054 = vpack.c.b16 %v3006, %v3006
        %v3055 = vpack.c.b16 %v3007, %v3007
        %v3056 = vpack.c.b16 %v3008, %v3008
        %v3057 = vpack.c.b16 %v3009, %v3009
        %v3058 = vpack.c.b16 %v3010, %v3010
        %v3059 = vpack.c.b16 %v3011, %v3011
        %v3060 = vpack.c.b16 %v3012, %v3012
        %v3061 = vpack.c.b16 %v3013, %v3013
        %v3062 = vpack.c.b16 %v3014, %v3014
        %v3063 = vpack.c.b16 %v3015, %v3015
        %v3064 = vpack.c.b16 %v3016, %v3016
        %v3065 = vpack.c.b16 %v3017, %v3017
        %v3066 = vpack.c.b16 %v3018, %v3018
        %v3067 = vpack.c.b16 %v3019, %v3019
        %v3068 = vpack.c.b16 %v3020, %v3020
        %v3069 = vpack.c.b16 %v3021, %v3021
        %v3070 = vpack.c.b16 %v3022, %v3022
        %v3071 = vpack.c.b16 %v3023, %v3023
        %v3072 = vpack.c.b16 %v3024, %v3024
        %v3073 = vpack.c.b16 %v3025, %v3025
        %v3074 = vpack.c.b16 %v3026, %v3026
        %v3075 = vpack.c.b16 %v3027, %v3027
        %v3076 = vpack.c.b16 %v3028, %v3028
        %v3077 = vpack.c.b16 %v3029, %v3029
        %v3078 = vpack.c.b16 %v3030, %v3030
        %v3079 = vpack.c.b16 %v3031, %v3031
        %v3080 = vpack.c.b16 %v3032, %v3032
        %v3081 = vpack.c.b16 %v3033, %v3033
        %v3082 = vpack.c.b16 %v3034, %v3034
        %v3083 = vpack.c.b16 %v3035, %v3035
        %v3084 = vpack.c.b16 %v3036, %v3036
        %v3085 = vpack.c.b16 %v3037, %v3037
        %v3086 = vpack.c.b16 %v3038, %v3038
        %v3087 = vpack.c.b16 %v3039, %v3039
        %v3088 = vpack.c.b16 %v3040, %v3040
        %3137 = vmatprep.subr.bf16.mxu0 %v1462
        %3138 = vmatpush1.bf16.msra.mxu0 %v1461
        %3139 = vmatprep.subr.bf16.mxu0 %v1458
        %3140 = vmatpush1.bf16.msra.mxu0 %v1457
        %3141 = vmatprep.subr.bf16.mxu0 %v1454
        %3142 = vmatpush1.bf16.msra.mxu0 %v1453
        %3143 = vmatprep.subr.bf16.mxu0 %v1450
        %3144 = vmatpush1.bf16.msra.mxu0 %v1449
        %3145 = vmatprep.subr.bf16.mxu0 %v1446
        %3146 = vmatpush1.bf16.msra.mxu0 %v1445
        %3147 = vmatprep.subr.bf16.mxu0 %v1442
        %3148 = vmatpush1.bf16.msra.mxu0 %v1441
        %3149 = vmatprep.subr.bf16.mxu0 %v1438
        %3150 = vmatpush1.bf16.msra.mxu0 %v1437
        %3151 = vmatprep.subr.bf16.mxu0 %v1434
        %3152 = vmatpush1.bf16.msra.mxu0 %v1433
        %3153 = vmatprep.subr.bf16.mxu0 %v1494
        %3154 = vmatpush2.bf16.msra.mxu0 %v1493
        %3155 = vmatprep.subr.bf16.mxu0 %v1490
        %3156 = vmatpush2.bf16.msra.mxu0 %v1489
        %3157 = vmatprep.subr.bf16.mxu0 %v1486
        %3158 = vmatpush2.bf16.msra.mxu0 %v1485
        %3159 = vmatprep.subr.bf16.mxu0 %v1482
        %3160 = vmatpush2.bf16.msra.mxu0 %v1481
        %3161 = vmatprep.subr.bf16.mxu0 %v1478
        %3162 = vmatpush2.bf16.msra.mxu0 %v1477
        %3163 = vmatprep.subr.bf16.mxu0 %v1474
        %3164 = vmatpush2.bf16.msra.mxu0 %v1473
        %3165 = vmatprep.subr.bf16.mxu0 %v1470
        %3166 = vmatpush2.bf16.msra.mxu0 %v1469
        %3167 = vmatprep.subr.bf16.mxu0 %v1466
        %3168 = vmatpush2.bf16.msra.mxu0 %v1465
        %3169 = vmatprep.mubr.bf16.mxu0 %v3042
        %3170 = vmatmul.mubr.bf16.gmra.mxu0 %v3041
        %v3171 = vpop.f32.mrf.mxu0
        %v3172 = vadd.f32 0.0, %v3171
        %v3173 = vpop.f32.mrf.mxu0
        %v3174 = vadd.f32 0.0, %v3173
        %v3175 = vpop.f32.mrf.mxu0
        %v3176 = vpop.f32.mrf.mxu0
        %3177 = vdwg.mxu0
        %3178 = vmatprep.subr.bf16.mxu0 %v1526
        %3179 = vmatpush1.bf16.msra.mxu0 %v1525
        %3180 = vmatprep.subr.bf16.mxu0 %v1522
        %3181 = vmatpush1.bf16.msra.mxu0 %v1521
        %3182 = vmatprep.subr.bf16.mxu0 %v1518
        %3183 = vmatpush1.bf16.msra.mxu0 %v1517
        %3184 = vmatprep.subr.bf16.mxu0 %v1514
        %3185 = vmatpush1.bf16.msra.mxu0 %v1513
        %3186 = vmatprep.subr.bf16.mxu0 %v1510
        %3187 = vmatpush1.bf16.msra.mxu0 %v1509
        %3188 = vmatprep.subr.bf16.mxu0 %v1506
        %3189 = vmatpush1.bf16.msra.mxu0 %v1505
        %3190 = vmatprep.subr.bf16.mxu0 %v1502
        %3191 = vmatpush1.bf16.msra.mxu0 %v1501
        %3192 = vmatprep.subr.bf16.mxu0 %v1498
        %3193 = vmatpush1.bf16.msra.mxu0 %v1497
        %3194 = vmatprep.subr.bf16.mxu0 %v1558
        %3195 = vmatpush2.bf16.msra.mxu0 %v1557
        %3196 = vmatprep.subr.bf16.mxu0 %v1554
        %3197 = vmatpush2.bf16.msra.mxu0 %v1553
        %3198 = vmatprep.subr.bf16.mxu0 %v1550
        %3199 = vmatpush2.bf16.msra.mxu0 %v1549
        %3200 = vmatprep.subr.bf16.mxu0 %v1546
        %3201 = vmatpush2.bf16.msra.mxu0 %v1545
        %3202 = vmatprep.subr.bf16.mxu0 %v1542
        %3203 = vmatpush2.bf16.msra.mxu0 %v1541
        %3204 = vmatprep.subr.bf16.mxu0 %v1538
        %3205 = vmatpush2.bf16.msra.mxu0 %v1537
        %3206 = vmatprep.subr.bf16.mxu0 %v1534
        %3207 = vmatpush2.bf16.msra.mxu0 %v1533
        %3208 = vmatprep.subr.bf16.mxu0 %v1530
        %3209 = vmatpush2.bf16.msra.mxu0 %v1529
        %3210 = vmatprep.mubr.bf16.mxu0 %v3044
        %3211 = vmatmul.mubr.bf16.gmra.mxu0 %v3043
        %v3212 = vpop.f32.mrf.mxu0
        %v3213 = vadd.f32 %v3172, %v3212
        %v3214 = vpop.f32.mrf.mxu0
        %v3215 = vadd.f32 %v3174, %v3214
        %v3216 = vpop.f32.mrf.mxu0
        %v3217 = vpop.f32.mrf.mxu0
        %3218 = vdwg.mxu0
        %3219 = vmatprep.subr.bf16.mxu0 %v1590
        %3220 = vmatpush1.bf16.msra.mxu0 %v1589
        %3221 = vmatprep.subr.bf16.mxu0 %v1586
        %3222 = vmatpush1.bf16.msra.mxu0 %v1585
        %3223 = vmatprep.subr.bf16.mxu0 %v1582
        %3224 = vmatpush1.bf16.msra.mxu0 %v1581
        %3225 = vmatprep.subr.bf16.mxu0 %v1578
        %3226 = vmatpush1.bf16.msra.mxu0 %v1577
        %3227 = vmatprep.subr.bf16.mxu0 %v1574
        %3228 = vmatpush1.bf16.msra.mxu0 %v1573
        %3229 = vmatprep.subr.bf16.mxu0 %v1570
        %3230 = vmatpush1.bf16.msra.mxu0 %v1569
        %3231 = vmatprep.subr.bf16.mxu0 %v1566
        %3232 = vmatpush1.bf16.msra.mxu0 %v1565
        %3233 = vmatprep.subr.bf16.mxu0 %v1562
        %3234 = vmatpush1.bf16.msra.mxu0 %v1561
        %3235 = vmatprep.subr.bf16.mxu0 %v1622
        %3236 = vmatpush2.bf16.msra.mxu0 %v1621
        %3237 = vmatprep.subr.bf16.mxu0 %v1618
        %3238 = vmatpush2.bf16.msra.mxu0 %v1617
        %3239 = vmatprep.subr.bf16.mxu0 %v1614
        %3240 = vmatpush2.bf16.msra.mxu0 %v1613
        %3241 = vmatprep.subr.bf16.mxu0 %v1610
        %3242 = vmatpush2.bf16.msra.mxu0 %v1609
        %3243 = vmatprep.subr.bf16.mxu0 %v1606
        %3244 = vmatpush2.bf16.msra.mxu0 %v1605
        %3245 = vmatprep.subr.bf16.mxu0 %v1602
        %3246 = vmatpush2.bf16.msra.mxu0 %v1601
        %3247 = vmatprep.subr.bf16.mxu0 %v1598
        %3248 = vmatpush2.bf16.msra.mxu0 %v1597
        %3249 = vmatprep.subr.bf16.mxu0 %v1594
        %3250 = vmatpush2.bf16.msra.mxu0 %v1593
        %3251 = vmatprep.mubr.bf16.mxu0 %v3046
        %3252 = vmatmul.mubr.bf16.gmra.mxu0 %v3045
        %v3253 = vpop.f32.mrf.mxu0
        %v3254 = vadd.f32 %v3213, %v3253
        %v3255 = vpop.f32.mrf.mxu0
        %v3256 = vadd.f32 %v3215, %v3255
        %v3257 = vpop.f32.mrf.mxu0
        %v3258 = vpop.f32.mrf.mxu0
        %3259 = vdwg.mxu0
        %3260 = vmatprep.subr.bf16.mxu0 %v1654
        %3261 = vmatpush1.bf16.msra.mxu0 %v1653
        %3262 = vmatprep.subr.bf16.mxu0 %v1650
        %3263 = vmatpush1.bf16.msra.mxu0 %v1649
        %3264 = vmatprep.subr.bf16.mxu0 %v1646
        %3265 = vmatpush1.bf16.msra.mxu0 %v1645
        %3266 = vmatprep.subr.bf16.mxu0 %v1642
        %3267 = vmatpush1.bf16.msra.mxu0 %v1641
        %3268 = vmatprep.subr.bf16.mxu0 %v1638
        %3269 = vmatpush1.bf16.msra.mxu0 %v1637
        %3270 = vmatprep.subr.bf16.mxu0 %v1634
        %3271 = vmatpush1.bf16.msra.mxu0 %v1633
        %3272 = vmatprep.subr.bf16.mxu0 %v1630
        %3273 = vmatpush1.bf16.msra.mxu0 %v1629
        %3274 = vmatprep.subr.bf16.mxu0 %v1626
        %3275 = vmatpush1.bf16.msra.mxu0 %v1625
        %3276 = vmatprep.subr.bf16.mxu0 %v1686
        %3277 = vmatpush2.bf16.msra.mxu0 %v1685
        %3278 = vmatprep.subr.bf16.mxu0 %v1682
        %3279 = vmatpush2.bf16.msra.mxu0 %v1681
        %3280 = vmatprep.subr.bf16.mxu0 %v1678
        %3281 = vmatpush2.bf16.msra.mxu0 %v1677
        %3282 = vmatprep.subr.bf16.mxu0 %v1674
        %3283 = vmatpush2.bf16.msra.mxu0 %v1673
        %3284 = vmatprep.subr.bf16.mxu0 %v1670
        %3285 = vmatpush2.bf16.msra.mxu0 %v1669
        %3286 = vmatprep.subr.bf16.mxu0 %v1666
        %3287 = vmatpush2.bf16.msra.mxu0 %v1665
        %3288 = vmatprep.subr.bf16.mxu0 %v1662
        %3289 = vmatpush2.bf16.msra.mxu0 %v1661
        %3290 = vmatprep.subr.bf16.mxu0 %v1658
        %3291 = vmatpush2.bf16.msra.mxu0 %v1657
        %3292 = vmatprep.mubr.bf16.mxu0 %v3048
        %3293 = vmatmul.mubr.bf16.gmra.mxu0 %v3047
        %v3294 = vpop.f32.mrf.mxu0
        %v3295 = vadd.f32 %v3254, %v3294
        %v3296 = vpop.f32.mrf.mxu0
        %v3297 = vadd.f32 %v3256, %v3296
        %v3298 = vpop.f32.mrf.mxu0
        %v3299 = vpop.f32.mrf.mxu0
        %3300 = vdwg.mxu0
        %3301 = vmatprep.subr.bf16.mxu0 %v1718
        %3302 = vmatpush1.bf16.msra.mxu0 %v1717
        %3303 = vmatprep.subr.bf16.mxu0 %v1714
        %3304 = vmatpush1.bf16.msra.mxu0 %v1713
        %3305 = vmatprep.subr.bf16.mxu0 %v1710
        %3306 = vmatpush1.bf16.msra.mxu0 %v1709
        %3307 = vmatprep.subr.bf16.mxu0 %v1706
        %3308 = vmatpush1.bf16.msra.mxu0 %v1705
        %3309 = vmatprep.subr.bf16.mxu0 %v1702
        %3310 = vmatpush1.bf16.msra.mxu0 %v1701
        %3311 = vmatprep.subr.bf16.mxu0 %v1698
        %3312 = vmatpush1.bf16.msra.mxu0 %v1697
        %3313 = vmatprep.subr.bf16.mxu0 %v1694
        %3314 = vmatpush1.bf16.msra.mxu0 %v1693
        %3315 = vmatprep.subr.bf16.mxu0 %v1690
        %3316 = vmatpush1.bf16.msra.mxu0 %v1689
        %3317 = vmatprep.subr.bf16.mxu0 %v1750
        %3318 = vmatpush2.bf16.msra.mxu0 %v1749
        %3319 = vmatprep.subr.bf16.mxu0 %v1746
        %3320 = vmatpush2.bf16.msra.mxu0 %v1745
        %3321 = vmatprep.subr.bf16.mxu0 %v1742
        %3322 = vmatpush2.bf16.msra.mxu0 %v1741
        %3323 = vmatprep.subr.bf16.mxu0 %v1738
        %3324 = vmatpush2.bf16.msra.mxu0 %v1737
        %3325 = vmatprep.subr.bf16.mxu0 %v1734
        %3326 = vmatpush2.bf16.msra.mxu0 %v1733
        %3327 = vmatprep.subr.bf16.mxu0 %v1730
        %3328 = vmatpush2.bf16.msra.mxu0 %v1729
        %3329 = vmatprep.subr.bf16.mxu0 %v1726
        %3330 = vmatpush2.bf16.msra.mxu0 %v1725
        %3331 = vmatprep.subr.bf16.mxu0 %v1722
        %3332 = vmatpush2.bf16.msra.mxu0 %v1721
        %3333 = vmatprep.mubr.bf16.mxu0 %v3050
        %3334 = vmatmul.mubr.bf16.gmra.mxu0 %v3049
        %v3335 = vpop.f32.mrf.mxu0
        %v3336 = vadd.f32 %v3295, %v3335
        %v3337 = vpop.f32.mrf.mxu0
        %v3338 = vadd.f32 %v3297, %v3337
        %v3339 = vpop.f32.mrf.mxu0
        %v3340 = vpop.f32.mrf.mxu0
        %3341 = vdwg.mxu0
        %3342 = vmatprep.subr.bf16.mxu0 %v1782
        %3343 = vmatpush1.bf16.msra.mxu0 %v1781
        %3344 = vmatprep.subr.bf16.mxu0 %v1778
        %3345 = vmatpush1.bf16.msra.mxu0 %v1777
        %3346 = vmatprep.subr.bf16.mxu0 %v1774
        %3347 = vmatpush1.bf16.msra.mxu0 %v1773
        %3348 = vmatprep.subr.bf16.mxu0 %v1770
        %3349 = vmatpush1.bf16.msra.mxu0 %v1769
        %3350 = vmatprep.subr.bf16.mxu0 %v1766
        %3351 = vmatpush1.bf16.msra.mxu0 %v1765
        %3352 = vmatprep.subr.bf16.mxu0 %v1762
        %3353 = vmatpush1.bf16.msra.mxu0 %v1761
        %3354 = vmatprep.subr.bf16.mxu0 %v1758
        %3355 = vmatpush1.bf16.msra.mxu0 %v1757
        %3356 = vmatprep.subr.bf16.mxu0 %v1754
        %3357 = vmatpush1.bf16.msra.mxu0 %v1753
        %3358 = vmatprep.subr.bf16.mxu0 %v1814
        %3359 = vmatpush2.bf16.msra.mxu0 %v1813
        %3360 = vmatprep.subr.bf16.mxu0 %v1810
        %3361 = vmatpush2.bf16.msra.mxu0 %v1809
        %3362 = vmatprep.subr.bf16.mxu0 %v1806
        %3363 = vmatpush2.bf16.msra.mxu0 %v1805
        %3364 = vmatprep.subr.bf16.mxu0 %v1802
        %3365 = vmatpush2.bf16.msra.mxu0 %v1801
        %3366 = vmatprep.subr.bf16.mxu0 %v1798
        %3367 = vmatpush2.bf16.msra.mxu0 %v1797
        %3368 = vmatprep.subr.bf16.mxu0 %v1794
        %3369 = vmatpush2.bf16.msra.mxu0 %v1793
        %3370 = vmatprep.subr.bf16.mxu0 %v1790
        %3371 = vmatpush2.bf16.msra.mxu0 %v1789
        %3372 = vmatprep.subr.bf16.mxu0 %v1786
        %3373 = vmatpush2.bf16.msra.mxu0 %v1785
        %3374 = vmatprep.mubr.bf16.mxu0 %v3052
        %3375 = vmatmul.mubr.bf16.gmra.mxu0 %v3051
        %v3376 = vpop.f32.mrf.mxu0
        %v3377 = vadd.f32 %v3336, %v3376
        %v3378 = vpop.f32.mrf.mxu0
        %v3379 = vadd.f32 %v3338, %v3378
        %v3380 = vpop.f32.mrf.mxu0
        %v3381 = vpop.f32.mrf.mxu0
        %3382 = vdwg.mxu0
        %3383 = vmatprep.subr.bf16.mxu0 %v1846
        %3384 = vmatpush1.bf16.msra.mxu0 %v1845
        %3385 = vmatprep.subr.bf16.mxu0 %v1842
        %3386 = vmatpush1.bf16.msra.mxu0 %v1841
        %3387 = vmatprep.subr.bf16.mxu0 %v1838
        %3388 = vmatpush1.bf16.msra.mxu0 %v1837
        %3389 = vmatprep.subr.bf16.mxu0 %v1834
        %3390 = vmatpush1.bf16.msra.mxu0 %v1833
        %3391 = vmatprep.subr.bf16.mxu0 %v1830
        %3392 = vmatpush1.bf16.msra.mxu0 %v1829
        %3393 = vmatprep.subr.bf16.mxu0 %v1826
        %3394 = vmatpush1.bf16.msra.mxu0 %v1825
        %3395 = vmatprep.subr.bf16.mxu0 %v1822
        %3396 = vmatpush1.bf16.msra.mxu0 %v1821
        %3397 = vmatprep.subr.bf16.mxu0 %v1818
        %3398 = vmatpush1.bf16.msra.mxu0 %v1817
        %3399 = vmatprep.subr.bf16.mxu0 %v1878
        %3400 = vmatpush2.bf16.msra.mxu0 %v1877
        %3401 = vmatprep.subr.bf16.mxu0 %v1874
        %3402 = vmatpush2.bf16.msra.mxu0 %v1873
        %3403 = vmatprep.subr.bf16.mxu0 %v1870
        %3404 = vmatpush2.bf16.msra.mxu0 %v1869
        %3405 = vmatprep.subr.bf16.mxu0 %v1866
        %3406 = vmatpush2.bf16.msra.mxu0 %v1865
        %3407 = vmatprep.subr.bf16.mxu0 %v1862
        %3408 = vmatpush2.bf16.msra.mxu0 %v1861
        %3409 = vmatprep.subr.bf16.mxu0 %v1858
        %3410 = vmatpush2.bf16.msra.mxu0 %v1857
        %3411 = vmatprep.subr.bf16.mxu0 %v1854
        %3412 = vmatpush2.bf16.msra.mxu0 %v1853
        %3413 = vmatprep.subr.bf16.mxu0 %v1850
        %3414 = vmatpush2.bf16.msra.mxu0 %v1849
        %3415 = vmatprep.mubr.bf16.mxu0 %v3054
        %3416 = vmatmul.mubr.bf16.gmra.mxu0 %v3053
        %v3417 = vpop.f32.mrf.mxu0
        %v3418 = vadd.f32 %v3377, %v3417
        %v3419 = vpop.f32.mrf.mxu0
        %v3420 = vadd.f32 %v3379, %v3419
        %v3421 = vpop.f32.mrf.mxu0
        %v3422 = vpop.f32.mrf.mxu0
        %3423 = vdwg.mxu0
        %3424 = vmatprep.subr.bf16.mxu0 %v1910
        %3425 = vmatpush1.bf16.msra.mxu0 %v1909
        %3426 = vmatprep.subr.bf16.mxu0 %v1906
        %3427 = vmatpush1.bf16.msra.mxu0 %v1905
        %3428 = vmatprep.subr.bf16.mxu0 %v1902
        %3429 = vmatpush1.bf16.msra.mxu0 %v1901
        %3430 = vmatprep.subr.bf16.mxu0 %v1898
        %3431 = vmatpush1.bf16.msra.mxu0 %v1897
        %3432 = vmatprep.subr.bf16.mxu0 %v1894
        %3433 = vmatpush1.bf16.msra.mxu0 %v1893
        %3434 = vmatprep.subr.bf16.mxu0 %v1890
        %3435 = vmatpush1.bf16.msra.mxu0 %v1889
        %3436 = vmatprep.subr.bf16.mxu0 %v1886
        %3437 = vmatpush1.bf16.msra.mxu0 %v1885
        %3438 = vmatprep.subr.bf16.mxu0 %v1882
        %3439 = vmatpush1.bf16.msra.mxu0 %v1881
        %3440 = vmatprep.subr.bf16.mxu0 %v1942
        %3441 = vmatpush2.bf16.msra.mxu0 %v1941
        %3442 = vmatprep.subr.bf16.mxu0 %v1938
        %3443 = vmatpush2.bf16.msra.mxu0 %v1937
        %3444 = vmatprep.subr.bf16.mxu0 %v1934
        %3445 = vmatpush2.bf16.msra.mxu0 %v1933
        %3446 = vmatprep.subr.bf16.mxu0 %v1930
        %3447 = vmatpush2.bf16.msra.mxu0 %v1929
        %3448 = vmatprep.subr.bf16.mxu0 %v1926
        %3449 = vmatpush2.bf16.msra.mxu0 %v1925
        %3450 = vmatprep.subr.bf16.mxu0 %v1922
        %3451 = vmatpush2.bf16.msra.mxu0 %v1921
        %3452 = vmatprep.subr.bf16.mxu0 %v1918
        %3453 = vmatpush2.bf16.msra.mxu0 %v1917
        %3454 = vmatprep.subr.bf16.mxu0 %v1914
        %3455 = vmatpush2.bf16.msra.mxu0 %v1913
        %3456 = vmatprep.mubr.bf16.mxu0 %v3056
        %3457 = vmatmul.mubr.bf16.gmra.mxu0 %v3055
        %v3458 = vpop.f32.mrf.mxu0
        %v3459 = vadd.f32 %v3418, %v3458
        %v3460 = vpop.f32.mrf.mxu0
        %v3461 = vadd.f32 %v3420, %v3460
        %v3462 = vpop.f32.mrf.mxu0
        %v3463 = vpop.f32.mrf.mxu0
        %3464 = vdwg.mxu0
        %3465 = vmatprep.subr.bf16.mxu0 %v1974
        %3466 = vmatpush1.bf16.msra.mxu0 %v1973
        %3467 = vmatprep.subr.bf16.mxu0 %v1970
        %3468 = vmatpush1.bf16.msra.mxu0 %v1969
        %3469 = vmatprep.subr.bf16.mxu0 %v1966
        %3470 = vmatpush1.bf16.msra.mxu0 %v1965
        %3471 = vmatprep.subr.bf16.mxu0 %v1962
        %3472 = vmatpush1.bf16.msra.mxu0 %v1961
        %3473 = vmatprep.subr.bf16.mxu0 %v1958
        %3474 = vmatpush1.bf16.msra.mxu0 %v1957
        %3475 = vmatprep.subr.bf16.mxu0 %v1954
        %3476 = vmatpush1.bf16.msra.mxu0 %v1953
        %3477 = vmatprep.subr.bf16.mxu0 %v1950
        %3478 = vmatpush1.bf16.msra.mxu0 %v1949
        %3479 = vmatprep.subr.bf16.mxu0 %v1946
        %3480 = vmatpush1.bf16.msra.mxu0 %v1945
        %3481 = vmatprep.subr.bf16.mxu0 %v2006
        %3482 = vmatpush2.bf16.msra.mxu0 %v2005
        %3483 = vmatprep.subr.bf16.mxu0 %v2002
        %3484 = vmatpush2.bf16.msra.mxu0 %v2001
        %3485 = vmatprep.subr.bf16.mxu0 %v1998
        %3486 = vmatpush2.bf16.msra.mxu0 %v1997
        %3487 = vmatprep.subr.bf16.mxu0 %v1994
        %3488 = vmatpush2.bf16.msra.mxu0 %v1993
        %3489 = vmatprep.subr.bf16.mxu0 %v1990
        %3490 = vmatpush2.bf16.msra.mxu0 %v1989
        %3491 = vmatprep.subr.bf16.mxu0 %v1986
        %3492 = vmatpush2.bf16.msra.mxu0 %v1985
        %3493 = vmatprep.subr.bf16.mxu0 %v1982
        %3494 = vmatpush2.bf16.msra.mxu0 %v1981
        %3495 = vmatprep.subr.bf16.mxu0 %v1978
        %3496 = vmatpush2.bf16.msra.mxu0 %v1977
        %3497 = vmatprep.mubr.bf16.mxu0 %v3058
        %3498 = vmatmul.mubr.bf16.gmra.mxu0 %v3057
        %v3499 = vpop.f32.mrf.mxu0
        %v3500 = vadd.f32 %v3459, %v3499
        %v3501 = vpop.f32.mrf.mxu0
        %v3502 = vadd.f32 %v3461, %v3501
        %v3503 = vpop.f32.mrf.mxu0
        %v3504 = vpop.f32.mrf.mxu0
        %3505 = vdwg.mxu0
        %3506 = vmatprep.subr.bf16.mxu0 %v2038
        %3507 = vmatpush1.bf16.msra.mxu0 %v2037
        %3508 = vmatprep.subr.bf16.mxu0 %v2034
        %3509 = vmatpush1.bf16.msra.mxu0 %v2033
        %3510 = vmatprep.subr.bf16.mxu0 %v2030
        %3511 = vmatpush1.bf16.msra.mxu0 %v2029
        %3512 = vmatprep.subr.bf16.mxu0 %v2026
        %3513 = vmatpush1.bf16.msra.mxu0 %v2025
        %3514 = vmatprep.subr.bf16.mxu0 %v2022
        %3515 = vmatpush1.bf16.msra.mxu0 %v2021
        %3516 = vmatprep.subr.bf16.mxu0 %v2018
        %3517 = vmatpush1.bf16.msra.mxu0 %v2017
        %3518 = vmatprep.subr.bf16.mxu0 %v2014
        %3519 = vmatpush1.bf16.msra.mxu0 %v2013
        %3520 = vmatprep.subr.bf16.mxu0 %v2010
        %3521 = vmatpush1.bf16.msra.mxu0 %v2009
        %3522 = vmatprep.subr.bf16.mxu0 %v2070
        %3523 = vmatpush2.bf16.msra.mxu0 %v2069
        %3524 = vmatprep.subr.bf16.mxu0 %v2066
        %3525 = vmatpush2.bf16.msra.mxu0 %v2065
        %3526 = vmatprep.subr.bf16.mxu0 %v2062
        %3527 = vmatpush2.bf16.msra.mxu0 %v2061
        %3528 = vmatprep.subr.bf16.mxu0 %v2058
        %3529 = vmatpush2.bf16.msra.mxu0 %v2057
        %3530 = vmatprep.subr.bf16.mxu0 %v2054
        %3531 = vmatpush2.bf16.msra.mxu0 %v2053
        %3532 = vmatprep.subr.bf16.mxu0 %v2050
        %3533 = vmatpush2.bf16.msra.mxu0 %v2049
        %3534 = vmatprep.subr.bf16.mxu0 %v2046
        %3535 = vmatpush2.bf16.msra.mxu0 %v2045
        %3536 = vmatprep.subr.bf16.mxu0 %v2042
        %3537 = vmatpush2.bf16.msra.mxu0 %v2041
        %3538 = vmatprep.mubr.bf16.mxu0 %v3060
        %3539 = vmatmul.mubr.bf16.gmra.mxu0 %v3059
        %v3540 = vpop.f32.mrf.mxu0
        %v3541 = vadd.f32 %v3500, %v3540
        %v3542 = vpop.f32.mrf.mxu0
        %v3543 = vadd.f32 %v3502, %v3542
        %v3544 = vpop.f32.mrf.mxu0
        %v3545 = vpop.f32.mrf.mxu0
        %3546 = vdwg.mxu0
        %3547 = vmatprep.subr.bf16.mxu0 %v2102
        %3548 = vmatpush1.bf16.msra.mxu0 %v2101
        %3549 = vmatprep.subr.bf16.mxu0 %v2098
        %3550 = vmatpush1.bf16.msra.mxu0 %v2097
        %3551 = vmatprep.subr.bf16.mxu0 %v2094
        %3552 = vmatpush1.bf16.msra.mxu0 %v2093
        %3553 = vmatprep.subr.bf16.mxu0 %v2090
        %3554 = vmatpush1.bf16.msra.mxu0 %v2089
        %3555 = vmatprep.subr.bf16.mxu0 %v2086
        %3556 = vmatpush1.bf16.msra.mxu0 %v2085
        %3557 = vmatprep.subr.bf16.mxu0 %v2082
        %3558 = vmatpush1.bf16.msra.mxu0 %v2081
        %3559 = vmatprep.subr.bf16.mxu0 %v2078
        %3560 = vmatpush1.bf16.msra.mxu0 %v2077
        %3561 = vmatprep.subr.bf16.mxu0 %v2074
        %3562 = vmatpush1.bf16.msra.mxu0 %v2073
        %3563 = vmatprep.subr.bf16.mxu0 %v2134
        %3564 = vmatpush2.bf16.msra.mxu0 %v2133
        %3565 = vmatprep.subr.bf16.mxu0 %v2130
        %3566 = vmatpush2.bf16.msra.mxu0 %v2129
        %3567 = vmatprep.subr.bf16.mxu0 %v2126
        %3568 = vmatpush2.bf16.msra.mxu0 %v2125
        %3569 = vmatprep.subr.bf16.mxu0 %v2122
        %3570 = vmatpush2.bf16.msra.mxu0 %v2121
        %3571 = vmatprep.subr.bf16.mxu0 %v2118
        %3572 = vmatpush2.bf16.msra.mxu0 %v2117
        %3573 = vmatprep.subr.bf16.mxu0 %v2114
        %3574 = vmatpush2.bf16.msra.mxu0 %v2113
        %3575 = vmatprep.subr.bf16.mxu0 %v2110
        %3576 = vmatpush2.bf16.msra.mxu0 %v2109
        %3577 = vmatprep.subr.bf16.mxu0 %v2106
        %3578 = vmatpush2.bf16.msra.mxu0 %v2105
        %3579 = vmatprep.mubr.bf16.mxu0 %v3062
        %3580 = vmatmul.mubr.bf16.gmra.mxu0 %v3061
        %v3581 = vpop.f32.mrf.mxu0
        %v3582 = vadd.f32 %v3541, %v3581
        %v3583 = vpop.f32.mrf.mxu0
        %v3584 = vadd.f32 %v3543, %v3583
        %v3585 = vpop.f32.mrf.mxu0
        %v3586 = vpop.f32.mrf.mxu0
        %3587 = vdwg.mxu0
        %3588 = vmatprep.subr.bf16.mxu0 %v2166
        %3589 = vmatpush1.bf16.msra.mxu0 %v2165
        %3590 = vmatprep.subr.bf16.mxu0 %v2162
        %3591 = vmatpush1.bf16.msra.mxu0 %v2161
        %3592 = vmatprep.subr.bf16.mxu0 %v2158
        %3593 = vmatpush1.bf16.msra.mxu0 %v2157
        %3594 = vmatprep.subr.bf16.mxu0 %v2154
        %3595 = vmatpush1.bf16.msra.mxu0 %v2153
        %3596 = vmatprep.subr.bf16.mxu0 %v2150
        %3597 = vmatpush1.bf16.msra.mxu0 %v2149
        %3598 = vmatprep.subr.bf16.mxu0 %v2146
        %3599 = vmatpush1.bf16.msra.mxu0 %v2145
        %3600 = vmatprep.subr.bf16.mxu0 %v2142
        %3601 = vmatpush1.bf16.msra.mxu0 %v2141
        %3602 = vmatprep.subr.bf16.mxu0 %v2138
        %3603 = vmatpush1.bf16.msra.mxu0 %v2137
        %3604 = vmatprep.subr.bf16.mxu0 %v2198
        %3605 = vmatpush2.bf16.msra.mxu0 %v2197
        %3606 = vmatprep.subr.bf16.mxu0 %v2194
        %3607 = vmatpush2.bf16.msra.mxu0 %v2193
        %3608 = vmatprep.subr.bf16.mxu0 %v2190
        %3609 = vmatpush2.bf16.msra.mxu0 %v2189
        %3610 = vmatprep.subr.bf16.mxu0 %v2186
        %3611 = vmatpush2.bf16.msra.mxu0 %v2185
        %3612 = vmatprep.subr.bf16.mxu0 %v2182
        %3613 = vmatpush2.bf16.msra.mxu0 %v2181
        %3614 = vmatprep.subr.bf16.mxu0 %v2178
        %3615 = vmatpush2.bf16.msra.mxu0 %v2177
        %3616 = vmatprep.subr.bf16.mxu0 %v2174
        %3617 = vmatpush2.bf16.msra.mxu0 %v2173
        %3618 = vmatprep.subr.bf16.mxu0 %v2170
        %3619 = vmatpush2.bf16.msra.mxu0 %v2169
        %3620 = vmatprep.mubr.bf16.mxu0 %v3064
        %3621 = vmatmul.mubr.bf16.gmra.mxu0 %v3063
        %v3622 = vpop.f32.mrf.mxu0
        %v3623 = vadd.f32 %v3582, %v3622
        %v3624 = vpop.f32.mrf.mxu0
        %v3625 = vadd.f32 %v3584, %v3624
        %v3626 = vpop.f32.mrf.mxu0
        %v3627 = vpop.f32.mrf.mxu0
        %3628 = vdwg.mxu0
        %3629 = vmatprep.subr.bf16.mxu0 %v2230
        %3630 = vmatpush1.bf16.msra.mxu0 %v2229
        %3631 = vmatprep.subr.bf16.mxu0 %v2226
        %3632 = vmatpush1.bf16.msra.mxu0 %v2225
        %3633 = vmatprep.subr.bf16.mxu0 %v2222
        %3634 = vmatpush1.bf16.msra.mxu0 %v2221
        %3635 = vmatprep.subr.bf16.mxu0 %v2218
        %3636 = vmatpush1.bf16.msra.mxu0 %v2217
        %3637 = vmatprep.subr.bf16.mxu0 %v2214
        %3638 = vmatpush1.bf16.msra.mxu0 %v2213
        %3639 = vmatprep.subr.bf16.mxu0 %v2210
        %3640 = vmatpush1.bf16.msra.mxu0 %v2209
        %3641 = vmatprep.subr.bf16.mxu0 %v2206
        %3642 = vmatpush1.bf16.msra.mxu0 %v2205
        %3643 = vmatprep.subr.bf16.mxu0 %v2202
        %3644 = vmatpush1.bf16.msra.mxu0 %v2201
        %3645 = vmatprep.subr.bf16.mxu0 %v2262
        %3646 = vmatpush2.bf16.msra.mxu0 %v2261
        %3647 = vmatprep.subr.bf16.mxu0 %v2258
        %3648 = vmatpush2.bf16.msra.mxu0 %v2257
        %3649 = vmatprep.subr.bf16.mxu0 %v2254
        %3650 = vmatpush2.bf16.msra.mxu0 %v2253
        %3651 = vmatprep.subr.bf16.mxu0 %v2250
        %3652 = vmatpush2.bf16.msra.mxu0 %v2249
        %3653 = vmatprep.subr.bf16.mxu0 %v2246
        %3654 = vmatpush2.bf16.msra.mxu0 %v2245
        %3655 = vmatprep.subr.bf16.mxu0 %v2242
        %3656 = vmatpush2.bf16.msra.mxu0 %v2241
        %3657 = vmatprep.subr.bf16.mxu0 %v2238
        %3658 = vmatpush2.bf16.msra.mxu0 %v2237
        %3659 = vmatprep.subr.bf16.mxu0 %v2234
        %3660 = vmatpush2.bf16.msra.mxu0 %v2233
        %3661 = vmatprep.mubr.bf16.mxu0 %v3066
        %3662 = vmatmul.mubr.bf16.gmra.mxu0 %v3065
        %v3663 = vpop.f32.mrf.mxu0
        %v3664 = vadd.f32 %v3623, %v3663
        %v3665 = vpop.f32.mrf.mxu0
        %v3666 = vadd.f32 %v3625, %v3665
        %v3667 = vpop.f32.mrf.mxu0
        %v3668 = vpop.f32.mrf.mxu0
        %3669 = vdwg.mxu0
        %3670 = vmatprep.subr.bf16.mxu0 %v2294
        %3671 = vmatpush1.bf16.msra.mxu0 %v2293
        %3672 = vmatprep.subr.bf16.mxu0 %v2290
        %3673 = vmatpush1.bf16.msra.mxu0 %v2289
        %3674 = vmatprep.subr.bf16.mxu0 %v2286
        %3675 = vmatpush1.bf16.msra.mxu0 %v2285
        %3676 = vmatprep.subr.bf16.mxu0 %v2282
        %3677 = vmatpush1.bf16.msra.mxu0 %v2281
        %3678 = vmatprep.subr.bf16.mxu0 %v2278
        %3679 = vmatpush1.bf16.msra.mxu0 %v2277
        %3680 = vmatprep.subr.bf16.mxu0 %v2274
        %3681 = vmatpush1.bf16.msra.mxu0 %v2273
        %3682 = vmatprep.subr.bf16.mxu0 %v2270
        %3683 = vmatpush1.bf16.msra.mxu0 %v2269
        %3684 = vmatprep.subr.bf16.mxu0 %v2266
        %3685 = vmatpush1.bf16.msra.mxu0 %v2265
        %3686 = vmatprep.subr.bf16.mxu0 %v2326
        %3687 = vmatpush2.bf16.msra.mxu0 %v2325
        %3688 = vmatprep.subr.bf16.mxu0 %v2322
        %3689 = vmatpush2.bf16.msra.mxu0 %v2321
        %3690 = vmatprep.subr.bf16.mxu0 %v2318
        %3691 = vmatpush2.bf16.msra.mxu0 %v2317
        %3692 = vmatprep.subr.bf16.mxu0 %v2314
        %3693 = vmatpush2.bf16.msra.mxu0 %v2313
        %3694 = vmatprep.subr.bf16.mxu0 %v2310
        %3695 = vmatpush2.bf16.msra.mxu0 %v2309
        %3696 = vmatprep.subr.bf16.mxu0 %v2306
        %3697 = vmatpush2.bf16.msra.mxu0 %v2305
        %3698 = vmatprep.subr.bf16.mxu0 %v2302
        %3699 = vmatpush2.bf16.msra.mxu0 %v2301
        %3700 = vmatprep.subr.bf16.mxu0 %v2298
        %3701 = vmatpush2.bf16.msra.mxu0 %v2297
        %3702 = vmatprep.mubr.bf16.mxu0 %v3068
        %3703 = vmatmul.mubr.bf16.gmra.mxu0 %v3067
        %v3704 = vpop.f32.mrf.mxu0
        %v3705 = vadd.f32 %v3664, %v3704
        %v3706 = vpop.f32.mrf.mxu0
        %v3707 = vadd.f32 %v3666, %v3706
        %v3708 = vpop.f32.mrf.mxu0
        %v3709 = vpop.f32.mrf.mxu0
        %3710 = vdwg.mxu0
        %3711 = vmatprep.subr.bf16.mxu0 %v2358
        %3712 = vmatpush1.bf16.msra.mxu0 %v2357
        %3713 = vmatprep.subr.bf16.mxu0 %v2354
        %3714 = vmatpush1.bf16.msra.mxu0 %v2353
        %3715 = vmatprep.subr.bf16.mxu0 %v2350
        %3716 = vmatpush1.bf16.msra.mxu0 %v2349
        %3717 = vmatprep.subr.bf16.mxu0 %v2346
        %3718 = vmatpush1.bf16.msra.mxu0 %v2345
        %3719 = vmatprep.subr.bf16.mxu0 %v2342
        %3720 = vmatpush1.bf16.msra.mxu0 %v2341
        %3721 = vmatprep.subr.bf16.mxu0 %v2338
        %3722 = vmatpush1.bf16.msra.mxu0 %v2337
        %3723 = vmatprep.subr.bf16.mxu0 %v2334
        %3724 = vmatpush1.bf16.msra.mxu0 %v2333
        %3725 = vmatprep.subr.bf16.mxu0 %v2330
        %3726 = vmatpush1.bf16.msra.mxu0 %v2329
        %3727 = vmatprep.subr.bf16.mxu0 %v2390
        %3728 = vmatpush2.bf16.msra.mxu0 %v2389
        %3729 = vmatprep.subr.bf16.mxu0 %v2386
        %3730 = vmatpush2.bf16.msra.mxu0 %v2385
        %3731 = vmatprep.subr.bf16.mxu0 %v2382
        %3732 = vmatpush2.bf16.msra.mxu0 %v2381
        %3733 = vmatprep.subr.bf16.mxu0 %v2378
        %3734 = vmatpush2.bf16.msra.mxu0 %v2377
        %3735 = vmatprep.subr.bf16.mxu0 %v2374
        %3736 = vmatpush2.bf16.msra.mxu0 %v2373
        %3737 = vmatprep.subr.bf16.mxu0 %v2370
        %3738 = vmatpush2.bf16.msra.mxu0 %v2369
        %3739 = vmatprep.subr.bf16.mxu0 %v2366
        %3740 = vmatpush2.bf16.msra.mxu0 %v2365
        %3741 = vmatprep.subr.bf16.mxu0 %v2362
        %3742 = vmatpush2.bf16.msra.mxu0 %v2361
        %3743 = vmatprep.mubr.bf16.mxu0 %v3070
        %3744 = vmatmul.mubr.bf16.gmra.mxu0 %v3069
        %v3745 = vpop.f32.mrf.mxu0
        %v3746 = vadd.f32 %v3705, %v3745
        %v3747 = vpop.f32.mrf.mxu0
        %v3748 = vadd.f32 %v3707, %v3747
        %v3749 = vpop.f32.mrf.mxu0
        %v3750 = vpop.f32.mrf.mxu0
        %3751 = vdwg.mxu0
        %3752 = vmatprep.subr.bf16.mxu0 %v2422
        %3753 = vmatpush1.bf16.msra.mxu0 %v2421
        %3754 = vmatprep.subr.bf16.mxu0 %v2418
        %3755 = vmatpush1.bf16.msra.mxu0 %v2417
        %3756 = vmatprep.subr.bf16.mxu0 %v2414
        %3757 = vmatpush1.bf16.msra.mxu0 %v2413
        %3758 = vmatprep.subr.bf16.mxu0 %v2410
        %3759 = vmatpush1.bf16.msra.mxu0 %v2409
        %3760 = vmatprep.subr.bf16.mxu0 %v2406
        %3761 = vmatpush1.bf16.msra.mxu0 %v2405
        %3762 = vmatprep.subr.bf16.mxu0 %v2402
        %3763 = vmatpush1.bf16.msra.mxu0 %v2401
        %3764 = vmatprep.subr.bf16.mxu0 %v2398
        %3765 = vmatpush1.bf16.msra.mxu0 %v2397
        %3766 = vmatprep.subr.bf16.mxu0 %v2394
        %3767 = vmatpush1.bf16.msra.mxu0 %v2393
        %3768 = vmatprep.subr.bf16.mxu0 %v2454
        %3769 = vmatpush2.bf16.msra.mxu0 %v2453
        %3770 = vmatprep.subr.bf16.mxu0 %v2450
        %3771 = vmatpush2.bf16.msra.mxu0 %v2449
        %3772 = vmatprep.subr.bf16.mxu0 %v2446
        %3773 = vmatpush2.bf16.msra.mxu0 %v2445
        %3774 = vmatprep.subr.bf16.mxu0 %v2442
        %3775 = vmatpush2.bf16.msra.mxu0 %v2441
        %3776 = vmatprep.subr.bf16.mxu0 %v2438
        %3777 = vmatpush2.bf16.msra.mxu0 %v2437
        %3778 = vmatprep.subr.bf16.mxu0 %v2434
        %3779 = vmatpush2.bf16.msra.mxu0 %v2433
        %3780 = vmatprep.subr.bf16.mxu0 %v2430
        %3781 = vmatpush2.bf16.msra.mxu0 %v2429
        %3782 = vmatprep.subr.bf16.mxu0 %v2426
        %3783 = vmatpush2.bf16.msra.mxu0 %v2425
        %3784 = vmatprep.mubr.bf16.mxu0 %v3072
        %3785 = vmatmul.mubr.bf16.gmra.mxu0 %v3071
        %v3786 = vpop.f32.mrf.mxu0
        %v3787 = vadd.f32 %v3746, %v3786
        %v3788 = vpop.f32.mrf.mxu0
        %v3789 = vadd.f32 %v3748, %v3788
        %v3790 = vpop.f32.mrf.mxu0
        %v3791 = vpop.f32.mrf.mxu0
        %3792 = vdwg.mxu0
        %3793 = vmatprep.subr.bf16.mxu0 %v2486
        %3794 = vmatpush1.bf16.msra.mxu0 %v2485
        %3795 = vmatprep.subr.bf16.mxu0 %v2482
        %3796 = vmatpush1.bf16.msra.mxu0 %v2481
        %3797 = vmatprep.subr.bf16.mxu0 %v2478
        %3798 = vmatpush1.bf16.msra.mxu0 %v2477
        %3799 = vmatprep.subr.bf16.mxu0 %v2474
        %3800 = vmatpush1.bf16.msra.mxu0 %v2473
        %3801 = vmatprep.subr.bf16.mxu0 %v2470
        %3802 = vmatpush1.bf16.msra.mxu0 %v2469
        %3803 = vmatprep.subr.bf16.mxu0 %v2466
        %3804 = vmatpush1.bf16.msra.mxu0 %v2465
        %3805 = vmatprep.subr.bf16.mxu0 %v2462
        %3806 = vmatpush1.bf16.msra.mxu0 %v2461
        %3807 = vmatprep.subr.bf16.mxu0 %v2458
        %3808 = vmatpush1.bf16.msra.mxu0 %v2457
        %3809 = vmatprep.subr.bf16.mxu0 %v2518
        %3810 = vmatpush2.bf16.msra.mxu0 %v2517
        %3811 = vmatprep.subr.bf16.mxu0 %v2514
        %3812 = vmatpush2.bf16.msra.mxu0 %v2513
        %3813 = vmatprep.subr.bf16.mxu0 %v2510
        %3814 = vmatpush2.bf16.msra.mxu0 %v2509
        %3815 = vmatprep.subr.bf16.mxu0 %v2506
        %3816 = vmatpush2.bf16.msra.mxu0 %v2505
        %3817 = vmatprep.subr.bf16.mxu0 %v2502
        %3818 = vmatpush2.bf16.msra.mxu0 %v2501
        %3819 = vmatprep.subr.bf16.mxu0 %v2498
        %3820 = vmatpush2.bf16.msra.mxu0 %v2497
        %3821 = vmatprep.subr.bf16.mxu0 %v2494
        %3822 = vmatpush2.bf16.msra.mxu0 %v2493
        %3823 = vmatprep.subr.bf16.mxu0 %v2490
        %3824 = vmatpush2.bf16.msra.mxu0 %v2489
        %3825 = vmatprep.mubr.bf16.mxu0 %v3074
        %3826 = vmatmul.mubr.bf16.gmra.mxu0 %v3073
        %v3827 = vpop.f32.mrf.mxu0
        %v3828 = vadd.f32 %v3787, %v3827
        %v3829 = vpop.f32.mrf.mxu0
        %v3830 = vadd.f32 %v3789, %v3829
        %v3831 = vpop.f32.mrf.mxu0
        %v3832 = vpop.f32.mrf.mxu0
        %3833 = vdwg.mxu0
        %3834 = vmatprep.subr.bf16.mxu0 %v2550
        %3835 = vmatpush1.bf16.msra.mxu0 %v2549
        %3836 = vmatprep.subr.bf16.mxu0 %v2546
        %3837 = vmatpush1.bf16.msra.mxu0 %v2545
        %3838 = vmatprep.subr.bf16.mxu0 %v2542
        %3839 = vmatpush1.bf16.msra.mxu0 %v2541
        %3840 = vmatprep.subr.bf16.mxu0 %v2538
        %3841 = vmatpush1.bf16.msra.mxu0 %v2537
        %3842 = vmatprep.subr.bf16.mxu0 %v2534
        %3843 = vmatpush1.bf16.msra.mxu0 %v2533
        %3844 = vmatprep.subr.bf16.mxu0 %v2530
        %3845 = vmatpush1.bf16.msra.mxu0 %v2529
        %3846 = vmatprep.subr.bf16.mxu0 %v2526
        %3847 = vmatpush1.bf16.msra.mxu0 %v2525
        %3848 = vmatprep.subr.bf16.mxu0 %v2522
        %3849 = vmatpush1.bf16.msra.mxu0 %v2521
        %3850 = vmatprep.subr.bf16.mxu0 %v2582
        %3851 = vmatpush2.bf16.msra.mxu0 %v2581
        %3852 = vmatprep.subr.bf16.mxu0 %v2578
        %3853 = vmatpush2.bf16.msra.mxu0 %v2577
        %3854 = vmatprep.subr.bf16.mxu0 %v2574
        %3855 = vmatpush2.bf16.msra.mxu0 %v2573
        %3856 = vmatprep.subr.bf16.mxu0 %v2570
        %3857 = vmatpush2.bf16.msra.mxu0 %v2569
        %3858 = vmatprep.subr.bf16.mxu0 %v2566
        %3859 = vmatpush2.bf16.msra.mxu0 %v2565
        %3860 = vmatprep.subr.bf16.mxu0 %v2562
        %3861 = vmatpush2.bf16.msra.mxu0 %v2561
        %3862 = vmatprep.subr.bf16.mxu0 %v2558
        %3863 = vmatpush2.bf16.msra.mxu0 %v2557
        %3864 = vmatprep.subr.bf16.mxu0 %v2554
        %3865 = vmatpush2.bf16.msra.mxu0 %v2553
        %3866 = vmatprep.mubr.bf16.mxu0 %v3076
        %3867 = vmatmul.mubr.bf16.gmra.mxu0 %v3075
        %v3868 = vpop.f32.mrf.mxu0
        %v3869 = vadd.f32 %v3828, %v3868
        %v3870 = vpop.f32.mrf.mxu0
        %v3871 = vadd.f32 %v3830, %v3870
        %v3872 = vpop.f32.mrf.mxu0
        %v3873 = vpop.f32.mrf.mxu0
        %3874 = vdwg.mxu0
        %3875 = vmatprep.subr.bf16.mxu0 %v2614
        %3876 = vmatpush1.bf16.msra.mxu0 %v2613
        %3877 = vmatprep.subr.bf16.mxu0 %v2610
        %3878 = vmatpush1.bf16.msra.mxu0 %v2609
        %3879 = vmatprep.subr.bf16.mxu0 %v2606
        %3880 = vmatpush1.bf16.msra.mxu0 %v2605
        %3881 = vmatprep.subr.bf16.mxu0 %v2602
        %3882 = vmatpush1.bf16.msra.mxu0 %v2601
        %3883 = vmatprep.subr.bf16.mxu0 %v2598
        %3884 = vmatpush1.bf16.msra.mxu0 %v2597
        %3885 = vmatprep.subr.bf16.mxu0 %v2594
        %3886 = vmatpush1.bf16.msra.mxu0 %v2593
        %3887 = vmatprep.subr.bf16.mxu0 %v2590
        %3888 = vmatpush1.bf16.msra.mxu0 %v2589
        %3889 = vmatprep.subr.bf16.mxu0 %v2586
        %3890 = vmatpush1.bf16.msra.mxu0 %v2585
        %3891 = vmatprep.subr.bf16.mxu0 %v2646
        %3892 = vmatpush2.bf16.msra.mxu0 %v2645
        %3893 = vmatprep.subr.bf16.mxu0 %v2642
        %3894 = vmatpush2.bf16.msra.mxu0 %v2641
        %3895 = vmatprep.subr.bf16.mxu0 %v2638
        %3896 = vmatpush2.bf16.msra.mxu0 %v2637
        %3897 = vmatprep.subr.bf16.mxu0 %v2634
        %3898 = vmatpush2.bf16.msra.mxu0 %v2633
        %3899 = vmatprep.subr.bf16.mxu0 %v2630
        %3900 = vmatpush2.bf16.msra.mxu0 %v2629
        %3901 = vmatprep.subr.bf16.mxu0 %v2626
        %3902 = vmatpush2.bf16.msra.mxu0 %v2625
        %3903 = vmatprep.subr.bf16.mxu0 %v2622
        %3904 = vmatpush2.bf16.msra.mxu0 %v2621
        %3905 = vmatprep.subr.bf16.mxu0 %v2618
        %3906 = vmatpush2.bf16.msra.mxu0 %v2617
        %3907 = vmatprep.mubr.bf16.mxu0 %v3078
        %3908 = vmatmul.mubr.bf16.gmra.mxu0 %v3077
        %v3909 = vpop.f32.mrf.mxu0
        %v3910 = vadd.f32 %v3869, %v3909
        %v3911 = vpop.f32.mrf.mxu0
        %v3912 = vadd.f32 %v3871, %v3911
        %v3913 = vpop.f32.mrf.mxu0
        %v3914 = vpop.f32.mrf.mxu0
        %3915 = vdwg.mxu0
        %3916 = vmatprep.subr.bf16.mxu0 %v2678
        %3917 = vmatpush1.bf16.msra.mxu0 %v2677
        %3918 = vmatprep.subr.bf16.mxu0 %v2674
        %3919 = vmatpush1.bf16.msra.mxu0 %v2673
        %3920 = vmatprep.subr.bf16.mxu0 %v2670
        %3921 = vmatpush1.bf16.msra.mxu0 %v2669
        %3922 = vmatprep.subr.bf16.mxu0 %v2666
        %3923 = vmatpush1.bf16.msra.mxu0 %v2665
        %3924 = vmatprep.subr.bf16.mxu0 %v2662
        %3925 = vmatpush1.bf16.msra.mxu0 %v2661
        %3926 = vmatprep.subr.bf16.mxu0 %v2658
        %3927 = vmatpush1.bf16.msra.mxu0 %v2657
        %3928 = vmatprep.subr.bf16.mxu0 %v2654
        %3929 = vmatpush1.bf16.msra.mxu0 %v2653
        %3930 = vmatprep.subr.bf16.mxu0 %v2650
        %3931 = vmatpush1.bf16.msra.mxu0 %v2649
        %3932 = vmatprep.subr.bf16.mxu0 %v2710
        %3933 = vmatpush2.bf16.msra.mxu0 %v2709
        %3934 = vmatprep.subr.bf16.mxu0 %v2706
        %3935 = vmatpush2.bf16.msra.mxu0 %v2705
        %3936 = vmatprep.subr.bf16.mxu0 %v2702
        %3937 = vmatpush2.bf16.msra.mxu0 %v2701
        %3938 = vmatprep.subr.bf16.mxu0 %v2698
        %3939 = vmatpush2.bf16.msra.mxu0 %v2697
        %3940 = vmatprep.subr.bf16.mxu0 %v2694
        %3941 = vmatpush2.bf16.msra.mxu0 %v2693
        %3942 = vmatprep.subr.bf16.mxu0 %v2690
        %3943 = vmatpush2.bf16.msra.mxu0 %v2689
        %3944 = vmatprep.subr.bf16.mxu0 %v2686
        %3945 = vmatpush2.bf16.msra.mxu0 %v2685
        %3946 = vmatprep.subr.bf16.mxu0 %v2682
        %3947 = vmatpush2.bf16.msra.mxu0 %v2681
        %3948 = vmatprep.mubr.bf16.mxu0 %v3080
        %3949 = vmatmul.mubr.bf16.gmra.mxu0 %v3079
        %v3950 = vpop.f32.mrf.mxu0
        %v3951 = vadd.f32 %v3910, %v3950
        %v3952 = vpop.f32.mrf.mxu0
        %v3953 = vadd.f32 %v3912, %v3952
        %v3954 = vpop.f32.mrf.mxu0
        %v3955 = vpop.f32.mrf.mxu0
        %3956 = vdwg.mxu0
        %3957 = vmatprep.subr.bf16.mxu0 %v2742
        %3958 = vmatpush1.bf16.msra.mxu0 %v2741
        %3959 = vmatprep.subr.bf16.mxu0 %v2738
        %3960 = vmatpush1.bf16.msra.mxu0 %v2737
        %3961 = vmatprep.subr.bf16.mxu0 %v2734
        %3962 = vmatpush1.bf16.msra.mxu0 %v2733
        %3963 = vmatprep.subr.bf16.mxu0 %v2730
        %3964 = vmatpush1.bf16.msra.mxu0 %v2729
        %3965 = vmatprep.subr.bf16.mxu0 %v2726
        %3966 = vmatpush1.bf16.msra.mxu0 %v2725
        %3967 = vmatprep.subr.bf16.mxu0 %v2722
        %3968 = vmatpush1.bf16.msra.mxu0 %v2721
        %3969 = vmatprep.subr.bf16.mxu0 %v2718
        %3970 = vmatpush1.bf16.msra.mxu0 %v2717
        %3971 = vmatprep.subr.bf16.mxu0 %v2714
        %3972 = vmatpush1.bf16.msra.mxu0 %v2713
        %3973 = vmatprep.subr.bf16.mxu0 %v2774
        %3974 = vmatpush2.bf16.msra.mxu0 %v2773
        %3975 = vmatprep.subr.bf16.mxu0 %v2770
        %3976 = vmatpush2.bf16.msra.mxu0 %v2769
        %3977 = vmatprep.subr.bf16.mxu0 %v2766
        %3978 = vmatpush2.bf16.msra.mxu0 %v2765
        %3979 = vmatprep.subr.bf16.mxu0 %v2762
        %3980 = vmatpush2.bf16.msra.mxu0 %v2761
        %3981 = vmatprep.subr.bf16.mxu0 %v2758
        %3982 = vmatpush2.bf16.msra.mxu0 %v2757
        %3983 = vmatprep.subr.bf16.mxu0 %v2754
        %3984 = vmatpush2.bf16.msra.mxu0 %v2753
        %3985 = vmatprep.subr.bf16.mxu0 %v2750
        %3986 = vmatpush2.bf16.msra.mxu0 %v2749
        %3987 = vmatprep.subr.bf16.mxu0 %v2746
        %3988 = vmatpush2.bf16.msra.mxu0 %v2745
        %3989 = vmatprep.mubr.bf16.mxu0 %v3082
        %3990 = vmatmul.mubr.bf16.gmra.mxu0 %v3081
        %v3991 = vpop.f32.mrf.mxu0
        %v3992 = vadd.f32 %v3951, %v3991
        %v3993 = vpop.f32.mrf.mxu0
        %v3994 = vadd.f32 %v3953, %v3993
        %v3995 = vpop.f32.mrf.mxu0
        %v3996 = vpop.f32.mrf.mxu0
        %3997 = vdwg.mxu0
        %3998 = vmatprep.subr.bf16.mxu0 %v2806
        %3999 = vmatpush1.bf16.msra.mxu0 %v2805
        %4000 = vmatprep.subr.bf16.mxu0 %v2802
        %4001 = vmatpush1.bf16.msra.mxu0 %v2801
        %4002 = vmatprep.subr.bf16.mxu0 %v2798
        %4003 = vmatpush1.bf16.msra.mxu0 %v2797
        %4004 = vmatprep.subr.bf16.mxu0 %v2794
        %4005 = vmatpush1.bf16.msra.mxu0 %v2793
        %4006 = vmatprep.subr.bf16.mxu0 %v2790
        %4007 = vmatpush1.bf16.msra.mxu0 %v2789
        %4008 = vmatprep.subr.bf16.mxu0 %v2786
        %4009 = vmatpush1.bf16.msra.mxu0 %v2785
        %4010 = vmatprep.subr.bf16.mxu0 %v2782
        %4011 = vmatpush1.bf16.msra.mxu0 %v2781
        %4012 = vmatprep.subr.bf16.mxu0 %v2778
        %4013 = vmatpush1.bf16.msra.mxu0 %v2777
        %4014 = vmatprep.subr.bf16.mxu0 %v2838
        %4015 = vmatpush2.bf16.msra.mxu0 %v2837
        %4016 = vmatprep.subr.bf16.mxu0 %v2834
        %4017 = vmatpush2.bf16.msra.mxu0 %v2833
        %4018 = vmatprep.subr.bf16.mxu0 %v2830
        %4019 = vmatpush2.bf16.msra.mxu0 %v2829
        %4020 = vmatprep.subr.bf16.mxu0 %v2826
        %4021 = vmatpush2.bf16.msra.mxu0 %v2825
        %4022 = vmatprep.subr.bf16.mxu0 %v2822
        %4023 = vmatpush2.bf16.msra.mxu0 %v2821
        %4024 = vmatprep.subr.bf16.mxu0 %v2818
        %4025 = vmatpush2.bf16.msra.mxu0 %v2817
        %4026 = vmatprep.subr.bf16.mxu0 %v2814
        %4027 = vmatpush2.bf16.msra.mxu0 %v2813
        %4028 = vmatprep.subr.bf16.mxu0 %v2810
        %4029 = vmatpush2.bf16.msra.mxu0 %v2809
        %4030 = vmatprep.mubr.bf16.mxu0 %v3084
        %4031 = vmatmul.mubr.bf16.gmra.mxu0 %v3083
        %v4032 = vpop.f32.mrf.mxu0
        %v4033 = vadd.f32 %v3992, %v4032
        %v4034 = vpop.f32.mrf.mxu0
        %v4035 = vadd.f32 %v3994, %v4034
        %v4036 = vpop.f32.mrf.mxu0
        %v4037 = vpop.f32.mrf.mxu0
        %4038 = vdwg.mxu0
        %4039 = vmatprep.subr.bf16.mxu0 %v2870
        %4040 = vmatpush1.bf16.msra.mxu0 %v2869
        %4041 = vmatprep.subr.bf16.mxu0 %v2866
        %4042 = vmatpush1.bf16.msra.mxu0 %v2865
        %4043 = vmatprep.subr.bf16.mxu0 %v2862
        %4044 = vmatpush1.bf16.msra.mxu0 %v2861
        %4045 = vmatprep.subr.bf16.mxu0 %v2858
        %4046 = vmatpush1.bf16.msra.mxu0 %v2857
        %4047 = vmatprep.subr.bf16.mxu0 %v2854
        %4048 = vmatpush1.bf16.msra.mxu0 %v2853
        %4049 = vmatprep.subr.bf16.mxu0 %v2850
        %4050 = vmatpush1.bf16.msra.mxu0 %v2849
        %4051 = vmatprep.subr.bf16.mxu0 %v2846
        %4052 = vmatpush1.bf16.msra.mxu0 %v2845
        %4053 = vmatprep.subr.bf16.mxu0 %v2842
        %4054 = vmatpush1.bf16.msra.mxu0 %v2841
        %4055 = vmatprep.subr.bf16.mxu0 %v2902
        %4056 = vmatpush2.bf16.msra.mxu0 %v2901
        %4057 = vmatprep.subr.bf16.mxu0 %v2898
        %4058 = vmatpush2.bf16.msra.mxu0 %v2897
        %4059 = vmatprep.subr.bf16.mxu0 %v2894
        %4060 = vmatpush2.bf16.msra.mxu0 %v2893
        %4061 = vmatprep.subr.bf16.mxu0 %v2890
        %4062 = vmatpush2.bf16.msra.mxu0 %v2889
        %4063 = vmatprep.subr.bf16.mxu0 %v2886
        %4064 = vmatpush2.bf16.msra.mxu0 %v2885
        %4065 = vmatprep.subr.bf16.mxu0 %v2882
        %4066 = vmatpush2.bf16.msra.mxu0 %v2881
        %4067 = vmatprep.subr.bf16.mxu0 %v2878
        %4068 = vmatpush2.bf16.msra.mxu0 %v2877
        %4069 = vmatprep.subr.bf16.mxu0 %v2874
        %4070 = vmatpush2.bf16.msra.mxu0 %v2873
        %4071 = vmatprep.mubr.bf16.mxu0 %v3086
        %4072 = vmatmul.mubr.bf16.gmra.mxu0 %v3085
        %v4073 = vpop.f32.mrf.mxu0
        %v4074 = vadd.f32 %v4033, %v4073
        %v4075 = vpop.f32.mrf.mxu0
        %v4076 = vadd.f32 %v4035, %v4075
        %v4077 = vpop.f32.mrf.mxu0
        %v4078 = vpop.f32.mrf.mxu0
        %4079 = vdwg.mxu0
        %4080 = vmatprep.subr.bf16.mxu0 %v2934
        %4081 = vmatpush1.bf16.msra.mxu0 %v2933
        %4082 = vmatprep.subr.bf16.mxu0 %v2930
        %4083 = vmatpush1.bf16.msra.mxu0 %v2929
        %4084 = vmatprep.subr.bf16.mxu0 %v2926
        %4085 = vmatpush1.bf16.msra.mxu0 %v2925
        %4086 = vmatprep.subr.bf16.mxu0 %v2922
        %4087 = vmatpush1.bf16.msra.mxu0 %v2921
        %4088 = vmatprep.subr.bf16.mxu0 %v2918
        %4089 = vmatpush1.bf16.msra.mxu0 %v2917
        %4090 = vmatprep.subr.bf16.mxu0 %v2914
        %4091 = vmatpush1.bf16.msra.mxu0 %v2913
        %4092 = vmatprep.subr.bf16.mxu0 %v2910
        %4093 = vmatpush1.bf16.msra.mxu0 %v2909
        %4094 = vmatprep.subr.bf16.mxu0 %v2906
        %4095 = vmatpush1.bf16.msra.mxu0 %v2905
        %4096 = vmatprep.subr.bf16.mxu0 %v2966
        %4097 = vmatpush2.bf16.msra.mxu0 %v2965
        %4098 = vmatprep.subr.bf16.mxu0 %v2962
        %4099 = vmatpush2.bf16.msra.mxu0 %v2961
        %4100 = vmatprep.subr.bf16.mxu0 %v2958
        %4101 = vmatpush2.bf16.msra.mxu0 %v2957
        %4102 = vmatprep.subr.bf16.mxu0 %v2954
        %4103 = vmatpush2.bf16.msra.mxu0 %v2953
        %4104 = vmatprep.subr.bf16.mxu0 %v2950
        %4105 = vmatpush2.bf16.msra.mxu0 %v2949
        %4106 = vmatprep.subr.bf16.mxu0 %v2946
        %4107 = vmatpush2.bf16.msra.mxu0 %v2945
        %4108 = vmatprep.subr.bf16.mxu0 %v2942
        %4109 = vmatpush2.bf16.msra.mxu0 %v2941
        %4110 = vmatprep.subr.bf16.mxu0 %v2938
        %4111 = vmatpush2.bf16.msra.mxu0 %v2937
        %4112 = vmatprep.mubr.bf16.mxu0 %v3088
        %4113 = vmatmul.mubr.bf16.gmra.mxu0 %v3087
        %v4114 = vpop.f32.mrf.mxu0
        %v4115 = vadd.f32 %v4074, %v4114
        %v4116 = vpop.f32.mrf.mxu0
        %v4117 = vadd.f32 %v4076, %v4116
        %v4118 = vpop.f32.mrf.mxu0
        %v4119 = vpop.f32.mrf.mxu0
        %4120 = vdwg.mxu0
        %4121 = vmatprep.subr.bf16.mxu0 %v1464
        %4122 = vmatpush1.bf16.msra.mxu0 %v1463
        %4123 = vmatprep.subr.bf16.mxu0 %v1460
        %4124 = vmatpush1.bf16.msra.mxu0 %v1459
        %4125 = vmatprep.subr.bf16.mxu0 %v1456
        %4126 = vmatpush1.bf16.msra.mxu0 %v1455
        %4127 = vmatprep.subr.bf16.mxu0 %v1452
        %4128 = vmatpush1.bf16.msra.mxu0 %v1451
        %4129 = vmatprep.subr.bf16.mxu0 %v1448
        %4130 = vmatpush1.bf16.msra.mxu0 %v1447
        %4131 = vmatprep.subr.bf16.mxu0 %v1444
        %4132 = vmatpush1.bf16.msra.mxu0 %v1443
        %4133 = vmatprep.subr.bf16.mxu0 %v1440
        %4134 = vmatpush1.bf16.msra.mxu0 %v1439
        %4135 = vmatprep.subr.bf16.mxu0 %v1436
        %4136 = vmatpush1.bf16.msra.mxu0 %v1435
        %4137 = vmatprep.subr.bf16.mxu0 %v1496
        %4138 = vmatpush2.bf16.msra.mxu0 %v1495
        %4139 = vmatprep.subr.bf16.mxu0 %v1492
        %4140 = vmatpush2.bf16.msra.mxu0 %v1491
        %4141 = vmatprep.subr.bf16.mxu0 %v1488
        %4142 = vmatpush2.bf16.msra.mxu0 %v1487
        %4143 = vmatprep.subr.bf16.mxu0 %v1484
        %4144 = vmatpush2.bf16.msra.mxu0 %v1483
        %4145 = vmatprep.subr.bf16.mxu0 %v1480
        %4146 = vmatpush2.bf16.msra.mxu0 %v1479
        %4147 = vmatprep.subr.bf16.mxu0 %v1476
        %4148 = vmatpush2.bf16.msra.mxu0 %v1475
        %4149 = vmatprep.subr.bf16.mxu0 %v1472
        %4150 = vmatpush2.bf16.msra.mxu0 %v1471
        %4151 = vmatprep.subr.bf16.mxu0 %v1468
        %4152 = vmatpush2.bf16.msra.mxu0 %v1467
        %4153 = vmatprep.mubr.bf16.mxu0 %v3042
        %4154 = vmatmul.mubr.bf16.gmra.mxu0 %v3041
        %v4155 = vpop.f32.mrf.mxu0
        %v4156 = vadd.f32 0.0, %v4155
        %v4157 = vpop.f32.mrf.mxu0
        %v4158 = vadd.f32 0.0, %v4157
        %v4159 = vpop.f32.mrf.mxu0
        %v4160 = vpop.f32.mrf.mxu0
        %4161 = vdwg.mxu0
        %4162 = vmatprep.subr.bf16.mxu0 %v1528
        %4163 = vmatpush1.bf16.msra.mxu0 %v1527
        %4164 = vmatprep.subr.bf16.mxu0 %v1524
        %4165 = vmatpush1.bf16.msra.mxu0 %v1523
        %4166 = vmatprep.subr.bf16.mxu0 %v1520
        %4167 = vmatpush1.bf16.msra.mxu0 %v1519
        %4168 = vmatprep.subr.bf16.mxu0 %v1516
        %4169 = vmatpush1.bf16.msra.mxu0 %v1515
        %4170 = vmatprep.subr.bf16.mxu0 %v1512
        %4171 = vmatpush1.bf16.msra.mxu0 %v1511
        %4172 = vmatprep.subr.bf16.mxu0 %v1508
        %4173 = vmatpush1.bf16.msra.mxu0 %v1507
        %4174 = vmatprep.subr.bf16.mxu0 %v1504
        %4175 = vmatpush1.bf16.msra.mxu0 %v1503
        %4176 = vmatprep.subr.bf16.mxu0 %v1500
        %4177 = vmatpush1.bf16.msra.mxu0 %v1499
        %4178 = vmatprep.subr.bf16.mxu0 %v1560
        %4179 = vmatpush2.bf16.msra.mxu0 %v1559
        %4180 = vmatprep.subr.bf16.mxu0 %v1556
        %4181 = vmatpush2.bf16.msra.mxu0 %v1555
        %4182 = vmatprep.subr.bf16.mxu0 %v1552
        %4183 = vmatpush2.bf16.msra.mxu0 %v1551
        %4184 = vmatprep.subr.bf16.mxu0 %v1548
        %4185 = vmatpush2.bf16.msra.mxu0 %v1547
        %4186 = vmatprep.subr.bf16.mxu0 %v1544
        %4187 = vmatpush2.bf16.msra.mxu0 %v1543
        %4188 = vmatprep.subr.bf16.mxu0 %v1540
        %4189 = vmatpush2.bf16.msra.mxu0 %v1539
        %4190 = vmatprep.subr.bf16.mxu0 %v1536
        %4191 = vmatpush2.bf16.msra.mxu0 %v1535
        %4192 = vmatprep.subr.bf16.mxu0 %v1532
        %4193 = vmatpush2.bf16.msra.mxu0 %v1531
        %4194 = vmatprep.mubr.bf16.mxu0 %v3044
        %4195 = vmatmul.mubr.bf16.gmra.mxu0 %v3043
        %v4196 = vpop.f32.mrf.mxu0
        %v4197 = vadd.f32 %v4156, %v4196
        %v4198 = vpop.f32.mrf.mxu0
        %v4199 = vadd.f32 %v4158, %v4198
        %v4200 = vpop.f32.mrf.mxu0
        %v4201 = vpop.f32.mrf.mxu0
        %4202 = vdwg.mxu0
        %4203 = vmatprep.subr.bf16.mxu0 %v1592
        %4204 = vmatpush1.bf16.msra.mxu0 %v1591
        %4205 = vmatprep.subr.bf16.mxu0 %v1588
        %4206 = vmatpush1.bf16.msra.mxu0 %v1587
        %4207 = vmatprep.subr.bf16.mxu0 %v1584
        %4208 = vmatpush1.bf16.msra.mxu0 %v1583
        %4209 = vmatprep.subr.bf16.mxu0 %v1580
        %4210 = vmatpush1.bf16.msra.mxu0 %v1579
        %4211 = vmatprep.subr.bf16.mxu0 %v1576
        %4212 = vmatpush1.bf16.msra.mxu0 %v1575
        %4213 = vmatprep.subr.bf16.mxu0 %v1572
        %4214 = vmatpush1.bf16.msra.mxu0 %v1571
        %4215 = vmatprep.subr.bf16.mxu0 %v1568
        %4216 = vmatpush1.bf16.msra.mxu0 %v1567
        %4217 = vmatprep.subr.bf16.mxu0 %v1564
        %4218 = vmatpush1.bf16.msra.mxu0 %v1563
        %4219 = vmatprep.subr.bf16.mxu0 %v1624
        %4220 = vmatpush2.bf16.msra.mxu0 %v1623
        %4221 = vmatprep.subr.bf16.mxu0 %v1620
        %4222 = vmatpush2.bf16.msra.mxu0 %v1619
        %4223 = vmatprep.subr.bf16.mxu0 %v1616
        %4224 = vmatpush2.bf16.msra.mxu0 %v1615
        %4225 = vmatprep.subr.bf16.mxu0 %v1612
        %4226 = vmatpush2.bf16.msra.mxu0 %v1611
        %4227 = vmatprep.subr.bf16.mxu0 %v1608
        %4228 = vmatpush2.bf16.msra.mxu0 %v1607
        %4229 = vmatprep.subr.bf16.mxu0 %v1604
        %4230 = vmatpush2.bf16.msra.mxu0 %v1603
        %4231 = vmatprep.subr.bf16.mxu0 %v1600
        %4232 = vmatpush2.bf16.msra.mxu0 %v1599
        %4233 = vmatprep.subr.bf16.mxu0 %v1596
        %4234 = vmatpush2.bf16.msra.mxu0 %v1595
        %4235 = vmatprep.mubr.bf16.mxu0 %v3046
        %4236 = vmatmul.mubr.bf16.gmra.mxu0 %v3045
        %v4237 = vpop.f32.mrf.mxu0
        %v4238 = vadd.f32 %v4197, %v4237
        %v4239 = vpop.f32.mrf.mxu0
        %v4240 = vadd.f32 %v4199, %v4239
        %v4241 = vpop.f32.mrf.mxu0
        %v4242 = vpop.f32.mrf.mxu0
        %4243 = vdwg.mxu0
        %4244 = vmatprep.subr.bf16.mxu0 %v1656
        %4245 = vmatpush1.bf16.msra.mxu0 %v1655
        %4246 = vmatprep.subr.bf16.mxu0 %v1652
        %4247 = vmatpush1.bf16.msra.mxu0 %v1651
        %4248 = vmatprep.subr.bf16.mxu0 %v1648
        %4249 = vmatpush1.bf16.msra.mxu0 %v1647
        %4250 = vmatprep.subr.bf16.mxu0 %v1644
        %4251 = vmatpush1.bf16.msra.mxu0 %v1643
        %4252 = vmatprep.subr.bf16.mxu0 %v1640
        %4253 = vmatpush1.bf16.msra.mxu0 %v1639
        %4254 = vmatprep.subr.bf16.mxu0 %v1636
        %4255 = vmatpush1.bf16.msra.mxu0 %v1635
        %4256 = vmatprep.subr.bf16.mxu0 %v1632
        %4257 = vmatpush1.bf16.msra.mxu0 %v1631
        %4258 = vmatprep.subr.bf16.mxu0 %v1628
        %4259 = vmatpush1.bf16.msra.mxu0 %v1627
        %4260 = vmatprep.subr.bf16.mxu0 %v1688
        %4261 = vmatpush2.bf16.msra.mxu0 %v1687
        %4262 = vmatprep.subr.bf16.mxu0 %v1684
        %4263 = vmatpush2.bf16.msra.mxu0 %v1683
        %4264 = vmatprep.subr.bf16.mxu0 %v1680
        %4265 = vmatpush2.bf16.msra.mxu0 %v1679
        %4266 = vmatprep.subr.bf16.mxu0 %v1676
        %4267 = vmatpush2.bf16.msra.mxu0 %v1675
        %4268 = vmatprep.subr.bf16.mxu0 %v1672
        %4269 = vmatpush2.bf16.msra.mxu0 %v1671
        %4270 = vmatprep.subr.bf16.mxu0 %v1668
        %4271 = vmatpush2.bf16.msra.mxu0 %v1667
        %4272 = vmatprep.subr.bf16.mxu0 %v1664
        %4273 = vmatpush2.bf16.msra.mxu0 %v1663
        %4274 = vmatprep.subr.bf16.mxu0 %v1660
        %4275 = vmatpush2.bf16.msra.mxu0 %v1659
        %4276 = vmatprep.mubr.bf16.mxu0 %v3048
        %4277 = vmatmul.mubr.bf16.gmra.mxu0 %v3047
        %v4278 = vpop.f32.mrf.mxu0
        %v4279 = vadd.f32 %v4238, %v4278
        %v4280 = vpop.f32.mrf.mxu0
        %v4281 = vadd.f32 %v4240, %v4280
        %v4282 = vpop.f32.mrf.mxu0
        %v4283 = vpop.f32.mrf.mxu0
        %4284 = vdwg.mxu0
        %4285 = vmatprep.subr.bf16.mxu0 %v1720
        %4286 = vmatpush1.bf16.msra.mxu0 %v1719
        %4287 = vmatprep.subr.bf16.mxu0 %v1716
        %4288 = vmatpush1.bf16.msra.mxu0 %v1715
        %4289 = vmatprep.subr.bf16.mxu0 %v1712
        %4290 = vmatpush1.bf16.msra.mxu0 %v1711
        %4291 = vmatprep.subr.bf16.mxu0 %v1708
        %4292 = vmatpush1.bf16.msra.mxu0 %v1707
        %4293 = vmatprep.subr.bf16.mxu0 %v1704
        %4294 = vmatpush1.bf16.msra.mxu0 %v1703
        %4295 = vmatprep.subr.bf16.mxu0 %v1700
        %4296 = vmatpush1.bf16.msra.mxu0 %v1699
        %4297 = vmatprep.subr.bf16.mxu0 %v1696
        %4298 = vmatpush1.bf16.msra.mxu0 %v1695
        %4299 = vmatprep.subr.bf16.mxu0 %v1692
        %4300 = vmatpush1.bf16.msra.mxu0 %v1691
        %4301 = vmatprep.subr.bf16.mxu0 %v1752
        %4302 = vmatpush2.bf16.msra.mxu0 %v1751
        %4303 = vmatprep.subr.bf16.mxu0 %v1748
        %4304 = vmatpush2.bf16.msra.mxu0 %v1747
        %4305 = vmatprep.subr.bf16.mxu0 %v1744
        %4306 = vmatpush2.bf16.msra.mxu0 %v1743
        %4307 = vmatprep.subr.bf16.mxu0 %v1740
        %4308 = vmatpush2.bf16.msra.mxu0 %v1739
        %4309 = vmatprep.subr.bf16.mxu0 %v1736
        %4310 = vmatpush2.bf16.msra.mxu0 %v1735
        %4311 = vmatprep.subr.bf16.mxu0 %v1732
        %4312 = vmatpush2.bf16.msra.mxu0 %v1731
        %4313 = vmatprep.subr.bf16.mxu0 %v1728
        %4314 = vmatpush2.bf16.msra.mxu0 %v1727
        %4315 = vmatprep.subr.bf16.mxu0 %v1724
        %4316 = vmatpush2.bf16.msra.mxu0 %v1723
        %4317 = vmatprep.mubr.bf16.mxu0 %v3050
        %4318 = vmatmul.mubr.bf16.gmra.mxu0 %v3049
        %v4319 = vpop.f32.mrf.mxu0
        %v4320 = vadd.f32 %v4279, %v4319
        %v4321 = vpop.f32.mrf.mxu0
        %v4322 = vadd.f32 %v4281, %v4321
        %v4323 = vpop.f32.mrf.mxu0
        %v4324 = vpop.f32.mrf.mxu0
        %4325 = vdwg.mxu0
        %4326 = vmatprep.subr.bf16.mxu0 %v1784
        %4327 = vmatpush1.bf16.msra.mxu0 %v1783
        %4328 = vmatprep.subr.bf16.mxu0 %v1780
        %4329 = vmatpush1.bf16.msra.mxu0 %v1779
        %4330 = vmatprep.subr.bf16.mxu0 %v1776
        %4331 = vmatpush1.bf16.msra.mxu0 %v1775
        %4332 = vmatprep.subr.bf16.mxu0 %v1772
        %4333 = vmatpush1.bf16.msra.mxu0 %v1771
        %4334 = vmatprep.subr.bf16.mxu0 %v1768
        %4335 = vmatpush1.bf16.msra.mxu0 %v1767
        %4336 = vmatprep.subr.bf16.mxu0 %v1764
        %4337 = vmatpush1.bf16.msra.mxu0 %v1763
        %4338 = vmatprep.subr.bf16.mxu0 %v1760
        %4339 = vmatpush1.bf16.msra.mxu0 %v1759
        %4340 = vmatprep.subr.bf16.mxu0 %v1756
        %4341 = vmatpush1.bf16.msra.mxu0 %v1755
        %4342 = vmatprep.subr.bf16.mxu0 %v1816
        %4343 = vmatpush2.bf16.msra.mxu0 %v1815
        %4344 = vmatprep.subr.bf16.mxu0 %v1812
        %4345 = vmatpush2.bf16.msra.mxu0 %v1811
        %4346 = vmatprep.subr.bf16.mxu0 %v1808
        %4347 = vmatpush2.bf16.msra.mxu0 %v1807
        %4348 = vmatprep.subr.bf16.mxu0 %v1804
        %4349 = vmatpush2.bf16.msra.mxu0 %v1803
        %4350 = vmatprep.subr.bf16.mxu0 %v1800
        %4351 = vmatpush2.bf16.msra.mxu0 %v1799
        %4352 = vmatprep.subr.bf16.mxu0 %v1796
        %4353 = vmatpush2.bf16.msra.mxu0 %v1795
        %4354 = vmatprep.subr.bf16.mxu0 %v1792
        %4355 = vmatpush2.bf16.msra.mxu0 %v1791
        %4356 = vmatprep.subr.bf16.mxu0 %v1788
        %4357 = vmatpush2.bf16.msra.mxu0 %v1787
        %4358 = vmatprep.mubr.bf16.mxu0 %v3052
        %4359 = vmatmul.mubr.bf16.gmra.mxu0 %v3051
        %v4360 = vpop.f32.mrf.mxu0
        %v4361 = vadd.f32 %v4320, %v4360
        %v4362 = vpop.f32.mrf.mxu0
        %v4363 = vadd.f32 %v4322, %v4362
        %v4364 = vpop.f32.mrf.mxu0
        %v4365 = vpop.f32.mrf.mxu0
        %4366 = vdwg.mxu0
        %4367 = vmatprep.subr.bf16.mxu0 %v1848
        %4368 = vmatpush1.bf16.msra.mxu0 %v1847
        %4369 = vmatprep.subr.bf16.mxu0 %v1844
        %4370 = vmatpush1.bf16.msra.mxu0 %v1843
        %4371 = vmatprep.subr.bf16.mxu0 %v1840
        %4372 = vmatpush1.bf16.msra.mxu0 %v1839
        %4373 = vmatprep.subr.bf16.mxu0 %v1836
        %4374 = vmatpush1.bf16.msra.mxu0 %v1835
        %4375 = vmatprep.subr.bf16.mxu0 %v1832
        %4376 = vmatpush1.bf16.msra.mxu0 %v1831
        %4377 = vmatprep.subr.bf16.mxu0 %v1828
        %4378 = vmatpush1.bf16.msra.mxu0 %v1827
        %4379 = vmatprep.subr.bf16.mxu0 %v1824
        %4380 = vmatpush1.bf16.msra.mxu0 %v1823
        %4381 = vmatprep.subr.bf16.mxu0 %v1820
        %4382 = vmatpush1.bf16.msra.mxu0 %v1819
        %4383 = vmatprep.subr.bf16.mxu0 %v1880
        %4384 = vmatpush2.bf16.msra.mxu0 %v1879
        %4385 = vmatprep.subr.bf16.mxu0 %v1876
        %4386 = vmatpush2.bf16.msra.mxu0 %v1875
        %4387 = vmatprep.subr.bf16.mxu0 %v1872
        %4388 = vmatpush2.bf16.msra.mxu0 %v1871
        %4389 = vmatprep.subr.bf16.mxu0 %v1868
        %4390 = vmatpush2.bf16.msra.mxu0 %v1867
        %4391 = vmatprep.subr.bf16.mxu0 %v1864
        %4392 = vmatpush2.bf16.msra.mxu0 %v1863
        %4393 = vmatprep.subr.bf16.mxu0 %v1860
        %4394 = vmatpush2.bf16.msra.mxu0 %v1859
        %4395 = vmatprep.subr.bf16.mxu0 %v1856
        %4396 = vmatpush2.bf16.msra.mxu0 %v1855
        %4397 = vmatprep.subr.bf16.mxu0 %v1852
        %4398 = vmatpush2.bf16.msra.mxu0 %v1851
        %4399 = vmatprep.mubr.bf16.mxu0 %v3054
        %4400 = vmatmul.mubr.bf16.gmra.mxu0 %v3053
        %v4401 = vpop.f32.mrf.mxu0
        %v4402 = vadd.f32 %v4361, %v4401
        %v4403 = vpop.f32.mrf.mxu0
        %v4404 = vadd.f32 %v4363, %v4403
        %v4405 = vpop.f32.mrf.mxu0
        %v4406 = vpop.f32.mrf.mxu0
        %4407 = vdwg.mxu0
        %4408 = vmatprep.subr.bf16.mxu0 %v1912
        %4409 = vmatpush1.bf16.msra.mxu0 %v1911
        %4410 = vmatprep.subr.bf16.mxu0 %v1908
        %4411 = vmatpush1.bf16.msra.mxu0 %v1907
        %4412 = vmatprep.subr.bf16.mxu0 %v1904
        %4413 = vmatpush1.bf16.msra.mxu0 %v1903
        %4414 = vmatprep.subr.bf16.mxu0 %v1900
        %4415 = vmatpush1.bf16.msra.mxu0 %v1899
        %4416 = vmatprep.subr.bf16.mxu0 %v1896
        %4417 = vmatpush1.bf16.msra.mxu0 %v1895
        %4418 = vmatprep.subr.bf16.mxu0 %v1892
        %4419 = vmatpush1.bf16.msra.mxu0 %v1891
        %4420 = vmatprep.subr.bf16.mxu0 %v1888
        %4421 = vmatpush1.bf16.msra.mxu0 %v1887
        %4422 = vmatprep.subr.bf16.mxu0 %v1884
        %4423 = vmatpush1.bf16.msra.mxu0 %v1883
        %4424 = vmatprep.subr.bf16.mxu0 %v1944
        %4425 = vmatpush2.bf16.msra.mxu0 %v1943
        %4426 = vmatprep.subr.bf16.mxu0 %v1940
        %4427 = vmatpush2.bf16.msra.mxu0 %v1939
        %4428 = vmatprep.subr.bf16.mxu0 %v1936
        %4429 = vmatpush2.bf16.msra.mxu0 %v1935
        %4430 = vmatprep.subr.bf16.mxu0 %v1932
        %4431 = vmatpush2.bf16.msra.mxu0 %v1931
        %4432 = vmatprep.subr.bf16.mxu0 %v1928
        %4433 = vmatpush2.bf16.msra.mxu0 %v1927
        %4434 = vmatprep.subr.bf16.mxu0 %v1924
        %4435 = vmatpush2.bf16.msra.mxu0 %v1923
        %4436 = vmatprep.subr.bf16.mxu0 %v1920
        %4437 = vmatpush2.bf16.msra.mxu0 %v1919
        %4438 = vmatprep.subr.bf16.mxu0 %v1916
        %4439 = vmatpush2.bf16.msra.mxu0 %v1915
        %4440 = vmatprep.mubr.bf16.mxu0 %v3056
        %4441 = vmatmul.mubr.bf16.gmra.mxu0 %v3055
        %v4442 = vpop.f32.mrf.mxu0
        %v4443 = vadd.f32 %v4402, %v4442
        %v4444 = vpop.f32.mrf.mxu0
        %v4445 = vadd.f32 %v4404, %v4444
        %v4446 = vpop.f32.mrf.mxu0
        %v4447 = vpop.f32.mrf.mxu0
        %4448 = vdwg.mxu0
        %4449 = vmatprep.subr.bf16.mxu0 %v1976
        %4450 = vmatpush1.bf16.msra.mxu0 %v1975
        %4451 = vmatprep.subr.bf16.mxu0 %v1972
        %4452 = vmatpush1.bf16.msra.mxu0 %v1971
        %4453 = vmatprep.subr.bf16.mxu0 %v1968
        %4454 = vmatpush1.bf16.msra.mxu0 %v1967
        %4455 = vmatprep.subr.bf16.mxu0 %v1964
        %4456 = vmatpush1.bf16.msra.mxu0 %v1963
        %4457 = vmatprep.subr.bf16.mxu0 %v1960
        %4458 = vmatpush1.bf16.msra.mxu0 %v1959
        %4459 = vmatprep.subr.bf16.mxu0 %v1956
        %4460 = vmatpush1.bf16.msra.mxu0 %v1955
        %4461 = vmatprep.subr.bf16.mxu0 %v1952
        %4462 = vmatpush1.bf16.msra.mxu0 %v1951
        %4463 = vmatprep.subr.bf16.mxu0 %v1948
        %4464 = vmatpush1.bf16.msra.mxu0 %v1947
        %4465 = vmatprep.subr.bf16.mxu0 %v2008
        %4466 = vmatpush2.bf16.msra.mxu0 %v2007
        %4467 = vmatprep.subr.bf16.mxu0 %v2004
        %4468 = vmatpush2.bf16.msra.mxu0 %v2003
        %4469 = vmatprep.subr.bf16.mxu0 %v2000
        %4470 = vmatpush2.bf16.msra.mxu0 %v1999
        %4471 = vmatprep.subr.bf16.mxu0 %v1996
        %4472 = vmatpush2.bf16.msra.mxu0 %v1995
        %4473 = vmatprep.subr.bf16.mxu0 %v1992
        %4474 = vmatpush2.bf16.msra.mxu0 %v1991
        %4475 = vmatprep.subr.bf16.mxu0 %v1988
        %4476 = vmatpush2.bf16.msra.mxu0 %v1987
        %4477 = vmatprep.subr.bf16.mxu0 %v1984
        %4478 = vmatpush2.bf16.msra.mxu0 %v1983
        %4479 = vmatprep.subr.bf16.mxu0 %v1980
        %4480 = vmatpush2.bf16.msra.mxu0 %v1979
        %4481 = vmatprep.mubr.bf16.mxu0 %v3058
        %4482 = vmatmul.mubr.bf16.gmra.mxu0 %v3057
        %v4483 = vpop.f32.mrf.mxu0
        %v4484 = vadd.f32 %v4443, %v4483
        %v4485 = vpop.f32.mrf.mxu0
        %v4486 = vadd.f32 %v4445, %v4485
        %v4487 = vpop.f32.mrf.mxu0
        %v4488 = vpop.f32.mrf.mxu0
        %4489 = vdwg.mxu0
        %4490 = vmatprep.subr.bf16.mxu0 %v2040
        %4491 = vmatpush1.bf16.msra.mxu0 %v2039
        %4492 = vmatprep.subr.bf16.mxu0 %v2036
        %4493 = vmatpush1.bf16.msra.mxu0 %v2035
        %4494 = vmatprep.subr.bf16.mxu0 %v2032
        %4495 = vmatpush1.bf16.msra.mxu0 %v2031
        %4496 = vmatprep.subr.bf16.mxu0 %v2028
        %4497 = vmatpush1.bf16.msra.mxu0 %v2027
        %4498 = vmatprep.subr.bf16.mxu0 %v2024
        %4499 = vmatpush1.bf16.msra.mxu0 %v2023
        %4500 = vmatprep.subr.bf16.mxu0 %v2020
        %4501 = vmatpush1.bf16.msra.mxu0 %v2019
        %4502 = vmatprep.subr.bf16.mxu0 %v2016
        %4503 = vmatpush1.bf16.msra.mxu0 %v2015
        %4504 = vmatprep.subr.bf16.mxu0 %v2012
        %4505 = vmatpush1.bf16.msra.mxu0 %v2011
        %4506 = vmatprep.subr.bf16.mxu0 %v2072
        %4507 = vmatpush2.bf16.msra.mxu0 %v2071
        %4508 = vmatprep.subr.bf16.mxu0 %v2068
        %4509 = vmatpush2.bf16.msra.mxu0 %v2067
        %4510 = vmatprep.subr.bf16.mxu0 %v2064
        %4511 = vmatpush2.bf16.msra.mxu0 %v2063
        %4512 = vmatprep.subr.bf16.mxu0 %v2060
        %4513 = vmatpush2.bf16.msra.mxu0 %v2059
        %4514 = vmatprep.subr.bf16.mxu0 %v2056
        %4515 = vmatpush2.bf16.msra.mxu0 %v2055
        %4516 = vmatprep.subr.bf16.mxu0 %v2052
        %4517 = vmatpush2.bf16.msra.mxu0 %v2051
        %4518 = vmatprep.subr.bf16.mxu0 %v2048
        %4519 = vmatpush2.bf16.msra.mxu0 %v2047
        %4520 = vmatprep.subr.bf16.mxu0 %v2044
        %4521 = vmatpush2.bf16.msra.mxu0 %v2043
        %4522 = vmatprep.mubr.bf16.mxu0 %v3060
        %4523 = vmatmul.mubr.bf16.gmra.mxu0 %v3059
        %v4524 = vpop.f32.mrf.mxu0
        %v4525 = vadd.f32 %v4484, %v4524
        %v4526 = vpop.f32.mrf.mxu0
        %v4527 = vadd.f32 %v4486, %v4526
        %v4528 = vpop.f32.mrf.mxu0
        %v4529 = vpop.f32.mrf.mxu0
        %4530 = vdwg.mxu0
        %4531 = vmatprep.subr.bf16.mxu0 %v2104
        %4532 = vmatpush1.bf16.msra.mxu0 %v2103
        %4533 = vmatprep.subr.bf16.mxu0 %v2100
        %4534 = vmatpush1.bf16.msra.mxu0 %v2099
        %4535 = vmatprep.subr.bf16.mxu0 %v2096
        %4536 = vmatpush1.bf16.msra.mxu0 %v2095
        %4537 = vmatprep.subr.bf16.mxu0 %v2092
        %4538 = vmatpush1.bf16.msra.mxu0 %v2091
        %4539 = vmatprep.subr.bf16.mxu0 %v2088
        %4540 = vmatpush1.bf16.msra.mxu0 %v2087
        %4541 = vmatprep.subr.bf16.mxu0 %v2084
        %4542 = vmatpush1.bf16.msra.mxu0 %v2083
        %4543 = vmatprep.subr.bf16.mxu0 %v2080
        %4544 = vmatpush1.bf16.msra.mxu0 %v2079
        %4545 = vmatprep.subr.bf16.mxu0 %v2076
        %4546 = vmatpush1.bf16.msra.mxu0 %v2075
        %4547 = vmatprep.subr.bf16.mxu0 %v2136
        %4548 = vmatpush2.bf16.msra.mxu0 %v2135
        %4549 = vmatprep.subr.bf16.mxu0 %v2132
        %4550 = vmatpush2.bf16.msra.mxu0 %v2131
        %4551 = vmatprep.subr.bf16.mxu0 %v2128
        %4552 = vmatpush2.bf16.msra.mxu0 %v2127
        %4553 = vmatprep.subr.bf16.mxu0 %v2124
        %4554 = vmatpush2.bf16.msra.mxu0 %v2123
        %4555 = vmatprep.subr.bf16.mxu0 %v2120
        %4556 = vmatpush2.bf16.msra.mxu0 %v2119
        %4557 = vmatprep.subr.bf16.mxu0 %v2116
        %4558 = vmatpush2.bf16.msra.mxu0 %v2115
        %4559 = vmatprep.subr.bf16.mxu0 %v2112
        %4560 = vmatpush2.bf16.msra.mxu0 %v2111
        %4561 = vmatprep.subr.bf16.mxu0 %v2108
        %4562 = vmatpush2.bf16.msra.mxu0 %v2107
        %4563 = vmatprep.mubr.bf16.mxu0 %v3062
        %4564 = vmatmul.mubr.bf16.gmra.mxu0 %v3061
        %v4565 = vpop.f32.mrf.mxu0
        %v4566 = vadd.f32 %v4525, %v4565
        %v4567 = vpop.f32.mrf.mxu0
        %v4568 = vadd.f32 %v4527, %v4567
        %v4569 = vpop.f32.mrf.mxu0
        %v4570 = vpop.f32.mrf.mxu0
        %4571 = vdwg.mxu0
        %4572 = vmatprep.subr.bf16.mxu0 %v2168
        %4573 = vmatpush1.bf16.msra.mxu0 %v2167
        %4574 = vmatprep.subr.bf16.mxu0 %v2164
        %4575 = vmatpush1.bf16.msra.mxu0 %v2163
        %4576 = vmatprep.subr.bf16.mxu0 %v2160
        %4577 = vmatpush1.bf16.msra.mxu0 %v2159
        %4578 = vmatprep.subr.bf16.mxu0 %v2156
        %4579 = vmatpush1.bf16.msra.mxu0 %v2155
        %4580 = vmatprep.subr.bf16.mxu0 %v2152
        %4581 = vmatpush1.bf16.msra.mxu0 %v2151
        %4582 = vmatprep.subr.bf16.mxu0 %v2148
        %4583 = vmatpush1.bf16.msra.mxu0 %v2147
        %4584 = vmatprep.subr.bf16.mxu0 %v2144
        %4585 = vmatpush1.bf16.msra.mxu0 %v2143
        %4586 = vmatprep.subr.bf16.mxu0 %v2140
        %4587 = vmatpush1.bf16.msra.mxu0 %v2139
        %4588 = vmatprep.subr.bf16.mxu0 %v2200
        %4589 = vmatpush2.bf16.msra.mxu0 %v2199
        %4590 = vmatprep.subr.bf16.mxu0 %v2196
        %4591 = vmatpush2.bf16.msra.mxu0 %v2195
        %4592 = vmatprep.subr.bf16.mxu0 %v2192
        %4593 = vmatpush2.bf16.msra.mxu0 %v2191
        %4594 = vmatprep.subr.bf16.mxu0 %v2188
        %4595 = vmatpush2.bf16.msra.mxu0 %v2187
        %4596 = vmatprep.subr.bf16.mxu0 %v2184
        %4597 = vmatpush2.bf16.msra.mxu0 %v2183
        %4598 = vmatprep.subr.bf16.mxu0 %v2180
        %4599 = vmatpush2.bf16.msra.mxu0 %v2179
        %4600 = vmatprep.subr.bf16.mxu0 %v2176
        %4601 = vmatpush2.bf16.msra.mxu0 %v2175
        %4602 = vmatprep.subr.bf16.mxu0 %v2172
        %4603 = vmatpush2.bf16.msra.mxu0 %v2171
        %4604 = vmatprep.mubr.bf16.mxu0 %v3064
        %4605 = vmatmul.mubr.bf16.gmra.mxu0 %v3063
        %v4606 = vpop.f32.mrf.mxu0
        %v4607 = vadd.f32 %v4566, %v4606
        %v4608 = vpop.f32.mrf.mxu0
        %v4609 = vadd.f32 %v4568, %v4608
        %v4610 = vpop.f32.mrf.mxu0
        %v4611 = vpop.f32.mrf.mxu0
        %4612 = vdwg.mxu0
        %4613 = vmatprep.subr.bf16.mxu0 %v2232
        %4614 = vmatpush1.bf16.msra.mxu0 %v2231
        %4615 = vmatprep.subr.bf16.mxu0 %v2228
        %4616 = vmatpush1.bf16.msra.mxu0 %v2227
        %4617 = vmatprep.subr.bf16.mxu0 %v2224
        %4618 = vmatpush1.bf16.msra.mxu0 %v2223
        %4619 = vmatprep.subr.bf16.mxu0 %v2220
        %4620 = vmatpush1.bf16.msra.mxu0 %v2219
        %4621 = vmatprep.subr.bf16.mxu0 %v2216
        %4622 = vmatpush1.bf16.msra.mxu0 %v2215
        %4623 = vmatprep.subr.bf16.mxu0 %v2212
        %4624 = vmatpush1.bf16.msra.mxu0 %v2211
        %4625 = vmatprep.subr.bf16.mxu0 %v2208
        %4626 = vmatpush1.bf16.msra.mxu0 %v2207
        %4627 = vmatprep.subr.bf16.mxu0 %v2204
        %4628 = vmatpush1.bf16.msra.mxu0 %v2203
        %4629 = vmatprep.subr.bf16.mxu0 %v2264
        %4630 = vmatpush2.bf16.msra.mxu0 %v2263
        %4631 = vmatprep.subr.bf16.mxu0 %v2260
        %4632 = vmatpush2.bf16.msra.mxu0 %v2259
        %4633 = vmatprep.subr.bf16.mxu0 %v2256
        %4634 = vmatpush2.bf16.msra.mxu0 %v2255
        %4635 = vmatprep.subr.bf16.mxu0 %v2252
        %4636 = vmatpush2.bf16.msra.mxu0 %v2251
        %4637 = vmatprep.subr.bf16.mxu0 %v2248
        %4638 = vmatpush2.bf16.msra.mxu0 %v2247
        %4639 = vmatprep.subr.bf16.mxu0 %v2244
        %4640 = vmatpush2.bf16.msra.mxu0 %v2243
        %4641 = vmatprep.subr.bf16.mxu0 %v2240
        %4642 = vmatpush2.bf16.msra.mxu0 %v2239
        %4643 = vmatprep.subr.bf16.mxu0 %v2236
        %4644 = vmatpush2.bf16.msra.mxu0 %v2235
        %4645 = vmatprep.mubr.bf16.mxu0 %v3066
        %4646 = vmatmul.mubr.bf16.gmra.mxu0 %v3065
        %v4647 = vpop.f32.mrf.mxu0
        %v4648 = vadd.f32 %v4607, %v4647
        %v4649 = vpop.f32.mrf.mxu0
        %v4650 = vadd.f32 %v4609, %v4649
        %v4651 = vpop.f32.mrf.mxu0
        %v4652 = vpop.f32.mrf.mxu0
        %4653 = vdwg.mxu0
        %4654 = vmatprep.subr.bf16.mxu0 %v2296
        %4655 = vmatpush1.bf16.msra.mxu0 %v2295
        %4656 = vmatprep.subr.bf16.mxu0 %v2292
        %4657 = vmatpush1.bf16.msra.mxu0 %v2291
        %4658 = vmatprep.subr.bf16.mxu0 %v2288
        %4659 = vmatpush1.bf16.msra.mxu0 %v2287
        %4660 = vmatprep.subr.bf16.mxu0 %v2284
        %4661 = vmatpush1.bf16.msra.mxu0 %v2283
        %4662 = vmatprep.subr.bf16.mxu0 %v2280
        %4663 = vmatpush1.bf16.msra.mxu0 %v2279
        %4664 = vmatprep.subr.bf16.mxu0 %v2276
        %4665 = vmatpush1.bf16.msra.mxu0 %v2275
        %4666 = vmatprep.subr.bf16.mxu0 %v2272
        %4667 = vmatpush1.bf16.msra.mxu0 %v2271
        %4668 = vmatprep.subr.bf16.mxu0 %v2268
        %4669 = vmatpush1.bf16.msra.mxu0 %v2267
        %4670 = vmatprep.subr.bf16.mxu0 %v2328
        %4671 = vmatpush2.bf16.msra.mxu0 %v2327
        %4672 = vmatprep.subr.bf16.mxu0 %v2324
        %4673 = vmatpush2.bf16.msra.mxu0 %v2323
        %4674 = vmatprep.subr.bf16.mxu0 %v2320
        %4675 = vmatpush2.bf16.msra.mxu0 %v2319
        %4676 = vmatprep.subr.bf16.mxu0 %v2316
        %4677 = vmatpush2.bf16.msra.mxu0 %v2315
        %4678 = vmatprep.subr.bf16.mxu0 %v2312
        %4679 = vmatpush2.bf16.msra.mxu0 %v2311
        %4680 = vmatprep.subr.bf16.mxu0 %v2308
        %4681 = vmatpush2.bf16.msra.mxu0 %v2307
        %4682 = vmatprep.subr.bf16.mxu0 %v2304
        %4683 = vmatpush2.bf16.msra.mxu0 %v2303
        %4684 = vmatprep.subr.bf16.mxu0 %v2300
        %4685 = vmatpush2.bf16.msra.mxu0 %v2299
        %4686 = vmatprep.mubr.bf16.mxu0 %v3068
        %4687 = vmatmul.mubr.bf16.gmra.mxu0 %v3067
        %v4688 = vpop.f32.mrf.mxu0
        %v4689 = vadd.f32 %v4648, %v4688
        %v4690 = vpop.f32.mrf.mxu0
        %v4691 = vadd.f32 %v4650, %v4690
        %v4692 = vpop.f32.mrf.mxu0
        %v4693 = vpop.f32.mrf.mxu0
        %4694 = vdwg.mxu0
        %4695 = vmatprep.subr.bf16.mxu0 %v2360
        %4696 = vmatpush1.bf16.msra.mxu0 %v2359
        %4697 = vmatprep.subr.bf16.mxu0 %v2356
        %4698 = vmatpush1.bf16.msra.mxu0 %v2355
        %4699 = vmatprep.subr.bf16.mxu0 %v2352
        %4700 = vmatpush1.bf16.msra.mxu0 %v2351
        %4701 = vmatprep.subr.bf16.mxu0 %v2348
        %4702 = vmatpush1.bf16.msra.mxu0 %v2347
        %4703 = vmatprep.subr.bf16.mxu0 %v2344
        %4704 = vmatpush1.bf16.msra.mxu0 %v2343
        %4705 = vmatprep.subr.bf16.mxu0 %v2340
        %4706 = vmatpush1.bf16.msra.mxu0 %v2339
        %4707 = vmatprep.subr.bf16.mxu0 %v2336
        %4708 = vmatpush1.bf16.msra.mxu0 %v2335
        %4709 = vmatprep.subr.bf16.mxu0 %v2332
        %4710 = vmatpush1.bf16.msra.mxu0 %v2331
        %4711 = vmatprep.subr.bf16.mxu0 %v2392
        %4712 = vmatpush2.bf16.msra.mxu0 %v2391
        %4713 = vmatprep.subr.bf16.mxu0 %v2388
        %4714 = vmatpush2.bf16.msra.mxu0 %v2387
        %4715 = vmatprep.subr.bf16.mxu0 %v2384
        %4716 = vmatpush2.bf16.msra.mxu0 %v2383
        %4717 = vmatprep.subr.bf16.mxu0 %v2380
        %4718 = vmatpush2.bf16.msra.mxu0 %v2379
        %4719 = vmatprep.subr.bf16.mxu0 %v2376
        %4720 = vmatpush2.bf16.msra.mxu0 %v2375
        %4721 = vmatprep.subr.bf16.mxu0 %v2372
        %4722 = vmatpush2.bf16.msra.mxu0 %v2371
        %4723 = vmatprep.subr.bf16.mxu0 %v2368
        %4724 = vmatpush2.bf16.msra.mxu0 %v2367
        %4725 = vmatprep.subr.bf16.mxu0 %v2364
        %4726 = vmatpush2.bf16.msra.mxu0 %v2363
        %4727 = vmatprep.mubr.bf16.mxu0 %v3070
        %4728 = vmatmul.mubr.bf16.gmra.mxu0 %v3069
        %v4729 = vpop.f32.mrf.mxu0
        %v4730 = vadd.f32 %v4689, %v4729
        %v4731 = vpop.f32.mrf.mxu0
        %v4732 = vadd.f32 %v4691, %v4731
        %v4733 = vpop.f32.mrf.mxu0
        %v4734 = vpop.f32.mrf.mxu0
        %4735 = vdwg.mxu0
        %4736 = vmatprep.subr.bf16.mxu0 %v2424
        %4737 = vmatpush1.bf16.msra.mxu0 %v2423
        %4738 = vmatprep.subr.bf16.mxu0 %v2420
        %4739 = vmatpush1.bf16.msra.mxu0 %v2419
        %4740 = vmatprep.subr.bf16.mxu0 %v2416
        %4741 = vmatpush1.bf16.msra.mxu0 %v2415
        %4742 = vmatprep.subr.bf16.mxu0 %v2412
        %4743 = vmatpush1.bf16.msra.mxu0 %v2411
        %4744 = vmatprep.subr.bf16.mxu0 %v2408
        %4745 = vmatpush1.bf16.msra.mxu0 %v2407
        %4746 = vmatprep.subr.bf16.mxu0 %v2404
        %4747 = vmatpush1.bf16.msra.mxu0 %v2403
        %4748 = vmatprep.subr.bf16.mxu0 %v2400
        %4749 = vmatpush1.bf16.msra.mxu0 %v2399
        %4750 = vmatprep.subr.bf16.mxu0 %v2396
        %4751 = vmatpush1.bf16.msra.mxu0 %v2395
        %4752 = vmatprep.subr.bf16.mxu0 %v2456
        %4753 = vmatpush2.bf16.msra.mxu0 %v2455
        %4754 = vmatprep.subr.bf16.mxu0 %v2452
        %4755 = vmatpush2.bf16.msra.mxu0 %v2451
        %4756 = vmatprep.subr.bf16.mxu0 %v2448
        %4757 = vmatpush2.bf16.msra.mxu0 %v2447
        %4758 = vmatprep.subr.bf16.mxu0 %v2444
        %4759 = vmatpush2.bf16.msra.mxu0 %v2443
        %4760 = vmatprep.subr.bf16.mxu0 %v2440
        %4761 = vmatpush2.bf16.msra.mxu0 %v2439
        %4762 = vmatprep.subr.bf16.mxu0 %v2436
        %4763 = vmatpush2.bf16.msra.mxu0 %v2435
        %4764 = vmatprep.subr.bf16.mxu0 %v2432
        %4765 = vmatpush2.bf16.msra.mxu0 %v2431
        %4766 = vmatprep.subr.bf16.mxu0 %v2428
        %4767 = vmatpush2.bf16.msra.mxu0 %v2427
        %4768 = vmatprep.mubr.bf16.mxu0 %v3072
        %4769 = vmatmul.mubr.bf16.gmra.mxu0 %v3071
        %v4770 = vpop.f32.mrf.mxu0
        %v4771 = vadd.f32 %v4730, %v4770
        %v4772 = vpop.f32.mrf.mxu0
        %v4773 = vadd.f32 %v4732, %v4772
        %v4774 = vpop.f32.mrf.mxu0
        %v4775 = vpop.f32.mrf.mxu0
        %4776 = vdwg.mxu0
        %4777 = vmatprep.subr.bf16.mxu0 %v2488
        %4778 = vmatpush1.bf16.msra.mxu0 %v2487
        %4779 = vmatprep.subr.bf16.mxu0 %v2484
        %4780 = vmatpush1.bf16.msra.mxu0 %v2483
        %4781 = vmatprep.subr.bf16.mxu0 %v2480
        %4782 = vmatpush1.bf16.msra.mxu0 %v2479
        %4783 = vmatprep.subr.bf16.mxu0 %v2476
        %4784 = vmatpush1.bf16.msra.mxu0 %v2475
        %4785 = vmatprep.subr.bf16.mxu0 %v2472
        %4786 = vmatpush1.bf16.msra.mxu0 %v2471
        %4787 = vmatprep.subr.bf16.mxu0 %v2468
        %4788 = vmatpush1.bf16.msra.mxu0 %v2467
        %4789 = vmatprep.subr.bf16.mxu0 %v2464
        %4790 = vmatpush1.bf16.msra.mxu0 %v2463
        %4791 = vmatprep.subr.bf16.mxu0 %v2460
        %4792 = vmatpush1.bf16.msra.mxu0 %v2459
        %4793 = vmatprep.subr.bf16.mxu0 %v2520
        %4794 = vmatpush2.bf16.msra.mxu0 %v2519
        %4795 = vmatprep.subr.bf16.mxu0 %v2516
        %4796 = vmatpush2.bf16.msra.mxu0 %v2515
        %4797 = vmatprep.subr.bf16.mxu0 %v2512
        %4798 = vmatpush2.bf16.msra.mxu0 %v2511
        %4799 = vmatprep.subr.bf16.mxu0 %v2508
        %4800 = vmatpush2.bf16.msra.mxu0 %v2507
        %4801 = vmatprep.subr.bf16.mxu0 %v2504
        %4802 = vmatpush2.bf16.msra.mxu0 %v2503
        %4803 = vmatprep.subr.bf16.mxu0 %v2500
        %4804 = vmatpush2.bf16.msra.mxu0 %v2499
        %4805 = vmatprep.subr.bf16.mxu0 %v2496
        %4806 = vmatpush2.bf16.msra.mxu0 %v2495
        %4807 = vmatprep.subr.bf16.mxu0 %v2492
        %4808 = vmatpush2.bf16.msra.mxu0 %v2491
        %4809 = vmatprep.mubr.bf16.mxu0 %v3074
        %4810 = vmatmul.mubr.bf16.gmra.mxu0 %v3073
        %v4811 = vpop.f32.mrf.mxu0
        %v4812 = vadd.f32 %v4771, %v4811
        %v4813 = vpop.f32.mrf.mxu0
        %v4814 = vadd.f32 %v4773, %v4813
        %v4815 = vpop.f32.mrf.mxu0
        %v4816 = vpop.f32.mrf.mxu0
        %4817 = vdwg.mxu0
        %4818 = vmatprep.subr.bf16.mxu0 %v2552
        %4819 = vmatpush1.bf16.msra.mxu0 %v2551
        %4820 = vmatprep.subr.bf16.mxu0 %v2548
        %4821 = vmatpush1.bf16.msra.mxu0 %v2547
        %4822 = vmatprep.subr.bf16.mxu0 %v2544
        %4823 = vmatpush1.bf16.msra.mxu0 %v2543
        %4824 = vmatprep.subr.bf16.mxu0 %v2540
        %4825 = vmatpush1.bf16.msra.mxu0 %v2539
        %4826 = vmatprep.subr.bf16.mxu0 %v2536
        %4827 = vmatpush1.bf16.msra.mxu0 %v2535
        %4828 = vmatprep.subr.bf16.mxu0 %v2532
        %4829 = vmatpush1.bf16.msra.mxu0 %v2531
        %4830 = vmatprep.subr.bf16.mxu0 %v2528
        %4831 = vmatpush1.bf16.msra.mxu0 %v2527
        %4832 = vmatprep.subr.bf16.mxu0 %v2524
        %4833 = vmatpush1.bf16.msra.mxu0 %v2523
        %4834 = vmatprep.subr.bf16.mxu0 %v2584
        %4835 = vmatpush2.bf16.msra.mxu0 %v2583
        %4836 = vmatprep.subr.bf16.mxu0 %v2580
        %4837 = vmatpush2.bf16.msra.mxu0 %v2579
        %4838 = vmatprep.subr.bf16.mxu0 %v2576
        %4839 = vmatpush2.bf16.msra.mxu0 %v2575
        %4840 = vmatprep.subr.bf16.mxu0 %v2572
        %4841 = vmatpush2.bf16.msra.mxu0 %v2571
        %4842 = vmatprep.subr.bf16.mxu0 %v2568
        %4843 = vmatpush2.bf16.msra.mxu0 %v2567
        %4844 = vmatprep.subr.bf16.mxu0 %v2564
        %4845 = vmatpush2.bf16.msra.mxu0 %v2563
        %4846 = vmatprep.subr.bf16.mxu0 %v2560
        %4847 = vmatpush2.bf16.msra.mxu0 %v2559
        %4848 = vmatprep.subr.bf16.mxu0 %v2556
        %4849 = vmatpush2.bf16.msra.mxu0 %v2555
        %4850 = vmatprep.mubr.bf16.mxu0 %v3076
        %4851 = vmatmul.mubr.bf16.gmra.mxu0 %v3075
        %v4852 = vpop.f32.mrf.mxu0
        %v4853 = vadd.f32 %v4812, %v4852
        %v4854 = vpop.f32.mrf.mxu0
        %v4855 = vadd.f32 %v4814, %v4854
        %v4856 = vpop.f32.mrf.mxu0
        %v4857 = vpop.f32.mrf.mxu0
        %4858 = vdwg.mxu0
        %4859 = vmatprep.subr.bf16.mxu0 %v2616
        %4860 = vmatpush1.bf16.msra.mxu0 %v2615
        %4861 = vmatprep.subr.bf16.mxu0 %v2612
        %4862 = vmatpush1.bf16.msra.mxu0 %v2611
        %4863 = vmatprep.subr.bf16.mxu0 %v2608
        %4864 = vmatpush1.bf16.msra.mxu0 %v2607
        %4865 = vmatprep.subr.bf16.mxu0 %v2604
        %4866 = vmatpush1.bf16.msra.mxu0 %v2603
        %4867 = vmatprep.subr.bf16.mxu0 %v2600
        %4868 = vmatpush1.bf16.msra.mxu0 %v2599
        %4869 = vmatprep.subr.bf16.mxu0 %v2596
        %4870 = vmatpush1.bf16.msra.mxu0 %v2595
        %4871 = vmatprep.subr.bf16.mxu0 %v2592
        %4872 = vmatpush1.bf16.msra.mxu0 %v2591
        %4873 = vmatprep.subr.bf16.mxu0 %v2588
        %4874 = vmatpush1.bf16.msra.mxu0 %v2587
        %4875 = vmatprep.subr.bf16.mxu0 %v2648
        %4876 = vmatpush2.bf16.msra.mxu0 %v2647
        %4877 = vmatprep.subr.bf16.mxu0 %v2644
        %4878 = vmatpush2.bf16.msra.mxu0 %v2643
        %4879 = vmatprep.subr.bf16.mxu0 %v2640
        %4880 = vmatpush2.bf16.msra.mxu0 %v2639
        %4881 = vmatprep.subr.bf16.mxu0 %v2636
        %4882 = vmatpush2.bf16.msra.mxu0 %v2635
        %4883 = vmatprep.subr.bf16.mxu0 %v2632
        %4884 = vmatpush2.bf16.msra.mxu0 %v2631
        %4885 = vmatprep.subr.bf16.mxu0 %v2628
        %4886 = vmatpush2.bf16.msra.mxu0 %v2627
        %4887 = vmatprep.subr.bf16.mxu0 %v2624
        %4888 = vmatpush2.bf16.msra.mxu0 %v2623
        %4889 = vmatprep.subr.bf16.mxu0 %v2620
        %4890 = vmatpush2.bf16.msra.mxu0 %v2619
        %4891 = vmatprep.mubr.bf16.mxu0 %v3078
        %4892 = vmatmul.mubr.bf16.gmra.mxu0 %v3077
        %v4893 = vpop.f32.mrf.mxu0
        %v4894 = vadd.f32 %v4853, %v4893
        %v4895 = vpop.f32.mrf.mxu0
        %v4896 = vadd.f32 %v4855, %v4895
        %v4897 = vpop.f32.mrf.mxu0
        %v4898 = vpop.f32.mrf.mxu0
        %4899 = vdwg.mxu0
        %4900 = vmatprep.subr.bf16.mxu0 %v2680
        %4901 = vmatpush1.bf16.msra.mxu0 %v2679
        %4902 = vmatprep.subr.bf16.mxu0 %v2676
        %4903 = vmatpush1.bf16.msra.mxu0 %v2675
        %4904 = vmatprep.subr.bf16.mxu0 %v2672
        %4905 = vmatpush1.bf16.msra.mxu0 %v2671
        %4906 = vmatprep.subr.bf16.mxu0 %v2668
        %4907 = vmatpush1.bf16.msra.mxu0 %v2667
        %4908 = vmatprep.subr.bf16.mxu0 %v2664
        %4909 = vmatpush1.bf16.msra.mxu0 %v2663
        %4910 = vmatprep.subr.bf16.mxu0 %v2660
        %4911 = vmatpush1.bf16.msra.mxu0 %v2659
        %4912 = vmatprep.subr.bf16.mxu0 %v2656
        %4913 = vmatpush1.bf16.msra.mxu0 %v2655
        %4914 = vmatprep.subr.bf16.mxu0 %v2652
        %4915 = vmatpush1.bf16.msra.mxu0 %v2651
        %4916 = vmatprep.subr.bf16.mxu0 %v2712
        %4917 = vmatpush2.bf16.msra.mxu0 %v2711
        %4918 = vmatprep.subr.bf16.mxu0 %v2708
        %4919 = vmatpush2.bf16.msra.mxu0 %v2707
        %4920 = vmatprep.subr.bf16.mxu0 %v2704
        %4921 = vmatpush2.bf16.msra.mxu0 %v2703
        %4922 = vmatprep.subr.bf16.mxu0 %v2700
        %4923 = vmatpush2.bf16.msra.mxu0 %v2699
        %4924 = vmatprep.subr.bf16.mxu0 %v2696
        %4925 = vmatpush2.bf16.msra.mxu0 %v2695
        %4926 = vmatprep.subr.bf16.mxu0 %v2692
        %4927 = vmatpush2.bf16.msra.mxu0 %v2691
        %4928 = vmatprep.subr.bf16.mxu0 %v2688
        %4929 = vmatpush2.bf16.msra.mxu0 %v2687
        %4930 = vmatprep.subr.bf16.mxu0 %v2684
        %4931 = vmatpush2.bf16.msra.mxu0 %v2683
        %4932 = vmatprep.mubr.bf16.mxu0 %v3080
        %4933 = vmatmul.mubr.bf16.gmra.mxu0 %v3079
        %v4934 = vpop.f32.mrf.mxu0
        %v4935 = vadd.f32 %v4894, %v4934
        %v4936 = vpop.f32.mrf.mxu0
        %v4937 = vadd.f32 %v4896, %v4936
        %v4938 = vpop.f32.mrf.mxu0
        %v4939 = vpop.f32.mrf.mxu0
        %4940 = vdwg.mxu0
        %4941 = vmatprep.subr.bf16.mxu0 %v2744
        %4942 = vmatpush1.bf16.msra.mxu0 %v2743
        %4943 = vmatprep.subr.bf16.mxu0 %v2740
        %4944 = vmatpush1.bf16.msra.mxu0 %v2739
        %4945 = vmatprep.subr.bf16.mxu0 %v2736
        %4946 = vmatpush1.bf16.msra.mxu0 %v2735
        %4947 = vmatprep.subr.bf16.mxu0 %v2732
        %4948 = vmatpush1.bf16.msra.mxu0 %v2731
        %4949 = vmatprep.subr.bf16.mxu0 %v2728
        %4950 = vmatpush1.bf16.msra.mxu0 %v2727
        %4951 = vmatprep.subr.bf16.mxu0 %v2724
        %4952 = vmatpush1.bf16.msra.mxu0 %v2723
        %4953 = vmatprep.subr.bf16.mxu0 %v2720
        %4954 = vmatpush1.bf16.msra.mxu0 %v2719
        %4955 = vmatprep.subr.bf16.mxu0 %v2716
        %4956 = vmatpush1.bf16.msra.mxu0 %v2715
        %4957 = vmatprep.subr.bf16.mxu0 %v2776
        %4958 = vmatpush2.bf16.msra.mxu0 %v2775
        %4959 = vmatprep.subr.bf16.mxu0 %v2772
        %4960 = vmatpush2.bf16.msra.mxu0 %v2771
        %4961 = vmatprep.subr.bf16.mxu0 %v2768
        %4962 = vmatpush2.bf16.msra.mxu0 %v2767
        %4963 = vmatprep.subr.bf16.mxu0 %v2764
        %4964 = vmatpush2.bf16.msra.mxu0 %v2763
        %4965 = vmatprep.subr.bf16.mxu0 %v2760
        %4966 = vmatpush2.bf16.msra.mxu0 %v2759
        %4967 = vmatprep.subr.bf16.mxu0 %v2756
        %4968 = vmatpush2.bf16.msra.mxu0 %v2755
        %4969 = vmatprep.subr.bf16.mxu0 %v2752
        %4970 = vmatpush2.bf16.msra.mxu0 %v2751
        %4971 = vmatprep.subr.bf16.mxu0 %v2748
        %4972 = vmatpush2.bf16.msra.mxu0 %v2747
        %4973 = vmatprep.mubr.bf16.mxu0 %v3082
        %4974 = vmatmul.mubr.bf16.gmra.mxu0 %v3081
        %v4975 = vpop.f32.mrf.mxu0
        %v4976 = vadd.f32 %v4935, %v4975
        %v4977 = vpop.f32.mrf.mxu0
        %v4978 = vadd.f32 %v4937, %v4977
        %v4979 = vpop.f32.mrf.mxu0
        %v4980 = vpop.f32.mrf.mxu0
        %4981 = vdwg.mxu0
        %4982 = vmatprep.subr.bf16.mxu0 %v2808
        %4983 = vmatpush1.bf16.msra.mxu0 %v2807
        %4984 = vmatprep.subr.bf16.mxu0 %v2804
        %4985 = vmatpush1.bf16.msra.mxu0 %v2803
        %4986 = vmatprep.subr.bf16.mxu0 %v2800
        %4987 = vmatpush1.bf16.msra.mxu0 %v2799
        %4988 = vmatprep.subr.bf16.mxu0 %v2796
        %4989 = vmatpush1.bf16.msra.mxu0 %v2795
        %4990 = vmatprep.subr.bf16.mxu0 %v2792
        %4991 = vmatpush1.bf16.msra.mxu0 %v2791
        %4992 = vmatprep.subr.bf16.mxu0 %v2788
        %4993 = vmatpush1.bf16.msra.mxu0 %v2787
        %4994 = vmatprep.subr.bf16.mxu0 %v2784
        %4995 = vmatpush1.bf16.msra.mxu0 %v2783
        %4996 = vmatprep.subr.bf16.mxu0 %v2780
        %4997 = vmatpush1.bf16.msra.mxu0 %v2779
        %4998 = vmatprep.subr.bf16.mxu0 %v2840
        %4999 = vmatpush2.bf16.msra.mxu0 %v2839
        %5000 = vmatprep.subr.bf16.mxu0 %v2836
        %5001 = vmatpush2.bf16.msra.mxu0 %v2835
        %5002 = vmatprep.subr.bf16.mxu0 %v2832
        %5003 = vmatpush2.bf16.msra.mxu0 %v2831
        %5004 = vmatprep.subr.bf16.mxu0 %v2828
        %5005 = vmatpush2.bf16.msra.mxu0 %v2827
        %5006 = vmatprep.subr.bf16.mxu0 %v2824
        %5007 = vmatpush2.bf16.msra.mxu0 %v2823
        %5008 = vmatprep.subr.bf16.mxu0 %v2820
        %5009 = vmatpush2.bf16.msra.mxu0 %v2819
        %5010 = vmatprep.subr.bf16.mxu0 %v2816
        %5011 = vmatpush2.bf16.msra.mxu0 %v2815
        %5012 = vmatprep.subr.bf16.mxu0 %v2812
        %5013 = vmatpush2.bf16.msra.mxu0 %v2811
        %5014 = vmatprep.mubr.bf16.mxu0 %v3084
        %5015 = vmatmul.mubr.bf16.gmra.mxu0 %v3083
        %v5016 = vpop.f32.mrf.mxu0
        %v5017 = vadd.f32 %v4976, %v5016
        %v5018 = vpop.f32.mrf.mxu0
        %v5019 = vadd.f32 %v4978, %v5018
        %v5020 = vpop.f32.mrf.mxu0
        %v5021 = vpop.f32.mrf.mxu0
        %5022 = vdwg.mxu0
        %5023 = vmatprep.subr.bf16.mxu0 %v2872
        %5024 = vmatpush1.bf16.msra.mxu0 %v2871
        %5025 = vmatprep.subr.bf16.mxu0 %v2868
        %5026 = vmatpush1.bf16.msra.mxu0 %v2867
        %5027 = vmatprep.subr.bf16.mxu0 %v2864
        %5028 = vmatpush1.bf16.msra.mxu0 %v2863
        %5029 = vmatprep.subr.bf16.mxu0 %v2860
        %5030 = vmatpush1.bf16.msra.mxu0 %v2859
        %5031 = vmatprep.subr.bf16.mxu0 %v2856
        %5032 = vmatpush1.bf16.msra.mxu0 %v2855
        %5033 = vmatprep.subr.bf16.mxu0 %v2852
        %5034 = vmatpush1.bf16.msra.mxu0 %v2851
        %5035 = vmatprep.subr.bf16.mxu0 %v2848
        %5036 = vmatpush1.bf16.msra.mxu0 %v2847
        %5037 = vmatprep.subr.bf16.mxu0 %v2844
        %5038 = vmatpush1.bf16.msra.mxu0 %v2843
        %5039 = vmatprep.subr.bf16.mxu0 %v2904
        %5040 = vmatpush2.bf16.msra.mxu0 %v2903
        %5041 = vmatprep.subr.bf16.mxu0 %v2900
        %5042 = vmatpush2.bf16.msra.mxu0 %v2899
        %5043 = vmatprep.subr.bf16.mxu0 %v2896
        %5044 = vmatpush2.bf16.msra.mxu0 %v2895
        %5045 = vmatprep.subr.bf16.mxu0 %v2892
        %5046 = vmatpush2.bf16.msra.mxu0 %v2891
        %5047 = vmatprep.subr.bf16.mxu0 %v2888
        %5048 = vmatpush2.bf16.msra.mxu0 %v2887
        %5049 = vmatprep.subr.bf16.mxu0 %v2884
        %5050 = vmatpush2.bf16.msra.mxu0 %v2883
        %5051 = vmatprep.subr.bf16.mxu0 %v2880
        %5052 = vmatpush2.bf16.msra.mxu0 %v2879
        %5053 = vmatprep.subr.bf16.mxu0 %v2876
        %5054 = vmatpush2.bf16.msra.mxu0 %v2875
        %5055 = vmatprep.mubr.bf16.mxu0 %v3086
        %5056 = vmatmul.mubr.bf16.gmra.mxu0 %v3085
        %v5057 = vpop.f32.mrf.mxu0
        %v5058 = vadd.f32 %v5017, %v5057
        %v5059 = vpop.f32.mrf.mxu0
        %v5060 = vadd.f32 %v5019, %v5059
        %v5061 = vpop.f32.mrf.mxu0
        %v5062 = vpop.f32.mrf.mxu0
        %5063 = vdwg.mxu0
        %5064 = vmatprep.subr.bf16.mxu0 %v2936
        %5065 = vmatpush1.bf16.msra.mxu0 %v2935
        %5066 = vmatprep.subr.bf16.mxu0 %v2932
        %5067 = vmatpush1.bf16.msra.mxu0 %v2931
        %5068 = vmatprep.subr.bf16.mxu0 %v2928
        %5069 = vmatpush1.bf16.msra.mxu0 %v2927
        %5070 = vmatprep.subr.bf16.mxu0 %v2924
        %5071 = vmatpush1.bf16.msra.mxu0 %v2923
        %5072 = vmatprep.subr.bf16.mxu0 %v2920
        %5073 = vmatpush1.bf16.msra.mxu0 %v2919
        %5074 = vmatprep.subr.bf16.mxu0 %v2916
        %5075 = vmatpush1.bf16.msra.mxu0 %v2915
        %5076 = vmatprep.subr.bf16.mxu0 %v2912
        %5077 = vmatpush1.bf16.msra.mxu0 %v2911
        %5078 = vmatprep.subr.bf16.mxu0 %v2908
        %5079 = vmatpush1.bf16.msra.mxu0 %v2907
        %5080 = vmatprep.subr.bf16.mxu0 %v2968
        %5081 = vmatpush2.bf16.msra.mxu0 %v2967
        %5082 = vmatprep.subr.bf16.mxu0 %v2964
        %5083 = vmatpush2.bf16.msra.mxu0 %v2963
        %5084 = vmatprep.subr.bf16.mxu0 %v2960
        %5085 = vmatpush2.bf16.msra.mxu0 %v2959
        %5086 = vmatprep.subr.bf16.mxu0 %v2956
        %5087 = vmatpush2.bf16.msra.mxu0 %v2955
        %5088 = vmatprep.subr.bf16.mxu0 %v2952
        %5089 = vmatpush2.bf16.msra.mxu0 %v2951
        %5090 = vmatprep.subr.bf16.mxu0 %v2948
        %5091 = vmatpush2.bf16.msra.mxu0 %v2947
        %5092 = vmatprep.subr.bf16.mxu0 %v2944
        %5093 = vmatpush2.bf16.msra.mxu0 %v2943
        %5094 = vmatprep.subr.bf16.mxu0 %v2940
        %5095 = vmatpush2.bf16.msra.mxu0 %v2939
        %5096 = vmatprep.mubr.bf16.mxu0 %v3088
        %5097 = vmatmul.mubr.bf16.gmra.mxu0 %v3087
        %v5098 = vpop.f32.mrf.mxu0
        %v5099 = vadd.f32 %v5058, %v5098
        %v5100 = vpop.f32.mrf.mxu0
        %v5101 = vadd.f32 %v5060, %v5100
        %v5102 = vpop.f32.mrf.mxu0
        %v5103 = vpop.f32.mrf.mxu0
        %5104 = vdwg.mxu0
        %v5105 = vld [vmem:[%s527] sm:$0xf]
        %v5107 = vlaneseq
        %v5108 = vshrl.u32 %v5107, 7
        %v5109 = vsub.s32 0, %v5108
        %v5110 = vrot.slane %v5105, %v5109
        %v5111 = vlaneseq
        %v5112 = vshrl.u32 %v5111, 7
        %v5113 = vsub.s32 1, %v5112
        %v5114 = vrot.slane %v5105, %v5113
        %v5115 = vlaneseq
        %v5116 = vshrl.u32 %v5115, 7
        %v5117 = vsub.s32 2, %v5116
        %v5118 = vrot.slane %v5105, %v5117
        %v5119 = vlaneseq
        %v5120 = vshrl.u32 %v5119, 7
        %v5121 = vsub.s32 3, %v5120
        %v5122 = vrot.slane %v5105, %v5121
        %v5127 = vmul.f32 %v4115, %v5110
        %v5128 = vmul.f32 %v4117, %v5114
        %v5129 = vmul.f32 %v5099, %v5118
        %v5130 = vmul.f32 %v5101, %v5122
        %v5131 = vld [vmem:[%s536] sm:$0xf]
        %v5133 = vlaneseq
        %v5134 = vshrl.u32 %v5133, 7
        %v5135 = vsub.s32 0, %v5134
        %v5136 = vrot.slane %v5131, %v5135
        %v5137 = vlaneseq
        %v5138 = vshrl.u32 %v5137, 7
        %v5139 = vsub.s32 1, %v5138
        %v5140 = vrot.slane %v5131, %v5139
        %v5141 = vlaneseq
        %v5142 = vshrl.u32 %v5141, 7
        %v5143 = vsub.s32 2, %v5142
        %v5144 = vrot.slane %v5131, %v5143
        %v5145 = vlaneseq
        %v5146 = vshrl.u32 %v5145, 7
        %v5147 = vsub.s32 3, %v5146
        %v5148 = vrot.slane %v5131, %v5147
        %v5153 = vadd.f32 %v5127, %v5136
        %v5154 = vadd.f32 %v5128, %v5140
        %v5155 = vadd.f32 %v5129, %v5144
        %v5156 = vadd.f32 %v5130, %v5148
        %v5157 = vmax.f32 %v5153, 0.0
        %v5158 = vmax.f32 %v5154, 0.0
        %v5159 = vmax.f32 %v5155, 0.0
        %v5160 = vmax.f32 %v5156, 0.0
        %v5161 = vld [vmem:[%s545] sm:$0xff]
        %v5162 = vld [vmem:[%s545 + $0x8] sm:$0xff]
        %v5163 = vld [vmem:[%s545 + $0x10] sm:$0xff]
        %v5164 = vld [vmem:[%s545 + $0x18] sm:$0xff]
        %v5165 = vld [vmem:[%s545 + $0x20] sm:$0xff]
        %v5166 = vld [vmem:[%s545 + $0x28] sm:$0xff]
        %v5167 = vld [vmem:[%s545 + $0x30] sm:$0xff]
        %v5168 = vld [vmem:[%s545 + $0x38] sm:$0xff]
        %v5169 = vld [vmem:[%s545 + $0x40] sm:$0xff]
        %v5170 = vld [vmem:[%s545 + $0x48] sm:$0xff]
        %v5171 = vld [vmem:[%s545 + $0x50] sm:$0xff]
        %v5172 = vld [vmem:[%s545 + $0x58] sm:$0xff]
        %v5173 = vld [vmem:[%s545 + $0x60] sm:$0xff]
        %v5174 = vld [vmem:[%s545 + $0x68] sm:$0xff]
        %v5175 = vld [vmem:[%s545 + $0x70] sm:$0xff]
        %v5176 = vld [vmem:[%s545 + $0x78] sm:$0xff]
        %v5177 = vld [vmem:[%s545 + $0x80] sm:$0xff]
        %v5178 = vld [vmem:[%s545 + $0x88] sm:$0xff]
        %v5179 = vld [vmem:[%s545 + $0x90] sm:$0xff]
        %v5180 = vld [vmem:[%s545 + $0x98] sm:$0xff]
        %v5181 = vld [vmem:[%s545 + $0xa0] sm:$0xff]
        %v5182 = vld [vmem:[%s545 + $0xa8] sm:$0xff]
        %v5183 = vld [vmem:[%s545 + $0xb0] sm:$0xff]
        %v5184 = vld [vmem:[%s545 + $0xb8] sm:$0xff]
        %v5185 = vld [vmem:[%s545 + $0xc0] sm:$0xff]
        %v5186 = vld [vmem:[%s545 + $0xc8] sm:$0xff]
        %v5187 = vld [vmem:[%s545 + $0xd0] sm:$0xff]
        %v5188 = vld [vmem:[%s545 + $0xd8] sm:$0xff]
        %v5189 = vld [vmem:[%s545 + $0xe0] sm:$0xff]
        %v5190 = vld [vmem:[%s545 + $0xe8] sm:$0xff]
        %v5191 = vld [vmem:[%s545 + $0xf0] sm:$0xff]
        %v5192 = vld [vmem:[%s545 + $0xf8] sm:$0xff]
        %v5193 = vld [vmem:[%s545 + $0x100] sm:$0xff]
        %v5194 = vld [vmem:[%s545 + $0x108] sm:$0xff]
        %v5195 = vld [vmem:[%s545 + $0x110] sm:$0xff]
        %v5196 = vld [vmem:[%s545 + $0x118] sm:$0xff]
        %v5197 = vld [vmem:[%s545 + $0x120] sm:$0xff]
        %v5198 = vld [vmem:[%s545 + $0x128] sm:$0xff]
        %v5199 = vld [vmem:[%s545 + $0x130] sm:$0xff]
        %v5200 = vld [vmem:[%s545 + $0x138] sm:$0xff]
        %v5201 = vld [vmem:[%s545 + $0x140] sm:$0xff]
        %v5202 = vld [vmem:[%s545 + $0x148] sm:$0xff]
        %v5203 = vld [vmem:[%s545 + $0x150] sm:$0xff]
        %v5204 = vld [vmem:[%s545 + $0x158] sm:$0xff]
        %v5205 = vld [vmem:[%s545 + $0x160] sm:$0xff]
        %v5206 = vld [vmem:[%s545 + $0x168] sm:$0xff]
        %v5207 = vld [vmem:[%s545 + $0x170] sm:$0xff]
        %v5208 = vld [vmem:[%s545 + $0x178] sm:$0xff]
        %v5209 = vld [vmem:[%s545 + $0x180] sm:$0xff]
        %v5210 = vld [vmem:[%s545 + $0x188] sm:$0xff]
        %v5211 = vld [vmem:[%s545 + $0x190] sm:$0xff]
        %v5212 = vld [vmem:[%s545 + $0x198] sm:$0xff]
        %v5213 = vld [vmem:[%s545 + $0x1a0] sm:$0xff]
        %v5214 = vld [vmem:[%s545 + $0x1a8] sm:$0xff]
        %v5215 = vld [vmem:[%s545 + $0x1b0] sm:$0xff]
        %v5216 = vld [vmem:[%s545 + $0x1b8] sm:$0xff]
        %v5217 = vld [vmem:[%s545 + $0x1c0] sm:$0xff]
        %v5218 = vld [vmem:[%s545 + $0x1c8] sm:$0xff]
        %v5219 = vld [vmem:[%s545 + $0x1d0] sm:$0xff]
        %v5220 = vld [vmem:[%s545 + $0x1d8] sm:$0xff]
        %v5221 = vld [vmem:[%s545 + $0x1e0] sm:$0xff]
        %v5222 = vld [vmem:[%s545 + $0x1e8] sm:$0xff]
        %v5223 = vld [vmem:[%s545 + $0x1f0] sm:$0xff]
        %v5224 = vld [vmem:[%s545 + $0x1f8] sm:$0xff]
        %v5225 = vld [vmem:[%s545 + $0x200] sm:$0xff]
        %v5226 = vld [vmem:[%s545 + $0x208] sm:$0xff]
        %v5227 = vld [vmem:[%s545 + $0x210] sm:$0xff]
        %v5228 = vld [vmem:[%s545 + $0x218] sm:$0xff]
        %v5229 = vld [vmem:[%s545 + $0x220] sm:$0xff]
        %v5230 = vld [vmem:[%s545 + $0x228] sm:$0xff]
        %v5231 = vld [vmem:[%s545 + $0x230] sm:$0xff]
        %v5232 = vld [vmem:[%s545 + $0x238] sm:$0xff]
        %v5233 = vld [vmem:[%s545 + $0x240] sm:$0xff]
        %v5234 = vld [vmem:[%s545 + $0x248] sm:$0xff]
        %v5235 = vld [vmem:[%s545 + $0x250] sm:$0xff]
        %v5236 = vld [vmem:[%s545 + $0x258] sm:$0xff]
        %v5237 = vld [vmem:[%s545 + $0x260] sm:$0xff]
        %v5238 = vld [vmem:[%s545 + $0x268] sm:$0xff]
        %v5239 = vld [vmem:[%s545 + $0x270] sm:$0xff]
        %v5240 = vld [vmem:[%s545 + $0x278] sm:$0xff]
        %v5241 = vld [vmem:[%s545 + $0x280] sm:$0xff]
        %v5242 = vld [vmem:[%s545 + $0x288] sm:$0xff]
        %v5243 = vld [vmem:[%s545 + $0x290] sm:$0xff]
        %v5244 = vld [vmem:[%s545 + $0x298] sm:$0xff]
        %v5245 = vld [vmem:[%s545 + $0x2a0] sm:$0xff]
        %v5246 = vld [vmem:[%s545 + $0x2a8] sm:$0xff]
        %v5247 = vld [vmem:[%s545 + $0x2b0] sm:$0xff]
        %v5248 = vld [vmem:[%s545 + $0x2b8] sm:$0xff]
        %v5249 = vld [vmem:[%s545 + $0x2c0] sm:$0xff]
        %v5250 = vld [vmem:[%s545 + $0x2c8] sm:$0xff]
        %v5251 = vld [vmem:[%s545 + $0x2d0] sm:$0xff]
        %v5252 = vld [vmem:[%s545 + $0x2d8] sm:$0xff]
        %v5253 = vld [vmem:[%s545 + $0x2e0] sm:$0xff]
        %v5254 = vld [vmem:[%s545 + $0x2e8] sm:$0xff]
        %v5255 = vld [vmem:[%s545 + $0x2f0] sm:$0xff]
        %v5256 = vld [vmem:[%s545 + $0x2f8] sm:$0xff]
        %v5257 = vld [vmem:[%s545 + $0x300] sm:$0xff]
        %v5258 = vld [vmem:[%s545 + $0x308] sm:$0xff]
        %v5259 = vld [vmem:[%s545 + $0x310] sm:$0xff]
        %v5260 = vld [vmem:[%s545 + $0x318] sm:$0xff]
        %v5261 = vld [vmem:[%s545 + $0x320] sm:$0xff]
        %v5262 = vld [vmem:[%s545 + $0x328] sm:$0xff]
        %v5263 = vld [vmem:[%s545 + $0x330] sm:$0xff]
        %v5264 = vld [vmem:[%s545 + $0x338] sm:$0xff]
        %v5265 = vld [vmem:[%s545 + $0x340] sm:$0xff]
        %v5266 = vld [vmem:[%s545 + $0x348] sm:$0xff]
        %v5267 = vld [vmem:[%s545 + $0x350] sm:$0xff]
        %v5268 = vld [vmem:[%s545 + $0x358] sm:$0xff]
        %v5269 = vld [vmem:[%s545 + $0x360] sm:$0xff]
        %v5270 = vld [vmem:[%s545 + $0x368] sm:$0xff]
        %v5271 = vld [vmem:[%s545 + $0x370] sm:$0xff]
        %v5272 = vld [vmem:[%s545 + $0x378] sm:$0xff]
        %v5273 = vld [vmem:[%s545 + $0x380] sm:$0xff]
        %v5274 = vld [vmem:[%s545 + $0x388] sm:$0xff]
        %v5275 = vld [vmem:[%s545 + $0x390] sm:$0xff]
        %v5276 = vld [vmem:[%s545 + $0x398] sm:$0xff]
        %v5277 = vld [vmem:[%s545 + $0x3a0] sm:$0xff]
        %v5278 = vld [vmem:[%s545 + $0x3a8] sm:$0xff]
        %v5279 = vld [vmem:[%s545 + $0x3b0] sm:$0xff]
        %v5280 = vld [vmem:[%s545 + $0x3b8] sm:$0xff]
        %v5281 = vld [vmem:[%s545 + $0x3c0] sm:$0xff]
        %v5282 = vld [vmem:[%s545 + $0x3c8] sm:$0xff]
        %v5283 = vld [vmem:[%s545 + $0x3d0] sm:$0xff]
        %v5284 = vld [vmem:[%s545 + $0x3d8] sm:$0xff]
        %v5285 = vld [vmem:[%s545 + $0x3e0] sm:$0xff]
        %v5286 = vld [vmem:[%s545 + $0x3e8] sm:$0xff]
        %v5287 = vld [vmem:[%s545 + $0x3f0] sm:$0xff]
        %v5288 = vld [vmem:[%s545 + $0x3f8] sm:$0xff]
        %v5289 = vunpack.c.l.s8.bf16 %v5161
        %v5290 = vunpack.c.l.s8.bf16 %v5162
        %v5291 = vunpack.c.l.s8.bf16 %v5163
        %v5292 = vunpack.c.l.s8.bf16 %v5164
        %v5293 = vunpack.c.l.s8.bf16 %v5165
        %v5294 = vunpack.c.l.s8.bf16 %v5166
        %v5295 = vunpack.c.l.s8.bf16 %v5167
        %v5296 = vunpack.c.l.s8.bf16 %v5168
        %v5297 = vunpack.c.h.s8.bf16 %v5161
        %v5298 = vunpack.c.h.s8.bf16 %v5162
        %v5299 = vunpack.c.h.s8.bf16 %v5163
        %v5300 = vunpack.c.h.s8.bf16 %v5164
        %v5301 = vunpack.c.h.s8.bf16 %v5165
        %v5302 = vunpack.c.h.s8.bf16 %v5166
        %v5303 = vunpack.c.h.s8.bf16 %v5167
        %v5304 = vunpack.c.h.s8.bf16 %v5168
        %v5305 = vunpack.c.l.s8.bf16 %v5169
        %v5306 = vunpack.c.l.s8.bf16 %v5170
        %v5307 = vunpack.c.l.s8.bf16 %v5171
        %v5308 = vunpack.c.l.s8.bf16 %v5172
        %v5309 = vunpack.c.l.s8.bf16 %v5173
        %v5310 = vunpack.c.l.s8.bf16 %v5174
        %v5311 = vunpack.c.l.s8.bf16 %v5175
        %v5312 = vunpack.c.l.s8.bf16 %v5176
        %v5313 = vunpack.c.h.s8.bf16 %v5169
        %v5314 = vunpack.c.h.s8.bf16 %v5170
        %v5315 = vunpack.c.h.s8.bf16 %v5171
        %v5316 = vunpack.c.h.s8.bf16 %v5172
        %v5317 = vunpack.c.h.s8.bf16 %v5173
        %v5318 = vunpack.c.h.s8.bf16 %v5174
        %v5319 = vunpack.c.h.s8.bf16 %v5175
        %v5320 = vunpack.c.h.s8.bf16 %v5176
        %v5321 = vunpack.c.l.s8.bf16 %v5177
        %v5322 = vunpack.c.l.s8.bf16 %v5178
        %v5323 = vunpack.c.l.s8.bf16 %v5179
        %v5324 = vunpack.c.l.s8.bf16 %v5180
        %v5325 = vunpack.c.l.s8.bf16 %v5181
        %v5326 = vunpack.c.l.s8.bf16 %v5182
        %v5327 = vunpack.c.l.s8.bf16 %v5183
        %v5328 = vunpack.c.l.s8.bf16 %v5184
        %v5329 = vunpack.c.h.s8.bf16 %v5177
        %v5330 = vunpack.c.h.s8.bf16 %v5178
        %v5331 = vunpack.c.h.s8.bf16 %v5179
        %v5332 = vunpack.c.h.s8.bf16 %v5180
        %v5333 = vunpack.c.h.s8.bf16 %v5181
        %v5334 = vunpack.c.h.s8.bf16 %v5182
        %v5335 = vunpack.c.h.s8.bf16 %v5183
        %v5336 = vunpack.c.h.s8.bf16 %v5184
        %v5337 = vunpack.c.l.s8.bf16 %v5185
        %v5338 = vunpack.c.l.s8.bf16 %v5186
        %v5339 = vunpack.c.l.s8.bf16 %v5187
        %v5340 = vunpack.c.l.s8.bf16 %v5188
        %v5341 = vunpack.c.l.s8.bf16 %v5189
        %v5342 = vunpack.c.l.s8.bf16 %v5190
        %v5343 = vunpack.c.l.s8.bf16 %v5191
        %v5344 = vunpack.c.l.s8.bf16 %v5192
        %v5345 = vunpack.c.h.s8.bf16 %v5185
        %v5346 = vunpack.c.h.s8.bf16 %v5186
        %v5347 = vunpack.c.h.s8.bf16 %v5187
        %v5348 = vunpack.c.h.s8.bf16 %v5188
        %v5349 = vunpack.c.h.s8.bf16 %v5189
        %v5350 = vunpack.c.h.s8.bf16 %v5190
        %v5351 = vunpack.c.h.s8.bf16 %v5191
        %v5352 = vunpack.c.h.s8.bf16 %v5192
        %v5353 = vunpack.c.l.s8.bf16 %v5193
        %v5354 = vunpack.c.l.s8.bf16 %v5194
        %v5355 = vunpack.c.l.s8.bf16 %v5195
        %v5356 = vunpack.c.l.s8.bf16 %v5196
        %v5357 = vunpack.c.l.s8.bf16 %v5197
        %v5358 = vunpack.c.l.s8.bf16 %v5198
        %v5359 = vunpack.c.l.s8.bf16 %v5199
        %v5360 = vunpack.c.l.s8.bf16 %v5200
        %v5361 = vunpack.c.h.s8.bf16 %v5193
        %v5362 = vunpack.c.h.s8.bf16 %v5194
        %v5363 = vunpack.c.h.s8.bf16 %v5195
        %v5364 = vunpack.c.h.s8.bf16 %v5196
        %v5365 = vunpack.c.h.s8.bf16 %v5197
        %v5366 = vunpack.c.h.s8.bf16 %v5198
        %v5367 = vunpack.c.h.s8.bf16 %v5199
        %v5368 = vunpack.c.h.s8.bf16 %v5200
        %v5369 = vunpack.c.l.s8.bf16 %v5201
        %v5370 = vunpack.c.l.s8.bf16 %v5202
        %v5371 = vunpack.c.l.s8.bf16 %v5203
        %v5372 = vunpack.c.l.s8.bf16 %v5204
        %v5373 = vunpack.c.l.s8.bf16 %v5205
        %v5374 = vunpack.c.l.s8.bf16 %v5206
        %v5375 = vunpack.c.l.s8.bf16 %v5207
        %v5376 = vunpack.c.l.s8.bf16 %v5208
        %v5377 = vunpack.c.h.s8.bf16 %v5201
        %v5378 = vunpack.c.h.s8.bf16 %v5202
        %v5379 = vunpack.c.h.s8.bf16 %v5203
        %v5380 = vunpack.c.h.s8.bf16 %v5204
        %v5381 = vunpack.c.h.s8.bf16 %v5205
        %v5382 = vunpack.c.h.s8.bf16 %v5206
        %v5383 = vunpack.c.h.s8.bf16 %v5207
        %v5384 = vunpack.c.h.s8.bf16 %v5208
        %v5385 = vunpack.c.l.s8.bf16 %v5209
        %v5386 = vunpack.c.l.s8.bf16 %v5210
        %v5387 = vunpack.c.l.s8.bf16 %v5211
        %v5388 = vunpack.c.l.s8.bf16 %v5212
        %v5389 = vunpack.c.l.s8.bf16 %v5213
        %v5390 = vunpack.c.l.s8.bf16 %v5214
        %v5391 = vunpack.c.l.s8.bf16 %v5215
        %v5392 = vunpack.c.l.s8.bf16 %v5216
        %v5393 = vunpack.c.h.s8.bf16 %v5209
        %v5394 = vunpack.c.h.s8.bf16 %v5210
        %v5395 = vunpack.c.h.s8.bf16 %v5211
        %v5396 = vunpack.c.h.s8.bf16 %v5212
        %v5397 = vunpack.c.h.s8.bf16 %v5213
        %v5398 = vunpack.c.h.s8.bf16 %v5214
        %v5399 = vunpack.c.h.s8.bf16 %v5215
        %v5400 = vunpack.c.h.s8.bf16 %v5216
        %v5401 = vunpack.c.l.s8.bf16 %v5217
        %v5402 = vunpack.c.l.s8.bf16 %v5218
        %v5403 = vunpack.c.l.s8.bf16 %v5219
        %v5404 = vunpack.c.l.s8.bf16 %v5220
        %v5405 = vunpack.c.l.s8.bf16 %v5221
        %v5406 = vunpack.c.l.s8.bf16 %v5222
        %v5407 = vunpack.c.l.s8.bf16 %v5223
        %v5408 = vunpack.c.l.s8.bf16 %v5224
        %v5409 = vunpack.c.h.s8.bf16 %v5217
        %v5410 = vunpack.c.h.s8.bf16 %v5218
        %v5411 = vunpack.c.h.s8.bf16 %v5219
        %v5412 = vunpack.c.h.s8.bf16 %v5220
        %v5413 = vunpack.c.h.s8.bf16 %v5221
        %v5414 = vunpack.c.h.s8.bf16 %v5222
        %v5415 = vunpack.c.h.s8.bf16 %v5223
        %v5416 = vunpack.c.h.s8.bf16 %v5224
        %v5417 = vunpack.c.l.s8.bf16 %v5225
        %v5418 = vunpack.c.l.s8.bf16 %v5226
        %v5419 = vunpack.c.l.s8.bf16 %v5227
        %v5420 = vunpack.c.l.s8.bf16 %v5228
        %v5421 = vunpack.c.l.s8.bf16 %v5229
        %v5422 = vunpack.c.l.s8.bf16 %v5230
        %v5423 = vunpack.c.l.s8.bf16 %v5231
        %v5424 = vunpack.c.l.s8.bf16 %v5232
        %v5425 = vunpack.c.h.s8.bf16 %v5225
        %v5426 = vunpack.c.h.s8.bf16 %v5226
        %v5427 = vunpack.c.h.s8.bf16 %v5227
        %v5428 = vunpack.c.h.s8.bf16 %v5228
        %v5429 = vunpack.c.h.s8.bf16 %v5229
        %v5430 = vunpack.c.h.s8.bf16 %v5230
        %v5431 = vunpack.c.h.s8.bf16 %v5231
        %v5432 = vunpack.c.h.s8.bf16 %v5232
        %v5433 = vunpack.c.l.s8.bf16 %v5233
        %v5434 = vunpack.c.l.s8.bf16 %v5234
        %v5435 = vunpack.c.l.s8.bf16 %v5235
        %v5436 = vunpack.c.l.s8.bf16 %v5236
        %v5437 = vunpack.c.l.s8.bf16 %v5237
        %v5438 = vunpack.c.l.s8.bf16 %v5238
        %v5439 = vunpack.c.l.s8.bf16 %v5239
        %v5440 = vunpack.c.l.s8.bf16 %v5240
        %v5441 = vunpack.c.h.s8.bf16 %v5233
        %v5442 = vunpack.c.h.s8.bf16 %v5234
        %v5443 = vunpack.c.h.s8.bf16 %v5235
        %v5444 = vunpack.c.h.s8.bf16 %v5236
        %v5445 = vunpack.c.h.s8.bf16 %v5237
        %v5446 = vunpack.c.h.s8.bf16 %v5238
        %v5447 = vunpack.c.h.s8.bf16 %v5239
        %v5448 = vunpack.c.h.s8.bf16 %v5240
        %v5449 = vunpack.c.l.s8.bf16 %v5241
        %v5450 = vunpack.c.l.s8.bf16 %v5242
        %v5451 = vunpack.c.l.s8.bf16 %v5243
        %v5452 = vunpack.c.l.s8.bf16 %v5244
        %v5453 = vunpack.c.l.s8.bf16 %v5245
        %v5454 = vunpack.c.l.s8.bf16 %v5246
        %v5455 = vunpack.c.l.s8.bf16 %v5247
        %v5456 = vunpack.c.l.s8.bf16 %v5248
        %v5457 = vunpack.c.h.s8.bf16 %v5241
        %v5458 = vunpack.c.h.s8.bf16 %v5242
        %v5459 = vunpack.c.h.s8.bf16 %v5243
        %v5460 = vunpack.c.h.s8.bf16 %v5244
        %v5461 = vunpack.c.h.s8.bf16 %v5245
        %v5462 = vunpack.c.h.s8.bf16 %v5246
        %v5463 = vunpack.c.h.s8.bf16 %v5247
        %v5464 = vunpack.c.h.s8.bf16 %v5248
        %v5465 = vunpack.c.l.s8.bf16 %v5249
        %v5466 = vunpack.c.l.s8.bf16 %v5250
        %v5467 = vunpack.c.l.s8.bf16 %v5251
        %v5468 = vunpack.c.l.s8.bf16 %v5252
        %v5469 = vunpack.c.l.s8.bf16 %v5253
        %v5470 = vunpack.c.l.s8.bf16 %v5254
        %v5471 = vunpack.c.l.s8.bf16 %v5255
        %v5472 = vunpack.c.l.s8.bf16 %v5256
        %v5473 = vunpack.c.h.s8.bf16 %v5249
        %v5474 = vunpack.c.h.s8.bf16 %v5250
        %v5475 = vunpack.c.h.s8.bf16 %v5251
        %v5476 = vunpack.c.h.s8.bf16 %v5252
        %v5477 = vunpack.c.h.s8.bf16 %v5253
        %v5478 = vunpack.c.h.s8.bf16 %v5254
        %v5479 = vunpack.c.h.s8.bf16 %v5255
        %v5480 = vunpack.c.h.s8.bf16 %v5256
        %v5481 = vunpack.c.l.s8.bf16 %v5257
        %v5482 = vunpack.c.l.s8.bf16 %v5258
        %v5483 = vunpack.c.l.s8.bf16 %v5259
        %v5484 = vunpack.c.l.s8.bf16 %v5260
        %v5485 = vunpack.c.l.s8.bf16 %v5261
        %v5486 = vunpack.c.l.s8.bf16 %v5262
        %v5487 = vunpack.c.l.s8.bf16 %v5263
        %v5488 = vunpack.c.l.s8.bf16 %v5264
        %v5489 = vunpack.c.h.s8.bf16 %v5257
        %v5490 = vunpack.c.h.s8.bf16 %v5258
        %v5491 = vunpack.c.h.s8.bf16 %v5259
        %v5492 = vunpack.c.h.s8.bf16 %v5260
        %v5493 = vunpack.c.h.s8.bf16 %v5261
        %v5494 = vunpack.c.h.s8.bf16 %v5262
        %v5495 = vunpack.c.h.s8.bf16 %v5263
        %v5496 = vunpack.c.h.s8.bf16 %v5264
        %v5497 = vunpack.c.l.s8.bf16 %v5265
        %v5498 = vunpack.c.l.s8.bf16 %v5266
        %v5499 = vunpack.c.l.s8.bf16 %v5267
        %v5500 = vunpack.c.l.s8.bf16 %v5268
        %v5501 = vunpack.c.l.s8.bf16 %v5269
        %v5502 = vunpack.c.l.s8.bf16 %v5270
        %v5503 = vunpack.c.l.s8.bf16 %v5271
        %v5504 = vunpack.c.l.s8.bf16 %v5272
        %v5505 = vunpack.c.h.s8.bf16 %v5265
        %v5506 = vunpack.c.h.s8.bf16 %v5266
        %v5507 = vunpack.c.h.s8.bf16 %v5267
        %v5508 = vunpack.c.h.s8.bf16 %v5268
        %v5509 = vunpack.c.h.s8.bf16 %v5269
        %v5510 = vunpack.c.h.s8.bf16 %v5270
        %v5511 = vunpack.c.h.s8.bf16 %v5271
        %v5512 = vunpack.c.h.s8.bf16 %v5272
        %v5513 = vunpack.c.l.s8.bf16 %v5273
        %v5514 = vunpack.c.l.s8.bf16 %v5274
        %v5515 = vunpack.c.l.s8.bf16 %v5275
        %v5516 = vunpack.c.l.s8.bf16 %v5276
        %v5517 = vunpack.c.l.s8.bf16 %v5277
        %v5518 = vunpack.c.l.s8.bf16 %v5278
        %v5519 = vunpack.c.l.s8.bf16 %v5279
        %v5520 = vunpack.c.l.s8.bf16 %v5280
        %v5521 = vunpack.c.h.s8.bf16 %v5273
        %v5522 = vunpack.c.h.s8.bf16 %v5274
        %v5523 = vunpack.c.h.s8.bf16 %v5275
        %v5524 = vunpack.c.h.s8.bf16 %v5276
        %v5525 = vunpack.c.h.s8.bf16 %v5277
        %v5526 = vunpack.c.h.s8.bf16 %v5278
        %v5527 = vunpack.c.h.s8.bf16 %v5279
        %v5528 = vunpack.c.h.s8.bf16 %v5280
        %v5529 = vunpack.c.l.s8.bf16 %v5281
        %v5530 = vunpack.c.l.s8.bf16 %v5282
        %v5531 = vunpack.c.l.s8.bf16 %v5283
        %v5532 = vunpack.c.l.s8.bf16 %v5284
        %v5533 = vunpack.c.l.s8.bf16 %v5285
        %v5534 = vunpack.c.l.s8.bf16 %v5286
        %v5535 = vunpack.c.l.s8.bf16 %v5287
        %v5536 = vunpack.c.l.s8.bf16 %v5288
        %v5537 = vunpack.c.h.s8.bf16 %v5281
        %v5538 = vunpack.c.h.s8.bf16 %v5282
        %v5539 = vunpack.c.h.s8.bf16 %v5283
        %v5540 = vunpack.c.h.s8.bf16 %v5284
        %v5541 = vunpack.c.h.s8.bf16 %v5285
        %v5542 = vunpack.c.h.s8.bf16 %v5286
        %v5543 = vunpack.c.h.s8.bf16 %v5287
        %v5544 = vunpack.c.h.s8.bf16 %v5288
        %v5545 = vld [vmem:[#allocation2] sm:$0xff]
        %v5546 = vld [vmem:[#allocation2 + $0x8] sm:$0xff]
        %v5547 = vld [vmem:[#allocation2 + $0x10] sm:$0xff]
        %v5548 = vld [vmem:[#allocation2 + $0x18] sm:$0xff]
        %v5549 = vld [vmem:[#allocation2 + $0x20] sm:$0xff]
        %v5550 = vld [vmem:[#allocation2 + $0x28] sm:$0xff]
        %v5551 = vld [vmem:[#allocation2 + $0x30] sm:$0xff]
        %v5552 = vld [vmem:[#allocation2 + $0x38] sm:$0xff]
        %v5553 = vpack.c.bf16 %v5157, %v5157
        %v5554 = vpack.c.bf16 %v5158, %v5158
        %v5555 = vpack.c.bf16 %v5159, %v5159
        %v5556 = vpack.c.bf16 %v5160, %v5160
        %5557 = vmatprep.subr.bf16.mxu0 %v5346
        %5558 = vmatpush1.bf16.msra.mxu0 %v5345
        %5559 = vmatprep.subr.bf16.mxu0 %v5338
        %5560 = vmatpush1.bf16.msra.mxu0 %v5337
        %5561 = vmatprep.subr.bf16.mxu0 %v5330
        %5562 = vmatpush1.bf16.msra.mxu0 %v5329
        %5563 = vmatprep.subr.bf16.mxu0 %v5322
        %5564 = vmatpush1.bf16.msra.mxu0 %v5321
        %5565 = vmatprep.subr.bf16.mxu0 %v5314
        %5566 = vmatpush1.bf16.msra.mxu0 %v5313
        %5567 = vmatprep.subr.bf16.mxu0 %v5306
        %5568 = vmatpush1.bf16.msra.mxu0 %v5305
        %5569 = vmatprep.subr.bf16.mxu0 %v5298
        %5570 = vmatpush1.bf16.msra.mxu0 %v5297
        %5571 = vmatprep.subr.bf16.mxu0 %v5290
        %5572 = vmatpush1.bf16.msra.mxu0 %v5289
        %5573 = vmatprep.subr.bf16.mxu0 %v5410
        %5574 = vmatpush2.bf16.msra.mxu0 %v5409
        %5575 = vmatprep.subr.bf16.mxu0 %v5402
        %5576 = vmatpush2.bf16.msra.mxu0 %v5401
        %5577 = vmatprep.subr.bf16.mxu0 %v5394
        %5578 = vmatpush2.bf16.msra.mxu0 %v5393
        %5579 = vmatprep.subr.bf16.mxu0 %v5386
        %5580 = vmatpush2.bf16.msra.mxu0 %v5385
        %5581 = vmatprep.subr.bf16.mxu0 %v5378
        %5582 = vmatpush2.bf16.msra.mxu0 %v5377
        %5583 = vmatprep.subr.bf16.mxu0 %v5370
        %5584 = vmatpush2.bf16.msra.mxu0 %v5369
        %5585 = vmatprep.subr.bf16.mxu0 %v5362
        %5586 = vmatpush2.bf16.msra.mxu0 %v5361
        %5587 = vmatprep.subr.bf16.mxu0 %v5354
        %5588 = vmatpush2.bf16.msra.mxu0 %v5353
        %5589 = vmatprep.mubr.bf16.mxu0 %v5554
        %5590 = vmatmul.mubr.bf16.gmra.mxu0 %v5553
        %v5591 = vpop.f32.mrf.mxu0
        %v5592 = vadd.f32 0.0, %v5591
        %v5593 = vpop.f32.mrf.mxu0
        %v5594 = vadd.f32 0.0, %v5593
        %v5595 = vpop.f32.mrf.mxu0
        %v5596 = vpop.f32.mrf.mxu0
        %5597 = vdwg.mxu0
        %5598 = vmatprep.subr.bf16.mxu0 %v5474
        %5599 = vmatpush1.bf16.msra.mxu0 %v5473
        %5600 = vmatprep.subr.bf16.mxu0 %v5466
        %5601 = vmatpush1.bf16.msra.mxu0 %v5465
        %5602 = vmatprep.subr.bf16.mxu0 %v5458
        %5603 = vmatpush1.bf16.msra.mxu0 %v5457
        %5604 = vmatprep.subr.bf16.mxu0 %v5450
        %5605 = vmatpush1.bf16.msra.mxu0 %v5449
        %5606 = vmatprep.subr.bf16.mxu0 %v5442
        %5607 = vmatpush1.bf16.msra.mxu0 %v5441
        %5608 = vmatprep.subr.bf16.mxu0 %v5434
        %5609 = vmatpush1.bf16.msra.mxu0 %v5433
        %5610 = vmatprep.subr.bf16.mxu0 %v5426
        %5611 = vmatpush1.bf16.msra.mxu0 %v5425
        %5612 = vmatprep.subr.bf16.mxu0 %v5418
        %5613 = vmatpush1.bf16.msra.mxu0 %v5417
        %5614 = vmatprep.subr.bf16.mxu0 %v5538
        %5615 = vmatpush2.bf16.msra.mxu0 %v5537
        %5616 = vmatprep.subr.bf16.mxu0 %v5530
        %5617 = vmatpush2.bf16.msra.mxu0 %v5529
        %5618 = vmatprep.subr.bf16.mxu0 %v5522
        %5619 = vmatpush2.bf16.msra.mxu0 %v5521
        %5620 = vmatprep.subr.bf16.mxu0 %v5514
        %5621 = vmatpush2.bf16.msra.mxu0 %v5513
        %5622 = vmatprep.subr.bf16.mxu0 %v5506
        %5623 = vmatpush2.bf16.msra.mxu0 %v5505
        %5624 = vmatprep.subr.bf16.mxu0 %v5498
        %5625 = vmatpush2.bf16.msra.mxu0 %v5497
        %5626 = vmatprep.subr.bf16.mxu0 %v5490
        %5627 = vmatpush2.bf16.msra.mxu0 %v5489
        %5628 = vmatprep.subr.bf16.mxu0 %v5482
        %5629 = vmatpush2.bf16.msra.mxu0 %v5481
        %5630 = vmatprep.mubr.bf16.mxu0 %v5556
        %5631 = vmatmul.mubr.bf16.gmra.mxu0 %v5555
        %v5632 = vpop.f32.mrf.mxu0
        %v5633 = vadd.f32 %v5592, %v5632
        %v5634 = vpop.f32.mrf.mxu0
        %v5635 = vadd.f32 %v5594, %v5634
        %v5636 = vpop.f32.mrf.mxu0
        %v5637 = vpop.f32.mrf.mxu0
        %5638 = vdwg.mxu0
        %5639 = vmatprep.subr.bf16.mxu0 %v5348
        %5640 = vmatpush1.bf16.msra.mxu0 %v5347
        %5641 = vmatprep.subr.bf16.mxu0 %v5340
        %5642 = vmatpush1.bf16.msra.mxu0 %v5339
        %5643 = vmatprep.subr.bf16.mxu0 %v5332
        %5644 = vmatpush1.bf16.msra.mxu0 %v5331
        %5645 = vmatprep.subr.bf16.mxu0 %v5324
        %5646 = vmatpush1.bf16.msra.mxu0 %v5323
        %5647 = vmatprep.subr.bf16.mxu0 %v5316
        %5648 = vmatpush1.bf16.msra.mxu0 %v5315
        %5649 = vmatprep.subr.bf16.mxu0 %v5308
        %5650 = vmatpush1.bf16.msra.mxu0 %v5307
        %5651 = vmatprep.subr.bf16.mxu0 %v5300
        %5652 = vmatpush1.bf16.msra.mxu0 %v5299
        %5653 = vmatprep.subr.bf16.mxu0 %v5292
        %5654 = vmatpush1.bf16.msra.mxu0 %v5291
        %5655 = vmatprep.subr.bf16.mxu0 %v5412
        %5656 = vmatpush2.bf16.msra.mxu0 %v5411
        %5657 = vmatprep.subr.bf16.mxu0 %v5404
        %5658 = vmatpush2.bf16.msra.mxu0 %v5403
        %5659 = vmatprep.subr.bf16.mxu0 %v5396
        %5660 = vmatpush2.bf16.msra.mxu0 %v5395
        %5661 = vmatprep.subr.bf16.mxu0 %v5388
        %5662 = vmatpush2.bf16.msra.mxu0 %v5387
        %5663 = vmatprep.subr.bf16.mxu0 %v5380
        %5664 = vmatpush2.bf16.msra.mxu0 %v5379
        %5665 = vmatprep.subr.bf16.mxu0 %v5372
        %5666 = vmatpush2.bf16.msra.mxu0 %v5371
        %5667 = vmatprep.subr.bf16.mxu0 %v5364
        %5668 = vmatpush2.bf16.msra.mxu0 %v5363
        %5669 = vmatprep.subr.bf16.mxu0 %v5356
        %5670 = vmatpush2.bf16.msra.mxu0 %v5355
        %5671 = vmatprep.mubr.bf16.mxu0 %v5554
        %5672 = vmatmul.mubr.bf16.gmra.mxu0 %v5553
        %v5673 = vpop.f32.mrf.mxu0
        %v5674 = vadd.f32 0.0, %v5673
        %v5675 = vpop.f32.mrf.mxu0
        %v5676 = vadd.f32 0.0, %v5675
        %v5677 = vpop.f32.mrf.mxu0
        %v5678 = vpop.f32.mrf.mxu0
        %5679 = vdwg.mxu0
        %5680 = vmatprep.subr.bf16.mxu0 %v5476
        %5681 = vmatpush1.bf16.msra.mxu0 %v5475
        %5682 = vmatprep.subr.bf16.mxu0 %v5468
        %5683 = vmatpush1.bf16.msra.mxu0 %v5467
        %5684 = vmatprep.subr.bf16.mxu0 %v5460
        %5685 = vmatpush1.bf16.msra.mxu0 %v5459
        %5686 = vmatprep.subr.bf16.mxu0 %v5452
        %5687 = vmatpush1.bf16.msra.mxu0 %v5451
        %5688 = vmatprep.subr.bf16.mxu0 %v5444
        %5689 = vmatpush1.bf16.msra.mxu0 %v5443
        %5690 = vmatprep.subr.bf16.mxu0 %v5436
        %5691 = vmatpush1.bf16.msra.mxu0 %v5435
        %5692 = vmatprep.subr.bf16.mxu0 %v5428
        %5693 = vmatpush1.bf16.msra.mxu0 %v5427
        %5694 = vmatprep.subr.bf16.mxu0 %v5420
        %5695 = vmatpush1.bf16.msra.mxu0 %v5419
        %5696 = vmatprep.subr.bf16.mxu0 %v5540
        %5697 = vmatpush2.bf16.msra.mxu0 %v5539
        %5698 = vmatprep.subr.bf16.mxu0 %v5532
        %5699 = vmatpush2.bf16.msra.mxu0 %v5531
        %5700 = vmatprep.subr.bf16.mxu0 %v5524
        %5701 = vmatpush2.bf16.msra.mxu0 %v5523
        %5702 = vmatprep.subr.bf16.mxu0 %v5516
        %5703 = vmatpush2.bf16.msra.mxu0 %v5515
        %5704 = vmatprep.subr.bf16.mxu0 %v5508
        %5705 = vmatpush2.bf16.msra.mxu0 %v5507
        %5706 = vmatprep.subr.bf16.mxu0 %v5500
        %5707 = vmatpush2.bf16.msra.mxu0 %v5499
        %5708 = vmatprep.subr.bf16.mxu0 %v5492
        %5709 = vmatpush2.bf16.msra.mxu0 %v5491
        %5710 = vmatprep.subr.bf16.mxu0 %v5484
        %5711 = vmatpush2.bf16.msra.mxu0 %v5483
        %5712 = vmatprep.mubr.bf16.mxu0 %v5556
        %5713 = vmatmul.mubr.bf16.gmra.mxu0 %v5555
        %v5714 = vpop.f32.mrf.mxu0
        %v5715 = vadd.f32 %v5674, %v5714
        %v5716 = vpop.f32.mrf.mxu0
        %v5717 = vadd.f32 %v5676, %v5716
        %v5718 = vpop.f32.mrf.mxu0
        %v5719 = vpop.f32.mrf.mxu0
        %5720 = vdwg.mxu0
        %5721 = vmatprep.subr.bf16.mxu0 %v5350
        %5722 = vmatpush1.bf16.msra.mxu0 %v5349
        %5723 = vmatprep.subr.bf16.mxu0 %v5342
        %5724 = vmatpush1.bf16.msra.mxu0 %v5341
        %5725 = vmatprep.subr.bf16.mxu0 %v5334
        %5726 = vmatpush1.bf16.msra.mxu0 %v5333
        %5727 = vmatprep.subr.bf16.mxu0 %v5326
        %5728 = vmatpush1.bf16.msra.mxu0 %v5325
        %5729 = vmatprep.subr.bf16.mxu0 %v5318
        %5730 = vmatpush1.bf16.msra.mxu0 %v5317
        %5731 = vmatprep.subr.bf16.mxu0 %v5310
        %5732 = vmatpush1.bf16.msra.mxu0 %v5309
        %5733 = vmatprep.subr.bf16.mxu0 %v5302
        %5734 = vmatpush1.bf16.msra.mxu0 %v5301
        %5735 = vmatprep.subr.bf16.mxu0 %v5294
        %5736 = vmatpush1.bf16.msra.mxu0 %v5293
        %5737 = vmatprep.subr.bf16.mxu0 %v5414
        %5738 = vmatpush2.bf16.msra.mxu0 %v5413
        %5739 = vmatprep.subr.bf16.mxu0 %v5406
        %5740 = vmatpush2.bf16.msra.mxu0 %v5405
        %5741 = vmatprep.subr.bf16.mxu0 %v5398
        %5742 = vmatpush2.bf16.msra.mxu0 %v5397
        %5743 = vmatprep.subr.bf16.mxu0 %v5390
        %5744 = vmatpush2.bf16.msra.mxu0 %v5389
        %5745 = vmatprep.subr.bf16.mxu0 %v5382
        %5746 = vmatpush2.bf16.msra.mxu0 %v5381
        %5747 = vmatprep.subr.bf16.mxu0 %v5374
        %5748 = vmatpush2.bf16.msra.mxu0 %v5373
        %5749 = vmatprep.subr.bf16.mxu0 %v5366
        %5750 = vmatpush2.bf16.msra.mxu0 %v5365
        %5751 = vmatprep.subr.bf16.mxu0 %v5358
        %5752 = vmatpush2.bf16.msra.mxu0 %v5357
        %5753 = vmatprep.mubr.bf16.mxu0 %v5554
        %5754 = vmatmul.mubr.bf16.gmra.mxu0 %v5553
        %v5755 = vpop.f32.mrf.mxu0
        %v5756 = vadd.f32 0.0, %v5755
        %v5757 = vpop.f32.mrf.mxu0
        %v5758 = vadd.f32 0.0, %v5757
        %v5759 = vpop.f32.mrf.mxu0
        %v5760 = vpop.f32.mrf.mxu0
        %5761 = vdwg.mxu0
        %5762 = vmatprep.subr.bf16.mxu0 %v5478
        %5763 = vmatpush1.bf16.msra.mxu0 %v5477
        %5764 = vmatprep.subr.bf16.mxu0 %v5470
        %5765 = vmatpush1.bf16.msra.mxu0 %v5469
        %5766 = vmatprep.subr.bf16.mxu0 %v5462
        %5767 = vmatpush1.bf16.msra.mxu0 %v5461
        %5768 = vmatprep.subr.bf16.mxu0 %v5454
        %5769 = vmatpush1.bf16.msra.mxu0 %v5453
        %5770 = vmatprep.subr.bf16.mxu0 %v5446
        %5771 = vmatpush1.bf16.msra.mxu0 %v5445
        %5772 = vmatprep.subr.bf16.mxu0 %v5438
        %5773 = vmatpush1.bf16.msra.mxu0 %v5437
        %5774 = vmatprep.subr.bf16.mxu0 %v5430
        %5775 = vmatpush1.bf16.msra.mxu0 %v5429
        %5776 = vmatprep.subr.bf16.mxu0 %v5422
        %5777 = vmatpush1.bf16.msra.mxu0 %v5421
        %5778 = vmatprep.subr.bf16.mxu0 %v5542
        %5779 = vmatpush2.bf16.msra.mxu0 %v5541
        %5780 = vmatprep.subr.bf16.mxu0 %v5534
        %5781 = vmatpush2.bf16.msra.mxu0 %v5533
        %5782 = vmatprep.subr.bf16.mxu0 %v5526
        %5783 = vmatpush2.bf16.msra.mxu0 %v5525
        %5784 = vmatprep.subr.bf16.mxu0 %v5518
        %5785 = vmatpush2.bf16.msra.mxu0 %v5517
        %5786 = vmatprep.subr.bf16.mxu0 %v5510
        %5787 = vmatpush2.bf16.msra.mxu0 %v5509
        %5788 = vmatprep.subr.bf16.mxu0 %v5502
        %5789 = vmatpush2.bf16.msra.mxu0 %v5501
        %5790 = vmatprep.subr.bf16.mxu0 %v5494
        %5791 = vmatpush2.bf16.msra.mxu0 %v5493
        %5792 = vmatprep.subr.bf16.mxu0 %v5486
        %5793 = vmatpush2.bf16.msra.mxu0 %v5485
        %5794 = vmatprep.mubr.bf16.mxu0 %v5556
        %5795 = vmatmul.mubr.bf16.gmra.mxu0 %v5555
        %v5796 = vpop.f32.mrf.mxu0
        %v5797 = vadd.f32 %v5756, %v5796
        %v5798 = vpop.f32.mrf.mxu0
        %v5799 = vadd.f32 %v5758, %v5798
        %v5800 = vpop.f32.mrf.mxu0
        %v5801 = vpop.f32.mrf.mxu0
        %5802 = vdwg.mxu0
        %5803 = vmatprep.subr.bf16.mxu0 %v5352
        %5804 = vmatpush1.bf16.msra.mxu0 %v5351
        %5805 = vmatprep.subr.bf16.mxu0 %v5344
        %5806 = vmatpush1.bf16.msra.mxu0 %v5343
        %5807 = vmatprep.subr.bf16.mxu0 %v5336
        %5808 = vmatpush1.bf16.msra.mxu0 %v5335
        %5809 = vmatprep.subr.bf16.mxu0 %v5328
        %5810 = vmatpush1.bf16.msra.mxu0 %v5327
        %5811 = vmatprep.subr.bf16.mxu0 %v5320
        %5812 = vmatpush1.bf16.msra.mxu0 %v5319
        %5813 = vmatprep.subr.bf16.mxu0 %v5312
        %5814 = vmatpush1.bf16.msra.mxu0 %v5311
        %5815 = vmatprep.subr.bf16.mxu0 %v5304
        %5816 = vmatpush1.bf16.msra.mxu0 %v5303
        %5817 = vmatprep.subr.bf16.mxu0 %v5296
        %5818 = vmatpush1.bf16.msra.mxu0 %v5295
        %5819 = vmatprep.subr.bf16.mxu0 %v5416
        %5820 = vmatpush2.bf16.msra.mxu0 %v5415
        %5821 = vmatprep.subr.bf16.mxu0 %v5408
        %5822 = vmatpush2.bf16.msra.mxu0 %v5407
        %5823 = vmatprep.subr.bf16.mxu0 %v5400
        %5824 = vmatpush2.bf16.msra.mxu0 %v5399
        %5825 = vmatprep.subr.bf16.mxu0 %v5392
        %5826 = vmatpush2.bf16.msra.mxu0 %v5391
        %5827 = vmatprep.subr.bf16.mxu0 %v5384
        %5828 = vmatpush2.bf16.msra.mxu0 %v5383
        %5829 = vmatprep.subr.bf16.mxu0 %v5376
        %5830 = vmatpush2.bf16.msra.mxu0 %v5375
        %5831 = vmatprep.subr.bf16.mxu0 %v5368
        %5832 = vmatpush2.bf16.msra.mxu0 %v5367
        %5833 = vmatprep.subr.bf16.mxu0 %v5360
        %5834 = vmatpush2.bf16.msra.mxu0 %v5359
        %5835 = vmatprep.mubr.bf16.mxu0 %v5554
        %5836 = vmatmul.mubr.bf16.gmra.mxu0 %v5553
        %v5837 = vpop.f32.mrf.mxu0
        %v5838 = vadd.f32 0.0, %v5837
        %v5839 = vpop.f32.mrf.mxu0
        %v5840 = vadd.f32 0.0, %v5839
        %v5841 = vpop.f32.mrf.mxu0
        %v5842 = vpop.f32.mrf.mxu0
        %5843 = vdwg.mxu0
        %5844 = vmatprep.subr.bf16.mxu0 %v5480
        %5845 = vmatpush1.bf16.msra.mxu0 %v5479
        %5846 = vmatprep.subr.bf16.mxu0 %v5472
        %5847 = vmatpush1.bf16.msra.mxu0 %v5471
        %5848 = vmatprep.subr.bf16.mxu0 %v5464
        %5849 = vmatpush1.bf16.msra.mxu0 %v5463
        %5850 = vmatprep.subr.bf16.mxu0 %v5456
        %5851 = vmatpush1.bf16.msra.mxu0 %v5455
        %5852 = vmatprep.subr.bf16.mxu0 %v5448
        %5853 = vmatpush1.bf16.msra.mxu0 %v5447
        %5854 = vmatprep.subr.bf16.mxu0 %v5440
        %5855 = vmatpush1.bf16.msra.mxu0 %v5439
        %5856 = vmatprep.subr.bf16.mxu0 %v5432
        %5857 = vmatpush1.bf16.msra.mxu0 %v5431
        %5858 = vmatprep.subr.bf16.mxu0 %v5424
        %5859 = vmatpush1.bf16.msra.mxu0 %v5423
        %5860 = vmatprep.subr.bf16.mxu0 %v5544
        %5861 = vmatpush2.bf16.msra.mxu0 %v5543
        %5862 = vmatprep.subr.bf16.mxu0 %v5536
        %5863 = vmatpush2.bf16.msra.mxu0 %v5535
        %5864 = vmatprep.subr.bf16.mxu0 %v5528
        %5865 = vmatpush2.bf16.msra.mxu0 %v5527
        %5866 = vmatprep.subr.bf16.mxu0 %v5520
        %5867 = vmatpush2.bf16.msra.mxu0 %v5519
        %5868 = vmatprep.subr.bf16.mxu0 %v5512
        %5869 = vmatpush2.bf16.msra.mxu0 %v5511
        %5870 = vmatprep.subr.bf16.mxu0 %v5504
        %5871 = vmatpush2.bf16.msra.mxu0 %v5503
        %5872 = vmatprep.subr.bf16.mxu0 %v5496
        %5873 = vmatpush2.bf16.msra.mxu0 %v5495
        %5874 = vmatprep.subr.bf16.mxu0 %v5488
        %5875 = vmatpush2.bf16.msra.mxu0 %v5487
        %5876 = vmatprep.mubr.bf16.mxu0 %v5556
        %5877 = vmatmul.mubr.bf16.gmra.mxu0 %v5555
        %v5878 = vpop.f32.mrf.mxu0
        %v5879 = vadd.f32 %v5838, %v5878
        %v5880 = vpop.f32.mrf.mxu0
        %v5881 = vadd.f32 %v5840, %v5880
        %v5882 = vpop.f32.mrf.mxu0
        %v5883 = vpop.f32.mrf.mxu0
        %5884 = vdwg.mxu0
        %v5885 = vadd.f32 %v5545, %v5633
        %v5886 = vadd.f32 %v5546, %v5635
        %v5887 = vadd.f32 %v5547, %v5715
        %v5888 = vadd.f32 %v5548, %v5717
        %v5889 = vadd.f32 %v5549, %v5797
        %v5890 = vadd.f32 %v5550, %v5799
        %v5891 = vadd.f32 %v5551, %v5879
        %v5892 = vadd.f32 %v5552, %v5881
        %5893 = vst [vmem:[#allocation2] sm:$0xff] %v5885
        %5894 = vst [vmem:[#allocation2 + $0x8] sm:$0xff] %v5886
        %5895 = vst [vmem:[#allocation2 + $0x10] sm:$0xff] %v5887
        %5896 = vst [vmem:[#allocation2 + $0x18] sm:$0xff] %v5888
        %5897 = vst [vmem:[#allocation2 + $0x20] sm:$0xff] %v5889
        %5898 = vst [vmem:[#allocation2 + $0x28] sm:$0xff] %v5890
        %5899 = vst [vmem:[#allocation2 + $0x30] sm:$0xff] %v5891
        %5900 = vst [vmem:[#allocation2 + $0x38] sm:$0xff] %v5892
        %p5901 = scmp.eq.s32.totalorder %s35, 3
        // Predicated region
        $region117: #{net_forward.1} parent=67 // pred_check
          %p5902 = pneg %p5901
        $region118: #{net_forward.1} parent=67 // pred_check_branch
          %5904 = sbr.rel (%p5902) target = $region120
        $region119: #{net_forward.1} parent=67 // pred_region
          %v5905 = vld [vmem:[#allocation2] sm:$0xff]
          %v5906 = vld [vmem:[#allocation2 + $0x8] sm:$0xff]
          %v5907 = vld [vmem:[#allocation2 + $0x10] sm:$0xff]
          %v5908 = vld [vmem:[#allocation2 + $0x18] sm:$0xff]
          %v5909 = vld [vmem:[#allocation2 + $0x20] sm:$0xff]
          %v5910 = vld [vmem:[#allocation2 + $0x28] sm:$0xff]
          %v5911 = vld [vmem:[#allocation2 + $0x30] sm:$0xff]
          %v5912 = vld [vmem:[#allocation2 + $0x38] sm:$0xff]
          %v5913 = vld [vmem:[#allocation10] sm:$0xff]
          %v5915 = vlaneseq
          %v5916 = vshrl.u32 %v5915, 7
          %v5917 = vsub.s32 0, %v5916
          %v5918 = vrot.slane %v5913, %v5917
          %v5919 = vlaneseq
          %v5920 = vshrl.u32 %v5919, 7
          %v5921 = vsub.s32 1, %v5920
          %v5922 = vrot.slane %v5913, %v5921
          %v5923 = vlaneseq
          %v5924 = vshrl.u32 %v5923, 7
          %v5925 = vsub.s32 2, %v5924
          %v5926 = vrot.slane %v5913, %v5925
          %v5927 = vlaneseq
          %v5928 = vshrl.u32 %v5927, 7
          %v5929 = vsub.s32 3, %v5928
          %v5930 = vrot.slane %v5913, %v5929
          %v5931 = vlaneseq
          %v5932 = vshrl.u32 %v5931, 7
          %v5933 = vsub.s32 4, %v5932
          %v5934 = vrot.slane %v5913, %v5933
          %v5935 = vlaneseq
          %v5936 = vshrl.u32 %v5935, 7
          %v5937 = vsub.s32 5, %v5936
          %v5938 = vrot.slane %v5913, %v5937
          %v5939 = vlaneseq
          %v5940 = vshrl.u32 %v5939, 7
          %v5941 = vsub.s32 6, %v5940
          %v5942 = vrot.slane %v5913, %v5941
          %v5943 = vlaneseq
          %v5944 = vshrl.u32 %v5943, 7
          %v5945 = vsub.s32 7, %v5944
          %v5946 = vrot.slane %v5913, %v5945
          %v5955 = vmul.f32 %v5905, %v5918
          %v5956 = vmul.f32 %v5906, %v5922
          %v5957 = vmul.f32 %v5907, %v5926
          %v5958 = vmul.f32 %v5908, %v5930
          %v5959 = vmul.f32 %v5909, %v5934
          %v5960 = vmul.f32 %v5910, %v5938
          %v5961 = vmul.f32 %v5911, %v5942
          %v5962 = vmul.f32 %v5912, %v5946
          %v5963 = vld [vmem:[#allocation11] sm:$0xff]
          %v5965 = vlaneseq
          %v5966 = vshrl.u32 %v5965, 7
          %v5967 = vsub.s32 0, %v5966
          %v5968 = vrot.slane %v5963, %v5967
          %v5969 = vlaneseq
          %v5970 = vshrl.u32 %v5969, 7
          %v5971 = vsub.s32 1, %v5970
          %v5972 = vrot.slane %v5963, %v5971
          %v5973 = vlaneseq
          %v5974 = vshrl.u32 %v5973, 7
          %v5975 = vsub.s32 2, %v5974
          %v5976 = vrot.slane %v5963, %v5975
          %v5977 = vlaneseq
          %v5978 = vshrl.u32 %v5977, 7
          %v5979 = vsub.s32 3, %v5978
          %v5980 = vrot.slane %v5963, %v5979
          %v5981 = vlaneseq
          %v5982 = vshrl.u32 %v5981, 7
          %v5983 = vsub.s32 4, %v5982
          %v5984 = vrot.slane %v5963, %v5983
          %v5985 = vlaneseq
          %v5986 = vshrl.u32 %v5985, 7
          %v5987 = vsub.s32 5, %v5986
          %v5988 = vrot.slane %v5963, %v5987
          %v5989 = vlaneseq
          %v5990 = vshrl.u32 %v5989, 7
          %v5991 = vsub.s32 6, %v5990
          %v5992 = vrot.slane %v5963, %v5991
          %v5993 = vlaneseq
          %v5994 = vshrl.u32 %v5993, 7
          %v5995 = vsub.s32 7, %v5994
          %v5996 = vrot.slane %v5963, %v5995
          %v6005 = vadd.f32 %v5955, %v5968
          %v6006 = vadd.f32 %v5956, %v5972
          %v6007 = vadd.f32 %v5957, %v5976
          %v6008 = vadd.f32 %v5958, %v5980
          %v6009 = vadd.f32 %v5959, %v5984
          %v6010 = vadd.f32 %v5960, %v5988
          %v6011 = vadd.f32 %v5961, %v5992
          %v6012 = vadd.f32 %v5962, %v5996
          %v6013 = vmax.f32 %v6005, 0.0
          %v6014 = vmax.f32 %v6006, 0.0
          %v6015 = vmax.f32 %v6007, 0.0
          %v6016 = vmax.f32 %v6008, 0.0
          %v6017 = vmax.f32 %v6009, 0.0
          %v6018 = vmax.f32 %v6010, 0.0
          %v6019 = vmax.f32 %v6011, 0.0
          %v6020 = vmax.f32 %v6012, 0.0
          %v6021 = vld [vmem:[#allocation13] sm:$0xff]
          %v6022 = vld [vmem:[#allocation13 + $0x8] sm:$0xff]
          %v6023 = vld [vmem:[#allocation13 + $0x10] sm:$0xff]
          %v6024 = vld [vmem:[#allocation13 + $0x18] sm:$0xff]
          %v6025 = vld [vmem:[#allocation13 + $0x20] sm:$0xff]
          %v6026 = vld [vmem:[#allocation13 + $0x28] sm:$0xff]
          %v6027 = vld [vmem:[#allocation13 + $0x30] sm:$0xff]
          %v6028 = vld [vmem:[#allocation13 + $0x38] sm:$0xff]
          %v6029 = vld [vmem:[#allocation13 + $0x40] sm:$0xff]
          %v6030 = vld [vmem:[#allocation13 + $0x48] sm:$0xff]
          %v6031 = vld [vmem:[#allocation13 + $0x50] sm:$0xff]
          %v6032 = vld [vmem:[#allocation13 + $0x58] sm:$0xff]
          %v6033 = vld [vmem:[#allocation13 + $0x60] sm:$0xff]
          %v6034 = vld [vmem:[#allocation13 + $0x68] sm:$0xff]
          %v6035 = vld [vmem:[#allocation13 + $0x70] sm:$0xff]
          %v6036 = vld [vmem:[#allocation13 + $0x78] sm:$0xff]
          %v6037 = vld [vmem:[#allocation13 + $0x80] sm:$0xff]
          %v6038 = vld [vmem:[#allocation13 + $0x88] sm:$0xff]
          %v6039 = vld [vmem:[#allocation13 + $0x90] sm:$0xff]
          %v6040 = vld [vmem:[#allocation13 + $0x98] sm:$0xff]
          %v6041 = vld [vmem:[#allocation13 + $0xa0] sm:$0xff]
          %v6042 = vld [vmem:[#allocation13 + $0xa8] sm:$0xff]
          %v6043 = vld [vmem:[#allocation13 + $0xb0] sm:$0xff]
          %v6044 = vld [vmem:[#allocation13 + $0xb8] sm:$0xff]
          %v6045 = vld [vmem:[#allocation13 + $0xc0] sm:$0xff]
          %v6046 = vld [vmem:[#allocation13 + $0xc8] sm:$0xff]
          %v6047 = vld [vmem:[#allocation13 + $0xd0] sm:$0xff]
          %v6048 = vld [vmem:[#allocation13 + $0xd8] sm:$0xff]
          %v6049 = vld [vmem:[#allocation13 + $0xe0] sm:$0xff]
          %v6050 = vld [vmem:[#allocation13 + $0xe8] sm:$0xff]
          %v6051 = vld [vmem:[#allocation13 + $0xf0] sm:$0xff]
          %v6052 = vld [vmem:[#allocation13 + $0xf8] sm:$0xff]
          %v6053 = vld [vmem:[#allocation13 + $0x100] sm:$0xff]
          %v6054 = vld [vmem:[#allocation13 + $0x108] sm:$0xff]
          %v6055 = vld [vmem:[#allocation13 + $0x110] sm:$0xff]
          %v6056 = vld [vmem:[#allocation13 + $0x118] sm:$0xff]
          %v6057 = vld [vmem:[#allocation13 + $0x120] sm:$0xff]
          %v6058 = vld [vmem:[#allocation13 + $0x128] sm:$0xff]
          %v6059 = vld [vmem:[#allocation13 + $0x130] sm:$0xff]
          %v6060 = vld [vmem:[#allocation13 + $0x138] sm:$0xff]
          %v6061 = vld [vmem:[#allocation13 + $0x140] sm:$0xff]
          %v6062 = vld [vmem:[#allocation13 + $0x148] sm:$0xff]
          %v6063 = vld [vmem:[#allocation13 + $0x150] sm:$0xff]
          %v6064 = vld [vmem:[#allocation13 + $0x158] sm:$0xff]
          %v6065 = vld [vmem:[#allocation13 + $0x160] sm:$0xff]
          %v6066 = vld [vmem:[#allocation13 + $0x168] sm:$0xff]
          %v6067 = vld [vmem:[#allocation13 + $0x170] sm:$0xff]
          %v6068 = vld [vmem:[#allocation13 + $0x178] sm:$0xff]
          %v6069 = vld [vmem:[#allocation13 + $0x180] sm:$0xff]
          %v6070 = vld [vmem:[#allocation13 + $0x188] sm:$0xff]
          %v6071 = vld [vmem:[#allocation13 + $0x190] sm:$0xff]
          %v6072 = vld [vmem:[#allocation13 + $0x198] sm:$0xff]
          %v6073 = vld [vmem:[#allocation13 + $0x1a0] sm:$0xff]
          %v6074 = vld [vmem:[#allocation13 + $0x1a8] sm:$0xff]
          %v6075 = vld [vmem:[#allocation13 + $0x1b0] sm:$0xff]
          %v6076 = vld [vmem:[#allocation13 + $0x1b8] sm:$0xff]
          %v6077 = vld [vmem:[#allocation13 + $0x1c0] sm:$0xff]
          %v6078 = vld [vmem:[#allocation13 + $0x1c8] sm:$0xff]
          %v6079 = vld [vmem:[#allocation13 + $0x1d0] sm:$0xff]
          %v6080 = vld [vmem:[#allocation13 + $0x1d8] sm:$0xff]
          %v6081 = vld [vmem:[#allocation13 + $0x1e0] sm:$0xff]
          %v6082 = vld [vmem:[#allocation13 + $0x1e8] sm:$0xff]
          %v6083 = vld [vmem:[#allocation13 + $0x1f0] sm:$0xff]
          %v6084 = vld [vmem:[#allocation13 + $0x1f8] sm:$0xff]
          %v6085 = vld [vmem:[#allocation13 + $0x200] sm:$0xff]
          %v6086 = vld [vmem:[#allocation13 + $0x208] sm:$0xff]
          %v6087 = vld [vmem:[#allocation13 + $0x210] sm:$0xff]
          %v6088 = vld [vmem:[#allocation13 + $0x218] sm:$0xff]
          %v6089 = vld [vmem:[#allocation13 + $0x220] sm:$0xff]
          %v6090 = vld [vmem:[#allocation13 + $0x228] sm:$0xff]
          %v6091 = vld [vmem:[#allocation13 + $0x230] sm:$0xff]
          %v6092 = vld [vmem:[#allocation13 + $0x238] sm:$0xff]
          %v6093 = vld [vmem:[#allocation13 + $0x240] sm:$0xff]
          %v6094 = vld [vmem:[#allocation13 + $0x248] sm:$0xff]
          %v6095 = vld [vmem:[#allocation13 + $0x250] sm:$0xff]
          %v6096 = vld [vmem:[#allocation13 + $0x258] sm:$0xff]
          %v6097 = vld [vmem:[#allocation13 + $0x260] sm:$0xff]
          %v6098 = vld [vmem:[#allocation13 + $0x268] sm:$0xff]
          %v6099 = vld [vmem:[#allocation13 + $0x270] sm:$0xff]
          %v6100 = vld [vmem:[#allocation13 + $0x278] sm:$0xff]
          %v6101 = vld [vmem:[#allocation13 + $0x280] sm:$0xff]
          %v6102 = vld [vmem:[#allocation13 + $0x288] sm:$0xff]
          %v6103 = vld [vmem:[#allocation13 + $0x290] sm:$0xff]
          %v6104 = vld [vmem:[#allocation13 + $0x298] sm:$0xff]
          %v6105 = vld [vmem:[#allocation13 + $0x2a0] sm:$0xff]
          %v6106 = vld [vmem:[#allocation13 + $0x2a8] sm:$0xff]
          %v6107 = vld [vmem:[#allocation13 + $0x2b0] sm:$0xff]
          %v6108 = vld [vmem:[#allocation13 + $0x2b8] sm:$0xff]
          %v6109 = vld [vmem:[#allocation13 + $0x2c0] sm:$0xff]
          %v6110 = vld [vmem:[#allocation13 + $0x2c8] sm:$0xff]
          %v6111 = vld [vmem:[#allocation13 + $0x2d0] sm:$0xff]
          %v6112 = vld [vmem:[#allocation13 + $0x2d8] sm:$0xff]
          %v6113 = vld [vmem:[#allocation13 + $0x2e0] sm:$0xff]
          %v6114 = vld [vmem:[#allocation13 + $0x2e8] sm:$0xff]
          %v6115 = vld [vmem:[#allocation13 + $0x2f0] sm:$0xff]
          %v6116 = vld [vmem:[#allocation13 + $0x2f8] sm:$0xff]
          %v6117 = vld [vmem:[#allocation13 + $0x300] sm:$0xff]
          %v6118 = vld [vmem:[#allocation13 + $0x308] sm:$0xff]
          %v6119 = vld [vmem:[#allocation13 + $0x310] sm:$0xff]
          %v6120 = vld [vmem:[#allocation13 + $0x318] sm:$0xff]
          %v6121 = vld [vmem:[#allocation13 + $0x320] sm:$0xff]
          %v6122 = vld [vmem:[#allocation13 + $0x328] sm:$0xff]
          %v6123 = vld [vmem:[#allocation13 + $0x330] sm:$0xff]
          %v6124 = vld [vmem:[#allocation13 + $0x338] sm:$0xff]
          %v6125 = vld [vmem:[#allocation13 + $0x340] sm:$0xff]
          %v6126 = vld [vmem:[#allocation13 + $0x348] sm:$0xff]
          %v6127 = vld [vmem:[#allocation13 + $0x350] sm:$0xff]
          %v6128 = vld [vmem:[#allocation13 + $0x358] sm:$0xff]
          %v6129 = vld [vmem:[#allocation13 + $0x360] sm:$0xff]
          %v6130 = vld [vmem:[#allocation13 + $0x368] sm:$0xff]
          %v6131 = vld [vmem:[#allocation13 + $0x370] sm:$0xff]
          %v6132 = vld [vmem:[#allocation13 + $0x378] sm:$0xff]
          %v6133 = vld [vmem:[#allocation13 + $0x380] sm:$0xff]
          %v6134 = vld [vmem:[#allocation13 + $0x388] sm:$0xff]
          %v6135 = vld [vmem:[#allocation13 + $0x390] sm:$0xff]
          %v6136 = vld [vmem:[#allocation13 + $0x398] sm:$0xff]
          %v6137 = vld [vmem:[#allocation13 + $0x3a0] sm:$0xff]
          %v6138 = vld [vmem:[#allocation13 + $0x3a8] sm:$0xff]
          %v6139 = vld [vmem:[#allocation13 + $0x3b0] sm:$0xff]
          %v6140 = vld [vmem:[#allocation13 + $0x3b8] sm:$0xff]
          %v6141 = vld [vmem:[#allocation13 + $0x3c0] sm:$0xff]
          %v6142 = vld [vmem:[#allocation13 + $0x3c8] sm:$0xff]
          %v6143 = vld [vmem:[#allocation13 + $0x3d0] sm:$0xff]
          %v6144 = vld [vmem:[#allocation13 + $0x3d8] sm:$0xff]
          %v6145 = vld [vmem:[#allocation13 + $0x3e0] sm:$0xff]
          %v6146 = vld [vmem:[#allocation13 + $0x3e8] sm:$0xff]
          %v6147 = vld [vmem:[#allocation13 + $0x3f0] sm:$0xff]
          %v6148 = vld [vmem:[#allocation13 + $0x3f8] sm:$0xff]
          %v6149 = vunpack.c.l.s8.bf16 %v6021
          %v6150 = vunpack.c.l.s8.bf16 %v6022
          %v6151 = vunpack.c.l.s8.bf16 %v6023
          %v6152 = vunpack.c.l.s8.bf16 %v6024
          %v6153 = vunpack.c.h.s8.bf16 %v6021
          %v6154 = vunpack.c.h.s8.bf16 %v6022
          %v6155 = vunpack.c.h.s8.bf16 %v6023
          %v6156 = vunpack.c.h.s8.bf16 %v6024
          %v6157 = vunpack.c.l.s8.bf16 %v6025
          %v6158 = vunpack.c.l.s8.bf16 %v6026
          %v6159 = vunpack.c.l.s8.bf16 %v6027
          %v6160 = vunpack.c.l.s8.bf16 %v6028
          %v6161 = vunpack.c.h.s8.bf16 %v6025
          %v6162 = vunpack.c.h.s8.bf16 %v6026
          %v6163 = vunpack.c.h.s8.bf16 %v6027
          %v6164 = vunpack.c.h.s8.bf16 %v6028
          %v6165 = vunpack.c.l.s8.bf16 %v6029
          %v6166 = vunpack.c.l.s8.bf16 %v6030
          %v6167 = vunpack.c.l.s8.bf16 %v6031
          %v6168 = vunpack.c.l.s8.bf16 %v6032
          %v6169 = vunpack.c.h.s8.bf16 %v6029
          %v6170 = vunpack.c.h.s8.bf16 %v6030
          %v6171 = vunpack.c.h.s8.bf16 %v6031
          %v6172 = vunpack.c.h.s8.bf16 %v6032
          %v6173 = vunpack.c.l.s8.bf16 %v6033
          %v6174 = vunpack.c.l.s8.bf16 %v6034
          %v6175 = vunpack.c.l.s8.bf16 %v6035
          %v6176 = vunpack.c.l.s8.bf16 %v6036
          %v6177 = vunpack.c.h.s8.bf16 %v6033
          %v6178 = vunpack.c.h.s8.bf16 %v6034
          %v6179 = vunpack.c.h.s8.bf16 %v6035
          %v6180 = vunpack.c.h.s8.bf16 %v6036
          %v6181 = vunpack.c.l.s8.bf16 %v6037
          %v6182 = vunpack.c.l.s8.bf16 %v6038
          %v6183 = vunpack.c.l.s8.bf16 %v6039
          %v6184 = vunpack.c.l.s8.bf16 %v6040
          %v6185 = vunpack.c.h.s8.bf16 %v6037
          %v6186 = vunpack.c.h.s8.bf16 %v6038
          %v6187 = vunpack.c.h.s8.bf16 %v6039
          %v6188 = vunpack.c.h.s8.bf16 %v6040
          %v6189 = vunpack.c.l.s8.bf16 %v6041
          %v6190 = vunpack.c.l.s8.bf16 %v6042
          %v6191 = vunpack.c.l.s8.bf16 %v6043
          %v6192 = vunpack.c.l.s8.bf16 %v6044
          %v6193 = vunpack.c.h.s8.bf16 %v6041
          %v6194 = vunpack.c.h.s8.bf16 %v6042
          %v6195 = vunpack.c.h.s8.bf16 %v6043
          %v6196 = vunpack.c.h.s8.bf16 %v6044
          %v6197 = vunpack.c.l.s8.bf16 %v6045
          %v6198 = vunpack.c.l.s8.bf16 %v6046
          %v6199 = vunpack.c.l.s8.bf16 %v6047
          %v6200 = vunpack.c.l.s8.bf16 %v6048
          %v6201 = vunpack.c.h.s8.bf16 %v6045
          %v6202 = vunpack.c.h.s8.bf16 %v6046
          %v6203 = vunpack.c.h.s8.bf16 %v6047
          %v6204 = vunpack.c.h.s8.bf16 %v6048
          %v6205 = vunpack.c.l.s8.bf16 %v6049
          %v6206 = vunpack.c.l.s8.bf16 %v6050
          %v6207 = vunpack.c.l.s8.bf16 %v6051
          %v6208 = vunpack.c.l.s8.bf16 %v6052
          %v6209 = vunpack.c.h.s8.bf16 %v6049
          %v6210 = vunpack.c.h.s8.bf16 %v6050
          %v6211 = vunpack.c.h.s8.bf16 %v6051
          %v6212 = vunpack.c.h.s8.bf16 %v6052
          %v6213 = vunpack.c.l.s8.bf16 %v6053
          %v6214 = vunpack.c.l.s8.bf16 %v6054
          %v6215 = vunpack.c.l.s8.bf16 %v6055
          %v6216 = vunpack.c.l.s8.bf16 %v6056
          %v6217 = vunpack.c.h.s8.bf16 %v6053
          %v6218 = vunpack.c.h.s8.bf16 %v6054
          %v6219 = vunpack.c.h.s8.bf16 %v6055
          %v6220 = vunpack.c.h.s8.bf16 %v6056
          %v6221 = vunpack.c.l.s8.bf16 %v6057
          %v6222 = vunpack.c.l.s8.bf16 %v6058
          %v6223 = vunpack.c.l.s8.bf16 %v6059
          %v6224 = vunpack.c.l.s8.bf16 %v6060
          %v6225 = vunpack.c.h.s8.bf16 %v6057
          %v6226 = vunpack.c.h.s8.bf16 %v6058
          %v6227 = vunpack.c.h.s8.bf16 %v6059
          %v6228 = vunpack.c.h.s8.bf16 %v6060
          %v6229 = vunpack.c.l.s8.bf16 %v6061
          %v6230 = vunpack.c.l.s8.bf16 %v6062
          %v6231 = vunpack.c.l.s8.bf16 %v6063
          %v6232 = vunpack.c.l.s8.bf16 %v6064
          %v6233 = vunpack.c.h.s8.bf16 %v6061
          %v6234 = vunpack.c.h.s8.bf16 %v6062
          %v6235 = vunpack.c.h.s8.bf16 %v6063
          %v6236 = vunpack.c.h.s8.bf16 %v6064
          %v6237 = vunpack.c.l.s8.bf16 %v6065
          %v6238 = vunpack.c.l.s8.bf16 %v6066
          %v6239 = vunpack.c.l.s8.bf16 %v6067
          %v6240 = vunpack.c.l.s8.bf16 %v6068
          %v6241 = vunpack.c.h.s8.bf16 %v6065
          %v6242 = vunpack.c.h.s8.bf16 %v6066
          %v6243 = vunpack.c.h.s8.bf16 %v6067
          %v6244 = vunpack.c.h.s8.bf16 %v6068
          %v6245 = vunpack.c.l.s8.bf16 %v6069
          %v6246 = vunpack.c.l.s8.bf16 %v6070
          %v6247 = vunpack.c.l.s8.bf16 %v6071
          %v6248 = vunpack.c.l.s8.bf16 %v6072
          %v6249 = vunpack.c.h.s8.bf16 %v6069
          %v6250 = vunpack.c.h.s8.bf16 %v6070
          %v6251 = vunpack.c.h.s8.bf16 %v6071
          %v6252 = vunpack.c.h.s8.bf16 %v6072
          %v6253 = vunpack.c.l.s8.bf16 %v6073
          %v6254 = vunpack.c.l.s8.bf16 %v6074
          %v6255 = vunpack.c.l.s8.bf16 %v6075
          %v6256 = vunpack.c.l.s8.bf16 %v6076
          %v6257 = vunpack.c.h.s8.bf16 %v6073
          %v6258 = vunpack.c.h.s8.bf16 %v6074
          %v6259 = vunpack.c.h.s8.bf16 %v6075
          %v6260 = vunpack.c.h.s8.bf16 %v6076
          %v6261 = vunpack.c.l.s8.bf16 %v6077
          %v6262 = vunpack.c.l.s8.bf16 %v6078
          %v6263 = vunpack.c.l.s8.bf16 %v6079
          %v6264 = vunpack.c.l.s8.bf16 %v6080
          %v6265 = vunpack.c.h.s8.bf16 %v6077
          %v6266 = vunpack.c.h.s8.bf16 %v6078
          %v6267 = vunpack.c.h.s8.bf16 %v6079
          %v6268 = vunpack.c.h.s8.bf16 %v6080
          %v6269 = vunpack.c.l.s8.bf16 %v6081
          %v6270 = vunpack.c.l.s8.bf16 %v6082
          %v6271 = vunpack.c.l.s8.bf16 %v6083
          %v6272 = vunpack.c.l.s8.bf16 %v6084
          %v6273 = vunpack.c.h.s8.bf16 %v6081
          %v6274 = vunpack.c.h.s8.bf16 %v6082
          %v6275 = vunpack.c.h.s8.bf16 %v6083
          %v6276 = vunpack.c.h.s8.bf16 %v6084
          %v6277 = vunpack.c.l.s8.bf16 %v6085
          %v6278 = vunpack.c.l.s8.bf16 %v6086
          %v6279 = vunpack.c.l.s8.bf16 %v6087
          %v6280 = vunpack.c.l.s8.bf16 %v6088
          %v6281 = vunpack.c.h.s8.bf16 %v6085
          %v6282 = vunpack.c.h.s8.bf16 %v6086
          %v6283 = vunpack.c.h.s8.bf16 %v6087
          %v6284 = vunpack.c.h.s8.bf16 %v6088
          %v6285 = vunpack.c.l.s8.bf16 %v6089
          %v6286 = vunpack.c.l.s8.bf16 %v6090
          %v6287 = vunpack.c.l.s8.bf16 %v6091
          %v6288 = vunpack.c.l.s8.bf16 %v6092
          %v6289 = vunpack.c.h.s8.bf16 %v6089
          %v6290 = vunpack.c.h.s8.bf16 %v6090
          %v6291 = vunpack.c.h.s8.bf16 %v6091
          %v6292 = vunpack.c.h.s8.bf16 %v6092
          %v6293 = vunpack.c.l.s8.bf16 %v6093
          %v6294 = vunpack.c.l.s8.bf16 %v6094
          %v6295 = vunpack.c.l.s8.bf16 %v6095
          %v6296 = vunpack.c.l.s8.bf16 %v6096
          %v6297 = vunpack.c.h.s8.bf16 %v6093
          %v6298 = vunpack.c.h.s8.bf16 %v6094
          %v6299 = vunpack.c.h.s8.bf16 %v6095
          %v6300 = vunpack.c.h.s8.bf16 %v6096
          %v6301 = vunpack.c.l.s8.bf16 %v6097
          %v6302 = vunpack.c.l.s8.bf16 %v6098
          %v6303 = vunpack.c.l.s8.bf16 %v6099
          %v6304 = vunpack.c.l.s8.bf16 %v6100
          %v6305 = vunpack.c.h.s8.bf16 %v6097
          %v6306 = vunpack.c.h.s8.bf16 %v6098
          %v6307 = vunpack.c.h.s8.bf16 %v6099
          %v6308 = vunpack.c.h.s8.bf16 %v6100
          %v6309 = vunpack.c.l.s8.bf16 %v6101
          %v6310 = vunpack.c.l.s8.bf16 %v6102
          %v6311 = vunpack.c.l.s8.bf16 %v6103
          %v6312 = vunpack.c.l.s8.bf16 %v6104
          %v6313 = vunpack.c.h.s8.bf16 %v6101
          %v6314 = vunpack.c.h.s8.bf16 %v6102
          %v6315 = vunpack.c.h.s8.bf16 %v6103
          %v6316 = vunpack.c.h.s8.bf16 %v6104
          %v6317 = vunpack.c.l.s8.bf16 %v6105
          %v6318 = vunpack.c.l.s8.bf16 %v6106
          %v6319 = vunpack.c.l.s8.bf16 %v6107
          %v6320 = vunpack.c.l.s8.bf16 %v6108
          %v6321 = vunpack.c.h.s8.bf16 %v6105
          %v6322 = vunpack.c.h.s8.bf16 %v6106
          %v6323 = vunpack.c.h.s8.bf16 %v6107
          %v6324 = vunpack.c.h.s8.bf16 %v6108
          %v6325 = vunpack.c.l.s8.bf16 %v6109
          %v6326 = vunpack.c.l.s8.bf16 %v6110
          %v6327 = vunpack.c.l.s8.bf16 %v6111
          %v6328 = vunpack.c.l.s8.bf16 %v6112
          %v6329 = vunpack.c.h.s8.bf16 %v6109
          %v6330 = vunpack.c.h.s8.bf16 %v6110
          %v6331 = vunpack.c.h.s8.bf16 %v6111
          %v6332 = vunpack.c.h.s8.bf16 %v6112
          %v6333 = vunpack.c.l.s8.bf16 %v6113
          %v6334 = vunpack.c.l.s8.bf16 %v6114
          %v6335 = vunpack.c.l.s8.bf16 %v6115
          %v6336 = vunpack.c.l.s8.bf16 %v6116
          %v6337 = vunpack.c.h.s8.bf16 %v6113
          %v6338 = vunpack.c.h.s8.bf16 %v6114
          %v6339 = vunpack.c.h.s8.bf16 %v6115
          %v6340 = vunpack.c.h.s8.bf16 %v6116
          %v6341 = vunpack.c.l.s8.bf16 %v6117
          %v6342 = vunpack.c.l.s8.bf16 %v6118
          %v6343 = vunpack.c.l.s8.bf16 %v6119
          %v6344 = vunpack.c.l.s8.bf16 %v6120
          %v6345 = vunpack.c.h.s8.bf16 %v6117
          %v6346 = vunpack.c.h.s8.bf16 %v6118
          %v6347 = vunpack.c.h.s8.bf16 %v6119
          %v6348 = vunpack.c.h.s8.bf16 %v6120
          %v6349 = vunpack.c.l.s8.bf16 %v6121
          %v6350 = vunpack.c.l.s8.bf16 %v6122
          %v6351 = vunpack.c.l.s8.bf16 %v6123
          %v6352 = vunpack.c.l.s8.bf16 %v6124
          %v6353 = vunpack.c.h.s8.bf16 %v6121
          %v6354 = vunpack.c.h.s8.bf16 %v6122
          %v6355 = vunpack.c.h.s8.bf16 %v6123
          %v6356 = vunpack.c.h.s8.bf16 %v6124
          %v6357 = vunpack.c.l.s8.bf16 %v6125
          %v6358 = vunpack.c.l.s8.bf16 %v6126
          %v6359 = vunpack.c.l.s8.bf16 %v6127
          %v6360 = vunpack.c.l.s8.bf16 %v6128
          %v6361 = vunpack.c.h.s8.bf16 %v6125
          %v6362 = vunpack.c.h.s8.bf16 %v6126
          %v6363 = vunpack.c.h.s8.bf16 %v6127
          %v6364 = vunpack.c.h.s8.bf16 %v6128
          %v6365 = vunpack.c.l.s8.bf16 %v6129
          %v6366 = vunpack.c.l.s8.bf16 %v6130
          %v6367 = vunpack.c.l.s8.bf16 %v6131
          %v6368 = vunpack.c.l.s8.bf16 %v6132
          %v6369 = vunpack.c.h.s8.bf16 %v6129
          %v6370 = vunpack.c.h.s8.bf16 %v6130
          %v6371 = vunpack.c.h.s8.bf16 %v6131
          %v6372 = vunpack.c.h.s8.bf16 %v6132
          %v6373 = vunpack.c.l.s8.bf16 %v6133
          %v6374 = vunpack.c.l.s8.bf16 %v6134
          %v6375 = vunpack.c.l.s8.bf16 %v6135
          %v6376 = vunpack.c.l.s8.bf16 %v6136
          %v6377 = vunpack.c.h.s8.bf16 %v6133
          %v6378 = vunpack.c.h.s8.bf16 %v6134
          %v6379 = vunpack.c.h.s8.bf16 %v6135
          %v6380 = vunpack.c.h.s8.bf16 %v6136
          %v6381 = vunpack.c.l.s8.bf16 %v6137
          %v6382 = vunpack.c.l.s8.bf16 %v6138
          %v6383 = vunpack.c.l.s8.bf16 %v6139
          %v6384 = vunpack.c.l.s8.bf16 %v6140
          %v6385 = vunpack.c.h.s8.bf16 %v6137
          %v6386 = vunpack.c.h.s8.bf16 %v6138
          %v6387 = vunpack.c.h.s8.bf16 %v6139
          %v6388 = vunpack.c.h.s8.bf16 %v6140
          %v6389 = vunpack.c.l.s8.bf16 %v6141
          %v6390 = vunpack.c.l.s8.bf16 %v6142
          %v6391 = vunpack.c.l.s8.bf16 %v6143
          %v6392 = vunpack.c.l.s8.bf16 %v6144
          %v6393 = vunpack.c.h.s8.bf16 %v6141
          %v6394 = vunpack.c.h.s8.bf16 %v6142
          %v6395 = vunpack.c.h.s8.bf16 %v6143
          %v6396 = vunpack.c.h.s8.bf16 %v6144
          %v6397 = vunpack.c.l.s8.bf16 %v6145
          %v6398 = vunpack.c.l.s8.bf16 %v6146
          %v6399 = vunpack.c.l.s8.bf16 %v6147
          %v6400 = vunpack.c.l.s8.bf16 %v6148
          %v6401 = vunpack.c.h.s8.bf16 %v6145
          %v6402 = vunpack.c.h.s8.bf16 %v6146
          %v6403 = vunpack.c.h.s8.bf16 %v6147
          %v6404 = vunpack.c.h.s8.bf16 %v6148
          %v6405 = vpack.c.bf16 %v6013, %v6013
          %v6406 = vpack.c.bf16 %v6014, %v6014
          %v6407 = vpack.c.bf16 %v6015, %v6015
          %v6408 = vpack.c.bf16 %v6016, %v6016
          %v6409 = vpack.c.bf16 %v6017, %v6017
          %v6410 = vpack.c.bf16 %v6018, %v6018
          %v6411 = vpack.c.bf16 %v6019, %v6019
          %v6412 = vpack.c.bf16 %v6020, %v6020
          %6413 = vmatprep.subr.bf16.mxu0 %v6178
          %6414 = vmatpush1.bf16.msra.mxu0 %v6177
          %6415 = vmatprep.subr.bf16.mxu0 %v6174
          %6416 = vmatpush1.bf16.msra.mxu0 %v6173
          %6417 = vmatprep.subr.bf16.mxu0 %v6170
          %6418 = vmatpush1.bf16.msra.mxu0 %v6169
          %6419 = vmatprep.subr.bf16.mxu0 %v6166
          %6420 = vmatpush1.bf16.msra.mxu0 %v6165
          %6421 = vmatprep.subr.bf16.mxu0 %v6162
          %6422 = vmatpush1.bf16.msra.mxu0 %v6161
          %6423 = vmatprep.subr.bf16.mxu0 %v6158
          %6424 = vmatpush1.bf16.msra.mxu0 %v6157
          %6425 = vmatprep.subr.bf16.mxu0 %v6154
          %6426 = vmatpush1.bf16.msra.mxu0 %v6153
          %6427 = vmatprep.subr.bf16.mxu0 %v6150
          %6428 = vmatpush1.bf16.msra.mxu0 %v6149
          %6429 = vmatprep.subr.bf16.mxu0 %v6210
          %6430 = vmatpush2.bf16.msra.mxu0 %v6209
          %6431 = vmatprep.subr.bf16.mxu0 %v6206
          %6432 = vmatpush2.bf16.msra.mxu0 %v6205
          %6433 = vmatprep.subr.bf16.mxu0 %v6202
          %6434 = vmatpush2.bf16.msra.mxu0 %v6201
          %6435 = vmatprep.subr.bf16.mxu0 %v6198
          %6436 = vmatpush2.bf16.msra.mxu0 %v6197
          %6437 = vmatprep.subr.bf16.mxu0 %v6194
          %6438 = vmatpush2.bf16.msra.mxu0 %v6193
          %6439 = vmatprep.subr.bf16.mxu0 %v6190
          %6440 = vmatpush2.bf16.msra.mxu0 %v6189
          %6441 = vmatprep.subr.bf16.mxu0 %v6186
          %6442 = vmatpush2.bf16.msra.mxu0 %v6185
          %6443 = vmatprep.subr.bf16.mxu0 %v6182
          %6444 = vmatpush2.bf16.msra.mxu0 %v6181
          %6445 = vmatprep.mubr.bf16.mxu0 %v6406
          %6446 = vmatmul.mubr.bf16.gmra.mxu0 %v6405
          %v6447 = vpop.f32.mrf.mxu0
          %v6448 = vadd.f32 0.0, %v6447
          %v6449 = vpop.f32.mrf.mxu0
          %v6450 = vadd.f32 0.0, %v6449
          %v6451 = vpop.f32.mrf.mxu0
          %v6452 = vpop.f32.mrf.mxu0
          %6453 = vdwg.mxu0
          %6454 = vmatprep.subr.bf16.mxu0 %v6242
          %6455 = vmatpush1.bf16.msra.mxu0 %v6241
          %6456 = vmatprep.subr.bf16.mxu0 %v6238
          %6457 = vmatpush1.bf16.msra.mxu0 %v6237
          %6458 = vmatprep.subr.bf16.mxu0 %v6234
          %6459 = vmatpush1.bf16.msra.mxu0 %v6233
          %6460 = vmatprep.subr.bf16.mxu0 %v6230
          %6461 = vmatpush1.bf16.msra.mxu0 %v6229
          %6462 = vmatprep.subr.bf16.mxu0 %v6226
          %6463 = vmatpush1.bf16.msra.mxu0 %v6225
          %6464 = vmatprep.subr.bf16.mxu0 %v6222
          %6465 = vmatpush1.bf16.msra.mxu0 %v6221
          %6466 = vmatprep.subr.bf16.mxu0 %v6218
          %6467 = vmatpush1.bf16.msra.mxu0 %v6217
          %6468 = vmatprep.subr.bf16.mxu0 %v6214
          %6469 = vmatpush1.bf16.msra.mxu0 %v6213
          %6470 = vmatprep.subr.bf16.mxu0 %v6274
          %6471 = vmatpush2.bf16.msra.mxu0 %v6273
          %6472 = vmatprep.subr.bf16.mxu0 %v6270
          %6473 = vmatpush2.bf16.msra.mxu0 %v6269
          %6474 = vmatprep.subr.bf16.mxu0 %v6266
          %6475 = vmatpush2.bf16.msra.mxu0 %v6265
          %6476 = vmatprep.subr.bf16.mxu0 %v6262
          %6477 = vmatpush2.bf16.msra.mxu0 %v6261
          %6478 = vmatprep.subr.bf16.mxu0 %v6258
          %6479 = vmatpush2.bf16.msra.mxu0 %v6257
          %6480 = vmatprep.subr.bf16.mxu0 %v6254
          %6481 = vmatpush2.bf16.msra.mxu0 %v6253
          %6482 = vmatprep.subr.bf16.mxu0 %v6250
          %6483 = vmatpush2.bf16.msra.mxu0 %v6249
          %6484 = vmatprep.subr.bf16.mxu0 %v6246
          %6485 = vmatpush2.bf16.msra.mxu0 %v6245
          %6486 = vmatprep.mubr.bf16.mxu0 %v6408
          %6487 = vmatmul.mubr.bf16.gmra.mxu0 %v6407
          %v6488 = vpop.f32.mrf.mxu0
          %v6489 = vadd.f32 %v6448, %v6488
          %v6490 = vpop.f32.mrf.mxu0
          %v6491 = vadd.f32 %v6450, %v6490
          %v6492 = vpop.f32.mrf.mxu0
          %v6493 = vpop.f32.mrf.mxu0
          %6494 = vdwg.mxu0
          %6495 = vmatprep.subr.bf16.mxu0 %v6306
          %6496 = vmatpush1.bf16.msra.mxu0 %v6305
          %6497 = vmatprep.subr.bf16.mxu0 %v6302
          %6498 = vmatpush1.bf16.msra.mxu0 %v6301
          %6499 = vmatprep.subr.bf16.mxu0 %v6298
          %6500 = vmatpush1.bf16.msra.mxu0 %v6297
          %6501 = vmatprep.subr.bf16.mxu0 %v6294
          %6502 = vmatpush1.bf16.msra.mxu0 %v6293
          %6503 = vmatprep.subr.bf16.mxu0 %v6290
          %6504 = vmatpush1.bf16.msra.mxu0 %v6289
          %6505 = vmatprep.subr.bf16.mxu0 %v6286
          %6506 = vmatpush1.bf16.msra.mxu0 %v6285
          %6507 = vmatprep.subr.bf16.mxu0 %v6282
          %6508 = vmatpush1.bf16.msra.mxu0 %v6281
          %6509 = vmatprep.subr.bf16.mxu0 %v6278
          %6510 = vmatpush1.bf16.msra.mxu0 %v6277
          %6511 = vmatprep.subr.bf16.mxu0 %v6338
          %6512 = vmatpush2.bf16.msra.mxu0 %v6337
          %6513 = vmatprep.subr.bf16.mxu0 %v6334
          %6514 = vmatpush2.bf16.msra.mxu0 %v6333
          %6515 = vmatprep.subr.bf16.mxu0 %v6330
          %6516 = vmatpush2.bf16.msra.mxu0 %v6329
          %6517 = vmatprep.subr.bf16.mxu0 %v6326
          %6518 = vmatpush2.bf16.msra.mxu0 %v6325
          %6519 = vmatprep.subr.bf16.mxu0 %v6322
          %6520 = vmatpush2.bf16.msra.mxu0 %v6321
          %6521 = vmatprep.subr.bf16.mxu0 %v6318
          %6522 = vmatpush2.bf16.msra.mxu0 %v6317
          %6523 = vmatprep.subr.bf16.mxu0 %v6314
          %6524 = vmatpush2.bf16.msra.mxu0 %v6313
          %6525 = vmatprep.subr.bf16.mxu0 %v6310
          %6526 = vmatpush2.bf16.msra.mxu0 %v6309
          %6527 = vmatprep.mubr.bf16.mxu0 %v6410
          %6528 = vmatmul.mubr.bf16.gmra.mxu0 %v6409
          %v6529 = vpop.f32.mrf.mxu0
          %v6530 = vadd.f32 %v6489, %v6529
          %v6531 = vpop.f32.mrf.mxu0
          %v6532 = vadd.f32 %v6491, %v6531
          %v6533 = vpop.f32.mrf.mxu0
          %v6534 = vpop.f32.mrf.mxu0
          %6535 = vdwg.mxu0
          %6536 = vmatprep.subr.bf16.mxu0 %v6370
          %6537 = vmatpush1.bf16.msra.mxu0 %v6369
          %6538 = vmatprep.subr.bf16.mxu0 %v6366
          %6539 = vmatpush1.bf16.msra.mxu0 %v6365
          %6540 = vmatprep.subr.bf16.mxu0 %v6362
          %6541 = vmatpush1.bf16.msra.mxu0 %v6361
          %6542 = vmatprep.subr.bf16.mxu0 %v6358
          %6543 = vmatpush1.bf16.msra.mxu0 %v6357
          %6544 = vmatprep.subr.bf16.mxu0 %v6354
          %6545 = vmatpush1.bf16.msra.mxu0 %v6353
          %6546 = vmatprep.subr.bf16.mxu0 %v6350
          %6547 = vmatpush1.bf16.msra.mxu0 %v6349
          %6548 = vmatprep.subr.bf16.mxu0 %v6346
          %6549 = vmatpush1.bf16.msra.mxu0 %v6345
          %6550 = vmatprep.subr.bf16.mxu0 %v6342
          %6551 = vmatpush1.bf16.msra.mxu0 %v6341
          %6552 = vmatprep.subr.bf16.mxu0 %v6402
          %6553 = vmatpush2.bf16.msra.mxu0 %v6401
          %6554 = vmatprep.subr.bf16.mxu0 %v6398
          %6555 = vmatpush2.bf16.msra.mxu0 %v6397
          %6556 = vmatprep.subr.bf16.mxu0 %v6394
          %6557 = vmatpush2.bf16.msra.mxu0 %v6393
          %6558 = vmatprep.subr.bf16.mxu0 %v6390
          %6559 = vmatpush2.bf16.msra.mxu0 %v6389
          %6560 = vmatprep.subr.bf16.mxu0 %v6386
          %6561 = vmatpush2.bf16.msra.mxu0 %v6385
          %6562 = vmatprep.subr.bf16.mxu0 %v6382
          %6563 = vmatpush2.bf16.msra.mxu0 %v6381
          %6564 = vmatprep.subr.bf16.mxu0 %v6378
          %6565 = vmatpush2.bf16.msra.mxu0 %v6377
          %6566 = vmatprep.subr.bf16.mxu0 %v6374
          %6567 = vmatpush2.bf16.msra.mxu0 %v6373
          %6568 = vmatprep.mubr.bf16.mxu0 %v6412
          %6569 = vmatmul.mubr.bf16.gmra.mxu0 %v6411
          %v6570 = vpop.f32.mrf.mxu0
          %v6571 = vadd.f32 %v6530, %v6570
          %v6572 = vpop.f32.mrf.mxu0
          %v6573 = vadd.f32 %v6532, %v6572
          %v6574 = vpop.f32.mrf.mxu0
          %v6575 = vpop.f32.mrf.mxu0
          %6576 = vdwg.mxu0
          %6577 = vmatprep.subr.bf16.mxu0 %v6180
          %6578 = vmatpush1.bf16.msra.mxu0 %v6179
          %6579 = vmatprep.subr.bf16.mxu0 %v6176
          %6580 = vmatpush1.bf16.msra.mxu0 %v6175
          %6581 = vmatprep.subr.bf16.mxu0 %v6172
          %6582 = vmatpush1.bf16.msra.mxu0 %v6171
          %6583 = vmatprep.subr.bf16.mxu0 %v6168
          %6584 = vmatpush1.bf16.msra.mxu0 %v6167
          %6585 = vmatprep.subr.bf16.mxu0 %v6164
          %6586 = vmatpush1.bf16.msra.mxu0 %v6163
          %6587 = vmatprep.subr.bf16.mxu0 %v6160
          %6588 = vmatpush1.bf16.msra.mxu0 %v6159
          %6589 = vmatprep.subr.bf16.mxu0 %v6156
          %6590 = vmatpush1.bf16.msra.mxu0 %v6155
          %6591 = vmatprep.subr.bf16.mxu0 %v6152
          %6592 = vmatpush1.bf16.msra.mxu0 %v6151
          %6593 = vmatprep.subr.bf16.mxu0 %v6212
          %6594 = vmatpush2.bf16.msra.mxu0 %v6211
          %6595 = vmatprep.subr.bf16.mxu0 %v6208
          %6596 = vmatpush2.bf16.msra.mxu0 %v6207
          %6597 = vmatprep.subr.bf16.mxu0 %v6204
          %6598 = vmatpush2.bf16.msra.mxu0 %v6203
          %6599 = vmatprep.subr.bf16.mxu0 %v6200
          %6600 = vmatpush2.bf16.msra.mxu0 %v6199
          %6601 = vmatprep.subr.bf16.mxu0 %v6196
          %6602 = vmatpush2.bf16.msra.mxu0 %v6195
          %6603 = vmatprep.subr.bf16.mxu0 %v6192
          %6604 = vmatpush2.bf16.msra.mxu0 %v6191
          %6605 = vmatprep.subr.bf16.mxu0 %v6188
          %6606 = vmatpush2.bf16.msra.mxu0 %v6187
          %6607 = vmatprep.subr.bf16.mxu0 %v6184
          %6608 = vmatpush2.bf16.msra.mxu0 %v6183
          %6609 = vmatprep.mubr.bf16.mxu0 %v6406
          %6610 = vmatmul.mubr.bf16.gmra.mxu0 %v6405
          %v6611 = vpop.f32.mrf.mxu0
          %v6612 = vadd.f32 0.0, %v6611
          %v6613 = vpop.f32.mrf.mxu0
          %v6614 = vadd.f32 0.0, %v6613
          %v6615 = vpop.f32.mrf.mxu0
          %v6616 = vpop.f32.mrf.mxu0
          %6617 = vdwg.mxu0
          %6618 = vmatprep.subr.bf16.mxu0 %v6244
          %6619 = vmatpush1.bf16.msra.mxu0 %v6243
          %6620 = vmatprep.subr.bf16.mxu0 %v6240
          %6621 = vmatpush1.bf16.msra.mxu0 %v6239
          %6622 = vmatprep.subr.bf16.mxu0 %v6236
          %6623 = vmatpush1.bf16.msra.mxu0 %v6235
          %6624 = vmatprep.subr.bf16.mxu0 %v6232
          %6625 = vmatpush1.bf16.msra.mxu0 %v6231
          %6626 = vmatprep.subr.bf16.mxu0 %v6228
          %6627 = vmatpush1.bf16.msra.mxu0 %v6227
          %6628 = vmatprep.subr.bf16.mxu0 %v6224
          %6629 = vmatpush1.bf16.msra.mxu0 %v6223
          %6630 = vmatprep.subr.bf16.mxu0 %v6220
          %6631 = vmatpush1.bf16.msra.mxu0 %v6219
          %6632 = vmatprep.subr.bf16.mxu0 %v6216
          %6633 = vmatpush1.bf16.msra.mxu0 %v6215
          %6634 = vmatprep.subr.bf16.mxu0 %v6276
          %6635 = vmatpush2.bf16.msra.mxu0 %v6275
          %6636 = vmatprep.subr.bf16.mxu0 %v6272
          %6637 = vmatpush2.bf16.msra.mxu0 %v6271
          %6638 = vmatprep.subr.bf16.mxu0 %v6268
          %6639 = vmatpush2.bf16.msra.mxu0 %v6267
          %6640 = vmatprep.subr.bf16.mxu0 %v6264
          %6641 = vmatpush2.bf16.msra.mxu0 %v6263
          %6642 = vmatprep.subr.bf16.mxu0 %v6260
          %6643 = vmatpush2.bf16.msra.mxu0 %v6259
          %6644 = vmatprep.subr.bf16.mxu0 %v6256
          %6645 = vmatpush2.bf16.msra.mxu0 %v6255
          %6646 = vmatprep.subr.bf16.mxu0 %v6252
          %6647 = vmatpush2.bf16.msra.mxu0 %v6251
          %6648 = vmatprep.subr.bf16.mxu0 %v6248
          %6649 = vmatpush2.bf16.msra.mxu0 %v6247
          %6650 = vmatprep.mubr.bf16.mxu0 %v6408
          %6651 = vmatmul.mubr.bf16.gmra.mxu0 %v6407
          %v6652 = vpop.f32.mrf.mxu0
          %v6653 = vadd.f32 %v6612, %v6652
          %v6654 = vpop.f32.mrf.mxu0
          %v6655 = vadd.f32 %v6614, %v6654
          %v6656 = vpop.f32.mrf.mxu0
          %v6657 = vpop.f32.mrf.mxu0
          %6658 = vdwg.mxu0
          %6659 = vmatprep.subr.bf16.mxu0 %v6308
          %6660 = vmatpush1.bf16.msra.mxu0 %v6307
          %6661 = vmatprep.subr.bf16.mxu0 %v6304
          %6662 = vmatpush1.bf16.msra.mxu0 %v6303
          %6663 = vmatprep.subr.bf16.mxu0 %v6300
          %6664 = vmatpush1.bf16.msra.mxu0 %v6299
          %6665 = vmatprep.subr.bf16.mxu0 %v6296
          %6666 = vmatpush1.bf16.msra.mxu0 %v6295
          %6667 = vmatprep.subr.bf16.mxu0 %v6292
          %6668 = vmatpush1.bf16.msra.mxu0 %v6291
          %6669 = vmatprep.subr.bf16.mxu0 %v6288
          %6670 = vmatpush1.bf16.msra.mxu0 %v6287
          %6671 = vmatprep.subr.bf16.mxu0 %v6284
          %6672 = vmatpush1.bf16.msra.mxu0 %v6283
          %6673 = vmatprep.subr.bf16.mxu0 %v6280
          %6674 = vmatpush1.bf16.msra.mxu0 %v6279
          %6675 = vmatprep.subr.bf16.mxu0 %v6340
          %6676 = vmatpush2.bf16.msra.mxu0 %v6339
          %6677 = vmatprep.subr.bf16.mxu0 %v6336
          %6678 = vmatpush2.bf16.msra.mxu0 %v6335
          %6679 = vmatprep.subr.bf16.mxu0 %v6332
          %6680 = vmatpush2.bf16.msra.mxu0 %v6331
          %6681 = vmatprep.subr.bf16.mxu0 %v6328
          %6682 = vmatpush2.bf16.msra.mxu0 %v6327
          %6683 = vmatprep.subr.bf16.mxu0 %v6324
          %6684 = vmatpush2.bf16.msra.mxu0 %v6323
          %6685 = vmatprep.subr.bf16.mxu0 %v6320
          %6686 = vmatpush2.bf16.msra.mxu0 %v6319
          %6687 = vmatprep.subr.bf16.mxu0 %v6316
          %6688 = vmatpush2.bf16.msra.mxu0 %v6315
          %6689 = vmatprep.subr.bf16.mxu0 %v6312
          %6690 = vmatpush2.bf16.msra.mxu0 %v6311
          %6691 = vmatprep.mubr.bf16.mxu0 %v6410
          %6692 = vmatmul.mubr.bf16.gmra.mxu0 %v6409
          %v6693 = vpop.f32.mrf.mxu0
          %v6694 = vadd.f32 %v6653, %v6693
          %v6695 = vpop.f32.mrf.mxu0
          %v6696 = vadd.f32 %v6655, %v6695
          %v6697 = vpop.f32.mrf.mxu0
          %v6698 = vpop.f32.mrf.mxu0
          %6699 = vdwg.mxu0
          %6700 = vmatprep.subr.bf16.mxu0 %v6372
          %6701 = vmatpush1.bf16.msra.mxu0 %v6371
          %6702 = vmatprep.subr.bf16.mxu0 %v6368
          %6703 = vmatpush1.bf16.msra.mxu0 %v6367
          %6704 = vmatprep.subr.bf16.mxu0 %v6364
          %6705 = vmatpush1.bf16.msra.mxu0 %v6363
          %6706 = vmatprep.subr.bf16.mxu0 %v6360
          %6707 = vmatpush1.bf16.msra.mxu0 %v6359
          %6708 = vmatprep.subr.bf16.mxu0 %v6356
          %6709 = vmatpush1.bf16.msra.mxu0 %v6355
          %6710 = vmatprep.subr.bf16.mxu0 %v6352
          %6711 = vmatpush1.bf16.msra.mxu0 %v6351
          %6712 = vmatprep.subr.bf16.mxu0 %v6348
          %6713 = vmatpush1.bf16.msra.mxu0 %v6347
          %6714 = vmatprep.subr.bf16.mxu0 %v6344
          %6715 = vmatpush1.bf16.msra.mxu0 %v6343
          %6716 = vmatprep.subr.bf16.mxu0 %v6404
          %6717 = vmatpush2.bf16.msra.mxu0 %v6403
          %6718 = vmatprep.subr.bf16.mxu0 %v6400
          %6719 = vmatpush2.bf16.msra.mxu0 %v6399
          %6720 = vmatprep.subr.bf16.mxu0 %v6396
          %6721 = vmatpush2.bf16.msra.mxu0 %v6395
          %6722 = vmatprep.subr.bf16.mxu0 %v6392
          %6723 = vmatpush2.bf16.msra.mxu0 %v6391
          %6724 = vmatprep.subr.bf16.mxu0 %v6388
          %6725 = vmatpush2.bf16.msra.mxu0 %v6387
          %6726 = vmatprep.subr.bf16.mxu0 %v6384
          %6727 = vmatpush2.bf16.msra.mxu0 %v6383
          %6728 = vmatprep.subr.bf16.mxu0 %v6380
          %6729 = vmatpush2.bf16.msra.mxu0 %v6379
          %6730 = vmatprep.subr.bf16.mxu0 %v6376
          %6731 = vmatpush2.bf16.msra.mxu0 %v6375
          %6732 = vmatprep.mubr.bf16.mxu0 %v6412
          %6733 = vmatmul.mubr.bf16.gmra.mxu0 %v6411
          %v6734 = vpop.f32.mrf.mxu0
          %v6735 = vadd.f32 %v6694, %v6734
          %v6736 = vpop.f32.mrf.mxu0
          %v6737 = vadd.f32 %v6696, %v6736
          %v6738 = vpop.f32.mrf.mxu0
          %v6739 = vpop.f32.mrf.mxu0
          %6740 = vdwg.mxu0
          %v6741 = vld [vmem:[#allocation14] sm:$0xf]
          %v6743 = vlaneseq
          %v6744 = vshrl.u32 %v6743, 7
          %v6745 = vsub.s32 0, %v6744
          %v6746 = vrot.slane %v6741, %v6745
          %v6747 = vlaneseq
          %v6748 = vshrl.u32 %v6747, 7
          %v6749 = vsub.s32 1, %v6748
          %v6750 = vrot.slane %v6741, %v6749
          %v6751 = vlaneseq
          %v6752 = vshrl.u32 %v6751, 7
          %v6753 = vsub.s32 2, %v6752
          %v6754 = vrot.slane %v6741, %v6753
          %v6755 = vlaneseq
          %v6756 = vshrl.u32 %v6755, 7
          %v6757 = vsub.s32 3, %v6756
          %v6758 = vrot.slane %v6741, %v6757
          %v6763 = vmul.f32 %v6571, %v6746
          %v6764 = vmul.f32 %v6573, %v6750
          %v6765 = vmul.f32 %v6735, %v6754
          %v6766 = vmul.f32 %v6737, %v6758
          %v6767 = vld [vmem:[#allocation16] sm:$0xf]
          %v6769 = vlaneseq
          %v6770 = vshrl.u32 %v6769, 7
          %v6771 = vsub.s32 0, %v6770
          %v6772 = vrot.slane %v6767, %v6771
          %v6773 = vlaneseq
          %v6774 = vshrl.u32 %v6773, 7
          %v6775 = vsub.s32 1, %v6774
          %v6776 = vrot.slane %v6767, %v6775
          %v6777 = vlaneseq
          %v6778 = vshrl.u32 %v6777, 7
          %v6779 = vsub.s32 2, %v6778
          %v6780 = vrot.slane %v6767, %v6779
          %v6781 = vlaneseq
          %v6782 = vshrl.u32 %v6781, 7
          %v6783 = vsub.s32 3, %v6782
          %v6784 = vrot.slane %v6767, %v6783
          %v6789 = vadd.f32 %v6763, %v6772
          %v6790 = vadd.f32 %v6764, %v6776
          %v6791 = vadd.f32 %v6765, %v6780
          %v6792 = vadd.f32 %v6766, %v6784
          %v6793 = vmax.f32 %v6789, 0.0
          %v6794 = vmax.f32 %v6790, 0.0
          %v6795 = vmax.f32 %v6791, 0.0
          %v6796 = vmax.f32 %v6792, 0.0
          %v6797 = vpack.c.bf16 %v6793, %v6793
          %v6798 = vpack.c.bf16 %v6794, %v6794
          %v6799 = vpack.c.bf16 %v6795, %v6795
          %v6800 = vpack.c.bf16 %v6796, %v6796
          %v6801 = vld [vmem:[#allocation17] sm:$0xf]
          %v6802 = vld [vmem:[#allocation17 + $0x4] sm:$0xf]
          %v6803 = vld [vmem:[#allocation17 + $0x8] sm:$0xf]
          %v6804 = vld [vmem:[#allocation17 + $0xc] sm:$0xf]
          %v6805 = vld [vmem:[#allocation17 + $0x10] sm:$0xf]
          %v6806 = vld [vmem:[#allocation17 + $0x14] sm:$0xf]
          %v6807 = vld [vmem:[#allocation17 + $0x18] sm:$0xf]
          %v6808 = vld [vmem:[#allocation17 + $0x1c] sm:$0xf]
          %v6809 = vld [vmem:[#allocation17 + $0x20] sm:$0xf]
          %v6810 = vld [vmem:[#allocation17 + $0x24] sm:$0xf]
          %v6811 = vld [vmem:[#allocation17 + $0x28] sm:$0xf]
          %v6812 = vld [vmem:[#allocation17 + $0x2c] sm:$0xf]
          %v6813 = vld [vmem:[#allocation17 + $0x30] sm:$0xf]
          %v6814 = vld [vmem:[#allocation17 + $0x34] sm:$0xf]
          %v6815 = vld [vmem:[#allocation17 + $0x38] sm:$0xf]
          %v6816 = vld [vmem:[#allocation17 + $0x3c] sm:$0xf]
          %v6817 = vld [vmem:[#allocation17 + $0x40] sm:$0xf]
          %v6818 = vld [vmem:[#allocation17 + $0x44] sm:$0xf]
          %v6819 = vld [vmem:[#allocation17 + $0x48] sm:$0xf]
          %v6820 = vld [vmem:[#allocation17 + $0x4c] sm:$0xf]
          %v6821 = vld [vmem:[#allocation17 + $0x50] sm:$0xf]
          %v6822 = vld [vmem:[#allocation17 + $0x54] sm:$0xf]
          %v6823 = vld [vmem:[#allocation17 + $0x58] sm:$0xf]
          %v6824 = vld [vmem:[#allocation17 + $0x5c] sm:$0xf]
          %v6825 = vld [vmem:[#allocation17 + $0x60] sm:$0xf]
          %v6826 = vld [vmem:[#allocation17 + $0x64] sm:$0xf]
          %v6827 = vld [vmem:[#allocation17 + $0x68] sm:$0xf]
          %v6828 = vld [vmem:[#allocation17 + $0x6c] sm:$0xf]
          %v6829 = vld [vmem:[#allocation17 + $0x70] sm:$0xf]
          %v6830 = vld [vmem:[#allocation17 + $0x74] sm:$0xf]
          %v6831 = vld [vmem:[#allocation17 + $0x78] sm:$0xf]
          %v6832 = vld [vmem:[#allocation17 + $0x7c] sm:$0xf]
          %v6833 = vld [vmem:[#allocation17 + $0x80] sm:$0xf]
          %v6834 = vld [vmem:[#allocation17 + $0x84] sm:$0xf]
          %v6835 = vld [vmem:[#allocation17 + $0x88] sm:$0xf]
          %v6836 = vld [vmem:[#allocation17 + $0x8c] sm:$0xf]
          %v6837 = vld [vmem:[#allocation17 + $0x90] sm:$0xf]
          %v6838 = vld [vmem:[#allocation17 + $0x94] sm:$0xf]
          %v6839 = vld [vmem:[#allocation17 + $0x98] sm:$0xf]
          %v6840 = vld [vmem:[#allocation17 + $0x9c] sm:$0xf]
          %v6841 = vld [vmem:[#allocation17 + $0xa0] sm:$0xf]
          %v6842 = vld [vmem:[#allocation17 + $0xa4] sm:$0xf]
          %v6843 = vld [vmem:[#allocation17 + $0xa8] sm:$0xf]
          %v6844 = vld [vmem:[#allocation17 + $0xac] sm:$0xf]
          %v6845 = vld [vmem:[#allocation17 + $0xb0] sm:$0xf]
          %v6846 = vld [vmem:[#allocation17 + $0xb4] sm:$0xf]
          %v6847 = vld [vmem:[#allocation17 + $0xb8] sm:$0xf]
          %v6848 = vld [vmem:[#allocation17 + $0xbc] sm:$0xf]
          %v6849 = vld [vmem:[#allocation17 + $0xc0] sm:$0xf]
          %v6850 = vld [vmem:[#allocation17 + $0xc4] sm:$0xf]
          %v6851 = vld [vmem:[#allocation17 + $0xc8] sm:$0xf]
          %v6852 = vld [vmem:[#allocation17 + $0xcc] sm:$0xf]
          %v6853 = vld [vmem:[#allocation17 + $0xd0] sm:$0xf]
          %v6854 = vld [vmem:[#allocation17 + $0xd4] sm:$0xf]
          %v6855 = vld [vmem:[#allocation17 + $0xd8] sm:$0xf]
          %v6856 = vld [vmem:[#allocation17 + $0xdc] sm:$0xf]
          %v6857 = vld [vmem:[#allocation17 + $0xe0] sm:$0xf]
          %v6858 = vld [vmem:[#allocation17 + $0xe4] sm:$0xf]
          %v6859 = vld [vmem:[#allocation17 + $0xe8] sm:$0xf]
          %v6860 = vld [vmem:[#allocation17 + $0xec] sm:$0xf]
          %v6861 = vld [vmem:[#allocation17 + $0xf0] sm:$0xf]
          %v6862 = vld [vmem:[#allocation17 + $0xf4] sm:$0xf]
          %v6863 = vld [vmem:[#allocation17 + $0xf8] sm:$0xf]
          %v6864 = vld [vmem:[#allocation17 + $0xfc] sm:$0xf]
          %v6865 = vld [vmem:[#allocation19] sm:$0x1]
          %v6867 = vlaneseq
          %v6868 = vshrl.u32 %v6867, 7
          %v6869 = vsub.s32 0, %v6868
          %v6870 = vrot.slane %v6865, %v6869
          %v6936 = vunpack.c.l.b16 %v6801
          %v6937 = vunpack.c.l.b16 %v6802
          %v6938 = vunpack.c.l.b16 %v6803
          %v6939 = vunpack.c.l.b16 %v6804
          %v6940 = vunpack.c.l.b16 %v6805
          %v6941 = vunpack.c.l.b16 %v6806
          %v6942 = vunpack.c.l.b16 %v6807
          %v6943 = vunpack.c.l.b16 %v6808
          %v6944 = vunpack.c.l.b16 %v6809
          %v6945 = vunpack.c.l.b16 %v6810
          %v6946 = vunpack.c.l.b16 %v6811
          %v6947 = vunpack.c.l.b16 %v6812
          %v6948 = vunpack.c.l.b16 %v6813
          %v6949 = vunpack.c.l.b16 %v6814
          %v6950 = vunpack.c.l.b16 %v6815
          %v6951 = vunpack.c.l.b16 %v6816
          %v6952 = vunpack.c.l.b16 %v6817
          %v6953 = vunpack.c.l.b16 %v6818
          %v6954 = vunpack.c.l.b16 %v6819
          %v6955 = vunpack.c.l.b16 %v6820
          %v6956 = vunpack.c.l.b16 %v6821
          %v6957 = vunpack.c.l.b16 %v6822
          %v6958 = vunpack.c.l.b16 %v6823
          %v6959 = vunpack.c.l.b16 %v6824
          %v6960 = vunpack.c.l.b16 %v6825
          %v6961 = vunpack.c.l.b16 %v6826
          %v6962 = vunpack.c.l.b16 %v6827
          %v6963 = vunpack.c.l.b16 %v6828
          %v6964 = vunpack.c.l.b16 %v6829
          %v6965 = vunpack.c.l.b16 %v6830
          %v6966 = vunpack.c.l.b16 %v6831
          %v6967 = vunpack.c.l.b16 %v6832
          %v6968 = vunpack.c.l.b16 %v6833
          %v6969 = vunpack.c.l.b16 %v6834
          %v6970 = vunpack.c.l.b16 %v6835
          %v6971 = vunpack.c.l.b16 %v6836
          %v6972 = vunpack.c.l.b16 %v6837
          %v6973 = vunpack.c.l.b16 %v6838
          %v6974 = vunpack.c.l.b16 %v6839
          %v6975 = vunpack.c.l.b16 %v6840
          %v6976 = vunpack.c.l.b16 %v6841
          %v6977 = vunpack.c.l.b16 %v6842
          %v6978 = vunpack.c.l.b16 %v6843
          %v6979 = vunpack.c.l.b16 %v6844
          %v6980 = vunpack.c.l.b16 %v6845
          %v6981 = vunpack.c.l.b16 %v6846
          %v6982 = vunpack.c.l.b16 %v6847
          %v6983 = vunpack.c.l.b16 %v6848
          %v6984 = vunpack.c.l.b16 %v6849
          %v6985 = vunpack.c.l.b16 %v6850
          %v6986 = vunpack.c.l.b16 %v6851
          %v6987 = vunpack.c.l.b16 %v6852
          %v6988 = vunpack.c.l.b16 %v6853
          %v6989 = vunpack.c.l.b16 %v6854
          %v6990 = vunpack.c.l.b16 %v6855
          %v6991 = vunpack.c.l.b16 %v6856
          %v6992 = vunpack.c.l.b16 %v6857
          %v6993 = vunpack.c.l.b16 %v6858
          %v6994 = vunpack.c.l.b16 %v6859
          %v6995 = vunpack.c.l.b16 %v6860
          %v6996 = vunpack.c.l.b16 %v6861
          %v6997 = vunpack.c.l.b16 %v6862
          %v6998 = vunpack.c.l.b16 %v6863
          %v6999 = vunpack.c.l.b16 %v6864
          %v7000 = vpack.c.b16 %v6937, %v6936
          %v7001 = vpack.c.b16 %v6939, %v6938
          %v7002 = vpack.c.b16 %v6941, %v6940
          %v7003 = vpack.c.b16 %v6943, %v6942
          %v7004 = vpack.c.b16 %v6945, %v6944
          %v7005 = vpack.c.b16 %v6947, %v6946
          %v7006 = vpack.c.b16 %v6949, %v6948
          %v7007 = vpack.c.b16 %v6951, %v6950
          %v7008 = vpack.c.b16 %v6953, %v6952
          %v7009 = vpack.c.b16 %v6955, %v6954
          %v7010 = vpack.c.b16 %v6957, %v6956
          %v7011 = vpack.c.b16 %v6959, %v6958
          %v7012 = vpack.c.b16 %v6961, %v6960
          %v7013 = vpack.c.b16 %v6963, %v6962
          %v7014 = vpack.c.b16 %v6965, %v6964
          %v7015 = vpack.c.b16 %v6967, %v6966
          %v7016 = vpack.c.b16 %v6969, %v6968
          %v7017 = vpack.c.b16 %v6971, %v6970
          %v7018 = vpack.c.b16 %v6973, %v6972
          %v7019 = vpack.c.b16 %v6975, %v6974
          %v7020 = vpack.c.b16 %v6977, %v6976
          %v7021 = vpack.c.b16 %v6979, %v6978
          %v7022 = vpack.c.b16 %v6981, %v6980
          %v7023 = vpack.c.b16 %v6983, %v6982
          %v7024 = vpack.c.b16 %v6985, %v6984
          %v7025 = vpack.c.b16 %v6987, %v6986
          %v7026 = vpack.c.b16 %v6989, %v6988
          %v7027 = vpack.c.b16 %v6991, %v6990
          %v7028 = vpack.c.b16 %v6993, %v6992
          %v7029 = vpack.c.b16 %v6995, %v6994
          %v7030 = vpack.c.b16 %v6997, %v6996
          %v7031 = vpack.c.b16 %v6999, %v6998
          %7064 = vmatprep.subr.bf16.mxu0 0
          %7065 = vmatpush1.bf16.msra.mxu0 %v7007
          %7066 = vmatprep.subr.bf16.mxu0 0
          %7067 = vmatpush1.bf16.msra.mxu0 %v7006
          %7068 = vmatprep.subr.bf16.mxu0 0
          %7069 = vmatpush1.bf16.msra.mxu0 %v7005
          %7070 = vmatprep.subr.bf16.mxu0 0
          %7071 = vmatpush1.bf16.msra.mxu0 %v7004
          %7072 = vmatprep.subr.bf16.mxu0 0
          %7073 = vmatpush1.bf16.msra.mxu0 %v7003
          %7074 = vmatprep.subr.bf16.mxu0 0
          %7075 = vmatpush1.bf16.msra.mxu0 %v7002
          %7076 = vmatprep.subr.bf16.mxu0 0
          %7077 = vmatpush1.bf16.msra.mxu0 %v7001
          %7078 = vmatprep.subr.bf16.mxu0 0
          %7079 = vmatpush1.bf16.msra.mxu0 %v7000
          %7080 = vmatprep.subr.bf16.mxu0 0
          %7081 = vmatpush2.bf16.msra.mxu0 %v7015
          %7082 = vmatprep.subr.bf16.mxu0 0
          %7083 = vmatpush2.bf16.msra.mxu0 %v7014
          %7084 = vmatprep.subr.bf16.mxu0 0
          %7085 = vmatpush2.bf16.msra.mxu0 %v7013
          %7086 = vmatprep.subr.bf16.mxu0 0
          %7087 = vmatpush2.bf16.msra.mxu0 %v7012
          %7088 = vmatprep.subr.bf16.mxu0 0
          %7089 = vmatpush2.bf16.msra.mxu0 %v7011
          %7090 = vmatprep.subr.bf16.mxu0 0
          %7091 = vmatpush2.bf16.msra.mxu0 %v7010
          %7092 = vmatprep.subr.bf16.mxu0 0
          %7093 = vmatpush2.bf16.msra.mxu0 %v7009
          %7094 = vmatprep.subr.bf16.mxu0 0
          %7095 = vmatpush2.bf16.msra.mxu0 %v7008
          %7096 = vmatprep.mubr.bf16.mxu0 %v6798
          %7097 = vmatmul.mubr.bf16.gmra.mxu0 %v6797
          %v7098 = vpop.f32.mrf.mxu0
          %v7099 = vadd.f32 %v6870, %v7098
          %v7100 = vpop.f32.mrf.mxu0
          %v7101 = vpop.f32.mrf.mxu0
          %v7102 = vpop.f32.mrf.mxu0
          %7103 = vdwg.mxu0
          %7104 = vmatprep.subr.bf16.mxu0 0
          %7105 = vmatpush1.bf16.msra.mxu0 %v7023
          %7106 = vmatprep.subr.bf16.mxu0 0
          %7107 = vmatpush1.bf16.msra.mxu0 %v7022
          %7108 = vmatprep.subr.bf16.mxu0 0
          %7109 = vmatpush1.bf16.msra.mxu0 %v7021
          %7110 = vmatprep.subr.bf16.mxu0 0
          %7111 = vmatpush1.bf16.msra.mxu0 %v7020
          %7112 = vmatprep.subr.bf16.mxu0 0
          %7113 = vmatpush1.bf16.msra.mxu0 %v7019
          %7114 = vmatprep.subr.bf16.mxu0 0
          %7115 = vmatpush1.bf16.msra.mxu0 %v7018
          %7116 = vmatprep.subr.bf16.mxu0 0
          %7117 = vmatpush1.bf16.msra.mxu0 %v7017
          %7118 = vmatprep.subr.bf16.mxu0 0
          %7119 = vmatpush1.bf16.msra.mxu0 %v7016
          %7120 = vmatprep.subr.bf16.mxu0 0
          %7121 = vmatpush2.bf16.msra.mxu0 %v7031
          %7122 = vmatprep.subr.bf16.mxu0 0
          %7123 = vmatpush2.bf16.msra.mxu0 %v7030
          %7124 = vmatprep.subr.bf16.mxu0 0
          %7125 = vmatpush2.bf16.msra.mxu0 %v7029
          %7126 = vmatprep.subr.bf16.mxu0 0
          %7127 = vmatpush2.bf16.msra.mxu0 %v7028
          %7128 = vmatprep.subr.bf16.mxu0 0
          %7129 = vmatpush2.bf16.msra.mxu0 %v7027
          %7130 = vmatprep.subr.bf16.mxu0 0
          %7131 = vmatpush2.bf16.msra.mxu0 %v7026
          %7132 = vmatprep.subr.bf16.mxu0 0
          %7133 = vmatpush2.bf16.msra.mxu0 %v7025
          %7134 = vmatprep.subr.bf16.mxu0 0
          %7135 = vmatpush2.bf16.msra.mxu0 %v7024
          %7136 = vmatprep.mubr.bf16.mxu0 %v6800
          %7137 = vmatmul.mubr.bf16.gmra.mxu0 %v6799
          %v7138 = vpop.f32.mrf.mxu0
          %v7139 = vadd.f32 %v7099, %v7138
          %v7140 = vpop.f32.mrf.mxu0
          %v7141 = vpop.f32.mrf.mxu0
          %v7142 = vpop.f32.mrf.mxu0
          %7143 = vdwg.mxu0
          %v7144 = vxor.u32 %v7139, 2147483648
          %v7145 = vmul.f32 %v7144, 1.442695
          %v7146 = vpow.pop %v7145
          %v7147 = vadd.f32 %v7146, 1.0
          %v7148 = vrcp.pop %v7147
          %v7149 = vmul.f32 1.0, %v7148
          %7150 = vst [vmem:[%s12] sm:$0xff] %v7149
        $region120: #{net_forward.1} parent=67 // pred_fallthru
          _
        // Predicated region
        $region121: #{net_forward.1} parent=67 // pred_check
          %p7151 = pneg %p320
        $region122: #{net_forward.1} parent=67 // pred_check_branch
          %7153 = sbr.rel (%p7151) target = $region124
        $region123: #{net_forward.1} parent=67 // pred_region
          _
        $region124: #{net_forward.1} parent=67 // pred_fallthru
          _
        // Predicated region
        $region125: #{net_forward.1} parent=67 // pred_check
          %p7154 = pneg %p320
        $region126: #{net_forward.1} parent=67 // pred_check_branch
          %7156 = sbr.rel (%p7154) target = $region128
        $region127: #{net_forward.1} parent=67 // pred_region
          _
        $region128: #{net_forward.1} parent=67 // pred_fallthru
          _
      $region68: #{net_forward.1} parent=5 // pred_fallthru
        _
      %p7157 = scmp.le.s32.totalorder 2, %s30
      // Predicated region
      $region129: #{net_forward.1} parent=5 // pred_check
        %p7158 = pneg %p7157
      $region130: #{net_forward.1} parent=5 // pred_check_branch
        %7160 = sbr.rel (%p7158) target = $region132
      $region131: #{net_forward.1} parent=5 // pred_region
        %s7161 = ssub.s32 %s30, 2
      $region132: #{net_forward.1} parent=5 // pred_fallthru
        _
    $region6: #{net_forward.1} parent=1 // loop_footer
      %s34 = sadd.s32 1, %s30
    $region7: #{net_forward.1} parent=1 // loop_footer_branch
      %29 = sbr.rel target = $region3
    $region8: #{net_forward.1} parent=1 // loop_exit
      _
    %7162 = vsyncpa [#allocation4], 1
    %s7163 = scalar_lea.sflag [#allocation4], 1
    %7164 = vsyncpa %s7163, 1
    %7165 = vsyncpa [#allocation6], 1
    %s7166 = scalar_lea.sflag [#allocation6], 1
    %7167 = vsyncpa %s7166, 1
    %7168 = vsyncpa [#allocation9], 1
    %s7169 = scalar_lea.sflag [#allocation9], 1
    %7170 = vsyncpa %s7169, 1
    %7171 = vsyncpa [#allocation12], 1
    %7172 = vsyncpa [#allocation15], 1
    %7173 = vsyncpa [#allocation18], 1

</llo_original>
